<compile_context>
chip_gen: v7x
topology: tpu7x:2x2x1
jax: 0.10.0
libtpu: 0.0.40
codegen_flags: <defaults>
</compile_context>

<pallas_src>
import functools

import jax
import jax.numpy as jnp
import numpy as np
from jax import lax
from jax.experimental import pallas as pl
from jax.experimental.pallas import tpu as pltpu

MM_DTYPE = jnp.bfloat16               # MXU operand dtype (accumulation stays f32)
VMEM_LIMIT_BYTES = 48 * 1024 * 1024   # fits v7x's 64 MiB/TC; plenty on v5e/v6e


# ---------------------------------------------------------------------------
# In-kernel building blocks (all operate on batched (tb*H, W*C) row slabs)
# ---------------------------------------------------------------------------
def _conv3x3_rows(x, w_ref, b_ref, rows_per_img):
    """3x3 / stride-1 / pad-1 conv on a batched lane-dense slab.

    x: (M, W*Cin) f32 with M = tb*rows_per_img (already ReLU'd if required).
    w_ref: (3, W*Cin, W*Cout) block-banded weights (kx taps + W padding folded in).
    b_ref: (1, W*Cout) bias, added once for the whole batched slab.
    H padding: pltpu.roll (+/-1 row) with per-image boundary rows zero-masked.
    """
    m = x.shape[0]
    rid = lax.broadcasted_iota(jnp.int32, (m, 1), 0)
    r = rid % rows_per_img
    x_up = jnp.where(r == 0, 0.0, pltpu.roll(x, shift=1, axis=0))            # row h-1
    x_dn = jnp.where(r == rows_per_img - 1, 0.0,
                     pltpu.roll(x, shift=m - 1, axis=0))                      # row h+1
    y = b_ref[...]
    y = y + jnp.dot(x_up.astype(MM_DTYPE), w_ref[0], preferred_element_type=jnp.float32)
    y = y + jnp.dot(x.astype(MM_DTYPE), w_ref[1], preferred_element_type=jnp.float32)
    y = y + jnp.dot(x_dn.astype(MM_DTYPE), w_ref[2], preferred_element_type=jnp.float32)
    return y


def _pool3x3s2(y, pw_ref, scratch, rows_per_img):
    """3x3 / stride-2 / pad-1 max pool on a batched (M, W*C) slab (rows_per_img even).

    H direction: roll + per-image-boundary masking + max, then a stride-2 sublane read
    from a VMEM scratch ref.  W direction: 3 exact 0/1 bf16 selection matmuls + max.
    """
    m, k = y.shape
    mo = m // 2
    rid = lax.broadcasted_iota(jnp.int32, (m, 1), 0)
    r = rid % rows_per_img
    up = jnp.where(r == 0, y, pltpu.roll(y, shift=1, axis=0))                 # pad -> dup
    dn = jnp.where(r == rows_per_img - 1, y, pltpu.roll(y, shift=m - 1, axis=0))
    hmax = jnp.maximum(jnp.maximum(y, up), dn)                                # (m, k) f32
    scratch[0:m, 0:k] = hmax
    sub = scratch[pl.ds(0, mo, stride=2), pl.ds(0, k)]                        # rows 2*ho
    hb = sub.astype(MM_DTYPE)
    z = jnp.dot(hb, pw_ref[0], preferred_element_type=jnp.float32)
    for dx in (1, 2):
        z = jnp.maximum(z, jnp.dot(hb, pw_ref[dx], preferred_element_type=jnp.float32))
    return z


def _resnet_kernel(x_ref, *rest, heights):
    """All three ConvSequences fused, for one batch tile of images."""
    o_ref, scratch = rest[-2], rest[-1]
    wrefs = rest[:-2]
    x = x_ref[...].astype(jnp.float32)                    # (tb*H1, W1*C1)
    i = 0
    for h in heights:                                      # unrolled over the 3 stages
        wc, bc, pw = wrefs[i], wrefs[i + 1], wrefs[i + 2]
        res = wrefs[i + 3:i + 11]
        i += 11
        ho = h // 2
        y = _conv3x3_rows(x, wc, bc, h)                    # first conv (1/255 folded in)
        p = _pool3x3s2(y, pw, scratch, h)                  # fused 3x3/s2 max pool
        for j in range(2):                                 # two residual blocks
            w0, b0, w1, b1 = res[4 * j:4 * j + 4]
            z = _conv3x3_rows(jnp.maximum(p, 0.0), w0, b0, ho)
            p = _conv3x3_rows(jnp.maximum(z, 0.0), w1, b1, ho) + p
        x = p
    o_ref[...] = x.astype(o_ref.dtype)


def _heads_kernel(x_ref, fcw, fcb, hw, hb, o_ref):
    """ReLU -> Linear(fc) -> ReLU -> fused, 128-lane-padded [actor | value] Linear."""
    x = jnp.maximum(x_ref[...], 0).astype(MM_DTYPE)        # nn.ReLU after Flatten
    h = jnp.dot(x, fcw[...], preferred_element_type=jnp.float32) + fcb[...]
    h = jnp.maximum(h, 0.0).astype(MM_DTYPE)               # nn.ReLU after Linear
    o_ref[...] = jnp.dot(h, hw[...], preferred_element_type=jnp.float32) + hb[...]


# ---------------------------------------------------------------------------
# pallas_call wrappers
# ---------------------------------------------------------------------------
def _const_spec(a):
    nd = a.ndim
    return pl.BlockSpec(a.shape, lambda *_, _nd=nd: (0,) * _nd)


def _pick_batch_tile(n, bytes_per_image, h_first, h_last,
                     target_bytes=1 << 20, max_bytes=8 << 20):
    """Images per grid step: target ~1 MiB input blocks, respect (8,*) block rules."""
    cands = [t for t in range(1, n + 1)
             if n % t == 0 and (t == n or ((t * h_first) % 8 == 0 and
                                           (t * h_last) % 8 == 0))]
    for t in cands:                                        # smallest tile reaching target
        if t * bytes_per_image >= target_bytes:
            return t
    within = [t for t in cands if t * bytes_per_image <= max_bytes]
    return within[-1] if within else cands[0]


def _pick_row_tile(m, cap=512):
    if m <= cap:
        return m
    best = 1
    for t in range(8, cap + 1, 8):
        if m % t == 0:
            best = t
    return best if best > 1 else m


def _fused_convnet(x, seqs, N, H, W, C):
    """x: (N*H, W*C) bf16 slab -> (N*Hf, Wf*Cf) bf16 slab (all 3 ConvSequences)."""
    ops, heights = [], []
    h, w, cin = H, W, C
    scratch_lanes = 0
    for s in seqs:
        cout = s['bc'].shape[1] // w
        assert h % 2 == 0, "feature-map heights must be even at every stage"
        heights.append(h)
        scratch_lanes = max(scratch_lanes, w * cout)
        ops += [s['wc'], s['bc'], s['pw']]
        for rb in s['res']:
            ops += [rb['w0'], rb['b0'], rb['w1'], rb['b1']]
        h, w, cin = h // 2, (w + 1) // 2, cout
    hf, wcf = h, w * cin

    tb = _pick_batch_tile(N, H * W * C * x.dtype.itemsize, H, hf)
    in_specs = [pl.BlockSpec((tb * H, W * C), lambda n: (n, 0))]
    in_specs += [_const_spec(a) for a in ops]              # constant index maps: no re-DMA
    return pl.pallas_call(
        functools.partial(_resnet_kernel, heights=tuple(heights)),
        out_shape=jax.ShapeDtypeStruct((N * hf, wcf), MM_DTYPE),
        grid=(N // tb,),
        in_specs=in_specs,
        out_specs=pl.BlockSpec((tb * hf, wcf), lambda n: (n, 0)),
        scratch_shapes=[pltpu.VMEM((tb * H, scratch_lanes), jnp.float32)],
        compiler_params=pltpu.CompilerParams(
            dimension_semantics=("parallel",),
            vmem_limit_bytes=VMEM_LIMIT_BYTES),
    )(x, *ops)


def _heads(flat, fcw, fcb, hw, hb):
    m, f = flat.shape
    a1 = hw.shape[1]                                       # padded to 128 lanes at prep
    tm = _pick_row_tile(m)
    in_specs = [pl.BlockSpec((tm, f), lambda i: (i, 0))]
    in_specs += [_const_spec(a) for a in (fcw, fcb, hw, hb)]
    return pl.pallas_call(
        _heads_kernel,
        out_shape=jax.ShapeDtypeStruct((m, a1), jnp.float32),
        grid=(m // tm,),
        in_specs=in_specs,
        out_specs=pl.BlockSpec((tm, a1), lambda i: (i, 0)),
        compiler_params=pltpu.CompilerParams(
            dimension_semantics=("parallel",),
            vmem_limit_bytes=VMEM_LIMIT_BYTES),
    )(flat, fcw, fcb, hw, hb)


# ---------------------------------------------------------------------------
# Model forward
# ---------------------------------------------------------------------------
def procgen_resnet_forward(observations, kp, n_actions):
    """observations: (N, H, W, C) NHWC, values in [0, 255]."""
    N, H, W, C = observations.shape
    x = observations.astype(MM_DTYPE).reshape(N * H, W * C)   # bf16 exact for 0..255
    feat = _fused_convnet(x, kp['seqs'], N, H, W, C)            # (N*Hf, Wf*Cf) bf16
    hf = feat.shape[0] // N
    flat = feat.reshape(N, hf * feat.shape[1])                  # (h, w, c) flatten (free)
    out = _heads(flat, kp['fc_w'], kp['fc_b'], kp['head_w'], kp['head_b'])
    return out[:, :n_actions], out[:, n_actions:n_actions + 1]  # actions, value


# ---------------------------------------------------------------------------
# One-time host-side parameter preparation (banded weights, pool selections, etc.)
# ---------------------------------------------------------------------------
def _banded_conv_weights(wt, W, scale=1.0):
    """PyTorch (Cout, Cin, 3, 3) -> 3 block-banded (W*Cin, W*Cout) matrices (per ky)."""
    cout, cin = wt.shape[0], wt.shape[1]
    wb = np.zeros((3, W * cin, W * cout), np.float32)
    for ky in range(3):
        for kx in range(3):
            blk = wt[:, :, ky, kx].T * scale              # (Cin, Cout)
            for w in range(W):
                wi = w + kx - 1
                if 0 <= wi < W:
                    wb[ky, wi * cin:(wi + 1) * cin, w * cout:(w + 1) * cout] = blk
    return wb


def _pool_w_sel(W, C):
    """0/1 selection matrices for the W direction of a 3x3/s2/p1 max pool."""
    Wo = (W + 1) // 2
    S = np.zeros((3, W * C, Wo * C), np.float32)
    for dx in range(3):
        for wo in range(Wo):
            ws = min(max(2 * wo + dx - 1, 0), W - 1)      # clamp == duplicate in-window tap
            for c in range(C):
                S[dx, ws * C + c, wo * C + c] = 1.0
    return S


def prepare_params(params, obs_hwc):
    """Convert PyTorch-layout params into the kernel-ready format (runs once, on host)."""
    H, W, C = obs_hwc
    kp = {'seqs': []}
    sh, sw, sc = H, W, C
    for i, seq in enumerate(params['conv_seqs']):
        wt = np.asarray(seq['conv_w'], np.float32)
        cout = wt.shape[0]
        scale = (1.0 / 255.0) if i == 0 else 1.0          # fold /255 into first conv weights
        assert sh % 2 == 0
        ho, wo = sh // 2, (sw + 1) // 2
        entry = {
            'wc': jnp.asarray(_banded_conv_weights(wt, sw, scale), MM_DTYPE),
            'bc': jnp.asarray(np.tile(np.asarray(seq['conv_b'], np.float32), sw)[None, :]),
            'pw': jnp.asarray(_pool_w_sel(sw, cout), MM_DTYPE),   # bf16 (exact 0/1)
            'res': [],
        }
        for name in ('res0', 'res1'):
            rb = seq[name]
            entry['res'].append({
                'w0': jnp.asarray(_banded_conv_weights(np.asarray(rb['w0'], np.float32), wo), MM_DTYPE),
                'b0': jnp.asarray(np.tile(np.asarray(rb['b0'], np.float32), wo)[None, :]),
                'w1': jnp.asarray(_banded_conv_weights(np.asarray(rb['w1'], np.float32), wo), MM_DTYPE),
                'b1': jnp.asarray(np.tile(np.asarray(rb['b1'], np.float32), wo)[None, :]),
            })
        kp['seqs'].append(entry)
        sc, sh, sw = cout, ho, wo
    # FC: permute rows so it consumes the (h, w, c)-flattened slab (no NCHW transpose).
    src = np.transpose(np.arange(sc * sh * sw).reshape(sc, sh, sw), (1, 2, 0)).reshape(-1)
    kp['fc_w'] = jnp.asarray(np.asarray(params['fc_w'], np.float32)[src, :], MM_DTYPE)
    kp['fc_b'] = jnp.asarray(np.asarray(params['fc_b'], np.float32)[None, :])
    # Actor + value heads fused into one matmul; output padded to 128 lanes (lane-dense).
    head_w = np.concatenate([np.asarray(params['actor_w'], np.float32),
                             np.asarray(params['value_w'], np.float32)], axis=1)
    head_b = np.concatenate([np.asarray(params['actor_b'], np.float32),
                             np.asarray(params['value_b'], np.float32)])
    pad = (-head_w.shape[1]) % 128
    kp['head_w'] = jnp.asarray(np.pad(head_w, ((0, 0), (0, pad))), MM_DTYPE)
    kp['head_b'] = jnp.asarray(np.pad(head_b, (0, pad))[None, :])
    return kp


# ---------------------------------------------------------------------------
# Deterministic parameter init (PyTorch shapes; synthetic values)
# ---------------------------------------------------------------------------
def init_params(key, c_in, h, w, cnn_width=8, mlp_width=32, n_actions=6):
    keys = iter(jax.random.split(key, 64))

    def nrm(shape, std=0.1):
        return (std * jax.random.normal(next(keys), shape)).astype(jnp.float32)

    params = {'conv_seqs': []}
    sc, sh, sw = c_in, h, w
    for out_c in [cnn_width, 2 * cnn_width, 2 * cnn_width]:
        seq = {
            'conv_w': nrm((out_c, sc, 3, 3)), 'conv_b': nrm((out_c,)),
            'res0': {'w0': nrm((out_c, out_c, 3, 3)), 'b0': nrm((out_c,)),
                     'w1': nrm((out_c, out_c, 3, 3)), 'b1': nrm((out_c,))},
            'res1': {'w0': nrm((out_c, out_c, 3, 3)), 'b0': nrm((out_c,)),
                     'w1': nrm((out_c, out_c, 3, 3)), 'b1': nrm((out_c,))},
        }
        params['conv_seqs'].append(seq)
        sc, sh, sw = out_c, (sh + 1) // 2, (sw + 1) // 2
    flat = sc * sh * sw
    params['fc_w'] = nrm((flat, mlp_width))
    params['fc_b'] = nrm((mlp_width,))
    params['actor_w'] = nrm((mlp_width, n_actions), std=0.01)
    params['actor_b'] = jnp.zeros((n_actions,), jnp.float32)
    params['value_w'] = nrm((mlp_width, 1), std=1.0)
    params['value_b'] = jnp.zeros((1,), jnp.float32)
    return params


# ---------------------------------------------------------------------------
# Pure-JAX f32 reference (exact PyTorch math) for numerical verification
# ---------------------------------------------------------------------------
def reference_forward(observations, params):
    x = observations.astype(jnp.float32) / 255.0

    def conv(x, w, b):
        wt = jnp.transpose(w, (2, 3, 1, 0))  # HWIO
        y = lax.conv_general_dilated(x, wt, (1, 1), ((1, 1), (1, 1)),
                                     dimension_numbers=('NHWC', 'HWIO', 'NHWC'))
        return y + b.reshape(1, 1, 1, -1)

    def pool(x):
        return lax.reduce_window(x, -jnp.inf, lax.max, (1, 3, 3, 1), (1, 2, 2, 1),
                                 padding=((0, 0), (1, 1), (1, 1), (0, 0)))

    for seq in params['conv_seqs']:
        x = conv(x, seq['conv_w'], seq['conv_b'])
        x = pool(x)
        for rb in (seq['res0'], seq['res1']):
            t = conv(jax.nn.relu(x), rb['w0'], rb['b0'])
            x = conv(jax.nn.relu(t), rb['w1'], rb['b1']) + x
    N = x.shape[0]
    flat = jnp.transpose(x, (0, 3, 1, 2)).reshape(N, -1)
    hidden = jax.nn.relu(jnp.dot(jax.nn.relu(flat), params['fc_w']) + params['fc_b'])
    actions = jnp.dot(hidden, params['actor_w']) + params['actor_b']
    value = jnp.dot(hidden, params['value_w']) + params['value_b']
    return actions, value


# ---------------------------------------------------------------------------
if __name__ == "__main__":
    key = jax.random.PRNGKey(0)
    kkey, xkey = jax.random.split(key)

    N, H, W, C = 2, 16, 16, 4            # batch, height, width, obs channels
    N_ACTIONS = 6
    obs = jax.random.randint(xkey, (N, H, W, C), 0, 256).astype(jnp.float32)
    params = init_params(kkey, C, H, W, cnn_width=8, mlp_width=32, n_actions=N_ACTIONS)
    kparams = prepare_params(params, (H, W, C))

    fwd = jax.jit(procgen_resnet_forward, static_argnames=('n_actions',))
    actions, value = fwd(obs, kparams, n_actions=N_ACTIONS)
    jax.block_until_ready((actions, value))

    assert actions.shape == (N, N_ACTIONS)
    assert value.shape == (N, 1)

    ref_a, ref_v = reference_forward(obs, params)
    # bf16 MXU operands vs. an all-f32 reference -> modest tolerance.
    assert jnp.allclose(actions, ref_a, rtol=5e-2, atol=5e-2), "actor mismatch"
    assert jnp.allclose(value, ref_v, rtol=5e-2, atol=5e-2), "value mismatch"

    print("KERNEL_OK")
</pallas_src>

<mosaic_0001>
module attributes {stable_mosaic.version = 11 : i64} {
  func.func @_heads_kernel(%arg0: i32, %arg1: memref<2x64xbf16, #tpu.memory_space<vmem>>, %arg2: memref<64x32xbf16, #tpu.memory_space<vmem>>, %arg3: memref<1x32xf32, #tpu.memory_space<vmem>>, %arg4: memref<32x128xbf16, #tpu.memory_space<vmem>>, %arg5: memref<1x128xf32, #tpu.memory_space<vmem>>, %arg6: memref<2x128xf32, #tpu.memory_space<vmem>>) attributes {dimension_semantics = [#tpu.dimension_semantics<parallel>], iteration_bounds = array<i64: 1>, scalar_prefetch = 0 : i64, scratch_operands = 0 : i64, tpu.core_type = #tpu.core_type<tc>, window_params = [{transform_indices = @transform_0, window_bounds = array<i64: 2, 64>}, {pipeline_mode = #tpu.pipeline_mode<synchronous>, transform_indices = @transform_1, window_bounds = array<i64: 64, 32>}, {pipeline_mode = #tpu.pipeline_mode<synchronous>, transform_indices = @transform_2, window_bounds = array<i64: 1, 32>}, {pipeline_mode = #tpu.pipeline_mode<synchronous>, transform_indices = @transform_3, window_bounds = array<i64: 32, 128>}, {pipeline_mode = #tpu.pipeline_mode<synchronous>, transform_indices = @transform_4, window_bounds = array<i64: 1, 128>}, {transform_indices = @transform_5, window_bounds = array<i64: 2, 128>}]} {
    %c0 = arith.constant 0 : index
    %c0_0 = arith.constant 0 : index
    %0 = vector.load %arg1[%c0, %c0_0] : memref<2x64xbf16, #tpu.memory_space<vmem>>, vector<2x64xbf16>
    %cst = arith.constant 0.000000e+00 : bf16
    %1 = vector.broadcast %cst : bf16 to vector<2x64xbf16>
    %2 = arith.maximumf %0, %1 : vector<2x64xbf16>
    %c0_1 = arith.constant 0 : index
    %c0_2 = arith.constant 0 : index
    %3 = vector.load %arg2[%c0_1, %c0_2] : memref<64x32xbf16, #tpu.memory_space<vmem>>, vector<64x32xbf16>
    %cst_3 = arith.constant dense<0.000000e+00> : vector<2x32xf32>
    %4 = tpu.matmul %2, %3, %cst_3 {dimension_numbers = #tpu.dot_dimension_numbers<[1], [0], [0], [1], [0, 0, 1, 1], [], []>} : vector<2x64xbf16>, vector<64x32xbf16>, vector<2x32xf32> -> vector<2x32xf32>
    %c0_4 = arith.constant 0 : index
    %c0_5 = arith.constant 0 : index
    %5 = vector.load %arg3[%c0_4, %c0_5] : memref<1x32xf32, #tpu.memory_space<vmem>>, vector<1x32xf32>
    %6 = vector.broadcast %5 : vector<1x32xf32> to vector<2x32xf32>
    %7 = arith.addf %4, %6 : vector<2x32xf32>
    %cst_6 = arith.constant 0.000000e+00 : f32
    %8 = vector.broadcast %cst_6 : f32 to vector<2x32xf32>
    %9 = arith.maximumf %7, %8 : vector<2x32xf32>
    %10 = arith.truncf %9 : vector<2x32xf32> to vector<2x32xbf16>
    %c0_7 = arith.constant 0 : index
    %c0_8 = arith.constant 0 : index
    %11 = vector.load %arg4[%c0_7, %c0_8] : memref<32x128xbf16, #tpu.memory_space<vmem>>, vector<32x128xbf16>
    %cst_9 = arith.constant dense<0.000000e+00> : vector<2x128xf32>
    %12 = tpu.matmul %10, %11, %cst_9 {dimension_numbers = #tpu.dot_dimension_numbers<[1], [0], [0], [1], [0, 0, 1, 1], [], []>} : vector<2x32xbf16>, vector<32x128xbf16>, vector<2x128xf32> -> vector<2x128xf32>
    %c0_10 = arith.constant 0 : index
    %c0_11 = arith.constant 0 : index
    %13 = vector.load %arg5[%c0_10, %c0_11] : memref<1x128xf32, #tpu.memory_space<vmem>>, vector<1x128xf32>
    %14 = vector.broadcast %13 : vector<1x128xf32> to vector<2x128xf32>
    %15 = arith.addf %12, %14 : vector<2x128xf32>
    %c0_12 = arith.constant 0 : index
    %c0_13 = arith.constant 0 : index
    %16 = vector.load %arg6[%c0_12, %c0_13] : memref<2x128xf32, #tpu.memory_space<vmem>>, vector<2x128xf32>
    tpu.vector_store %arg6[%c0_12, %c0_13], %15 {strides = array<i32>} : memref<2x128xf32, #tpu.memory_space<vmem>>, vector<2x128xf32>,
    return
  }
  func.func @transform_0(%arg0: i32) -> (i32, i32) {
    %c0_i32 = arith.constant 0 : i32
    %c0_i32_0 = arith.constant 0 : i32
    return %arg0, %c0_i32 : i32, i32
  }
  func.func @transform_1(%arg0: i32) -> (i32, i32) {
    %c0_i32 = arith.constant 0 : i32
    %c0_i32_0 = arith.constant 0 : i32
    %c0_i32_1 = arith.constant 0 : i32
    return %c0_i32, %c0_i32_0 : i32, i32
  }
  func.func @transform_2(%arg0: i32) -> (i32, i32) {
    %c0_i32 = arith.constant 0 : i32
    %c0_i32_0 = arith.constant 0 : i32
    %c0_i32_1 = arith.constant 0 : i32
    return %c0_i32, %c0_i32_0 : i32, i32
  }
  func.func @transform_3(%arg0: i32) -> (i32, i32) {
    %c0_i32 = arith.constant 0 : i32
    %c0_i32_0 = arith.constant 0 : i32
    %c0_i32_1 = arith.constant 0 : i32
    return %c0_i32, %c0_i32_0 : i32, i32
  }
  func.func @transform_4(%arg0: i32) -> (i32, i32) {
    %c0_i32 = arith.constant 0 : i32
    %c0_i32_0 = arith.constant 0 : i32
    %c0_i32_1 = arith.constant 0 : i32
    return %c0_i32, %c0_i32_0 : i32, i32
  }
  func.func @transform_5(%arg0: i32) -> (i32, i32) {
    %c0_i32 = arith.constant 0 : i32
    %c0_i32_0 = arith.constant 0 : i32
    return %arg0, %c0_i32 : i32, i32
  }
}

module attributes {stable_mosaic.version = 11 : i64} {
  func.func @_resnet_kernel(%arg0: i32, %arg1: memref<32x64xbf16, #tpu.memory_space<vmem>>, %arg2: memref<3x64x128xbf16, #tpu.memory_space<vmem>>, %arg3: memref<1x128xf32, #tpu.memory_space<vmem>>, %arg4: memref<3x128x64xbf16, #tpu.memory_space<vmem>>, %arg5: memref<3x64x64xbf16, #tpu.memory_space<vmem>>, %arg6: memref<1x64xf32, #tpu.memory_space<vmem>>, %arg7: memref<3x64x64xbf16, #tpu.memory_space<vmem>>, %arg8: memref<1x64xf32, #tpu.memory_space<vmem>>, %arg9: memref<3x64x64xbf16, #tpu.memory_space<vmem>>, %arg10: memref<1x64xf32, #tpu.memory_space<vmem>>, %arg11: memref<3x64x64xbf16, #tpu.memory_space<vmem>>, %arg12: memref<1x64xf32, #tpu.memory_space<vmem>>, %arg13: memref<3x64x128xbf16, #tpu.memory_space<vmem>>, %arg14: memref<1x128xf32, #tpu.memory_space<vmem>>, %arg15: memref<3x128x64xbf16, #tpu.memory_space<vmem>>, %arg16: memref<3x64x64xbf16, #tpu.memory_space<vmem>>, %arg17: memref<1x64xf32, #tpu.memory_space<vmem>>, %arg18: memref<3x64x64xbf16, #tpu.memory_space<vmem>>, %arg19: memref<1x64xf32, #tpu.memory_space<vmem>>, %arg20: memref<3x64x64xbf16, #tpu.memory_space<vmem>>, %arg21: memref<1x64xf32, #tpu.memory_space<vmem>>, %arg22: memref<3x64x64xbf16, #tpu.memory_space<vmem>>, %arg23: memref<1x64xf32, #tpu.memory_space<vmem>>, %arg24: memref<3x64x64xbf16, #tpu.memory_space<vmem>>, %arg25: memref<1x64xf32, #tpu.memory_space<vmem>>, %arg26: memref<3x64x32xbf16, #tpu.memory_space<vmem>>, %arg27: memref<3x32x32xbf16, #tpu.memory_space<vmem>>, %arg28: memref<1x32xf32, #tpu.memory_space<vmem>>, %arg29: memref<3x32x32xbf16, #tpu.memory_space<vmem>>, %arg30: memref<1x32xf32, #tpu.memory_space<vmem>>, %arg31: memref<3x32x32xbf16, #tpu.memory_space<vmem>>, %arg32: memref<1x32xf32, #tpu.memory_space<vmem>>, %arg33: memref<3x32x32xbf16, #tpu.memory_space<vmem>>, %arg34: memref<1x32xf32, #tpu.memory_space<vmem>>, %arg35: memref<4x32xbf16, #tpu.memory_space<vmem>>, %arg36: memref<32x128xf32, #tpu.memory_space<vmem>>) attributes {dimension_semantics = [#tpu.dimension_semantics<parallel>], iteration_bounds = array<i64: 1>, scalar_prefetch = 0 : i64, scratch_operands = 1 : i64, tpu.core_type = #tpu.core_type<tc>, window_params = [{transform_indices = @transform_0, window_bounds = array<i64: 32, 64>}, {pipeline_mode = #tpu.pipeline_mode<synchronous>, transform_indices = @transform_1, window_bounds = array<i64: 3, 64, 128>}, {pipeline_mode = #tpu.pipeline_mode<synchronous>, transform_indices = @transform_2, window_bounds = array<i64: 1, 128>}, {pipeline_mode = #tpu.pipeline_mode<synchronous>, transform_indices = @transform_3, window_bounds = array<i64: 3, 128, 64>}, {pipeline_mode = #tpu.pipeline_mode<synchronous>, transform_indices = @transform_4, window_bounds = array<i64: 3, 64, 64>}, {pipeline_mode = #tpu.pipeline_mode<synchronous>, transform_indices = @transform_5, window_bounds = array<i64: 1, 64>}, {pipeline_mode = #tpu.pipeline_mode<synchronous>, transform_indices = @transform_6, window_bounds = array<i64: 3, 64, 64>}, {pipeline_mode = #tpu.pipeline_mode<synchronous>, transform_indices = @transform_7, window_bounds = array<i64: 1, 64>}, {pipeline_mode = #tpu.pipeline_mode<synchronous>, transform_indices = @transform_8, window_bounds = array<i64: 3, 64, 64>}, {pipeline_mode = #tpu.pipeline_mode<synchronous>, transform_indices = @transform_9, window_bounds = array<i64: 1, 64>}, {pipeline_mode = #tpu.pipeline_mode<synchronous>, transform_indices = @transform_10, window_bounds = array<i64: 3, 64, 64>}, {pipeline_mode = #tpu.pipeline_mode<synchronous>, transform_indices = @transform_11, window_bounds = array<i64: 1, 64>}, {pipeline_mode = #tpu.pipeline_mode<synchronous>, transform_indices = @transform_12, window_bounds = array<i64: 3, 64, 128>}, {pipeline_mode = #tpu.pipeline_mode<synchronous>, transform_indices = @transform_13, window_bounds = array<i64: 1, 128>}, {pipeline_mode = #tpu.pipeline_mode<synchronous>, transform_indices = @transform_14, window_bounds = array<i64: 3, 128, 64>}, {pipeline_mode = #tpu.pipeline_mode<synchronous>, transform_indices = @transform_15, window_bounds = array<i64: 3, 64, 64>}, {pipeline_mode = #tpu.pipeline_mode<synchronous>, transform_indices = @transform_16, window_bounds = array<i64: 1, 64>}, {pipeline_mode = #tpu.pipeline_mode<synchronous>, transform_indices = @transform_17, window_bounds = array<i64: 3, 64, 64>}, {pipeline_mode = #tpu.pipeline_mode<synchronous>, transform_indices = @transform_18, window_bounds = array<i64: 1, 64>}, {pipeline_mode = #tpu.pipeline_mode<synchronous>, transform_indices = @transform_19, window_bounds = array<i64: 3, 64, 64>}, {pipeline_mode = #tpu.pipeline_mode<synchronous>, transform_indices = @transform_20, window_bounds = array<i64: 1, 64>}, {pipeline_mode = #tpu.pipeline_mode<synchronous>, transform_indices = @transform_21, window_bounds = array<i64: 3, 64, 64>}, {pipeline_mode = #tpu.pipeline_mode<synchronous>, transform_indices = @transform_22, window_bounds = array<i64: 1, 64>}, {pipeline_mode = #tpu.pipeline_mode<synchronous>, transform_indices = @transform_23, window_bounds = array<i64: 3, 64, 64>}, {pipeline_mode = #tpu.pipeline_mode<synchronous>, transform_indices = @transform_24, window_bounds = array<i64: 1, 64>}, {pipeline_mode = #tpu.pipeline_mode<synchronous>, transform_indices = @transform_25, window_bounds = array<i64: 3, 64, 32>}, {pipeline_mode = #tpu.pipeline_mode<synchronous>, transform_indices = @transform_26, window_bounds = array<i64: 3, 32, 32>}, {pipeline_mode = #tpu.pipeline_mode<synchronous>, transform_indices = @transform_27, window_bounds = array<i64: 1, 32>}, {pipeline_mode = #tpu.pipeline_mode<synchronous>, transform_indices = @transform_28, window_bounds = array<i64: 3, 32, 32>}, {pipeline_mode = #tpu.pipeline_mode<synchronous>, transform_indices = @transform_29, window_bounds = array<i64: 1, 32>}, {pipeline_mode = #tpu.pipeline_mode<synchronous>, transform_indices = @transform_30, window_bounds = array<i64: 3, 32, 32>}, {pipeline_mode = #tpu.pipeline_mode<synchronous>, transform_indices = @transform_31, window_bounds = array<i64: 1, 32>}, {pipeline_mode = #tpu.pipeline_mode<synchronous>, transform_indices = @transform_32, window_bounds = array<i64: 3, 32, 32>}, {pipeline_mode = #tpu.pipeline_mode<synchronous>, transform_indices = @transform_33, window_bounds = array<i64: 1, 32>}, {transform_indices = @transform_34, window_bounds = array<i64: 4, 32>}]} {
    %c0 = arith.constant 0 : index
    %c0_0 = arith.constant 0 : index
    %0 = vector.load %arg1[%c0, %c0_0] : memref<32x64xbf16, #tpu.memory_space<vmem>>, vector<32x64xbf16>
    %1 = arith.extf %0 : vector<32x64xbf16> to vector<32x64xf32>
    %2 = tpu.iota {dimensions = array<i32: 0>} : vector<32x1xi32>
    %c16_i32 = arith.constant 16 : i32
    %c0_i32 = arith.constant 0 : i32
    %3 = arith.cmpi eq, %c16_i32, %c0_i32 : i32
    %c1_i32 = arith.constant 1 : i32
    %4 = arith.select %3, %c1_i32, %c16_i32 : i32
    %5 = vector.broadcast %4 : i32 to vector<32x1xi32>
    %6 = arith.remsi %2, %5 : vector<32x1xi32>
    %c0_i32_1 = arith.constant 0 : i32
    %7 = vector.broadcast %c0_i32_1 : i32 to vector<32x1xi32>
    %8 = arith.cmpi ne, %6, %7 : vector<32x1xi32>
    %c0_i32_2 = arith.constant 0 : i32
    %9 = vector.broadcast %c0_i32_2 : i32 to vector<32x1xi32>
    %10 = arith.cmpi slt, %6, %9 : vector<32x1xi32>
    %c0_i32_3 = arith.constant 0 : i32
    %11 = arith.cmpi slt, %4, %c0_i32_3 : i32
    %12 = vector.broadcast %11 : i1 to vector<32x1xi1>
    %13 = vector.broadcast %12 : vector<32x1xi1> to vector<32x1xi1>
    %14 = arith.xori %10, %13 : vector<32x1xi1>
    %15 = arith.andi %14, %8 : vector<32x1xi1>
    %16 = vector.broadcast %4 : i32 to vector<32x1xi32>
    %17 = arith.addi %6, %16 : vector<32x1xi32>
    %18 = arith.select %15, %17, %6 : vector<32x1xi1>, vector<32x1xi32>
    %c0_i32_4 = arith.constant 0 : i32
    %19 = vector.broadcast %c0_i32_4 : i32 to vector<32x1xi32>
    %20 = arith.cmpi eq, %18, %19 : vector<32x1xi32>
    %c1_i32_5 = arith.constant 1 : i32
    %21 = tpu.dynamic_rotate %1 by %c1_i32_5 dim 0 : vector<32x64xf32>, i32 -> vector<32x64xf32>
    %cst = arith.constant 0.000000e+00 : f32
    %22 = vector.shape_cast %20 : vector<32x1xi1> to vector<32x1xi1>
    %23 = vector.broadcast %22 : vector<32x1xi1> to vector<32x64xi1>
    %24 = vector.broadcast %cst : f32 to vector<32x64xf32>
    %25 = arith.select %23, %24, %21 : vector<32x64xi1>, vector<32x64xf32>
    %c15_i32 = arith.constant 15 : i32
    %26 = vector.broadcast %c15_i32 : i32 to vector<32x1xi32>
    %27 = arith.cmpi eq, %18, %26 : vector<32x1xi32>
    %c31_i32 = arith.constant 31 : i32
    %28 = tpu.dynamic_rotate %1 by %c31_i32 dim 0 : vector<32x64xf32>, i32 -> vector<32x64xf32>
    %cst_6 = arith.constant 0.000000e+00 : f32
    %29 = vector.shape_cast %27 : vector<32x1xi1> to vector<32x1xi1>
    %30 = vector.broadcast %29 : vector<32x1xi1> to vector<32x64xi1>
    %31 = vector.broadcast %cst_6 : f32 to vector<32x64xf32>
    %32 = arith.select %30, %31, %28 : vector<32x64xi1>, vector<32x64xf32>
    %c0_7 = arith.constant 0 : index
    %c0_8 = arith.constant 0 : index
    %33 = vector.load %arg3[%c0_7, %c0_8] : memref<1x128xf32, #tpu.memory_space<vmem>>, vector<1x128xf32>
    %34 = arith.truncf %25 : vector<32x64xf32> to vector<32x64xbf16>
    %c0_9 = arith.constant 0 : index
    %c0_10 = arith.constant 0 : index
    %c0_11 = arith.constant 0 : index
    %35 = vector.load %arg2[%c0_9, %c0_10, %c0_11] : memref<3x64x128xbf16, #tpu.memory_space<vmem>>, vector<1x64x128xbf16>
    %36 = vector.shape_cast %35 : vector<1x64x128xbf16> to vector<64x128xbf16>
    %cst_12 = arith.constant dense<0.000000e+00> : vector<32x128xf32>
    %37 = tpu.matmul %34, %36, %cst_12 {dimension_numbers = #tpu.dot_dimension_numbers<[1], [0], [0], [1], [0, 0, 1, 1], [], []>} : vector<32x64xbf16>, vector<64x128xbf16>, vector<32x128xf32> -> vector<32x128xf32>
    %38 = vector.broadcast %33 : vector<1x128xf32> to vector<32x128xf32>
    %39 = arith.addf %38, %37 : vector<32x128xf32>
    %40 = arith.truncf %1 : vector<32x64xf32> to vector<32x64xbf16>
    %c1 = arith.constant 1 : index
    %c0_13 = arith.constant 0 : index
    %c0_14 = arith.constant 0 : index
    %41 = vector.load %arg2[%c1, %c0_13, %c0_14] : memref<3x64x128xbf16, #tpu.memory_space<vmem>>, vector<1x64x128xbf16>
    %42 = vector.shape_cast %41 : vector<1x64x128xbf16> to vector<64x128xbf16>
    %cst_15 = arith.constant dense<0.000000e+00> : vector<32x128xf32>
    %43 = tpu.matmul %40, %42, %cst_15 {dimension_numbers = #tpu.dot_dimension_numbers<[1], [0], [0], [1], [0, 0, 1, 1], [], []>} : vector<32x64xbf16>, vector<64x128xbf16>, vector<32x128xf32> -> vector<32x128xf32>
    %44 = arith.addf %39, %43 : vector<32x128xf32>
    %45 = arith.truncf %32 : vector<32x64xf32> to vector<32x64xbf16>
    %c2 = arith.constant 2 : index
    %c0_16 = arith.constant 0 : index
    %c0_17 = arith.constant 0 : index
    %46 = vector.load %arg2[%c2, %c0_16, %c0_17] : memref<3x64x128xbf16, #tpu.memory_space<vmem>>, vector<1x64x128xbf16>
    %47 = vector.shape_cast %46 : vector<1x64x128xbf16> to vector<64x128xbf16>
    %cst_18 = arith.constant dense<0.000000e+00> : vector<32x128xf32>
    %48 = tpu.matmul %45, %47, %cst_18 {dimension_numbers = #tpu.dot_dimension_numbers<[1], [0], [0], [1], [0, 0, 1, 1], [], []>} : vector<32x64xbf16>, vector<64x128xbf16>, vector<32x128xf32> -> vector<32x128xf32>
    %49 = arith.addf %44, %48 : vector<32x128xf32>
    %50 = tpu.iota {dimensions = array<i32: 0>} : vector<32x1xi32>
    %c16_i32_19 = arith.constant 16 : i32
    %c0_i32_20 = arith.constant 0 : i32
    %51 = arith.cmpi eq, %c16_i32_19, %c0_i32_20 : i32
    %c1_i32_21 = arith.constant 1 : i32
    %52 = arith.select %51, %c1_i32_21, %c16_i32_19 : i32
    %53 = vector.broadcast %52 : i32 to vector<32x1xi32>
    %54 = arith.remsi %50, %53 : vector<32x1xi32>
    %c0_i32_22 = arith.constant 0 : i32
    %55 = vector.broadcast %c0_i32_22 : i32 to vector<32x1xi32>
    %56 = arith.cmpi ne, %54, %55 : vector<32x1xi32>
    %c0_i32_23 = arith.constant 0 : i32
    %57 = vector.broadcast %c0_i32_23 : i32 to vector<32x1xi32>
    %58 = arith.cmpi slt, %54, %57 : vector<32x1xi32>
    %c0_i32_24 = arith.constant 0 : i32
    %59 = arith.cmpi slt, %52, %c0_i32_24 : i32
    %60 = vector.broadcast %59 : i1 to vector<32x1xi1>
    %61 = vector.broadcast %60 : vector<32x1xi1> to vector<32x1xi1>
    %62 = arith.xori %58, %61 : vector<32x1xi1>
    %63 = arith.andi %62, %56 : vector<32x1xi1>
    %64 = vector.broadcast %52 : i32 to vector<32x1xi32>
    %65 = arith.addi %54, %64 : vector<32x1xi32>
    %66 = arith.select %63, %65, %54 : vector<32x1xi1>, vector<32x1xi32>
    %c0_i32_25 = arith.constant 0 : i32
    %67 = vector.broadcast %c0_i32_25 : i32 to vector<32x1xi32>
    %68 = arith.cmpi eq, %66, %67 : vector<32x1xi32>
    %c1_i32_26 = arith.constant 1 : i32
    %69 = tpu.dynamic_rotate %49 by %c1_i32_26 dim 0 : vector<32x128xf32>, i32 -> vector<32x128xf32>
    %70 = vector.shape_cast %68 : vector<32x1xi1> to vector<32x1xi1>
    %71 = vector.broadcast %70 : vector<32x1xi1> to vector<32x128xi1>
    %72 = arith.select %71, %49, %69 : vector<32x128xi1>, vector<32x128xf32>
    %c15_i32_27 = arith.constant 15 : i32
    %73 = vector.broadcast %c15_i32_27 : i32 to vector<32x1xi32>
    %74 = arith.cmpi eq, %66, %73 : vector<32x1xi32>
    %c31_i32_28 = arith.constant 31 : i32
    %75 = tpu.dynamic_rotate %49 by %c31_i32_28 dim 0 : vector<32x128xf32>, i32 -> vector<32x128xf32>
    %76 = vector.shape_cast %74 : vector<32x1xi1> to vector<32x1xi1>
    %77 = vector.broadcast %76 : vector<32x1xi1> to vector<32x128xi1>
    %78 = arith.select %77, %49, %75 : vector<32x128xi1>, vector<32x128xf32>
    %79 = arith.maximumf %49, %72 : vector<32x128xf32>
    %80 = arith.maximumf %79, %78 : vector<32x128xf32>
    %c0_29 = arith.constant 0 : index
    %c0_30 = arith.constant 0 : index
    %81 = vector.load %arg36[%c0_29, %c0_30] : memref<32x128xf32, #tpu.memory_space<vmem>>, vector<32x128xf32>
    tpu.vector_store %arg36[%c0_29, %c0_30], %80 {strides = array<i32>} : memref<32x128xf32, #tpu.memory_space<vmem>>, vector<32x128xf32>,
    %c0_31 = arith.constant 0 : index
    %c0_32 = arith.constant 0 : index
    %82 = tpu.strided_load %arg36[%c0_31, %c0_32] {strides = array<i32: 2, 1>} : memref<32x128xf32, #tpu.memory_space<vmem>>, vector<16x128xf32>
    %83 = arith.truncf %82 : vector<16x128xf32> to vector<16x128xbf16>
    %c0_33 = arith.constant 0 : index
    %c0_34 = arith.constant 0 : index
    %c0_35 = arith.constant 0 : index
    %84 = vector.load %arg4[%c0_33, %c0_34, %c0_35] : memref<3x128x64xbf16, #tpu.memory_space<vmem>>, vector<1x128x64xbf16>
    %85 = vector.shape_cast %84 : vector<1x128x64xbf16> to vector<128x64xbf16>
    %cst_36 = arith.constant dense<0.000000e+00> : vector<16x64xf32>
    %86 = tpu.matmul %83, %85, %cst_36 {dimension_numbers = #tpu.dot_dimension_numbers<[1], [0], [0], [1], [0, 0, 1, 1], [], []>} : vector<16x128xbf16>, vector<128x64xbf16>, vector<16x64xf32> -> vector<16x64xf32>
    %c1_37 = arith.constant 1 : index
    %c0_38 = arith.constant 0 : index
    %c0_39 = arith.constant 0 : index
    %87 = vector.load %arg4[%c1_37, %c0_38, %c0_39] : memref<3x128x64xbf16, #tpu.memory_space<vmem>>, vector<1x128x64xbf16>
    %88 = vector.shape_cast %87 : vector<1x128x64xbf16> to vector<128x64xbf16>
    %cst_40 = arith.constant dense<0.000000e+00> : vector<16x64xf32>
    %89 = tpu.matmul %83, %88, %cst_40 {dimension_numbers = #tpu.dot_dimension_numbers<[1], [0], [0], [1], [0, 0, 1, 1], [], []>} : vector<16x128xbf16>, vector<128x64xbf16>, vector<16x64xf32> -> vector<16x64xf32>
    %90 = arith.maximumf %86, %89 : vector<16x64xf32>
    %c2_41 = arith.constant 2 : index
    %c0_42 = arith.constant 0 : index
    %c0_43 = arith.constant 0 : index
    %91 = vector.load %arg4[%c2_41, %c0_42, %c0_43] : memref<3x128x64xbf16, #tpu.memory_space<vmem>>, vector<1x128x64xbf16>
    %92 = vector.shape_cast %91 : vector<1x128x64xbf16> to vector<128x64xbf16>
    %cst_44 = arith.constant dense<0.000000e+00> : vector<16x64xf32>
    %93 = tpu.matmul %83, %92, %cst_44 {dimension_numbers = #tpu.dot_dimension_numbers<[1], [0], [0], [1], [0, 0, 1, 1], [], []>} : vector<16x128xbf16>, vector<128x64xbf16>, vector<16x64xf32> -> vector<16x64xf32>
    %94 = arith.maximumf %90, %93 : vector<16x64xf32>
    %cst_45 = arith.constant 0.000000e+00 : f32
    %95 = vector.broadcast %cst_45 : f32 to vector<16x64xf32>
    %96 = arith.maximumf %94, %95 : vector<16x64xf32>
    %97 = tpu.iota {dimensions = array<i32: 0>} : vector<16x1xi32>
    %c8_i32 = arith.constant 8 : i32
    %c0_i32_46 = arith.constant 0 : i32
    %98 = arith.cmpi eq, %c8_i32, %c0_i32_46 : i32
    %c1_i32_47 = arith.constant 1 : i32
    %99 = arith.select %98, %c1_i32_47, %c8_i32 : i32
    %100 = vector.broadcast %99 : i32 to vector<16x1xi32>
    %101 = arith.remsi %97, %100 : vector<16x1xi32>
    %c0_i32_48 = arith.constant 0 : i32
    %102 = vector.broadcast %c0_i32_48 : i32 to vector<16x1xi32>
    %103 = arith.cmpi ne, %101, %102 : vector<16x1xi32>
    %c0_i32_49 = arith.constant 0 : i32
    %104 = vector.broadcast %c0_i32_49 : i32 to vector<16x1xi32>
    %105 = arith.cmpi slt, %101, %104 : vector<16x1xi32>
    %c0_i32_50 = arith.constant 0 : i32
    %106 = arith.cmpi slt, %99, %c0_i32_50 : i32
    %107 = vector.broadcast %106 : i1 to vector<16x1xi1>
    %108 = vector.broadcast %107 : vector<16x1xi1> to vector<16x1xi1>
    %109 = arith.xori %105, %108 : vector<16x1xi1>
    %110 = arith.andi %109, %103 : vector<16x1xi1>
    %111 = vector.broadcast %99 : i32 to vector<16x1xi32>
    %112 = arith.addi %101, %111 : vector<16x1xi32>
    %113 = arith.select %110, %112, %101 : vector<16x1xi1>, vector<16x1xi32>
    %c0_i32_51 = arith.constant 0 : i32
    %114 = vector.broadcast %c0_i32_51 : i32 to vector<16x1xi32>
    %115 = arith.cmpi eq, %113, %114 : vector<16x1xi32>
    %c1_i32_52 = arith.constant 1 : i32
    %116 = tpu.dynamic_rotate %96 by %c1_i32_52 dim 0 : vector<16x64xf32>, i32 -> vector<16x64xf32>
    %cst_53 = arith.constant 0.000000e+00 : f32
    %117 = vector.shape_cast %115 : vector<16x1xi1> to vector<16x1xi1>
    %118 = vector.broadcast %117 : vector<16x1xi1> to vector<16x64xi1>
    %119 = vector.broadcast %cst_53 : f32 to vector<16x64xf32>
    %120 = arith.select %118, %119, %116 : vector<16x64xi1>, vector<16x64xf32>
    %c7_i32 = arith.constant 7 : i32
    %121 = vector.broadcast %c7_i32 : i32 to vector<16x1xi32>
    %122 = arith.cmpi eq, %113, %121 : vector<16x1xi32>
    %c15_i32_54 = arith.constant 15 : i32
    %123 = tpu.dynamic_rotate %96 by %c15_i32_54 dim 0 : vector<16x64xf32>, i32 -> vector<16x64xf32>
    %cst_55 = arith.constant 0.000000e+00 : f32
    %124 = vector.shape_cast %122 : vector<16x1xi1> to vector<16x1xi1>
    %125 = vector.broadcast %124 : vector<16x1xi1> to vector<16x64xi1>
    %126 = vector.broadcast %cst_55 : f32 to vector<16x64xf32>
    %127 = arith.select %125, %126, %123 : vector<16x64xi1>, vector<16x64xf32>
    %c0_56 = arith.constant 0 : index
    %c0_57 = arith.constant 0 : index
    %128 = vector.load %arg6[%c0_56, %c0_57] : memref<1x64xf32, #tpu.memory_space<vmem>>, vector<1x64xf32>
    %129 = arith.truncf %120 : vector<16x64xf32> to vector<16x64xbf16>
    %c0_58 = arith.constant 0 : index
    %c0_59 = arith.constant 0 : index
    %c0_60 = arith.constant 0 : index
    %130 = vector.load %arg5[%c0_58, %c0_59, %c0_60] : memref<3x64x64xbf16, #tpu.memory_space<vmem>>, vector<1x64x64xbf16>
    %131 = vector.shape_cast %130 : vector<1x64x64xbf16> to vector<64x64xbf16>
    %cst_61 = arith.constant dense<0.000000e+00> : vector<16x64xf32>
    %132 = tpu.matmul %129, %131, %cst_61 {dimension_numbers = #tpu.dot_dimension_numbers<[1], [0], [0], [1], [0, 0, 1, 1], [], []>} : vector<16x64xbf16>, vector<64x64xbf16>, vector<16x64xf32> -> vector<16x64xf32>
    %133 = vector.broadcast %128 : vector<1x64xf32> to vector<16x64xf32>
    %134 = arith.addf %133, %132 : vector<16x64xf32>
    %135 = arith.truncf %96 : vector<16x64xf32> to vector<16x64xbf16>
    %c1_62 = arith.constant 1 : index
    %c0_63 = arith.constant 0 : index
    %c0_64 = arith.constant 0 : index
    %136 = vector.load %arg5[%c1_62, %c0_63, %c0_64] : memref<3x64x64xbf16, #tpu.memory_space<vmem>>, vector<1x64x64xbf16>
    %137 = vector.shape_cast %136 : vector<1x64x64xbf16> to vector<64x64xbf16>
    %cst_65 = arith.constant dense<0.000000e+00> : vector<16x64xf32>
    %138 = tpu.matmul %135, %137, %cst_65 {dimension_numbers = #tpu.dot_dimension_numbers<[1], [0], [0], [1], [0, 0, 1, 1], [], []>} : vector<16x64xbf16>, vector<64x64xbf16>, vector<16x64xf32> -> vector<16x64xf32>
    %139 = arith.addf %134, %138 : vector<16x64xf32>
    %140 = arith.truncf %127 : vector<16x64xf32> to vector<16x64xbf16>
    %c2_66 = arith.constant 2 : index
    %c0_67 = arith.constant 0 : index
    %c0_68 = arith.constant 0 : index
    %141 = vector.load %arg5[%c2_66, %c0_67, %c0_68] : memref<3x64x64xbf16, #tpu.memory_space<vmem>>, vector<1x64x64xbf16>
    %142 = vector.shape_cast %141 : vector<1x64x64xbf16> to vector<64x64xbf16>
    %cst_69 = arith.constant dense<0.000000e+00> : vector<16x64xf32>
    %143 = tpu.matmul %140, %142, %cst_69 {dimension_numbers = #tpu.dot_dimension_numbers<[1], [0], [0], [1], [0, 0, 1, 1], [], []>} : vector<16x64xbf16>, vector<64x64xbf16>, vector<16x64xf32> -> vector<16x64xf32>
    %144 = arith.addf %139, %143 : vector<16x64xf32>
    %cst_70 = arith.constant 0.000000e+00 : f32
    %145 = vector.broadcast %cst_70 : f32 to vector<16x64xf32>
    %146 = arith.maximumf %144, %145 : vector<16x64xf32>
    %147 = tpu.iota {dimensions = array<i32: 0>} : vector<16x1xi32>
    %c8_i32_71 = arith.constant 8 : i32
    %c0_i32_72 = arith.constant 0 : i32
    %148 = arith.cmpi eq, %c8_i32_71, %c0_i32_72 : i32
    %c1_i32_73 = arith.constant 1 : i32
    %149 = arith.select %148, %c1_i32_73, %c8_i32_71 : i32
    %150 = vector.broadcast %149 : i32 to vector<16x1xi32>
    %151 = arith.remsi %147, %150 : vector<16x1xi32>
    %c0_i32_74 = arith.constant 0 : i32
    %152 = vector.broadcast %c0_i32_74 : i32 to vector<16x1xi32>
    %153 = arith.cmpi ne, %151, %152 : vector<16x1xi32>
    %c0_i32_75 = arith.constant 0 : i32
    %154 = vector.broadcast %c0_i32_75 : i32 to vector<16x1xi32>
    %155 = arith.cmpi slt, %151, %154 : vector<16x1xi32>
    %c0_i32_76 = arith.constant 0 : i32
    %156 = arith.cmpi slt, %149, %c0_i32_76 : i32
    %157 = vector.broadcast %156 : i1 to vector<16x1xi1>
    %158 = vector.broadcast %157 : vector<16x1xi1> to vector<16x1xi1>
    %159 = arith.xori %155, %158 : vector<16x1xi1>
    %160 = arith.andi %159, %153 : vector<16x1xi1>
    %161 = vector.broadcast %149 : i32 to vector<16x1xi32>
    %162 = arith.addi %151, %161 : vector<16x1xi32>
    %163 = arith.select %160, %162, %151 : vector<16x1xi1>, vector<16x1xi32>
    %c0_i32_77 = arith.constant 0 : i32
    %164 = vector.broadcast %c0_i32_77 : i32 to vector<16x1xi32>
    %165 = arith.cmpi eq, %163, %164 : vector<16x1xi32>
    %c1_i32_78 = arith.constant 1 : i32
    %166 = tpu.dynamic_rotate %146 by %c1_i32_78 dim 0 : vector<16x64xf32>, i32 -> vector<16x64xf32>
    %cst_79 = arith.constant 0.000000e+00 : f32
    %167 = vector.shape_cast %165 : vector<16x1xi1> to vector<16x1xi1>
    %168 = vector.broadcast %167 : vector<16x1xi1> to vector<16x64xi1>
    %169 = vector.broadcast %cst_79 : f32 to vector<16x64xf32>
    %170 = arith.select %168, %169, %166 : vector<16x64xi1>, vector<16x64xf32>
    %c7_i32_80 = arith.constant 7 : i32
    %171 = vector.broadcast %c7_i32_80 : i32 to vector<16x1xi32>
    %172 = arith.cmpi eq, %163, %171 : vector<16x1xi32>
    %c15_i32_81 = arith.constant 15 : i32
    %173 = tpu.dynamic_rotate %146 by %c15_i32_81 dim 0 : vector<16x64xf32>, i32 -> vector<16x64xf32>
    %cst_82 = arith.constant 0.000000e+00 : f32
    %174 = vector.shape_cast %172 : vector<16x1xi1> to vector<16x1xi1>
    %175 = vector.broadcast %174 : vector<16x1xi1> to vector<16x64xi1>
    %176 = vector.broadcast %cst_82 : f32 to vector<16x64xf32>
    %177 = arith.select %175, %176, %173 : vector<16x64xi1>, vector<16x64xf32>
    %c0_83 = arith.constant 0 : index
    %c0_84 = arith.constant 0 : index
    %178 = vector.load %arg8[%c0_83, %c0_84] : memref<1x64xf32, #tpu.memory_space<vmem>>, vector<1x64xf32>
    %179 = arith.truncf %170 : vector<16x64xf32> to vector<16x64xbf16>
    %c0_85 = arith.constant 0 : index
    %c0_86 = arith.constant 0 : index
    %c0_87 = arith.constant 0 : index
    %180 = vector.load %arg7[%c0_85, %c0_86, %c0_87] : memref<3x64x64xbf16, #tpu.memory_space<vmem>>, vector<1x64x64xbf16>
    %181 = vector.shape_cast %180 : vector<1x64x64xbf16> to vector<64x64xbf16>
    %cst_88 = arith.constant dense<0.000000e+00> : vector<16x64xf32>
    %182 = tpu.matmul %179, %181, %cst_88 {dimension_numbers = #tpu.dot_dimension_numbers<[1], [0], [0], [1], [0, 0, 1, 1], [], []>} : vector<16x64xbf16>, vector<64x64xbf16>, vector<16x64xf32> -> vector<16x64xf32>
    %183 = vector.broadcast %178 : vector<1x64xf32> to vector<16x64xf32>
    %184 = arith.addf %183, %182 : vector<16x64xf32>
    %185 = arith.truncf %146 : vector<16x64xf32> to vector<16x64xbf16>
    %c1_89 = arith.constant 1 : index
    %c0_90 = arith.constant 0 : index
    %c0_91 = arith.constant 0 : index
    %186 = vector.load %arg7[%c1_89, %c0_90, %c0_91] : memref<3x64x64xbf16, #tpu.memory_space<vmem>>, vector<1x64x64xbf16>
    %187 = vector.shape_cast %186 : vector<1x64x64xbf16> to vector<64x64xbf16>
    %cst_92 = arith.constant dense<0.000000e+00> : vector<16x64xf32>
    %188 = tpu.matmul %185, %187, %cst_92 {dimension_numbers = #tpu.dot_dimension_numbers<[1], [0], [0], [1], [0, 0, 1, 1], [], []>} : vector<16x64xbf16>, vector<64x64xbf16>, vector<16x64xf32> -> vector<16x64xf32>
    %189 = arith.addf %184, %188 : vector<16x64xf32>
    %190 = arith.truncf %177 : vector<16x64xf32> to vector<16x64xbf16>
    %c2_93 = arith.constant 2 : index
    %c0_94 = arith.constant 0 : index
    %c0_95 = arith.constant 0 : index
    %191 = vector.load %arg7[%c2_93, %c0_94, %c0_95] : memref<3x64x64xbf16, #tpu.memory_space<vmem>>, vector<1x64x64xbf16>
    %192 = vector.shape_cast %191 : vector<1x64x64xbf16> to vector<64x64xbf16>
    %cst_96 = arith.constant dense<0.000000e+00> : vector<16x64xf32>
    %193 = tpu.matmul %190, %192, %cst_96 {dimension_numbers = #tpu.dot_dimension_numbers<[1], [0], [0], [1], [0, 0, 1, 1], [], []>} : vector<16x64xbf16>, vector<64x64xbf16>, vector<16x64xf32> -> vector<16x64xf32>
    %194 = arith.addf %189, %193 : vector<16x64xf32>
    %195 = arith.addf %194, %94 : vector<16x64xf32>
    %cst_97 = arith.constant 0.000000e+00 : f32
    %196 = vector.broadcast %cst_97 : f32 to vector<16x64xf32>
    %197 = arith.maximumf %195, %196 : vector<16x64xf32>
    %198 = tpu.iota {dimensions = array<i32: 0>} : vector<16x1xi32>
    %c8_i32_98 = arith.constant 8 : i32
    %c0_i32_99 = arith.constant 0 : i32
    %199 = arith.cmpi eq, %c8_i32_98, %c0_i32_99 : i32
    %c1_i32_100 = arith.constant 1 : i32
    %200 = arith.select %199, %c1_i32_100, %c8_i32_98 : i32
    %201 = vector.broadcast %200 : i32 to vector<16x1xi32>
    %202 = arith.remsi %198, %201 : vector<16x1xi32>
    %c0_i32_101 = arith.constant 0 : i32
    %203 = vector.broadcast %c0_i32_101 : i32 to vector<16x1xi32>
    %204 = arith.cmpi ne, %202, %203 : vector<16x1xi32>
    %c0_i32_102 = arith.constant 0 : i32
    %205 = vector.broadcast %c0_i32_102 : i32 to vector<16x1xi32>
    %206 = arith.cmpi slt, %202, %205 : vector<16x1xi32>
    %c0_i32_103 = arith.constant 0 : i32
    %207 = arith.cmpi slt, %200, %c0_i32_103 : i32
    %208 = vector.broadcast %207 : i1 to vector<16x1xi1>
    %209 = vector.broadcast %208 : vector<16x1xi1> to vector<16x1xi1>
    %210 = arith.xori %206, %209 : vector<16x1xi1>
    %211 = arith.andi %210, %204 : vector<16x1xi1>
    %212 = vector.broadcast %200 : i32 to vector<16x1xi32>
    %213 = arith.addi %202, %212 : vector<16x1xi32>
    %214 = arith.select %211, %213, %202 : vector<16x1xi1>, vector<16x1xi32>
    %c0_i32_104 = arith.constant 0 : i32
    %215 = vector.broadcast %c0_i32_104 : i32 to vector<16x1xi32>
    %216 = arith.cmpi eq, %214, %215 : vector<16x1xi32>
    %c1_i32_105 = arith.constant 1 : i32
    %217 = tpu.dynamic_rotate %197 by %c1_i32_105 dim 0 : vector<16x64xf32>, i32 -> vector<16x64xf32>
    %cst_106 = arith.constant 0.000000e+00 : f32
    %218 = vector.shape_cast %216 : vector<16x1xi1> to vector<16x1xi1>
    %219 = vector.broadcast %218 : vector<16x1xi1> to vector<16x64xi1>
    %220 = vector.broadcast %cst_106 : f32 to vector<16x64xf32>
    %221 = arith.select %219, %220, %217 : vector<16x64xi1>, vector<16x64xf32>
    %c7_i32_107 = arith.constant 7 : i32
    %222 = vector.broadcast %c7_i32_107 : i32 to vector<16x1xi32>
    %223 = arith.cmpi eq, %214, %222 : vector<16x1xi32>
    %c15_i32_108 = arith.constant 15 : i32
    %224 = tpu.dynamic_rotate %197 by %c15_i32_108 dim 0 : vector<16x64xf32>, i32 -> vector<16x64xf32>
    %cst_109 = arith.constant 0.000000e+00 : f32
    %225 = vector.shape_cast %223 : vector<16x1xi1> to vector<16x1xi1>
    %226 = vector.broadcast %225 : vector<16x1xi1> to vector<16x64xi1>
    %227 = vector.broadcast %cst_109 : f32 to vector<16x64xf32>
    %228 = arith.select %226, %227, %224 : vector<16x64xi1>, vector<16x64xf32>
    %c0_110 = arith.constant 0 : index
    %c0_111 = arith.constant 0 : index
    %229 = vector.load %arg10[%c0_110, %c0_111] : memref<1x64xf32, #tpu.memory_space<vmem>>, vector<1x64xf32>
    %230 = arith.truncf %221 : vector<16x64xf32> to vector<16x64xbf16>
    %c0_112 = arith.constant 0 : index
    %c0_113 = arith.constant 0 : index
    %c0_114 = arith.constant 0 : index
    %231 = vector.load %arg9[%c0_112, %c0_113, %c0_114] : memref<3x64x64xbf16, #tpu.memory_space<vmem>>, vector<1x64x64xbf16>
    %232 = vector.shape_cast %231 : vector<1x64x64xbf16> to vector<64x64xbf16>
    %cst_115 = arith.constant dense<0.000000e+00> : vector<16x64xf32>
    %233 = tpu.matmul %230, %232, %cst_115 {dimension_numbers = #tpu.dot_dimension_numbers<[1], [0], [0], [1], [0, 0, 1, 1], [], []>} : vector<16x64xbf16>, vector<64x64xbf16>, vector<16x64xf32> -> vector<16x64xf32>
    %234 = vector.broadcast %229 : vector<1x64xf32> to vector<16x64xf32>
    %235 = arith.addf %234, %233 : vector<16x64xf32>
    %236 = arith.truncf %197 : vector<16x64xf32> to vector<16x64xbf16>
    %c1_116 = arith.constant 1 : index
    %c0_117 = arith.constant 0 : index
    %c0_118 = arith.constant 0 : index
    %237 = vector.load %arg9[%c1_116, %c0_117, %c0_118] : memref<3x64x64xbf16, #tpu.memory_space<vmem>>, vector<1x64x64xbf16>
    %238 = vector.shape_cast %237 : vector<1x64x64xbf16> to vector<64x64xbf16>
    %cst_119 = arith.constant dense<0.000000e+00> : vector<16x64xf32>
    %239 = tpu.matmul %236, %238, %cst_119 {dimension_numbers = #tpu.dot_dimension_numbers<[1], [0], [0], [1], [0, 0, 1, 1], [], []>} : vector<16x64xbf16>, vector<64x64xbf16>, vector<16x64xf32> -> vector<16x64xf32>
    %240 = arith.addf %235, %239 : vector<16x64xf32>
    %241 = arith.truncf %228 : vector<16x64xf32> to vector<16x64xbf16>
    %c2_120 = arith.constant 2 : index
    %c0_121 = arith.constant 0 : index
    %c0_122 = arith.constant 0 : index
    %242 = vector.load %arg9[%c2_120, %c0_121, %c0_122] : memref<3x64x64xbf16, #tpu.memory_space<vmem>>, vector<1x64x64xbf16>
    %243 = vector.shape_cast %242 : vector<1x64x64xbf16> to vector<64x64xbf16>
    %cst_123 = arith.constant dense<0.000000e+00> : vector<16x64xf32>
    %244 = tpu.matmul %241, %243, %cst_123 {dimension_numbers = #tpu.dot_dimension_numbers<[1], [0], [0], [1], [0, 0, 1, 1], [], []>} : vector<16x64xbf16>, vector<64x64xbf16>, vector<16x64xf32> -> vector<16x64xf32>
    %245 = arith.addf %240, %244 : vector<16x64xf32>
    %cst_124 = arith.constant 0.000000e+00 : f32
    %246 = vector.broadcast %cst_124 : f32 to vector<16x64xf32>
    %247 = arith.maximumf %245, %246 : vector<16x64xf32>
    %248 = tpu.iota {dimensions = array<i32: 0>} : vector<16x1xi32>
    %c8_i32_125 = arith.constant 8 : i32
    %c0_i32_126 = arith.constant 0 : i32
    %249 = arith.cmpi eq, %c8_i32_125, %c0_i32_126 : i32
    %c1_i32_127 = arith.constant 1 : i32
    %250 = arith.select %249, %c1_i32_127, %c8_i32_125 : i32
    %251 = vector.broadcast %250 : i32 to vector<16x1xi32>
    %252 = arith.remsi %248, %251 : vector<16x1xi32>
    %c0_i32_128 = arith.constant 0 : i32
    %253 = vector.broadcast %c0_i32_128 : i32 to vector<16x1xi32>
    %254 = arith.cmpi ne, %252, %253 : vector<16x1xi32>
    %c0_i32_129 = arith.constant 0 : i32
    %255 = vector.broadcast %c0_i32_129 : i32 to vector<16x1xi32>
    %256 = arith.cmpi slt, %252, %255 : vector<16x1xi32>
    %c0_i32_130 = arith.constant 0 : i32
    %257 = arith.cmpi slt, %250, %c0_i32_130 : i32
    %258 = vector.broadcast %257 : i1 to vector<16x1xi1>
    %259 = vector.broadcast %258 : vector<16x1xi1> to vector<16x1xi1>
    %260 = arith.xori %256, %259 : vector<16x1xi1>
    %261 = arith.andi %260, %254 : vector<16x1xi1>
    %262 = vector.broadcast %250 : i32 to vector<16x1xi32>
    %263 = arith.addi %252, %262 : vector<16x1xi32>
    %264 = arith.select %261, %263, %252 : vector<16x1xi1>, vector<16x1xi32>
    %c0_i32_131 = arith.constant 0 : i32
    %265 = vector.broadcast %c0_i32_131 : i32 to vector<16x1xi32>
    %266 = arith.cmpi eq, %264, %265 : vector<16x1xi32>
    %c1_i32_132 = arith.constant 1 : i32
    %267 = tpu.dynamic_rotate %247 by %c1_i32_132 dim 0 : vector<16x64xf32>, i32 -> vector<16x64xf32>
    %cst_133 = arith.constant 0.000000e+00 : f32
    %268 = vector.shape_cast %266 : vector<16x1xi1> to vector<16x1xi1>
    %269 = vector.broadcast %268 : vector<16x1xi1> to vector<16x64xi1>
    %270 = vector.broadcast %cst_133 : f32 to vector<16x64xf32>
    %271 = arith.select %269, %270, %267 : vector<16x64xi1>, vector<16x64xf32>
    %c7_i32_134 = arith.constant 7 : i32
    %272 = vector.broadcast %c7_i32_134 : i32 to vector<16x1xi32>
    %273 = arith.cmpi eq, %264, %272 : vector<16x1xi32>
    %c15_i32_135 = arith.constant 15 : i32
    %274 = tpu.dynamic_rotate %247 by %c15_i32_135 dim 0 : vector<16x64xf32>, i32 -> vector<16x64xf32>
    %cst_136 = arith.constant 0.000000e+00 : f32
    %275 = vector.shape_cast %273 : vector<16x1xi1> to vector<16x1xi1>
    %276 = vector.broadcast %275 : vector<16x1xi1> to vector<16x64xi1>
    %277 = vector.broadcast %cst_136 : f32 to vector<16x64xf32>
    %278 = arith.select %276, %277, %274 : vector<16x64xi1>, vector<16x64xf32>
    %c0_137 = arith.constant 0 : index
    %c0_138 = arith.constant 0 : index
    %279 = vector.load %arg12[%c0_137, %c0_138] : memref<1x64xf32, #tpu.memory_space<vmem>>, vector<1x64xf32>
    %280 = arith.truncf %271 : vector<16x64xf32> to vector<16x64xbf16>
    %c0_139 = arith.constant 0 : index
    %c0_140 = arith.constant 0 : index
    %c0_141 = arith.constant 0 : index
    %281 = vector.load %arg11[%c0_139, %c0_140, %c0_141] : memref<3x64x64xbf16, #tpu.memory_space<vmem>>, vector<1x64x64xbf16>
    %282 = vector.shape_cast %281 : vector<1x64x64xbf16> to vector<64x64xbf16>
    %cst_142 = arith.constant dense<0.000000e+00> : vector<16x64xf32>
    %283 = tpu.matmul %280, %282, %cst_142 {dimension_numbers = #tpu.dot_dimension_numbers<[1], [0], [0], [1], [0, 0, 1, 1], [], []>} : vector<16x64xbf16>, vector<64x64xbf16>, vector<16x64xf32> -> vector<16x64xf32>
    %284 = vector.broadcast %279 : vector<1x64xf32> to vector<16x64xf32>
    %285 = arith.addf %284, %283 : vector<16x64xf32>
    %286 = arith.truncf %247 : vector<16x64xf32> to vector<16x64xbf16>
    %c1_143 = arith.constant 1 : index
    %c0_144 = arith.constant 0 : index
    %c0_145 = arith.constant 0 : index
    %287 = vector.load %arg11[%c1_143, %c0_144, %c0_145] : memref<3x64x64xbf16, #tpu.memory_space<vmem>>, vector<1x64x64xbf16>
    %288 = vector.shape_cast %287 : vector<1x64x64xbf16> to vector<64x64xbf16>
    %cst_146 = arith.constant dense<0.000000e+00> : vector<16x64xf32>
    %289 = tpu.matmul %286, %288, %cst_146 {dimension_numbers = #tpu.dot_dimension_numbers<[1], [0], [0], [1], [0, 0, 1, 1], [], []>} : vector<16x64xbf16>, vector<64x64xbf16>, vector<16x64xf32> -> vector<16x64xf32>
    %290 = arith.addf %285, %289 : vector<16x64xf32>
    %291 = arith.truncf %278 : vector<16x64xf32> to vector<16x64xbf16>
    %c2_147 = arith.constant 2 : index
    %c0_148 = arith.constant 0 : index
    %c0_149 = arith.constant 0 : index
    %292 = vector.load %arg11[%c2_147, %c0_148, %c0_149] : memref<3x64x64xbf16, #tpu.memory_space<vmem>>, vector<1x64x64xbf16>
    %293 = vector.shape_cast %292 : vector<1x64x64xbf16> to vector<64x64xbf16>
    %cst_150 = arith.constant dense<0.000000e+00> : vector<16x64xf32>
    %294 = tpu.matmul %291, %293, %cst_150 {dimension_numbers = #tpu.dot_dimension_numbers<[1], [0], [0], [1], [0, 0, 1, 1], [], []>} : vector<16x64xbf16>, vector<64x64xbf16>, vector<16x64xf32> -> vector<16x64xf32>
    %295 = arith.addf %290, %294 : vector<16x64xf32>
    %296 = arith.addf %295, %195 : vector<16x64xf32>
    %297 = tpu.iota {dimensions = array<i32: 0>} : vector<16x1xi32>
    %c8_i32_151 = arith.constant 8 : i32
    %c0_i32_152 = arith.constant 0 : i32
    %298 = arith.cmpi eq, %c8_i32_151, %c0_i32_152 : i32
    %c1_i32_153 = arith.constant 1 : i32
    %299 = arith.select %298, %c1_i32_153, %c8_i32_151 : i32
    %300 = vector.broadcast %299 : i32 to vector<16x1xi32>
    %301 = arith.remsi %297, %300 : vector<16x1xi32>
    %c0_i32_154 = arith.constant 0 : i32
    %302 = vector.broadcast %c0_i32_154 : i32 to vector<16x1xi32>
    %303 = arith.cmpi ne, %301, %302 : vector<16x1xi32>
    %c0_i32_155 = arith.constant 0 : i32
    %304 = vector.broadcast %c0_i32_155 : i32 to vector<16x1xi32>
    %305 = arith.cmpi slt, %301, %304 : vector<16x1xi32>
    %c0_i32_156 = arith.constant 0 : i32
    %306 = arith.cmpi slt, %299, %c0_i32_156 : i32
    %307 = vector.broadcast %306 : i1 to vector<16x1xi1>
    %308 = vector.broadcast %307 : vector<16x1xi1> to vector<16x1xi1>
    %309 = arith.xori %305, %308 : vector<16x1xi1>
    %310 = arith.andi %309, %303 : vector<16x1xi1>
    %311 = vector.broadcast %299 : i32 to vector<16x1xi32>
    %312 = arith.addi %301, %311 : vector<16x1xi32>
    %313 = arith.select %310, %312, %301 : vector<16x1xi1>, vector<16x1xi32>
    %c0_i32_157 = arith.constant 0 : i32
    %314 = vector.broadcast %c0_i32_157 : i32 to vector<16x1xi32>
    %315 = arith.cmpi eq, %313, %314 : vector<16x1xi32>
    %c1_i32_158 = arith.constant 1 : i32
    %316 = tpu.dynamic_rotate %296 by %c1_i32_158 dim 0 : vector<16x64xf32>, i32 -> vector<16x64xf32>
    %cst_159 = arith.constant 0.000000e+00 : f32
    %317 = vector.shape_cast %315 : vector<16x1xi1> to vector<16x1xi1>
    %318 = vector.broadcast %317 : vector<16x1xi1> to vector<16x64xi1>
    %319 = vector.broadcast %cst_159 : f32 to vector<16x64xf32>
    %320 = arith.select %318, %319, %316 : vector<16x64xi1>, vector<16x64xf32>
    %c7_i32_160 = arith.constant 7 : i32
    %321 = vector.broadcast %c7_i32_160 : i32 to vector<16x1xi32>
    %322 = arith.cmpi eq, %313, %321 : vector<16x1xi32>
    %c15_i32_161 = arith.constant 15 : i32
    %323 = tpu.dynamic_rotate %296 by %c15_i32_161 dim 0 : vector<16x64xf32>, i32 -> vector<16x64xf32>
    %cst_162 = arith.constant 0.000000e+00 : f32
    %324 = vector.shape_cast %322 : vector<16x1xi1> to vector<16x1xi1>
    %325 = vector.broadcast %324 : vector<16x1xi1> to vector<16x64xi1>
    %326 = vector.broadcast %cst_162 : f32 to vector<16x64xf32>
    %327 = arith.select %325, %326, %323 : vector<16x64xi1>, vector<16x64xf32>
    %c0_163 = arith.constant 0 : index
    %c0_164 = arith.constant 0 : index
    %328 = vector.load %arg14[%c0_163, %c0_164] : memref<1x128xf32, #tpu.memory_space<vmem>>, vector<1x128xf32>
    %329 = arith.truncf %320 : vector<16x64xf32> to vector<16x64xbf16>
    %c0_165 = arith.constant 0 : index
    %c0_166 = arith.constant 0 : index
    %c0_167 = arith.constant 0 : index
    %330 = vector.load %arg13[%c0_165, %c0_166, %c0_167] : memref<3x64x128xbf16, #tpu.memory_space<vmem>>, vector<1x64x128xbf16>
    %331 = vector.shape_cast %330 : vector<1x64x128xbf16> to vector<64x128xbf16>
    %cst_168 = arith.constant dense<0.000000e+00> : vector<16x128xf32>
    %332 = tpu.matmul %329, %331, %cst_168 {dimension_numbers = #tpu.dot_dimension_numbers<[1], [0], [0], [1], [0, 0, 1, 1], [], []>} : vector<16x64xbf16>, vector<64x128xbf16>, vector<16x128xf32> -> vector<16x128xf32>
    %333 = vector.broadcast %328 : vector<1x128xf32> to vector<16x128xf32>
    %334 = arith.addf %333, %332 : vector<16x128xf32>
    %335 = arith.truncf %296 : vector<16x64xf32> to vector<16x64xbf16>
    %c1_169 = arith.constant 1 : index
    %c0_170 = arith.constant 0 : index
    %c0_171 = arith.constant 0 : index
    %336 = vector.load %arg13[%c1_169, %c0_170, %c0_171] : memref<3x64x128xbf16, #tpu.memory_space<vmem>>, vector<1x64x128xbf16>
    %337 = vector.shape_cast %336 : vector<1x64x128xbf16> to vector<64x128xbf16>
    %cst_172 = arith.constant dense<0.000000e+00> : vector<16x128xf32>
    %338 = tpu.matmul %335, %337, %cst_172 {dimension_numbers = #tpu.dot_dimension_numbers<[1], [0], [0], [1], [0, 0, 1, 1], [], []>} : vector<16x64xbf16>, vector<64x128xbf16>, vector<16x128xf32> -> vector<16x128xf32>
    %339 = arith.addf %334, %338 : vector<16x128xf32>
    %340 = arith.truncf %327 : vector<16x64xf32> to vector<16x64xbf16>
    %c2_173 = arith.constant 2 : index
    %c0_174 = arith.constant 0 : index
    %c0_175 = arith.constant 0 : index
    %341 = vector.load %arg13[%c2_173, %c0_174, %c0_175] : memref<3x64x128xbf16, #tpu.memory_space<vmem>>, vector<1x64x128xbf16>
    %342 = vector.shape_cast %341 : vector<1x64x128xbf16> to vector<64x128xbf16>
    %cst_176 = arith.constant dense<0.000000e+00> : vector<16x128xf32>
    %343 = tpu.matmul %340, %342, %cst_176 {dimension_numbers = #tpu.dot_dimension_numbers<[1], [0], [0], [1], [0, 0, 1, 1], [], []>} : vector<16x64xbf16>, vector<64x128xbf16>, vector<16x128xf32> -> vector<16x128xf32>
    %344 = arith.addf %339, %343 : vector<16x128xf32>
    %345 = tpu.iota {dimensions = array<i32: 0>} : vector<16x1xi32>
    %c8_i32_177 = arith.constant 8 : i32
    %c0_i32_178 = arith.constant 0 : i32
    %346 = arith.cmpi eq, %c8_i32_177, %c0_i32_178 : i32
    %c1_i32_179 = arith.constant 1 : i32
    %347 = arith.select %346, %c1_i32_179, %c8_i32_177 : i32
    %348 = vector.broadcast %347 : i32 to vector<16x1xi32>
    %349 = arith.remsi %345, %348 : vector<16x1xi32>
    %c0_i32_180 = arith.constant 0 : i32
    %350 = vector.broadcast %c0_i32_180 : i32 to vector<16x1xi32>
    %351 = arith.cmpi ne, %349, %350 : vector<16x1xi32>
    %c0_i32_181 = arith.constant 0 : i32
    %352 = vector.broadcast %c0_i32_181 : i32 to vector<16x1xi32>
    %353 = arith.cmpi slt, %349, %352 : vector<16x1xi32>
    %c0_i32_182 = arith.constant 0 : i32
    %354 = arith.cmpi slt, %347, %c0_i32_182 : i32
    %355 = vector.broadcast %354 : i1 to vector<16x1xi1>
    %356 = vector.broadcast %355 : vector<16x1xi1> to vector<16x1xi1>
    %357 = arith.xori %353, %356 : vector<16x1xi1>
    %358 = arith.andi %357, %351 : vector<16x1xi1>
    %359 = vector.broadcast %347 : i32 to vector<16x1xi32>
    %360 = arith.addi %349, %359 : vector<16x1xi32>
    %361 = arith.select %358, %360, %349 : vector<16x1xi1>, vector<16x1xi32>
    %c0_i32_183 = arith.constant 0 : i32
    %362 = vector.broadcast %c0_i32_183 : i32 to vector<16x1xi32>
    %363 = arith.cmpi eq, %361, %362 : vector<16x1xi32>
    %c1_i32_184 = arith.constant 1 : i32
    %364 = tpu.dynamic_rotate %344 by %c1_i32_184 dim 0 : vector<16x128xf32>, i32 -> vector<16x128xf32>
    %365 = vector.shape_cast %363 : vector<16x1xi1> to vector<16x1xi1>
    %366 = vector.broadcast %365 : vector<16x1xi1> to vector<16x128xi1>
    %367 = arith.select %366, %344, %364 : vector<16x128xi1>, vector<16x128xf32>
    %c7_i32_185 = arith.constant 7 : i32
    %368 = vector.broadcast %c7_i32_185 : i32 to vector<16x1xi32>
    %369 = arith.cmpi eq, %361, %368 : vector<16x1xi32>
    %c15_i32_186 = arith.constant 15 : i32
    %370 = tpu.dynamic_rotate %344 by %c15_i32_186 dim 0 : vector<16x128xf32>, i32 -> vector<16x128xf32>
    %371 = vector.shape_cast %369 : vector<16x1xi1> to vector<16x1xi1>
    %372 = vector.broadcast %371 : vector<16x1xi1> to vector<16x128xi1>
    %373 = arith.select %372, %344, %370 : vector<16x128xi1>, vector<16x128xf32>
    %374 = arith.maximumf %344, %367 : vector<16x128xf32>
    %375 = arith.maximumf %374, %373 : vector<16x128xf32>
    %c0_187 = arith.constant 0 : index
    %c0_188 = arith.constant 0 : index
    %376 = vector.load %arg36[%c0_187, %c0_188] : memref<32x128xf32, #tpu.memory_space<vmem>>, vector<16x128xf32>
    tpu.vector_store %arg36[%c0_187, %c0_188], %375 {strides = array<i32>} : memref<32x128xf32, #tpu.memory_space<vmem>>, vector<16x128xf32>,
    %c0_189 = arith.constant 0 : index
    %c0_190 = arith.constant 0 : index
    %377 = tpu.strided_load %arg36[%c0_189, %c0_190] {strides = array<i32: 2, 1>} : memref<32x128xf32, #tpu.memory_space<vmem>>, vector<8x128xf32>
    %378 = arith.truncf %377 : vector<8x128xf32> to vector<8x128xbf16>
    %c0_191 = arith.constant 0 : index
    %c0_192 = arith.constant 0 : index
    %c0_193 = arith.constant 0 : index
    %379 = vector.load %arg15[%c0_191, %c0_192, %c0_193] : memref<3x128x64xbf16, #tpu.memory_space<vmem>>, vector<1x128x64xbf16>
    %380 = vector.shape_cast %379 : vector<1x128x64xbf16> to vector<128x64xbf16>
    %cst_194 = arith.constant dense<0.000000e+00> : vector<8x64xf32>
    %381 = tpu.matmul %378, %380, %cst_194 {dimension_numbers = #tpu.dot_dimension_numbers<[1], [0], [0], [1], [0, 0, 1, 1], [], []>} : vector<8x128xbf16>, vector<128x64xbf16>, vector<8x64xf32> -> vector<8x64xf32>
    %c1_195 = arith.constant 1 : index
    %c0_196 = arith.constant 0 : index
    %c0_197 = arith.constant 0 : index
    %382 = vector.load %arg15[%c1_195, %c0_196, %c0_197] : memref<3x128x64xbf16, #tpu.memory_space<vmem>>, vector<1x128x64xbf16>
    %383 = vector.shape_cast %382 : vector<1x128x64xbf16> to vector<128x64xbf16>
    %cst_198 = arith.constant dense<0.000000e+00> : vector<8x64xf32>
    %384 = tpu.matmul %378, %383, %cst_198 {dimension_numbers = #tpu.dot_dimension_numbers<[1], [0], [0], [1], [0, 0, 1, 1], [], []>} : vector<8x128xbf16>, vector<128x64xbf16>, vector<8x64xf32> -> vector<8x64xf32>
    %385 = arith.maximumf %381, %384 : vector<8x64xf32>
    %c2_199 = arith.constant 2 : index
    %c0_200 = arith.constant 0 : index
    %c0_201 = arith.constant 0 : index
    %386 = vector.load %arg15[%c2_199, %c0_200, %c0_201] : memref<3x128x64xbf16, #tpu.memory_space<vmem>>, vector<1x128x64xbf16>
    %387 = vector.shape_cast %386 : vector<1x128x64xbf16> to vector<128x64xbf16>
    %cst_202 = arith.constant dense<0.000000e+00> : vector<8x64xf32>
    %388 = tpu.matmul %378, %387, %cst_202 {dimension_numbers = #tpu.dot_dimension_numbers<[1], [0], [0], [1], [0, 0, 1, 1], [], []>} : vector<8x128xbf16>, vector<128x64xbf16>, vector<8x64xf32> -> vector<8x64xf32>
    %389 = arith.maximumf %385, %388 : vector<8x64xf32>
    %cst_203 = arith.constant 0.000000e+00 : f32
    %390 = vector.broadcast %cst_203 : f32 to vector<8x64xf32>
    %391 = arith.maximumf %389, %390 : vector<8x64xf32>
    %392 = tpu.iota {dimensions = array<i32: 0>} : vector<8x1xi32>
    %c4_i32 = arith.constant 4 : i32
    %c0_i32_204 = arith.constant 0 : i32
    %393 = arith.cmpi eq, %c4_i32, %c0_i32_204 : i32
    %c1_i32_205 = arith.constant 1 : i32
    %394 = arith.select %393, %c1_i32_205, %c4_i32 : i32
    %395 = vector.broadcast %394 : i32 to vector<8x1xi32>
    %396 = arith.remsi %392, %395 : vector<8x1xi32>
    %c0_i32_206 = arith.constant 0 : i32
    %397 = vector.broadcast %c0_i32_206 : i32 to vector<8x1xi32>
    %398 = arith.cmpi ne, %396, %397 : vector<8x1xi32>
    %c0_i32_207 = arith.constant 0 : i32
    %399 = vector.broadcast %c0_i32_207 : i32 to vector<8x1xi32>
    %400 = arith.cmpi slt, %396, %399 : vector<8x1xi32>
    %c0_i32_208 = arith.constant 0 : i32
    %401 = arith.cmpi slt, %394, %c0_i32_208 : i32
    %402 = vector.broadcast %401 : i1 to vector<8x1xi1>
    %403 = vector.broadcast %402 : vector<8x1xi1> to vector<8x1xi1>
    %404 = arith.xori %400, %403 : vector<8x1xi1>
    %405 = arith.andi %404, %398 : vector<8x1xi1>
    %406 = vector.broadcast %394 : i32 to vector<8x1xi32>
    %407 = arith.addi %396, %406 : vector<8x1xi32>
    %408 = arith.select %405, %407, %396 : vector<8x1xi1>, vector<8x1xi32>
    %c0_i32_209 = arith.constant 0 : i32
    %409 = vector.broadcast %c0_i32_209 : i32 to vector<8x1xi32>
    %410 = arith.cmpi eq, %408, %409 : vector<8x1xi32>
    %c1_i32_210 = arith.constant 1 : i32
    %411 = tpu.dynamic_rotate %391 by %c1_i32_210 dim 0 : vector<8x64xf32>, i32 -> vector<8x64xf32>
    %cst_211 = arith.constant 0.000000e+00 : f32
    %412 = vector.shape_cast %410 : vector<8x1xi1> to vector<8x1xi1>
    %413 = vector.broadcast %412 : vector<8x1xi1> to vector<8x64xi1>
    %414 = vector.broadcast %cst_211 : f32 to vector<8x64xf32>
    %415 = arith.select %413, %414, %411 : vector<8x64xi1>, vector<8x64xf32>
    %c3_i32 = arith.constant 3 : i32
    %416 = vector.broadcast %c3_i32 : i32 to vector<8x1xi32>
    %417 = arith.cmpi eq, %408, %416 : vector<8x1xi32>
    %c7_i32_212 = arith.constant 7 : i32
    %418 = tpu.dynamic_rotate %391 by %c7_i32_212 dim 0 : vector<8x64xf32>, i32 -> vector<8x64xf32>
    %cst_213 = arith.constant 0.000000e+00 : f32
    %419 = vector.shape_cast %417 : vector<8x1xi1> to vector<8x1xi1>
    %420 = vector.broadcast %419 : vector<8x1xi1> to vector<8x64xi1>
    %421 = vector.broadcast %cst_213 : f32 to vector<8x64xf32>
    %422 = arith.select %420, %421, %418 : vector<8x64xi1>, vector<8x64xf32>
    %c0_214 = arith.constant 0 : index
    %c0_215 = arith.constant 0 : index
    %423 = vector.load %arg17[%c0_214, %c0_215] : memref<1x64xf32, #tpu.memory_space<vmem>>, vector<1x64xf32>
    %424 = arith.truncf %415 : vector<8x64xf32> to vector<8x64xbf16>
    %c0_216 = arith.constant 0 : index
    %c0_217 = arith.constant 0 : index
    %c0_218 = arith.constant 0 : index
    %425 = vector.load %arg16[%c0_216, %c0_217, %c0_218] : memref<3x64x64xbf16, #tpu.memory_space<vmem>>, vector<1x64x64xbf16>
    %426 = vector.shape_cast %425 : vector<1x64x64xbf16> to vector<64x64xbf16>
    %cst_219 = arith.constant dense<0.000000e+00> : vector<8x64xf32>
    %427 = tpu.matmul %424, %426, %cst_219 {dimension_numbers = #tpu.dot_dimension_numbers<[1], [0], [0], [1], [0, 0, 1, 1], [], []>} : vector<8x64xbf16>, vector<64x64xbf16>, vector<8x64xf32> -> vector<8x64xf32>
    %428 = vector.broadcast %423 : vector<1x64xf32> to vector<8x64xf32>
    %429 = arith.addf %428, %427 : vector<8x64xf32>
    %430 = arith.truncf %391 : vector<8x64xf32> to vector<8x64xbf16>
    %c1_220 = arith.constant 1 : index
    %c0_221 = arith.constant 0 : index
    %c0_222 = arith.constant 0 : index
    %431 = vector.load %arg16[%c1_220, %c0_221, %c0_222] : memref<3x64x64xbf16, #tpu.memory_space<vmem>>, vector<1x64x64xbf16>
    %432 = vector.shape_cast %431 : vector<1x64x64xbf16> to vector<64x64xbf16>
    %cst_223 = arith.constant dense<0.000000e+00> : vector<8x64xf32>
    %433 = tpu.matmul %430, %432, %cst_223 {dimension_numbers = #tpu.dot_dimension_numbers<[1], [0], [0], [1], [0, 0, 1, 1], [], []>} : vector<8x64xbf16>, vector<64x64xbf16>, vector<8x64xf32> -> vector<8x64xf32>
    %434 = arith.addf %429, %433 : vector<8x64xf32>
    %435 = arith.truncf %422 : vector<8x64xf32> to vector<8x64xbf16>
    %c2_224 = arith.constant 2 : index
    %c0_225 = arith.constant 0 : index
    %c0_226 = arith.constant 0 : index
    %436 = vector.load %arg16[%c2_224, %c0_225, %c0_226] : memref<3x64x64xbf16, #tpu.memory_space<vmem>>, vector<1x64x64xbf16>
    %437 = vector.shape_cast %436 : vector<1x64x64xbf16> to vector<64x64xbf16>
    %cst_227 = arith.constant dense<0.000000e+00> : vector<8x64xf32>
    %438 = tpu.matmul %435, %437, %cst_227 {dimension_numbers = #tpu.dot_dimension_numbers<[1], [0], [0], [1], [0, 0, 1, 1], [], []>} : vector<8x64xbf16>, vector<64x64xbf16>, vector<8x64xf32> -> vector<8x64xf32>
    %439 = arith.addf %434, %438 : vector<8x64xf32>
    %cst_228 = arith.constant 0.000000e+00 : f32
    %440 = vector.broadcast %cst_228 : f32 to vector<8x64xf32>
    %441 = arith.maximumf %439, %440 : vector<8x64xf32>
    %442 = tpu.iota {dimensions = array<i32: 0>} : vector<8x1xi32>
    %c4_i32_229 = arith.constant 4 : i32
    %c0_i32_230 = arith.constant 0 : i32
    %443 = arith.cmpi eq, %c4_i32_229, %c0_i32_230 : i32
    %c1_i32_231 = arith.constant 1 : i32
    %444 = arith.select %443, %c1_i32_231, %c4_i32_229 : i32
    %445 = vector.broadcast %444 : i32 to vector<8x1xi32>
    %446 = arith.remsi %442, %445 : vector<8x1xi32>
    %c0_i32_232 = arith.constant 0 : i32
    %447 = vector.broadcast %c0_i32_232 : i32 to vector<8x1xi32>
    %448 = arith.cmpi ne, %446, %447 : vector<8x1xi32>
    %c0_i32_233 = arith.constant 0 : i32
    %449 = vector.broadcast %c0_i32_233 : i32 to vector<8x1xi32>
    %450 = arith.cmpi slt, %446, %449 : vector<8x1xi32>
    %c0_i32_234 = arith.constant 0 : i32
    %451 = arith.cmpi slt, %444, %c0_i32_234 : i32
    %452 = vector.broadcast %451 : i1 to vector<8x1xi1>
    %453 = vector.broadcast %452 : vector<8x1xi1> to vector<8x1xi1>
    %454 = arith.xori %450, %453 : vector<8x1xi1>
    %455 = arith.andi %454, %448 : vector<8x1xi1>
    %456 = vector.broadcast %444 : i32 to vector<8x1xi32>
    %457 = arith.addi %446, %456 : vector<8x1xi32>
    %458 = arith.select %455, %457, %446 : vector<8x1xi1>, vector<8x1xi32>
    %c0_i32_235 = arith.constant 0 : i32
    %459 = vector.broadcast %c0_i32_235 : i32 to vector<8x1xi32>
    %460 = arith.cmpi eq, %458, %459 : vector<8x1xi32>
    %c1_i32_236 = arith.constant 1 : i32
    %461 = tpu.dynamic_rotate %441 by %c1_i32_236 dim 0 : vector<8x64xf32>, i32 -> vector<8x64xf32>
    %cst_237 = arith.constant 0.000000e+00 : f32
    %462 = vector.shape_cast %460 : vector<8x1xi1> to vector<8x1xi1>
    %463 = vector.broadcast %462 : vector<8x1xi1> to vector<8x64xi1>
    %464 = vector.broadcast %cst_237 : f32 to vector<8x64xf32>
    %465 = arith.select %463, %464, %461 : vector<8x64xi1>, vector<8x64xf32>
    %c3_i32_238 = arith.constant 3 : i32
    %466 = vector.broadcast %c3_i32_238 : i32 to vector<8x1xi32>
    %467 = arith.cmpi eq, %458, %466 : vector<8x1xi32>
    %c7_i32_239 = arith.constant 7 : i32
    %468 = tpu.dynamic_rotate %441 by %c7_i32_239 dim 0 : vector<8x64xf32>, i32 -> vector<8x64xf32>
    %cst_240 = arith.constant 0.000000e+00 : f32
    %469 = vector.shape_cast %467 : vector<8x1xi1> to vector<8x1xi1>
    %470 = vector.broadcast %469 : vector<8x1xi1> to vector<8x64xi1>
    %471 = vector.broadcast %cst_240 : f32 to vector<8x64xf32>
    %472 = arith.select %470, %471, %468 : vector<8x64xi1>, vector<8x64xf32>
    %c0_241 = arith.constant 0 : index
    %c0_242 = arith.constant 0 : index
    %473 = vector.load %arg19[%c0_241, %c0_242] : memref<1x64xf32, #tpu.memory_space<vmem>>, vector<1x64xf32>
    %474 = arith.truncf %465 : vector<8x64xf32> to vector<8x64xbf16>
    %c0_243 = arith.constant 0 : index
    %c0_244 = arith.constant 0 : index
    %c0_245 = arith.constant 0 : index
    %475 = vector.load %arg18[%c0_243, %c0_244, %c0_245] : memref<3x64x64xbf16, #tpu.memory_space<vmem>>, vector<1x64x64xbf16>
    %476 = vector.shape_cast %475 : vector<1x64x64xbf16> to vector<64x64xbf16>
    %cst_246 = arith.constant dense<0.000000e+00> : vector<8x64xf32>
    %477 = tpu.matmul %474, %476, %cst_246 {dimension_numbers = #tpu.dot_dimension_numbers<[1], [0], [0], [1], [0, 0, 1, 1], [], []>} : vector<8x64xbf16>, vector<64x64xbf16>, vector<8x64xf32> -> vector<8x64xf32>
    %478 = vector.broadcast %473 : vector<1x64xf32> to vector<8x64xf32>
    %479 = arith.addf %478, %477 : vector<8x64xf32>
    %480 = arith.truncf %441 : vector<8x64xf32> to vector<8x64xbf16>
    %c1_247 = arith.constant 1 : index
    %c0_248 = arith.constant 0 : index
    %c0_249 = arith.constant 0 : index
    %481 = vector.load %arg18[%c1_247, %c0_248, %c0_249] : memref<3x64x64xbf16, #tpu.memory_space<vmem>>, vector<1x64x64xbf16>
    %482 = vector.shape_cast %481 : vector<1x64x64xbf16> to vector<64x64xbf16>
    %cst_250 = arith.constant dense<0.000000e+00> : vector<8x64xf32>
    %483 = tpu.matmul %480, %482, %cst_250 {dimension_numbers = #tpu.dot_dimension_numbers<[1], [0], [0], [1], [0, 0, 1, 1], [], []>} : vector<8x64xbf16>, vector<64x64xbf16>, vector<8x64xf32> -> vector<8x64xf32>
    %484 = arith.addf %479, %483 : vector<8x64xf32>
    %485 = arith.truncf %472 : vector<8x64xf32> to vector<8x64xbf16>
    %c2_251 = arith.constant 2 : index
    %c0_252 = arith.constant 0 : index
    %c0_253 = arith.constant 0 : index
    %486 = vector.load %arg18[%c2_251, %c0_252, %c0_253] : memref<3x64x64xbf16, #tpu.memory_space<vmem>>, vector<1x64x64xbf16>
    %487 = vector.shape_cast %486 : vector<1x64x64xbf16> to vector<64x64xbf16>
    %cst_254 = arith.constant dense<0.000000e+00> : vector<8x64xf32>
    %488 = tpu.matmul %485, %487, %cst_254 {dimension_numbers = #tpu.dot_dimension_numbers<[1], [0], [0], [1], [0, 0, 1, 1], [], []>} : vector<8x64xbf16>, vector<64x64xbf16>, vector<8x64xf32> -> vector<8x64xf32>
    %489 = arith.addf %484, %488 : vector<8x64xf32>
    %490 = arith.addf %489, %389 : vector<8x64xf32>
    %cst_255 = arith.constant 0.000000e+00 : f32
    %491 = vector.broadcast %cst_255 : f32 to vector<8x64xf32>
    %492 = arith.maximumf %490, %491 : vector<8x64xf32>
    %493 = tpu.iota {dimensions = array<i32: 0>} : vector<8x1xi32>
    %c4_i32_256 = arith.constant 4 : i32
    %c0_i32_257 = arith.constant 0 : i32
    %494 = arith.cmpi eq, %c4_i32_256, %c0_i32_257 : i32
    %c1_i32_258 = arith.constant 1 : i32
    %495 = arith.select %494, %c1_i32_258, %c4_i32_256 : i32
    %496 = vector.broadcast %495 : i32 to vector<8x1xi32>
    %497 = arith.remsi %493, %496 : vector<8x1xi32>
    %c0_i32_259 = arith.constant 0 : i32
    %498 = vector.broadcast %c0_i32_259 : i32 to vector<8x1xi32>
    %499 = arith.cmpi ne, %497, %498 : vector<8x1xi32>
    %c0_i32_260 = arith.constant 0 : i32
    %500 = vector.broadcast %c0_i32_260 : i32 to vector<8x1xi32>
    %501 = arith.cmpi slt, %497, %500 : vector<8x1xi32>
    %c0_i32_261 = arith.constant 0 : i32
    %502 = arith.cmpi slt, %495, %c0_i32_261 : i32
    %503 = vector.broadcast %502 : i1 to vector<8x1xi1>
    %504 = vector.broadcast %503 : vector<8x1xi1> to vector<8x1xi1>
    %505 = arith.xori %501, %504 : vector<8x1xi1>
    %506 = arith.andi %505, %499 : vector<8x1xi1>
    %507 = vector.broadcast %495 : i32 to vector<8x1xi32>
    %508 = arith.addi %497, %507 : vector<8x1xi32>
    %509 = arith.select %506, %508, %497 : vector<8x1xi1>, vector<8x1xi32>
    %c0_i32_262 = arith.constant 0 : i32
    %510 = vector.broadcast %c0_i32_262 : i32 to vector<8x1xi32>
    %511 = arith.cmpi eq, %509, %510 : vector<8x1xi32>
    %c1_i32_263 = arith.constant 1 : i32
    %512 = tpu.dynamic_rotate %492 by %c1_i32_263 dim 0 : vector<8x64xf32>, i32 -> vector<8x64xf32>
    %cst_264 = arith.constant 0.000000e+00 : f32
    %513 = vector.shape_cast %511 : vector<8x1xi1> to vector<8x1xi1>
    %514 = vector.broadcast %513 : vector<8x1xi1> to vector<8x64xi1>
    %515 = vector.broadcast %cst_264 : f32 to vector<8x64xf32>
    %516 = arith.select %514, %515, %512 : vector<8x64xi1>, vector<8x64xf32>
    %c3_i32_265 = arith.constant 3 : i32
    %517 = vector.broadcast %c3_i32_265 : i32 to vector<8x1xi32>
    %518 = arith.cmpi eq, %509, %517 : vector<8x1xi32>
    %c7_i32_266 = arith.constant 7 : i32
    %519 = tpu.dynamic_rotate %492 by %c7_i32_266 dim 0 : vector<8x64xf32>, i32 -> vector<8x64xf32>
    %cst_267 = arith.constant 0.000000e+00 : f32
    %520 = vector.shape_cast %518 : vector<8x1xi1> to vector<8x1xi1>
    %521 = vector.broadcast %520 : vector<8x1xi1> to vector<8x64xi1>
    %522 = vector.broadcast %cst_267 : f32 to vector<8x64xf32>
    %523 = arith.select %521, %522, %519 : vector<8x64xi1>, vector<8x64xf32>
    %c0_268 = arith.constant 0 : index
    %c0_269 = arith.constant 0 : index
    %524 = vector.load %arg21[%c0_268, %c0_269] : memref<1x64xf32, #tpu.memory_space<vmem>>, vector<1x64xf32>
    %525 = arith.truncf %516 : vector<8x64xf32> to vector<8x64xbf16>
    %c0_270 = arith.constant 0 : index
    %c0_271 = arith.constant 0 : index
    %c0_272 = arith.constant 0 : index
    %526 = vector.load %arg20[%c0_270, %c0_271, %c0_272] : memref<3x64x64xbf16, #tpu.memory_space<vmem>>, vector<1x64x64xbf16>
    %527 = vector.shape_cast %526 : vector<1x64x64xbf16> to vector<64x64xbf16>
    %cst_273 = arith.constant dense<0.000000e+00> : vector<8x64xf32>
    %528 = tpu.matmul %525, %527, %cst_273 {dimension_numbers = #tpu.dot_dimension_numbers<[1], [0], [0], [1], [0, 0, 1, 1], [], []>} : vector<8x64xbf16>, vector<64x64xbf16>, vector<8x64xf32> -> vector<8x64xf32>
    %529 = vector.broadcast %524 : vector<1x64xf32> to vector<8x64xf32>
    %530 = arith.addf %529, %528 : vector<8x64xf32>
    %531 = arith.truncf %492 : vector<8x64xf32> to vector<8x64xbf16>
    %c1_274 = arith.constant 1 : index
    %c0_275 = arith.constant 0 : index
    %c0_276 = arith.constant 0 : index
    %532 = vector.load %arg20[%c1_274, %c0_275, %c0_276] : memref<3x64x64xbf16, #tpu.memory_space<vmem>>, vector<1x64x64xbf16>
    %533 = vector.shape_cast %532 : vector<1x64x64xbf16> to vector<64x64xbf16>
    %cst_277 = arith.constant dense<0.000000e+00> : vector<8x64xf32>
    %534 = tpu.matmul %531, %533, %cst_277 {dimension_numbers = #tpu.dot_dimension_numbers<[1], [0], [0], [1], [0, 0, 1, 1], [], []>} : vector<8x64xbf16>, vector<64x64xbf16>, vector<8x64xf32> -> vector<8x64xf32>
    %535 = arith.addf %530, %534 : vector<8x64xf32>
    %536 = arith.truncf %523 : vector<8x64xf32> to vector<8x64xbf16>
    %c2_278 = arith.constant 2 : index
    %c0_279 = arith.constant 0 : index
    %c0_280 = arith.constant 0 : index
    %537 = vector.load %arg20[%c2_278, %c0_279, %c0_280] : memref<3x64x64xbf16, #tpu.memory_space<vmem>>, vector<1x64x64xbf16>
    %538 = vector.shape_cast %537 : vector<1x64x64xbf16> to vector<64x64xbf16>
    %cst_281 = arith.constant dense<0.000000e+00> : vector<8x64xf32>
    %539 = tpu.matmul %536, %538, %cst_281 {dimension_numbers = #tpu.dot_dimension_numbers<[1], [0], [0], [1], [0, 0, 1, 1], [], []>} : vector<8x64xbf16>, vector<64x64xbf16>, vector<8x64xf32> -> vector<8x64xf32>
    %540 = arith.addf %535, %539 : vector<8x64xf32>
    %cst_282 = arith.constant 0.000000e+00 : f32
    %541 = vector.broadcast %cst_282 : f32 to vector<8x64xf32>
    %542 = arith.maximumf %540, %541 : vector<8x64xf32>
    %543 = tpu.iota {dimensions = array<i32: 0>} : vector<8x1xi32>
    %c4_i32_283 = arith.constant 4 : i32
    %c0_i32_284 = arith.constant 0 : i32
    %544 = arith.cmpi eq, %c4_i32_283, %c0_i32_284 : i32
    %c1_i32_285 = arith.constant 1 : i32
    %545 = arith.select %544, %c1_i32_285, %c4_i32_283 : i32
    %546 = vector.broadcast %545 : i32 to vector<8x1xi32>
    %547 = arith.remsi %543, %546 : vector<8x1xi32>
    %c0_i32_286 = arith.constant 0 : i32
    %548 = vector.broadcast %c0_i32_286 : i32 to vector<8x1xi32>
    %549 = arith.cmpi ne, %547, %548 : vector<8x1xi32>
    %c0_i32_287 = arith.constant 0 : i32
    %550 = vector.broadcast %c0_i32_287 : i32 to vector<8x1xi32>
    %551 = arith.cmpi slt, %547, %550 : vector<8x1xi32>
    %c0_i32_288 = arith.constant 0 : i32
    %552 = arith.cmpi slt, %545, %c0_i32_288 : i32
    %553 = vector.broadcast %552 : i1 to vector<8x1xi1>
    %554 = vector.broadcast %553 : vector<8x1xi1> to vector<8x1xi1>
    %555 = arith.xori %551, %554 : vector<8x1xi1>
    %556 = arith.andi %555, %549 : vector<8x1xi1>
    %557 = vector.broadcast %545 : i32 to vector<8x1xi32>
    %558 = arith.addi %547, %557 : vector<8x1xi32>
    %559 = arith.select %556, %558, %547 : vector<8x1xi1>, vector<8x1xi32>
    %c0_i32_289 = arith.constant 0 : i32
    %560 = vector.broadcast %c0_i32_289 : i32 to vector<8x1xi32>
    %561 = arith.cmpi eq, %559, %560 : vector<8x1xi32>
    %c1_i32_290 = arith.constant 1 : i32
    %562 = tpu.dynamic_rotate %542 by %c1_i32_290 dim 0 : vector<8x64xf32>, i32 -> vector<8x64xf32>
    %cst_291 = arith.constant 0.000000e+00 : f32
    %563 = vector.shape_cast %561 : vector<8x1xi1> to vector<8x1xi1>
    %564 = vector.broadcast %563 : vector<8x1xi1> to vector<8x64xi1>
    %565 = vector.broadcast %cst_291 : f32 to vector<8x64xf32>
    %566 = arith.select %564, %565, %562 : vector<8x64xi1>, vector<8x64xf32>
    %c3_i32_292 = arith.constant 3 : i32
    %567 = vector.broadcast %c3_i32_292 : i32 to vector<8x1xi32>
    %568 = arith.cmpi eq, %559, %567 : vector<8x1xi32>
    %c7_i32_293 = arith.constant 7 : i32
    %569 = tpu.dynamic_rotate %542 by %c7_i32_293 dim 0 : vector<8x64xf32>, i32 -> vector<8x64xf32>
    %cst_294 = arith.constant 0.000000e+00 : f32
    %570 = vector.shape_cast %568 : vector<8x1xi1> to vector<8x1xi1>
    %571 = vector.broadcast %570 : vector<8x1xi1> to vector<8x64xi1>
    %572 = vector.broadcast %cst_294 : f32 to vector<8x64xf32>
    %573 = arith.select %571, %572, %569 : vector<8x64xi1>, vector<8x64xf32>
    %c0_295 = arith.constant 0 : index
    %c0_296 = arith.constant 0 : index
    %574 = vector.load %arg23[%c0_295, %c0_296] : memref<1x64xf32, #tpu.memory_space<vmem>>, vector<1x64xf32>
    %575 = arith.truncf %566 : vector<8x64xf32> to vector<8x64xbf16>
    %c0_297 = arith.constant 0 : index
    %c0_298 = arith.constant 0 : index
    %c0_299 = arith.constant 0 : index
    %576 = vector.load %arg22[%c0_297, %c0_298, %c0_299] : memref<3x64x64xbf16, #tpu.memory_space<vmem>>, vector<1x64x64xbf16>
    %577 = vector.shape_cast %576 : vector<1x64x64xbf16> to vector<64x64xbf16>
    %cst_300 = arith.constant dense<0.000000e+00> : vector<8x64xf32>
    %578 = tpu.matmul %575, %577, %cst_300 {dimension_numbers = #tpu.dot_dimension_numbers<[1], [0], [0], [1], [0, 0, 1, 1], [], []>} : vector<8x64xbf16>, vector<64x64xbf16>, vector<8x64xf32> -> vector<8x64xf32>
    %579 = vector.broadcast %574 : vector<1x64xf32> to vector<8x64xf32>
    %580 = arith.addf %579, %578 : vector<8x64xf32>
    %581 = arith.truncf %542 : vector<8x64xf32> to vector<8x64xbf16>
    %c1_301 = arith.constant 1 : index
    %c0_302 = arith.constant 0 : index
    %c0_303 = arith.constant 0 : index
    %582 = vector.load %arg22[%c1_301, %c0_302, %c0_303] : memref<3x64x64xbf16, #tpu.memory_space<vmem>>, vector<1x64x64xbf16>
    %583 = vector.shape_cast %582 : vector<1x64x64xbf16> to vector<64x64xbf16>
    %cst_304 = arith.constant dense<0.000000e+00> : vector<8x64xf32>
    %584 = tpu.matmul %581, %583, %cst_304 {dimension_numbers = #tpu.dot_dimension_numbers<[1], [0], [0], [1], [0, 0, 1, 1], [], []>} : vector<8x64xbf16>, vector<64x64xbf16>, vector<8x64xf32> -> vector<8x64xf32>
    %585 = arith.addf %580, %584 : vector<8x64xf32>
    %586 = arith.truncf %573 : vector<8x64xf32> to vector<8x64xbf16>
    %c2_305 = arith.constant 2 : index
    %c0_306 = arith.constant 0 : index
    %c0_307 = arith.constant 0 : index
    %587 = vector.load %arg22[%c2_305, %c0_306, %c0_307] : memref<3x64x64xbf16, #tpu.memory_space<vmem>>, vector<1x64x64xbf16>
    %588 = vector.shape_cast %587 : vector<1x64x64xbf16> to vector<64x64xbf16>
    %cst_308 = arith.constant dense<0.000000e+00> : vector<8x64xf32>
    %589 = tpu.matmul %586, %588, %cst_308 {dimension_numbers = #tpu.dot_dimension_numbers<[1], [0], [0], [1], [0, 0, 1, 1], [], []>} : vector<8x64xbf16>, vector<64x64xbf16>, vector<8x64xf32> -> vector<8x64xf32>
    %590 = arith.addf %585, %589 : vector<8x64xf32>
    %591 = arith.addf %590, %490 : vector<8x64xf32>
    %592 = tpu.iota {dimensions = array<i32: 0>} : vector<8x1xi32>
    %c4_i32_309 = arith.constant 4 : i32
    %c0_i32_310 = arith.constant 0 : i32
    %593 = arith.cmpi eq, %c4_i32_309, %c0_i32_310 : i32
    %c1_i32_311 = arith.constant 1 : i32
    %594 = arith.select %593, %c1_i32_311, %c4_i32_309 : i32
    %595 = vector.broadcast %594 : i32 to vector<8x1xi32>
    %596 = arith.remsi %592, %595 : vector<8x1xi32>
    %c0_i32_312 = arith.constant 0 : i32
    %597 = vector.broadcast %c0_i32_312 : i32 to vector<8x1xi32>
    %598 = arith.cmpi ne, %596, %597 : vector<8x1xi32>
    %c0_i32_313 = arith.constant 0 : i32
    %599 = vector.broadcast %c0_i32_313 : i32 to vector<8x1xi32>
    %600 = arith.cmpi slt, %596, %599 : vector<8x1xi32>
    %c0_i32_314 = arith.constant 0 : i32
    %601 = arith.cmpi slt, %594, %c0_i32_314 : i32
    %602 = vector.broadcast %601 : i1 to vector<8x1xi1>
    %603 = vector.broadcast %602 : vector<8x1xi1> to vector<8x1xi1>
    %604 = arith.xori %600, %603 : vector<8x1xi1>
    %605 = arith.andi %604, %598 : vector<8x1xi1>
    %606 = vector.broadcast %594 : i32 to vector<8x1xi32>
    %607 = arith.addi %596, %606 : vector<8x1xi32>
    %608 = arith.select %605, %607, %596 : vector<8x1xi1>, vector<8x1xi32>
    %c0_i32_315 = arith.constant 0 : i32
    %609 = vector.broadcast %c0_i32_315 : i32 to vector<8x1xi32>
    %610 = arith.cmpi eq, %608, %609 : vector<8x1xi32>
    %c1_i32_316 = arith.constant 1 : i32
    %611 = tpu.dynamic_rotate %591 by %c1_i32_316 dim 0 : vector<8x64xf32>, i32 -> vector<8x64xf32>
    %cst_317 = arith.constant 0.000000e+00 : f32
    %612 = vector.shape_cast %610 : vector<8x1xi1> to vector<8x1xi1>
    %613 = vector.broadcast %612 : vector<8x1xi1> to vector<8x64xi1>
    %614 = vector.broadcast %cst_317 : f32 to vector<8x64xf32>
    %615 = arith.select %613, %614, %611 : vector<8x64xi1>, vector<8x64xf32>
    %c3_i32_318 = arith.constant 3 : i32
    %616 = vector.broadcast %c3_i32_318 : i32 to vector<8x1xi32>
    %617 = arith.cmpi eq, %608, %616 : vector<8x1xi32>
    %c7_i32_319 = arith.constant 7 : i32
    %618 = tpu.dynamic_rotate %591 by %c7_i32_319 dim 0 : vector<8x64xf32>, i32 -> vector<8x64xf32>
    %cst_320 = arith.constant 0.000000e+00 : f32
    %619 = vector.shape_cast %617 : vector<8x1xi1> to vector<8x1xi1>
    %620 = vector.broadcast %619 : vector<8x1xi1> to vector<8x64xi1>
    %621 = vector.broadcast %cst_320 : f32 to vector<8x64xf32>
    %622 = arith.select %620, %621, %618 : vector<8x64xi1>, vector<8x64xf32>
    %c0_321 = arith.constant 0 : index
    %c0_322 = arith.constant 0 : index
    %623 = vector.load %arg25[%c0_321, %c0_322] : memref<1x64xf32, #tpu.memory_space<vmem>>, vector<1x64xf32>
    %624 = arith.truncf %615 : vector<8x64xf32> to vector<8x64xbf16>
    %c0_323 = arith.constant 0 : index
    %c0_324 = arith.constant 0 : index
    %c0_325 = arith.constant 0 : index
    %625 = vector.load %arg24[%c0_323, %c0_324, %c0_325] : memref<3x64x64xbf16, #tpu.memory_space<vmem>>, vector<1x64x64xbf16>
    %626 = vector.shape_cast %625 : vector<1x64x64xbf16> to vector<64x64xbf16>
    %cst_326 = arith.constant dense<0.000000e+00> : vector<8x64xf32>
    %627 = tpu.matmul %624, %626, %cst_326 {dimension_numbers = #tpu.dot_dimension_numbers<[1], [0], [0], [1], [0, 0, 1, 1], [], []>} : vector<8x64xbf16>, vector<64x64xbf16>, vector<8x64xf32> -> vector<8x64xf32>
    %628 = vector.broadcast %623 : vector<1x64xf32> to vector<8x64xf32>
    %629 = arith.addf %628, %627 : vector<8x64xf32>
    %630 = arith.truncf %591 : vector<8x64xf32> to vector<8x64xbf16>
    %c1_327 = arith.constant 1 : index
    %c0_328 = arith.constant 0 : index
    %c0_329 = arith.constant 0 : index
    %631 = vector.load %arg24[%c1_327, %c0_328, %c0_329] : memref<3x64x64xbf16, #tpu.memory_space<vmem>>, vector<1x64x64xbf16>
    %632 = vector.shape_cast %631 : vector<1x64x64xbf16> to vector<64x64xbf16>
    %cst_330 = arith.constant dense<0.000000e+00> : vector<8x64xf32>
    %633 = tpu.matmul %630, %632, %cst_330 {dimension_numbers = #tpu.dot_dimension_numbers<[1], [0], [0], [1], [0, 0, 1, 1], [], []>} : vector<8x64xbf16>, vector<64x64xbf16>, vector<8x64xf32> -> vector<8x64xf32>
    %634 = arith.addf %629, %633 : vector<8x64xf32>
    %635 = arith.truncf %622 : vector<8x64xf32> to vector<8x64xbf16>
    %c2_331 = arith.constant 2 : index
    %c0_332 = arith.constant 0 : index
    %c0_333 = arith.constant 0 : index
    %636 = vector.load %arg24[%c2_331, %c0_332, %c0_333] : memref<3x64x64xbf16, #tpu.memory_space<vmem>>, vector<1x64x64xbf16>
    %637 = vector.shape_cast %636 : vector<1x64x64xbf16> to vector<64x64xbf16>
    %cst_334 = arith.constant dense<0.000000e+00> : vector<8x64xf32>
    %638 = tpu.matmul %635, %637, %cst_334 {dimension_numbers = #tpu.dot_dimension_numbers<[1], [0], [0], [1], [0, 0, 1, 1], [], []>} : vector<8x64xbf16>, vector<64x64xbf16>, vector<8x64xf32> -> vector<8x64xf32>
    %639 = arith.addf %634, %638 : vector<8x64xf32>
    %640 = tpu.iota {dimensions = array<i32: 0>} : vector<8x1xi32>
    %c4_i32_335 = arith.constant 4 : i32
    %c0_i32_336 = arith.constant 0 : i32
    %641 = arith.cmpi eq, %c4_i32_335, %c0_i32_336 : i32
    %c1_i32_337 = arith.constant 1 : i32
    %642 = arith.select %641, %c1_i32_337, %c4_i32_335 : i32
    %643 = vector.broadcast %642 : i32 to vector<8x1xi32>
    %644 = arith.remsi %640, %643 : vector<8x1xi32>
    %c0_i32_338 = arith.constant 0 : i32
    %645 = vector.broadcast %c0_i32_338 : i32 to vector<8x1xi32>
    %646 = arith.cmpi ne, %644, %645 : vector<8x1xi32>
    %c0_i32_339 = arith.constant 0 : i32
    %647 = vector.broadcast %c0_i32_339 : i32 to vector<8x1xi32>
    %648 = arith.cmpi slt, %644, %647 : vector<8x1xi32>
    %c0_i32_340 = arith.constant 0 : i32
    %649 = arith.cmpi slt, %642, %c0_i32_340 : i32
    %650 = vector.broadcast %649 : i1 to vector<8x1xi1>
    %651 = vector.broadcast %650 : vector<8x1xi1> to vector<8x1xi1>
    %652 = arith.xori %648, %651 : vector<8x1xi1>
    %653 = arith.andi %652, %646 : vector<8x1xi1>
    %654 = vector.broadcast %642 : i32 to vector<8x1xi32>
    %655 = arith.addi %644, %654 : vector<8x1xi32>
    %656 = arith.select %653, %655, %644 : vector<8x1xi1>, vector<8x1xi32>
    %c0_i32_341 = arith.constant 0 : i32
    %657 = vector.broadcast %c0_i32_341 : i32 to vector<8x1xi32>
    %658 = arith.cmpi eq, %656, %657 : vector<8x1xi32>
    %c1_i32_342 = arith.constant 1 : i32
    %659 = tpu.dynamic_rotate %639 by %c1_i32_342 dim 0 : vector<8x64xf32>, i32 -> vector<8x64xf32>
    %660 = vector.shape_cast %658 : vector<8x1xi1> to vector<8x1xi1>
    %661 = vector.broadcast %660 : vector<8x1xi1> to vector<8x64xi1>
    %662 = arith.select %661, %639, %659 : vector<8x64xi1>, vector<8x64xf32>
    %c3_i32_343 = arith.constant 3 : i32
    %663 = vector.broadcast %c3_i32_343 : i32 to vector<8x1xi32>
    %664 = arith.cmpi eq, %656, %663 : vector<8x1xi32>
    %c7_i32_344 = arith.constant 7 : i32
    %665 = tpu.dynamic_rotate %639 by %c7_i32_344 dim 0 : vector<8x64xf32>, i32 -> vector<8x64xf32>
    %666 = vector.shape_cast %664 : vector<8x1xi1> to vector<8x1xi1>
    %667 = vector.broadcast %666 : vector<8x1xi1> to vector<8x64xi1>
    %668 = arith.select %667, %639, %665 : vector<8x64xi1>, vector<8x64xf32>
    %669 = arith.maximumf %639, %662 : vector<8x64xf32>
    %670 = arith.maximumf %669, %668 : vector<8x64xf32>
    %c0_345 = arith.constant 0 : index
    %c0_346 = arith.constant 0 : index
    %671 = vector.load %arg36[%c0_345, %c0_346] : memref<32x128xf32, #tpu.memory_space<vmem>>, vector<8x64xf32>
    tpu.vector_store %arg36[%c0_345, %c0_346], %670 {strides = array<i32>} : memref<32x128xf32, #tpu.memory_space<vmem>>, vector<8x64xf32>,
    %c0_347 = arith.constant 0 : index
    %c0_348 = arith.constant 0 : index
    %672 = tpu.strided_load %arg36[%c0_347, %c0_348] {strides = array<i32: 2, 1>} : memref<32x128xf32, #tpu.memory_space<vmem>>, vector<4x64xf32>
    %673 = arith.truncf %672 : vector<4x64xf32> to vector<4x64xbf16>
    %c0_349 = arith.constant 0 : index
    %c0_350 = arith.constant 0 : index
    %c0_351 = arith.constant 0 : index
    %674 = vector.load %arg26[%c0_349, %c0_350, %c0_351] : memref<3x64x32xbf16, #tpu.memory_space<vmem>>, vector<1x64x32xbf16>
    %675 = vector.shape_cast %674 : vector<1x64x32xbf16> to vector<64x32xbf16>
    %cst_352 = arith.constant dense<0.000000e+00> : vector<4x32xf32>
    %676 = tpu.matmul %673, %675, %cst_352 {dimension_numbers = #tpu.dot_dimension_numbers<[1], [0], [0], [1], [0, 0, 1, 1], [], []>} : vector<4x64xbf16>, vector<64x32xbf16>, vector<4x32xf32> -> vector<4x32xf32>
    %c1_353 = arith.constant 1 : index
    %c0_354 = arith.constant 0 : index
    %c0_355 = arith.constant 0 : index
    %677 = vector.load %arg26[%c1_353, %c0_354, %c0_355] : memref<3x64x32xbf16, #tpu.memory_space<vmem>>, vector<1x64x32xbf16>
    %678 = vector.shape_cast %677 : vector<1x64x32xbf16> to vector<64x32xbf16>
    %cst_356 = arith.constant dense<0.000000e+00> : vector<4x32xf32>
    %679 = tpu.matmul %673, %678, %cst_356 {dimension_numbers = #tpu.dot_dimension_numbers<[1], [0], [0], [1], [0, 0, 1, 1], [], []>} : vector<4x64xbf16>, vector<64x32xbf16>, vector<4x32xf32> -> vector<4x32xf32>
    %680 = arith.maximumf %676, %679 : vector<4x32xf32>
    %c2_357 = arith.constant 2 : index
    %c0_358 = arith.constant 0 : index
    %c0_359 = arith.constant 0 : index
    %681 = vector.load %arg26[%c2_357, %c0_358, %c0_359] : memref<3x64x32xbf16, #tpu.memory_space<vmem>>, vector<1x64x32xbf16>
    %682 = vector.shape_cast %681 : vector<1x64x32xbf16> to vector<64x32xbf16>
    %cst_360 = arith.constant dense<0.000000e+00> : vector<4x32xf32>
    %683 = tpu.matmul %673, %682, %cst_360 {dimension_numbers = #tpu.dot_dimension_numbers<[1], [0], [0], [1], [0, 0, 1, 1], [], []>} : vector<4x64xbf16>, vector<64x32xbf16>, vector<4x32xf32> -> vector<4x32xf32>
    %684 = arith.maximumf %680, %683 : vector<4x32xf32>
    %cst_361 = arith.constant 0.000000e+00 : f32
    %685 = vector.broadcast %cst_361 : f32 to vector<4x32xf32>
    %686 = arith.maximumf %684, %685 : vector<4x32xf32>
    %687 = tpu.iota {dimensions = array<i32: 0>} : vector<4x1xi32>
    %c2_i32 = arith.constant 2 : i32
    %c0_i32_362 = arith.constant 0 : i32
    %688 = arith.cmpi eq, %c2_i32, %c0_i32_362 : i32
    %c1_i32_363 = arith.constant 1 : i32
    %689 = arith.select %688, %c1_i32_363, %c2_i32 : i32
    %690 = vector.broadcast %689 : i32 to vector<4x1xi32>
    %691 = arith.remsi %687, %690 : vector<4x1xi32>
    %c0_i32_364 = arith.constant 0 : i32
    %692 = vector.broadcast %c0_i32_364 : i32 to vector<4x1xi32>
    %693 = arith.cmpi ne, %691, %692 : vector<4x1xi32>
    %c0_i32_365 = arith.constant 0 : i32
    %694 = vector.broadcast %c0_i32_365 : i32 to vector<4x1xi32>
    %695 = arith.cmpi slt, %691, %694 : vector<4x1xi32>
    %c0_i32_366 = arith.constant 0 : i32
    %696 = arith.cmpi slt, %689, %c0_i32_366 : i32
    %697 = vector.broadcast %696 : i1 to vector<4x1xi1>
    %698 = vector.broadcast %697 : vector<4x1xi1> to vector<4x1xi1>
    %699 = arith.xori %695, %698 : vector<4x1xi1>
    %700 = arith.andi %699, %693 : vector<4x1xi1>
    %701 = vector.broadcast %689 : i32 to vector<4x1xi32>
    %702 = arith.addi %691, %701 : vector<4x1xi32>
    %703 = arith.select %700, %702, %691 : vector<4x1xi1>, vector<4x1xi32>
    %c0_i32_367 = arith.constant 0 : i32
    %704 = vector.broadcast %c0_i32_367 : i32 to vector<4x1xi32>
    %705 = arith.cmpi eq, %703, %704 : vector<4x1xi32>
    %c1_i32_368 = arith.constant 1 : i32
    %706 = tpu.dynamic_rotate %686 by %c1_i32_368 dim 0 : vector<4x32xf32>, i32 -> vector<4x32xf32>
    %cst_369 = arith.constant 0.000000e+00 : f32
    %707 = vector.shape_cast %705 : vector<4x1xi1> to vector<4x1xi1>
    %708 = vector.broadcast %707 : vector<4x1xi1> to vector<4x32xi1>
    %709 = vector.broadcast %cst_369 : f32 to vector<4x32xf32>
    %710 = arith.select %708, %709, %706 : vector<4x32xi1>, vector<4x32xf32>
    %c1_i32_370 = arith.constant 1 : i32
    %711 = vector.broadcast %c1_i32_370 : i32 to vector<4x1xi32>
    %712 = arith.cmpi eq, %703, %711 : vector<4x1xi32>
    %c3_i32_371 = arith.constant 3 : i32
    %713 = tpu.dynamic_rotate %686 by %c3_i32_371 dim 0 : vector<4x32xf32>, i32 -> vector<4x32xf32>
    %cst_372 = arith.constant 0.000000e+00 : f32
    %714 = vector.shape_cast %712 : vector<4x1xi1> to vector<4x1xi1>
    %715 = vector.broadcast %714 : vector<4x1xi1> to vector<4x32xi1>
    %716 = vector.broadcast %cst_372 : f32 to vector<4x32xf32>
    %717 = arith.select %715, %716, %713 : vector<4x32xi1>, vector<4x32xf32>
    %c0_373 = arith.constant 0 : index
    %c0_374 = arith.constant 0 : index
    %718 = vector.load %arg28[%c0_373, %c0_374] : memref<1x32xf32, #tpu.memory_space<vmem>>, vector<1x32xf32>
    %719 = arith.truncf %710 : vector<4x32xf32> to vector<4x32xbf16>
    %c0_375 = arith.constant 0 : index
    %c0_376 = arith.constant 0 : index
    %c0_377 = arith.constant 0 : index
    %720 = vector.load %arg27[%c0_375, %c0_376, %c0_377] : memref<3x32x32xbf16, #tpu.memory_space<vmem>>, vector<1x32x32xbf16>
    %721 = vector.shape_cast %720 : vector<1x32x32xbf16> to vector<32x32xbf16>
    %cst_378 = arith.constant dense<0.000000e+00> : vector<4x32xf32>
    %722 = tpu.matmul %719, %721, %cst_378 {dimension_numbers = #tpu.dot_dimension_numbers<[1], [0], [0], [1], [0, 0, 1, 1], [], []>} : vector<4x32xbf16>, vector<32x32xbf16>, vector<4x32xf32> -> vector<4x32xf32>
    %723 = vector.broadcast %718 : vector<1x32xf32> to vector<4x32xf32>
    %724 = arith.addf %723, %722 : vector<4x32xf32>
    %725 = arith.truncf %686 : vector<4x32xf32> to vector<4x32xbf16>
    %c1_379 = arith.constant 1 : index
    %c0_380 = arith.constant 0 : index
    %c0_381 = arith.constant 0 : index
    %726 = vector.load %arg27[%c1_379, %c0_380, %c0_381] : memref<3x32x32xbf16, #tpu.memory_space<vmem>>, vector<1x32x32xbf16>
    %727 = vector.shape_cast %726 : vector<1x32x32xbf16> to vector<32x32xbf16>
    %cst_382 = arith.constant dense<0.000000e+00> : vector<4x32xf32>
    %728 = tpu.matmul %725, %727, %cst_382 {dimension_numbers = #tpu.dot_dimension_numbers<[1], [0], [0], [1], [0, 0, 1, 1], [], []>} : vector<4x32xbf16>, vector<32x32xbf16>, vector<4x32xf32> -> vector<4x32xf32>
    %729 = arith.addf %724, %728 : vector<4x32xf32>
    %730 = arith.truncf %717 : vector<4x32xf32> to vector<4x32xbf16>
    %c2_383 = arith.constant 2 : index
    %c0_384 = arith.constant 0 : index
    %c0_385 = arith.constant 0 : index
    %731 = vector.load %arg27[%c2_383, %c0_384, %c0_385] : memref<3x32x32xbf16, #tpu.memory_space<vmem>>, vector<1x32x32xbf16>
    %732 = vector.shape_cast %731 : vector<1x32x32xbf16> to vector<32x32xbf16>
    %cst_386 = arith.constant dense<0.000000e+00> : vector<4x32xf32>
    %733 = tpu.matmul %730, %732, %cst_386 {dimension_numbers = #tpu.dot_dimension_numbers<[1], [0], [0], [1], [0, 0, 1, 1], [], []>} : vector<4x32xbf16>, vector<32x32xbf16>, vector<4x32xf32> -> vector<4x32xf32>
    %734 = arith.addf %729, %733 : vector<4x32xf32>
    %cst_387 = arith.constant 0.000000e+00 : f32
    %735 = vector.broadcast %cst_387 : f32 to vector<4x32xf32>
    %736 = arith.maximumf %734, %735 : vector<4x32xf32>
    %737 = tpu.iota {dimensions = array<i32: 0>} : vector<4x1xi32>
    %c2_i32_388 = arith.constant 2 : i32
    %c0_i32_389 = arith.constant 0 : i32
    %738 = arith.cmpi eq, %c2_i32_388, %c0_i32_389 : i32
    %c1_i32_390 = arith.constant 1 : i32
    %739 = arith.select %738, %c1_i32_390, %c2_i32_388 : i32
    %740 = vector.broadcast %739 : i32 to vector<4x1xi32>
    %741 = arith.remsi %737, %740 : vector<4x1xi32>
    %c0_i32_391 = arith.constant 0 : i32
    %742 = vector.broadcast %c0_i32_391 : i32 to vector<4x1xi32>
    %743 = arith.cmpi ne, %741, %742 : vector<4x1xi32>
    %c0_i32_392 = arith.constant 0 : i32
    %744 = vector.broadcast %c0_i32_392 : i32 to vector<4x1xi32>
    %745 = arith.cmpi slt, %741, %744 : vector<4x1xi32>
    %c0_i32_393 = arith.constant 0 : i32
    %746 = arith.cmpi slt, %739, %c0_i32_393 : i32
    %747 = vector.broadcast %746 : i1 to vector<4x1xi1>
    %748 = vector.broadcast %747 : vector<4x1xi1> to vector<4x1xi1>
    %749 = arith.xori %745, %748 : vector<4x1xi1>
    %750 = arith.andi %749, %743 : vector<4x1xi1>
    %751 = vector.broadcast %739 : i32 to vector<4x1xi32>
    %752 = arith.addi %741, %751 : vector<4x1xi32>
    %753 = arith.select %750, %752, %741 : vector<4x1xi1>, vector<4x1xi32>
    %c0_i32_394 = arith.constant 0 : i32
    %754 = vector.broadcast %c0_i32_394 : i32 to vector<4x1xi32>
    %755 = arith.cmpi eq, %753, %754 : vector<4x1xi32>
    %c1_i32_395 = arith.constant 1 : i32
    %756 = tpu.dynamic_rotate %736 by %c1_i32_395 dim 0 : vector<4x32xf32>, i32 -> vector<4x32xf32>
    %cst_396 = arith.constant 0.000000e+00 : f32
    %757 = vector.shape_cast %755 : vector<4x1xi1> to vector<4x1xi1>
    %758 = vector.broadcast %757 : vector<4x1xi1> to vector<4x32xi1>
    %759 = vector.broadcast %cst_396 : f32 to vector<4x32xf32>
    %760 = arith.select %758, %759, %756 : vector<4x32xi1>, vector<4x32xf32>
    %c1_i32_397 = arith.constant 1 : i32
    %761 = vector.broadcast %c1_i32_397 : i32 to vector<4x1xi32>
    %762 = arith.cmpi eq, %753, %761 : vector<4x1xi32>
    %c3_i32_398 = arith.constant 3 : i32
    %763 = tpu.dynamic_rotate %736 by %c3_i32_398 dim 0 : vector<4x32xf32>, i32 -> vector<4x32xf32>
    %cst_399 = arith.constant 0.000000e+00 : f32
    %764 = vector.shape_cast %762 : vector<4x1xi1> to vector<4x1xi1>
    %765 = vector.broadcast %764 : vector<4x1xi1> to vector<4x32xi1>
    %766 = vector.broadcast %cst_399 : f32 to vector<4x32xf32>
    %767 = arith.select %765, %766, %763 : vector<4x32xi1>, vector<4x32xf32>
    %c0_400 = arith.constant 0 : index
    %c0_401 = arith.constant 0 : index
    %768 = vector.load %arg30[%c0_400, %c0_401] : memref<1x32xf32, #tpu.memory_space<vmem>>, vector<1x32xf32>
    %769 = arith.truncf %760 : vector<4x32xf32> to vector<4x32xbf16>
    %c0_402 = arith.constant 0 : index
    %c0_403 = arith.constant 0 : index
    %c0_404 = arith.constant 0 : index
    %770 = vector.load %arg29[%c0_402, %c0_403, %c0_404] : memref<3x32x32xbf16, #tpu.memory_space<vmem>>, vector<1x32x32xbf16>
    %771 = vector.shape_cast %770 : vector<1x32x32xbf16> to vector<32x32xbf16>
    %cst_405 = arith.constant dense<0.000000e+00> : vector<4x32xf32>
    %772 = tpu.matmul %769, %771, %cst_405 {dimension_numbers = #tpu.dot_dimension_numbers<[1], [0], [0], [1], [0, 0, 1, 1], [], []>} : vector<4x32xbf16>, vector<32x32xbf16>, vector<4x32xf32> -> vector<4x32xf32>
    %773 = vector.broadcast %768 : vector<1x32xf32> to vector<4x32xf32>
    %774 = arith.addf %773, %772 : vector<4x32xf32>
    %775 = arith.truncf %736 : vector<4x32xf32> to vector<4x32xbf16>
    %c1_406 = arith.constant 1 : index
    %c0_407 = arith.constant 0 : index
    %c0_408 = arith.constant 0 : index
    %776 = vector.load %arg29[%c1_406, %c0_407, %c0_408] : memref<3x32x32xbf16, #tpu.memory_space<vmem>>, vector<1x32x32xbf16>
    %777 = vector.shape_cast %776 : vector<1x32x32xbf16> to vector<32x32xbf16>
    %cst_409 = arith.constant dense<0.000000e+00> : vector<4x32xf32>
    %778 = tpu.matmul %775, %777, %cst_409 {dimension_numbers = #tpu.dot_dimension_numbers<[1], [0], [0], [1], [0, 0, 1, 1], [], []>} : vector<4x32xbf16>, vector<32x32xbf16>, vector<4x32xf32> -> vector<4x32xf32>
    %779 = arith.addf %774, %778 : vector<4x32xf32>
    %780 = arith.truncf %767 : vector<4x32xf32> to vector<4x32xbf16>
    %c2_410 = arith.constant 2 : index
    %c0_411 = arith.constant 0 : index
    %c0_412 = arith.constant 0 : index
    %781 = vector.load %arg29[%c2_410, %c0_411, %c0_412] : memref<3x32x32xbf16, #tpu.memory_space<vmem>>, vector<1x32x32xbf16>
    %782 = vector.shape_cast %781 : vector<1x32x32xbf16> to vector<32x32xbf16>
    %cst_413 = arith.constant dense<0.000000e+00> : vector<4x32xf32>
    %783 = tpu.matmul %780, %782, %cst_413 {dimension_numbers = #tpu.dot_dimension_numbers<[1], [0], [0], [1], [0, 0, 1, 1], [], []>} : vector<4x32xbf16>, vector<32x32xbf16>, vector<4x32xf32> -> vector<4x32xf32>
    %784 = arith.addf %779, %783 : vector<4x32xf32>
    %785 = arith.addf %784, %684 : vector<4x32xf32>
    %cst_414 = arith.constant 0.000000e+00 : f32
    %786 = vector.broadcast %cst_414 : f32 to vector<4x32xf32>
    %787 = arith.maximumf %785, %786 : vector<4x32xf32>
    %788 = tpu.iota {dimensions = array<i32: 0>} : vector<4x1xi32>
    %c2_i32_415 = arith.constant 2 : i32
    %c0_i32_416 = arith.constant 0 : i32
    %789 = arith.cmpi eq, %c2_i32_415, %c0_i32_416 : i32
    %c1_i32_417 = arith.constant 1 : i32
    %790 = arith.select %789, %c1_i32_417, %c2_i32_415 : i32
    %791 = vector.broadcast %790 : i32 to vector<4x1xi32>
    %792 = arith.remsi %788, %791 : vector<4x1xi32>
    %c0_i32_418 = arith.constant 0 : i32
    %793 = vector.broadcast %c0_i32_418 : i32 to vector<4x1xi32>
    %794 = arith.cmpi ne, %792, %793 : vector<4x1xi32>
    %c0_i32_419 = arith.constant 0 : i32
    %795 = vector.broadcast %c0_i32_419 : i32 to vector<4x1xi32>
    %796 = arith.cmpi slt, %792, %795 : vector<4x1xi32>
    %c0_i32_420 = arith.constant 0 : i32
    %797 = arith.cmpi slt, %790, %c0_i32_420 : i32
    %798 = vector.broadcast %797 : i1 to vector<4x1xi1>
    %799 = vector.broadcast %798 : vector<4x1xi1> to vector<4x1xi1>
    %800 = arith.xori %796, %799 : vector<4x1xi1>
    %801 = arith.andi %800, %794 : vector<4x1xi1>
    %802 = vector.broadcast %790 : i32 to vector<4x1xi32>
    %803 = arith.addi %792, %802 : vector<4x1xi32>
    %804 = arith.select %801, %803, %792 : vector<4x1xi1>, vector<4x1xi32>
    %c0_i32_421 = arith.constant 0 : i32
    %805 = vector.broadcast %c0_i32_421 : i32 to vector<4x1xi32>
    %806 = arith.cmpi eq, %804, %805 : vector<4x1xi32>
    %c1_i32_422 = arith.constant 1 : i32
    %807 = tpu.dynamic_rotate %787 by %c1_i32_422 dim 0 : vector<4x32xf32>, i32 -> vector<4x32xf32>
    %cst_423 = arith.constant 0.000000e+00 : f32
    %808 = vector.shape_cast %806 : vector<4x1xi1> to vector<4x1xi1>
    %809 = vector.broadcast %808 : vector<4x1xi1> to vector<4x32xi1>
    %810 = vector.broadcast %cst_423 : f32 to vector<4x32xf32>
    %811 = arith.select %809, %810, %807 : vector<4x32xi1>, vector<4x32xf32>
    %c1_i32_424 = arith.constant 1 : i32
    %812 = vector.broadcast %c1_i32_424 : i32 to vector<4x1xi32>
    %813 = arith.cmpi eq, %804, %812 : vector<4x1xi32>
    %c3_i32_425 = arith.constant 3 : i32
    %814 = tpu.dynamic_rotate %787 by %c3_i32_425 dim 0 : vector<4x32xf32>, i32 -> vector<4x32xf32>
    %cst_426 = arith.constant 0.000000e+00 : f32
    %815 = vector.shape_cast %813 : vector<4x1xi1> to vector<4x1xi1>
    %816 = vector.broadcast %815 : vector<4x1xi1> to vector<4x32xi1>
    %817 = vector.broadcast %cst_426 : f32 to vector<4x32xf32>
    %818 = arith.select %816, %817, %814 : vector<4x32xi1>, vector<4x32xf32>
    %c0_427 = arith.constant 0 : index
    %c0_428 = arith.constant 0 : index
    %819 = vector.load %arg32[%c0_427, %c0_428] : memref<1x32xf32, #tpu.memory_space<vmem>>, vector<1x32xf32>
    %820 = arith.truncf %811 : vector<4x32xf32> to vector<4x32xbf16>
    %c0_429 = arith.constant 0 : index
    %c0_430 = arith.constant 0 : index
    %c0_431 = arith.constant 0 : index
    %821 = vector.load %arg31[%c0_429, %c0_430, %c0_431] : memref<3x32x32xbf16, #tpu.memory_space<vmem>>, vector<1x32x32xbf16>
    %822 = vector.shape_cast %821 : vector<1x32x32xbf16> to vector<32x32xbf16>
    %cst_432 = arith.constant dense<0.000000e+00> : vector<4x32xf32>
    %823 = tpu.matmul %820, %822, %cst_432 {dimension_numbers = #tpu.dot_dimension_numbers<[1], [0], [0], [1], [0, 0, 1, 1], [], []>} : vector<4x32xbf16>, vector<32x32xbf16>, vector<4x32xf32> -> vector<4x32xf32>
    %824 = vector.broadcast %819 : vector<1x32xf32> to vector<4x32xf32>
    %825 = arith.addf %824, %823 : vector<4x32xf32>
    %826 = arith.truncf %787 : vector<4x32xf32> to vector<4x32xbf16>
    %c1_433 = arith.constant 1 : index
    %c0_434 = arith.constant 0 : index
    %c0_435 = arith.constant 0 : index
    %827 = vector.load %arg31[%c1_433, %c0_434, %c0_435] : memref<3x32x32xbf16, #tpu.memory_space<vmem>>, vector<1x32x32xbf16>
    %828 = vector.shape_cast %827 : vector<1x32x32xbf16> to vector<32x32xbf16>
    %cst_436 = arith.constant dense<0.000000e+00> : vector<4x32xf32>
    %829 = tpu.matmul %826, %828, %cst_436 {dimension_numbers = #tpu.dot_dimension_numbers<[1], [0], [0], [1], [0, 0, 1, 1], [], []>} : vector<4x32xbf16>, vector<32x32xbf16>, vector<4x32xf32> -> vector<4x32xf32>
    %830 = arith.addf %825, %829 : vector<4x32xf32>
    %831 = arith.truncf %818 : vector<4x32xf32> to vector<4x32xbf16>
    %c2_437 = arith.constant 2 : index
    %c0_438 = arith.constant 0 : index
    %c0_439 = arith.constant 0 : index
    %832 = vector.load %arg31[%c2_437, %c0_438, %c0_439] : memref<3x32x32xbf16, #tpu.memory_space<vmem>>, vector<1x32x32xbf16>
    %833 = vector.shape_cast %832 : vector<1x32x32xbf16> to vector<32x32xbf16>
    %cst_440 = arith.constant dense<0.000000e+00> : vector<4x32xf32>
    %834 = tpu.matmul %831, %833, %cst_440 {dimension_numbers = #tpu.dot_dimension_numbers<[1], [0], [0], [1], [0, 0, 1, 1], [], []>} : vector<4x32xbf16>, vector<32x32xbf16>, vector<4x32xf32> -> vector<4x32xf32>
    %835 = arith.addf %830, %834 : vector<4x32xf32>
    %cst_441 = arith.constant 0.000000e+00 : f32
    %836 = vector.broadcast %cst_441 : f32 to vector<4x32xf32>
    %837 = arith.maximumf %835, %836 : vector<4x32xf32>
    %838 = tpu.iota {dimensions = array<i32: 0>} : vector<4x1xi32>
    %c2_i32_442 = arith.constant 2 : i32
    %c0_i32_443 = arith.constant 0 : i32
    %839 = arith.cmpi eq, %c2_i32_442, %c0_i32_443 : i32
    %c1_i32_444 = arith.constant 1 : i32
    %840 = arith.select %839, %c1_i32_444, %c2_i32_442 : i32
    %841 = vector.broadcast %840 : i32 to vector<4x1xi32>
    %842 = arith.remsi %838, %841 : vector<4x1xi32>
    %c0_i32_445 = arith.constant 0 : i32
    %843 = vector.broadcast %c0_i32_445 : i32 to vector<4x1xi32>
    %844 = arith.cmpi ne, %842, %843 : vector<4x1xi32>
    %c0_i32_446 = arith.constant 0 : i32
    %845 = vector.broadcast %c0_i32_446 : i32 to vector<4x1xi32>
    %846 = arith.cmpi slt, %842, %845 : vector<4x1xi32>
    %c0_i32_447 = arith.constant 0 : i32
    %847 = arith.cmpi slt, %840, %c0_i32_447 : i32
    %848 = vector.broadcast %847 : i1 to vector<4x1xi1>
    %849 = vector.broadcast %848 : vector<4x1xi1> to vector<4x1xi1>
    %850 = arith.xori %846, %849 : vector<4x1xi1>
    %851 = arith.andi %850, %844 : vector<4x1xi1>
    %852 = vector.broadcast %840 : i32 to vector<4x1xi32>
    %853 = arith.addi %842, %852 : vector<4x1xi32>
    %854 = arith.select %851, %853, %842 : vector<4x1xi1>, vector<4x1xi32>
    %c0_i32_448 = arith.constant 0 : i32
    %855 = vector.broadcast %c0_i32_448 : i32 to vector<4x1xi32>
    %856 = arith.cmpi eq, %854, %855 : vector<4x1xi32>
    %c1_i32_449 = arith.constant 1 : i32
    %857 = tpu.dynamic_rotate %837 by %c1_i32_449 dim 0 : vector<4x32xf32>, i32 -> vector<4x32xf32>
    %cst_450 = arith.constant 0.000000e+00 : f32
    %858 = vector.shape_cast %856 : vector<4x1xi1> to vector<4x1xi1>
    %859 = vector.broadcast %858 : vector<4x1xi1> to vector<4x32xi1>
    %860 = vector.broadcast %cst_450 : f32 to vector<4x32xf32>
    %861 = arith.select %859, %860, %857 : vector<4x32xi1>, vector<4x32xf32>
    %c1_i32_451 = arith.constant 1 : i32
    %862 = vector.broadcast %c1_i32_451 : i32 to vector<4x1xi32>
    %863 = arith.cmpi eq, %854, %862 : vector<4x1xi32>
    %c3_i32_452 = arith.constant 3 : i32
    %864 = tpu.dynamic_rotate %837 by %c3_i32_452 dim 0 : vector<4x32xf32>, i32 -> vector<4x32xf32>
    %cst_453 = arith.constant 0.000000e+00 : f32
    %865 = vector.shape_cast %863 : vector<4x1xi1> to vector<4x1xi1>
    %866 = vector.broadcast %865 : vector<4x1xi1> to vector<4x32xi1>
    %867 = vector.broadcast %cst_453 : f32 to vector<4x32xf32>
    %868 = arith.select %866, %867, %864 : vector<4x32xi1>, vector<4x32xf32>
    %c0_454 = arith.constant 0 : index
    %c0_455 = arith.constant 0 : index
    %869 = vector.load %arg34[%c0_454, %c0_455] : memref<1x32xf32, #tpu.memory_space<vmem>>, vector<1x32xf32>
    %870 = arith.truncf %861 : vector<4x32xf32> to vector<4x32xbf16>
    %c0_456 = arith.constant 0 : index
    %c0_457 = arith.constant 0 : index
    %c0_458 = arith.constant 0 : index
    %871 = vector.load %arg33[%c0_456, %c0_457, %c0_458] : memref<3x32x32xbf16, #tpu.memory_space<vmem>>, vector<1x32x32xbf16>
    %872 = vector.shape_cast %871 : vector<1x32x32xbf16> to vector<32x32xbf16>
    %cst_459 = arith.constant dense<0.000000e+00> : vector<4x32xf32>
    %873 = tpu.matmul %870, %872, %cst_459 {dimension_numbers = #tpu.dot_dimension_numbers<[1], [0], [0], [1], [0, 0, 1, 1], [], []>} : vector<4x32xbf16>, vector<32x32xbf16>, vector<4x32xf32> -> vector<4x32xf32>
    %874 = vector.broadcast %869 : vector<1x32xf32> to vector<4x32xf32>
    %875 = arith.addf %874, %873 : vector<4x32xf32>
    %876 = arith.truncf %837 : vector<4x32xf32> to vector<4x32xbf16>
    %c1_460 = arith.constant 1 : index
    %c0_461 = arith.constant 0 : index
    %c0_462 = arith.constant 0 : index
    %877 = vector.load %arg33[%c1_460, %c0_461, %c0_462] : memref<3x32x32xbf16, #tpu.memory_space<vmem>>, vector<1x32x32xbf16>
    %878 = vector.shape_cast %877 : vector<1x32x32xbf16> to vector<32x32xbf16>
    %cst_463 = arith.constant dense<0.000000e+00> : vector<4x32xf32>
    %879 = tpu.matmul %876, %878, %cst_463 {dimension_numbers = #tpu.dot_dimension_numbers<[1], [0], [0], [1], [0, 0, 1, 1], [], []>} : vector<4x32xbf16>, vector<32x32xbf16>, vector<4x32xf32> -> vector<4x32xf32>
    %880 = arith.addf %875, %879 : vector<4x32xf32>
    %881 = arith.truncf %868 : vector<4x32xf32> to vector<4x32xbf16>
    %c2_464 = arith.constant 2 : index
    %c0_465 = arith.constant 0 : index
    %c0_466 = arith.constant 0 : index
    %882 = vector.load %arg33[%c2_464, %c0_465, %c0_466] : memref<3x32x32xbf16, #tpu.memory_space<vmem>>, vector<1x32x32xbf16>
    %883 = vector.shape_cast %882 : vector<1x32x32xbf16> to vector<32x32xbf16>
    %cst_467 = arith.constant dense<0.000000e+00> : vector<4x32xf32>
    %884 = tpu.matmul %881, %883, %cst_467 {dimension_numbers = #tpu.dot_dimension_numbers<[1], [0], [0], [1], [0, 0, 1, 1], [], []>} : vector<4x32xbf16>, vector<32x32xbf16>, vector<4x32xf32> -> vector<4x32xf32>
    %885 = arith.addf %880, %884 : vector<4x32xf32>
    %886 = arith.addf %885, %785 : vector<4x32xf32>
    %887 = arith.truncf %886 : vector<4x32xf32> to vector<4x32xbf16>
    %c0_468 = arith.constant 0 : index
    %c0_469 = arith.constant 0 : index
    %888 = vector.load %arg35[%c0_468, %c0_469] : memref<4x32xbf16, #tpu.memory_space<vmem>>, vector<4x32xbf16>
    tpu.vector_store %arg35[%c0_468, %c0_469], %887 {strides = array<i32>} : memref<4x32xbf16, #tpu.memory_space<vmem>>, vector<4x32xbf16>,
    return
  }
  func.func @transform_0(%arg0: i32) -> (i32, i32) {
    %c0_i32 = arith.constant 0 : i32
    %c0_i32_0 = arith.constant 0 : i32
    return %arg0, %c0_i32 : i32, i32
  }
  func.func @transform_1(%arg0: i32) -> (i32, i32, i32) {
    %c0_i32 = arith.constant 0 : i32
    %c0_i32_0 = arith.constant 0 : i32
    %c0_i32_1 = arith.constant 0 : i32
    %c0_i32_2 = arith.constant 0 : i32
    return %c0_i32, %c0_i32_0, %c0_i32_1 : i32, i32, i32
  }
  func.func @transform_2(%arg0: i32) -> (i32, i32) {
    %c0_i32 = arith.constant 0 : i32
    %c0_i32_0 = arith.constant 0 : i32
    %c0_i32_1 = arith.constant 0 : i32
    return %c0_i32, %c0_i32_0 : i32, i32
  }
  func.func @transform_3(%arg0: i32) -> (i32, i32, i32) {
    %c0_i32 = arith.constant 0 : i32
    %c0_i32_0 = arith.constant 0 : i32
    %c0_i32_1 = arith.constant 0 : i32
    %c0_i32_2 = arith.constant 0 : i32
    return %c0_i32, %c0_i32_0, %c0_i32_1 : i32, i32, i32
  }
  func.func @transform_4(%arg0: i32) -> (i32, i32, i32) {
    %c0_i32 = arith.constant 0 : i32
    %c0_i32_0 = arith.constant 0 : i32
    %c0_i32_1 = arith.constant 0 : i32
    %c0_i32_2 = arith.constant 0 : i32
    return %c0_i32, %c0_i32_0, %c0_i32_1 : i32, i32, i32
  }
  func.func @transform_5(%arg0: i32) -> (i32, i32) {
    %c0_i32 = arith.constant 0 : i32
    %c0_i32_0 = arith.constant 0 : i32
    %c0_i32_1 = arith.constant 0 : i32
    return %c0_i32, %c0_i32_0 : i32, i32
  }
  func.func @transform_6(%arg0: i32) -> (i32, i32, i32) {
    %c0_i32 = arith.constant 0 : i32
    %c0_i32_0 = arith.constant 0 : i32
    %c0_i32_1 = arith.constant 0 : i32
    %c0_i32_2 = arith.constant 0 : i32
    return %c0_i32, %c0_i32_0, %c0_i32_1 : i32, i32, i32
  }
  func.func @transform_7(%arg0: i32) -> (i32, i32) {
    %c0_i32 = arith.constant 0 : i32
    %c0_i32_0 = arith.constant 0 : i32
    %c0_i32_1 = arith.constant 0 : i32
    return %c0_i32, %c0_i32_0 : i32, i32
  }
  func.func @transform_8(%arg0: i32) -> (i32, i32, i32) {
    %c0_i32 = arith.constant 0 : i32
    %c0_i32_0 = arith.constant 0 : i32
    %c0_i32_1 = arith.constant 0 : i32
    %c0_i32_2 = arith.constant 0 : i32
    return %c0_i32, %c0_i32_0, %c0_i32_1 : i32, i32, i32
  }
  func.func @transform_9(%arg0: i32) -> (i32, i32) {
    %c0_i32 = arith.constant 0 : i32
    %c0_i32_0 = arith.constant 0 : i32
    %c0_i32_1 = arith.constant 0 : i32
    return %c0_i32, %c0_i32_0 : i32, i32
  }
  func.func @transform_10(%arg0: i32) -> (i32, i32, i32) {
    %c0_i32 = arith.constant 0 : i32
    %c0_i32_0 = arith.constant 0 : i32
    %c0_i32_1 = arith.constant 0 : i32
    %c0_i32_2 = arith.constant 0 : i32
    return %c0_i32, %c0_i32_0, %c0_i32_1 : i32, i32, i32
  }
  func.func @transform_11(%arg0: i32) -> (i32, i32) {
    %c0_i32 = arith.constant 0 : i32
    %c0_i32_0 = arith.constant 0 : i32
    %c0_i32_1 = arith.constant 0 : i32
    return %c0_i32, %c0_i32_0 : i32, i32
  }
  func.func @transform_12(%arg0: i32) -> (i32, i32, i32) {
    %c0_i32 = arith.constant 0 : i32
    %c0_i32_0 = arith.constant 0 : i32
    %c0_i32_1 = arith.constant 0 : i32
    %c0_i32_2 = arith.constant 0 : i32
    return %c0_i32, %c0_i32_0, %c0_i32_1 : i32, i32, i32
  }
  func.func @transform_13(%arg0: i32) -> (i32, i32) {
    %c0_i32 = arith.constant 0 : i32
    %c0_i32_0 = arith.constant 0 : i32
    %c0_i32_1 = arith.constant 0 : i32
    return %c0_i32, %c0_i32_0 : i32, i32
  }
  func.func @transform_14(%arg0: i32) -> (i32, i32, i32) {
    %c0_i32 = arith.constant 0 : i32
    %c0_i32_0 = arith.constant 0 : i32
    %c0_i32_1 = arith.constant 0 : i32
    %c0_i32_2 = arith.constant 0 : i32
    return %c0_i32, %c0_i32_0, %c0_i32_1 : i32, i32, i32
  }
  func.func @transform_15(%arg0: i32) -> (i32, i32, i32) {
    %c0_i32 = arith.constant 0 : i32
    %c0_i32_0 = arith.constant 0 : i32
    %c0_i32_1 = arith.constant 0 : i32
    %c0_i32_2 = arith.constant 0 : i32
    return %c0_i32, %c0_i32_0, %c0_i32_1 : i32, i32, i32
  }
  func.func @transform_16(%arg0: i32) -> (i32, i32) {
    %c0_i32 = arith.constant 0 : i32
    %c0_i32_0 = arith.constant 0 : i32
    %c0_i32_1 = arith.constant 0 : i32
    return %c0_i32, %c0_i32_0 : i32, i32
  }
  func.func @transform_17(%arg0: i32) -> (i32, i32, i32) {
    %c0_i32 = arith.constant 0 : i32
    %c0_i32_0 = arith.constant 0 : i32
    %c0_i32_1 = arith.constant 0 : i32
    %c0_i32_2 = arith.constant 0 : i32
    return %c0_i32, %c0_i32_0, %c0_i32_1 : i32, i32, i32
  }
  func.func @transform_18(%arg0: i32) -> (i32, i32) {
    %c0_i32 = arith.constant 0 : i32
    %c0_i32_0 = arith.constant 0 : i32
    %c0_i32_1 = arith.constant 0 : i32
    return %c0_i32, %c0_i32_0 : i32, i32
  }
  func.func @transform_19(%arg0: i32) -> (i32, i32, i32) {
    %c0_i32 = arith.constant 0 : i32
    %c0_i32_0 = arith.constant 0 : i32
    %c0_i32_1 = arith.constant 0 : i32
    %c0_i32_2 = arith.constant 0 : i32
    return %c0_i32, %c0_i32_0, %c0_i32_1 : i32, i32, i32
  }
  func.func @transform_20(%arg0: i32) -> (i32, i32) {
    %c0_i32 = arith.constant 0 : i32
    %c0_i32_0 = arith.constant 0 : i32
    %c0_i32_1 = arith.constant 0 : i32
    return %c0_i32, %c0_i32_0 : i32, i32
  }
  func.func @transform_21(%arg0: i32) -> (i32, i32, i32) {
    %c0_i32 = arith.constant 0 : i32
    %c0_i32_0 = arith.constant 0 : i32
    %c0_i32_1 = arith.constant 0 : i32
    %c0_i32_2 = arith.constant 0 : i32
    return %c0_i32, %c0_i32_0, %c0_i32_1 : i32, i32, i32
  }
  func.func @transform_22(%arg0: i32) -> (i32, i32) {
    %c0_i32 = arith.constant 0 : i32
    %c0_i32_0 = arith.constant 0 : i32
    %c0_i32_1 = arith.constant 0 : i32
    return %c0_i32, %c0_i32_0 : i32, i32
  }
  func.func @transform_23(%arg0: i32) -> (i32, i32, i32) {
    %c0_i32 = arith.constant 0 : i32
    %c0_i32_0 = arith.constant 0 : i32
    %c0_i32_1 = arith.constant 0 : i32
    %c0_i32_2 = arith.constant 0 : i32
    return %c0_i32, %c0_i32_0, %c0_i32_1 : i32, i32, i32
  }
  func.func @transform_24(%arg0: i32) -> (i32, i32) {
    %c0_i32 = arith.constant 0 : i32
    %c0_i32_0 = arith.constant 0 : i32
    %c0_i32_1 = arith.constant 0 : i32
    return %c0_i32, %c0_i32_0 : i32, i32
  }
  func.func @transform_25(%arg0: i32) -> (i32, i32, i32) {
    %c0_i32 = arith.constant 0 : i32
    %c0_i32_0 = arith.constant 0 : i32
    %c0_i32_1 = arith.constant 0 : i32
    %c0_i32_2 = arith.constant 0 : i32
    return %c0_i32, %c0_i32_0, %c0_i32_1 : i32, i32, i32
  }
  func.func @transform_26(%arg0: i32) -> (i32, i32, i32) {
    %c0_i32 = arith.constant 0 : i32
    %c0_i32_0 = arith.constant 0 : i32
    %c0_i32_1 = arith.constant 0 : i32
    %c0_i32_2 = arith.constant 0 : i32
    return %c0_i32, %c0_i32_0, %c0_i32_1 : i32, i32, i32
  }
  func.func @transform_27(%arg0: i32) -> (i32, i32) {
    %c0_i32 = arith.constant 0 : i32
    %c0_i32_0 = arith.constant 0 : i32
    %c0_i32_1 = arith.constant 0 : i32
    return %c0_i32, %c0_i32_0 : i32, i32
  }
  func.func @transform_28(%arg0: i32) -> (i32, i32, i32) {
    %c0_i32 = arith.constant 0 : i32
    %c0_i32_0 = arith.constant 0 : i32
    %c0_i32_1 = arith.constant 0 : i32
    %c0_i32_2 = arith.constant 0 : i32
    return %c0_i32, %c0_i32_0, %c0_i32_1 : i32, i32, i32
  }
  func.func @transform_29(%arg0: i32) -> (i32, i32) {
    %c0_i32 = arith.constant 0 : i32
    %c0_i32_0 = arith.constant 0 : i32
    %c0_i32_1 = arith.constant 0 : i32
    return %c0_i32, %c0_i32_0 : i32, i32
  }
  func.func @transform_30(%arg0: i32) -> (i32, i32, i32) {
    %c0_i32 = arith.constant 0 : i32
    %c0_i32_0 = arith.constant 0 : i32
    %c0_i32_1 = arith.constant 0 : i32
    %c0_i32_2 = arith.constant 0 : i32
    return %c0_i32, %c0_i32_0, %c0_i32_1 : i32, i32, i32
  }
  func.func @transform_31(%arg0: i32) -> (i32, i32) {
    %c0_i32 = arith.constant 0 : i32
    %c0_i32_0 = arith.constant 0 : i32
    %c0_i32_1 = arith.constant 0 : i32
    return %c0_i32, %c0_i32_0 : i32, i32
  }
  func.func @transform_32(%arg0: i32) -> (i32, i32, i32) {
    %c0_i32 = arith.constant 0 : i32
    %c0_i32_0 = arith.constant 0 : i32
    %c0_i32_1 = arith.constant 0 : i32
    %c0_i32_2 = arith.constant 0 : i32
    return %c0_i32, %c0_i32_0, %c0_i32_1 : i32, i32, i32
  }
  func.func @transform_33(%arg0: i32) -> (i32, i32) {
    %c0_i32 = arith.constant 0 : i32
    %c0_i32_0 = arith.constant 0 : i32
    %c0_i32_1 = arith.constant 0 : i32
    return %c0_i32, %c0_i32_0 : i32, i32
  }
  func.func @transform_34(%arg0: i32) -> (i32, i32) {
    %c0_i32 = arith.constant 0 : i32
    %c0_i32_0 = arith.constant 0 : i32
    return %arg0, %c0_i32 : i32, i32
  }
}

</mosaic_0001>

<llo_original>
// kernel: procgen_resnet_forward.3
$region0: #{procgen_resnet_forward.3}
  #allocation0 [shape = 'u32[]', space=smem, size = 0x4, offset = 0x4, fixed_abs, tag = 'smem constant byte address 0x4 - core index']
  #allocation1 [shape = 'u32[144,128]{1,0:T(1,128)}', space=vmem, size = 0x12000, scoped, tag = 'internal scratch']
  %s0 = inlined_call_operand.vmem [shape: bf16[2,64], index: 0, kind: input, shape index: {}]
  %s1 = inlined_call_operand.vmem [shape: bf16[64,32], index: 1, kind: input, shape index: {}]
  %s2 = inlined_call_operand.vmem [shape: f32[1,32], index: 2, kind: input, shape index: {}]
  %s3 = inlined_call_operand.vmem [shape: bf16[32,128], index: 3, kind: input, shape index: {}]
  %s4 = inlined_call_operand.vmem [shape: f32[1,128], index: 4, kind: input, shape index: {}]
  %s5 = inlined_call_operand.vmem [shape: f32[2,128], index: 5, kind: output, shape index: {}]
  %s6 = sld [smem:[#allocation0]]
  $region30: #{procgen_resnet_forward.3} parent=0
    _
  %s8 = ssub.s32 1, %s6
  %s9 = scalar_select 0, %s8, %s6
  // Predicated region
  $region2: #{procgen_resnet_forward.3} parent=0 // pred_check
    _
  $region3: #{procgen_resnet_forward.3} parent=0 // pred_check_branch
    %11 = sbr.rel (0) target = $region5
  $region4: #{procgen_resnet_forward.3} parent=0 // pred_region
    _
  $region5: #{procgen_resnet_forward.3} parent=0 // pred_fallthru
    _
  // Predicated region
  $region6: #{procgen_resnet_forward.3} parent=0 // pred_check
    _
  $region7: #{procgen_resnet_forward.3} parent=0 // pred_check_branch
    %13 = sbr.rel (0) target = $region9
  $region8: #{procgen_resnet_forward.3} parent=0 // pred_region
    _
  $region9: #{procgen_resnet_forward.3} parent=0 // pred_fallthru
    _
  // Predicated region
  $region10: #{procgen_resnet_forward.3} parent=0 // pred_check
    _
  $region11: #{procgen_resnet_forward.3} parent=0 // pred_check_branch
    %15 = sbr.rel (0) target = $region13
  $region12: #{procgen_resnet_forward.3} parent=0 // pred_region
    _
  $region13: #{procgen_resnet_forward.3} parent=0 // pred_fallthru
    _
  // Predicated region
  $region14: #{procgen_resnet_forward.3} parent=0 // pred_check
    _
  $region15: #{procgen_resnet_forward.3} parent=0 // pred_check_branch
    %17 = sbr.rel (0) target = $region17
  $region16: #{procgen_resnet_forward.3} parent=0 // pred_region
    _
  $region17: #{procgen_resnet_forward.3} parent=0 // pred_fallthru
    _
  // Predicated region
  $region18: #{procgen_resnet_forward.3} parent=0 // pred_check
    _
  $region19: #{procgen_resnet_forward.3} parent=0 // pred_check_branch
    %19 = sbr.rel (0) target = $region21
  $region20: #{procgen_resnet_forward.3} parent=0 // pred_region
    _
  $region21: #{procgen_resnet_forward.3} parent=0 // pred_fallthru
    _
  %v21 = vld [vmem:[%s0] sm:$0x1]
  %v22 = vmax.bf16 %v21, 0
  %v23 = vld [vmem:[%s1] sm:$0xf]
  %v24 = vld [vmem:[%s1 + $0x4] sm:$0xf]
  %v25 = vld [vmem:[%s1 + $0x8] sm:$0xf]
  %v26 = vld [vmem:[%s1 + $0xc] sm:$0xf]
  %v27 = vld [vmem:[%s1 + $0x10] sm:$0xf]
  %v28 = vld [vmem:[%s1 + $0x14] sm:$0xf]
  %v29 = vld [vmem:[%s1 + $0x18] sm:$0xf]
  %v30 = vld [vmem:[%s1 + $0x1c] sm:$0xf]
  %v31 = vld [vmem:[%s2] sm:$0x1]
  %v33 = vlaneseq
  %v34 = vshrl.u32 %v33, 7
  %v35 = vsub.s32 0, %v34
  %v36 = vrot.slane %v31, %v35
  %v46 = vunpack.c.l.b16 %v23
  %v47 = vunpack.c.l.b16 %v24
  %v48 = vunpack.c.l.b16 %v25
  %v49 = vunpack.c.l.b16 %v26
  %v50 = vunpack.c.l.b16 %v27
  %v51 = vunpack.c.l.b16 %v28
  %v52 = vunpack.c.l.b16 %v29
  %v53 = vunpack.c.l.b16 %v30
  %v54 = vpack.c.b16 %v47, %v46
  %v55 = vpack.c.b16 %v49, %v48
  %v56 = vpack.c.b16 %v51, %v50
  %v57 = vpack.c.b16 %v53, %v52
  %vm62 = vcmask 523264
  %v64 = vsel %vm62, %v22, 0
  %66 = vmatprep.subr.bf16.mxu0 0
  %67 = vmatpush1.bf16.msra.mxu0 %v54
  %68 = vmatprep.subr.bf16.mxu0 0
  %69 = vmatpush1.bf16.msra.mxu0 %v55
  %70 = vmatprep.subr.bf16.mxu0 0
  %71 = vmatpush1.bf16.msra.mxu0 %v56
  %72 = vmatprep.subr.bf16.mxu0 0
  %73 = vmatpush1.bf16.msra.mxu0 %v57
  %74 = vmatprep.subr.bf16.mxu0 0
  %75 = vmatpush1.bf16.msra.mxu0 0
  %76 = vmatprep.subr.bf16.mxu0 0
  %77 = vmatpush1.bf16.msra.mxu0 0
  %78 = vmatprep.subr.bf16.mxu0 0
  %79 = vmatpush1.bf16.msra.mxu0 0
  %80 = vmatprep.subr.bf16.mxu0 0
  %81 = vmatpush1.bf16.msra.mxu0 0
  %82 = vmatprep.subr.bf16.mxu0 0
  %83 = vmatpush1.bf16.msra.mxu0 0
  %84 = vmatprep.subr.bf16.mxu0 0
  %85 = vmatpush1.bf16.msra.mxu0 0
  %86 = vmatprep.subr.bf16.mxu0 0
  %87 = vmatpush1.bf16.msra.mxu0 0
  %88 = vmatprep.subr.bf16.mxu0 0
  %89 = vmatpush1.bf16.msra.mxu0 0
  %90 = vmatprep.subr.bf16.mxu0 0
  %91 = vmatpush1.bf16.msra.mxu0 0
  %92 = vmatprep.subr.bf16.mxu0 0
  %93 = vmatpush1.bf16.msra.mxu0 0
  %94 = vmatprep.subr.bf16.mxu0 0
  %95 = vmatpush1.bf16.msra.mxu0 0
  %96 = vmatprep.subr.bf16.mxu0 0
  %97 = vmatpush1.bf16.msra.mxu0 0
  %98 = vmatprep.mubr.bf16.mxu0 0
  %99 = vmatmul.mubr.bf16.gmra.mrb[0].mxu0 %v64
  %v100 = vpop.f32.mrb[0].mxu0
  %v101 = vadd.f32 %v36, %v100
  %v102 = vpop.f32.mrb[0].mxu0
  %v103 = vpop.f32.mrb[0].mxu0
  %v104 = vpop.f32.mrb[0].mxu0
  %105 = vdwg.mxu0
  %v106 = vmax.f32 %v101, 0.0
  %v107 = vpack.c.bf16 %v106, %v106
  %v108 = vld [vmem:[%s3] sm:$0xf]
  %v109 = vld [vmem:[%s3 + $0x4] sm:$0xf]
  %v110 = vld [vmem:[%s3 + $0x8] sm:$0xf]
  %v111 = vld [vmem:[%s3 + $0xc] sm:$0xf]
  %v112 = vld [vmem:[%s4] sm:$0x1]
  %v114 = vlaneseq
  %v115 = vshrl.u32 %v114, 7
  %v116 = vsub.s32 0, %v115
  %v117 = vrot.slane %v112, %v116
  %v123 = vunpack.c.l.b16 %v108
  %v124 = vunpack.c.l.b16 %v109
  %v125 = vunpack.c.l.b16 %v110
  %v126 = vunpack.c.l.b16 %v111
  %v127 = vpack.c.b16 %v124, %v123
  %v128 = vpack.c.b16 %v126, %v125
  %vm131 = vcmask 261120
  %v133 = vsel %vm131, %v107, 0
  %135 = vmatprep.subr.bf16.mxu0 0
  %136 = vmatpush1.bf16.msra.mxu0 %v127
  %137 = vmatprep.subr.bf16.mxu0 0
  %138 = vmatpush1.bf16.msra.mxu0 %v128
  %139 = vmatprep.subr.bf16.mxu0 0
  %140 = vmatpush1.bf16.msra.mxu0 0
  %141 = vmatprep.subr.bf16.mxu0 0
  %142 = vmatpush1.bf16.msra.mxu0 0
  %143 = vmatprep.subr.bf16.mxu0 0
  %144 = vmatpush1.bf16.msra.mxu0 0
  %145 = vmatprep.subr.bf16.mxu0 0
  %146 = vmatpush1.bf16.msra.mxu0 0
  %147 = vmatprep.subr.bf16.mxu0 0
  %148 = vmatpush1.bf16.msra.mxu0 0
  %149 = vmatprep.subr.bf16.mxu0 0
  %150 = vmatpush1.bf16.msra.mxu0 0
  %151 = vmatprep.subr.bf16.mxu0 0
  %152 = vmatpush1.bf16.msra.mxu0 0
  %153 = vmatprep.subr.bf16.mxu0 0
  %154 = vmatpush1.bf16.msra.mxu0 0
  %155 = vmatprep.subr.bf16.mxu0 0
  %156 = vmatpush1.bf16.msra.mxu0 0
  %157 = vmatprep.subr.bf16.mxu0 0
  %158 = vmatpush1.bf16.msra.mxu0 0
  %159 = vmatprep.subr.bf16.mxu0 0
  %160 = vmatpush1.bf16.msra.mxu0 0
  %161 = vmatprep.subr.bf16.mxu0 0
  %162 = vmatpush1.bf16.msra.mxu0 0
  %163 = vmatprep.subr.bf16.mxu0 0
  %164 = vmatpush1.bf16.msra.mxu0 0
  %165 = vmatprep.subr.bf16.mxu0 0
  %166 = vmatpush1.bf16.msra.mxu0 0
  %167 = vmatprep.mubr.bf16.mxu0 0
  %168 = vmatmul.mubr.bf16.gmra.mrb[0].mxu0 %v133
  %v169 = vpop.f32.mrb[0].mxu0
  %v170 = vadd.f32 %v117, %v169
  %v171 = vpop.f32.mrb[0].mxu0
  %v172 = vpop.f32.mrb[0].mxu0
  %v173 = vpop.f32.mrb[0].mxu0
  %174 = vdwg.mxu0
  %175 = vst [vmem:[%s5] sm:$0x3] %v170
  // Predicated region
  $region22: #{procgen_resnet_forward.3} parent=0 // pred_check
    _
  $region23: #{procgen_resnet_forward.3} parent=0 // pred_check_branch
    %177 = sbr.rel (0) target = $region25
  $region24: #{procgen_resnet_forward.3} parent=0 // pred_region
    _
  $region25: #{procgen_resnet_forward.3} parent=0 // pred_fallthru
    _
  // Predicated region
  $region26: #{procgen_resnet_forward.3} parent=0 // pred_check
    _
  $region27: #{procgen_resnet_forward.3} parent=0 // pred_check_branch
    %179 = sbr.rel (0) target = $region29
  $region28: #{procgen_resnet_forward.3} parent=0 // pred_region
    _
  $region29: #{procgen_resnet_forward.3} parent=0 // pred_fallthru
    _

// kernel: procgen_resnet_forward.2
$region0: #{procgen_resnet_forward.2}
  #allocation0 [shape = 'u32[]', space=smem, size = 0x4, offset = 0x4, fixed_abs, tag = 'smem constant byte address 0x4 - core index']
  #allocation1 [shape = 'u32[144,128]{1,0:T(1,128)}', space=vmem, size = 0x12000, scoped, tag = 'internal scratch']
  #allocation2 [shape = 'f32[32,128]{1,0:T(8,128)}', space=vmem, size = 0x4000, scoped, tag = 'scratch operand']
  %s0 = inlined_call_operand.smem [shape: u32[35], index: -1, kind: input, shape index: {}]
  %s1 = sld [smem:[%s0]]
  %s2 = scalar_lea.smem %s0, 1
  %s3 = sld [smem:[%s2]]
  %s4 = scalar_lea.smem %s0, 2
  %s5 = sld [smem:[%s4]]
  %s6 = scalar_lea.smem %s0, 3
  %s7 = sld [smem:[%s6]]
  %s8 = scalar_lea.smem %s0, 4
  %s9 = sld [smem:[%s8]]
  %s10 = scalar_lea.smem %s0, 5
  %s11 = sld [smem:[%s10]]
  %s12 = scalar_lea.smem %s0, 6
  %s13 = sld [smem:[%s12]]
  %s14 = scalar_lea.smem %s0, 7
  %s15 = sld [smem:[%s14]]
  %s16 = scalar_lea.smem %s0, 8
  %s17 = sld [smem:[%s16]]
  %s18 = scalar_lea.smem %s0, 9
  %s19 = sld [smem:[%s18]]
  %s20 = scalar_lea.smem %s0, 10
  %s21 = sld [smem:[%s20]]
  %s22 = scalar_lea.smem %s0, 11
  %s23 = sld [smem:[%s22]]
  %s24 = scalar_lea.smem %s0, 12
  %s25 = sld [smem:[%s24]]
  %s26 = scalar_lea.smem %s0, 13
  %s27 = sld [smem:[%s26]]
  %s28 = scalar_lea.smem %s0, 14
  %s29 = sld [smem:[%s28]]
  %s30 = scalar_lea.smem %s0, 15
  %s31 = sld [smem:[%s30]]
  %s32 = scalar_lea.smem %s0, 16
  %s33 = sld [smem:[%s32]]
  %s34 = scalar_lea.smem %s0, 17
  %s35 = sld [smem:[%s34]]
  %s36 = scalar_lea.smem %s0, 18
  %s37 = sld [smem:[%s36]]
  %s38 = scalar_lea.smem %s0, 19
  %s39 = sld [smem:[%s38]]
  %s40 = scalar_lea.smem %s0, 20
  %s41 = sld [smem:[%s40]]
  %s42 = scalar_lea.smem %s0, 21
  %s43 = sld [smem:[%s42]]
  %s44 = scalar_lea.smem %s0, 22
  %s45 = sld [smem:[%s44]]
  %s46 = scalar_lea.smem %s0, 23
  %s47 = sld [smem:[%s46]]
  %s48 = scalar_lea.smem %s0, 24
  %s49 = sld [smem:[%s48]]
  %s50 = scalar_lea.smem %s0, 25
  %s51 = sld [smem:[%s50]]
  %s52 = scalar_lea.smem %s0, 26
  %s53 = sld [smem:[%s52]]
  %s54 = scalar_lea.smem %s0, 27
  %s55 = sld [smem:[%s54]]
  %s56 = scalar_lea.smem %s0, 28
  %s57 = sld [smem:[%s56]]
  %s58 = scalar_lea.smem %s0, 29
  %s59 = sld [smem:[%s58]]
  %s60 = scalar_lea.smem %s0, 30
  %s61 = sld [smem:[%s60]]
  %s62 = scalar_lea.smem %s0, 31
  %s63 = sld [smem:[%s62]]
  %s64 = scalar_lea.smem %s0, 32
  %s65 = sld [smem:[%s64]]
  %s66 = scalar_lea.smem %s0, 33
  %s67 = sld [smem:[%s66]]
  %s68 = scalar_lea.smem %s0, 34
  %s69 = sld [smem:[%s68]]
  %s70 = sld [smem:[#allocation0]]
  $region162: #{procgen_resnet_forward.2} parent=0
    _
  %s72 = ssub.s32 1, %s70
  %s73 = scalar_select 0, %s72, %s70
  $region1: #{procgen_resnet_forward.2} parent=0
    #allocation3 [shape = 'u8[24576]{0}', space=vmem, size = 0x6000, scoped, tag = 'input window, operand 26, single buffered']
    #allocation4 [shape = 's32[1]{0}', space=sflag, size = 0x4, scoped, tag = 'scoped memory for procgen_resnet_forward.2']
    #allocation5 [shape = 'u8[24576]{0}', space=vmem, size = 0x6000, scoped, tag = 'input window, operand 28, single buffered']
    #allocation6 [shape = 's32[1]{0}', space=sflag, size = 0x4, scoped, tag = 'scoped memory for procgen_resnet_forward.2']
    #allocation7 [shape = 'u8[24576]{0}', space=vmem, size = 0x6000, scoped, tag = 'input window, operand 30, single buffered']
    #allocation8 [shape = 'u8[24576]{0}', space=vmem, size = 0x6000, scoped, tag = 'input window, operand 32, single buffered']
    #allocation9 [shape = 's32[1]{0}', space=sflag, size = 0x4, scoped, tag = 'scoped memory for procgen_resnet_forward.2']
    %74 = vsyncpa [#allocation4], 0
    %75 = vsyncpa [#allocation6], 0
    %76 = vsyncpa [#allocation9], 0
    // Predicated region
    $region2: #{procgen_resnet_forward.2} parent=1 // pred_check
      _
    $region3: #{procgen_resnet_forward.2} parent=1 // pred_check_branch
      %78 = sbr.rel (0) target = $region5
    $region4: #{procgen_resnet_forward.2} parent=1 // pred_region
      _
    $region5: #{procgen_resnet_forward.2} parent=1 // pred_fallthru
      _
    // Predicated region
    $region6: #{procgen_resnet_forward.2} parent=1 // pred_check
      _
    $region7: #{procgen_resnet_forward.2} parent=1 // pred_check_branch
      %80 = sbr.rel (0) target = $region9
    $region8: #{procgen_resnet_forward.2} parent=1 // pred_region
      _
    $region9: #{procgen_resnet_forward.2} parent=1 // pred_fallthru
      _
    // Predicated region
    $region10: #{procgen_resnet_forward.2} parent=1 // pred_check
      _
    $region11: #{procgen_resnet_forward.2} parent=1 // pred_check_branch
      %82 = sbr.rel (0) target = $region13
    $region12: #{procgen_resnet_forward.2} parent=1 // pred_region
      _
    $region13: #{procgen_resnet_forward.2} parent=1 // pred_fallthru
      _
    // Predicated region
    $region14: #{procgen_resnet_forward.2} parent=1 // pred_check
      _
    $region15: #{procgen_resnet_forward.2} parent=1 // pred_check_branch
      %84 = sbr.rel (0) target = $region17
    $region16: #{procgen_resnet_forward.2} parent=1 // pred_region
      _
    $region17: #{procgen_resnet_forward.2} parent=1 // pred_fallthru
      _
    // Predicated region
    $region18: #{procgen_resnet_forward.2} parent=1 // pred_check
      _
    $region19: #{procgen_resnet_forward.2} parent=1 // pred_check_branch
      %86 = sbr.rel (0) target = $region21
    $region20: #{procgen_resnet_forward.2} parent=1 // pred_region
      _
    $region21: #{procgen_resnet_forward.2} parent=1 // pred_fallthru
      _
    // Predicated region
    $region22: #{procgen_resnet_forward.2} parent=1 // pred_check
      _
    $region23: #{procgen_resnet_forward.2} parent=1 // pred_check_branch
      %88 = sbr.rel (0) target = $region25
    $region24: #{procgen_resnet_forward.2} parent=1 // pred_region
      _
    $region25: #{procgen_resnet_forward.2} parent=1 // pred_fallthru
      _
    // Predicated region
    $region26: #{procgen_resnet_forward.2} parent=1 // pred_check
      _
    $region27: #{procgen_resnet_forward.2} parent=1 // pred_check_branch
      %90 = sbr.rel (0) target = $region29
    $region28: #{procgen_resnet_forward.2} parent=1 // pred_region
      _
    $region29: #{procgen_resnet_forward.2} parent=1 // pred_fallthru
      _
    // Predicated region
    $region30: #{procgen_resnet_forward.2} parent=1 // pred_check
      _
    $region31: #{procgen_resnet_forward.2} parent=1 // pred_check_branch
      %92 = sbr.rel (0) target = $region33
    $region32: #{procgen_resnet_forward.2} parent=1 // pred_region
      _
    $region33: #{procgen_resnet_forward.2} parent=1 // pred_fallthru
      _
    // Predicated region
    $region34: #{procgen_resnet_forward.2} parent=1 // pred_check
      _
    $region35: #{procgen_resnet_forward.2} parent=1 // pred_check_branch
      %94 = sbr.rel (0) target = $region37
    $region36: #{procgen_resnet_forward.2} parent=1 // pred_region
      _
    $region37: #{procgen_resnet_forward.2} parent=1 // pred_fallthru
      _
    // Predicated region
    $region38: #{procgen_resnet_forward.2} parent=1 // pred_check
      _
    $region39: #{procgen_resnet_forward.2} parent=1 // pred_check_branch
      %96 = sbr.rel (0) target = $region41
    $region40: #{procgen_resnet_forward.2} parent=1 // pred_region
      _
    $region41: #{procgen_resnet_forward.2} parent=1 // pred_fallthru
      _
    // Predicated region
    $region42: #{procgen_resnet_forward.2} parent=1 // pred_check
      _
    $region43: #{procgen_resnet_forward.2} parent=1 // pred_check_branch
      %98 = sbr.rel (0) target = $region45
    $region44: #{procgen_resnet_forward.2} parent=1 // pred_region
      _
    $region45: #{procgen_resnet_forward.2} parent=1 // pred_fallthru
      _
    // Predicated region
    $region46: #{procgen_resnet_forward.2} parent=1 // pred_check
      _
    $region47: #{procgen_resnet_forward.2} parent=1 // pred_check_branch
      %100 = sbr.rel (0) target = $region49
    $region48: #{procgen_resnet_forward.2} parent=1 // pred_region
      _
    $region49: #{procgen_resnet_forward.2} parent=1 // pred_fallthru
      _
    // Predicated region
    $region50: #{procgen_resnet_forward.2} parent=1 // pred_check
      _
    $region51: #{procgen_resnet_forward.2} parent=1 // pred_check_branch
      %102 = sbr.rel (0) target = $region53
    $region52: #{procgen_resnet_forward.2} parent=1 // pred_region
      _
    $region53: #{procgen_resnet_forward.2} parent=1 // pred_fallthru
      _
    // Predicated region
    $region54: #{procgen_resnet_forward.2} parent=1 // pred_check
      _
    $region55: #{procgen_resnet_forward.2} parent=1 // pred_check_branch
      %104 = sbr.rel (0) target = $region57
    $region56: #{procgen_resnet_forward.2} parent=1 // pred_region
      _
    $region57: #{procgen_resnet_forward.2} parent=1 // pred_fallthru
      _
    // Predicated region
    $region58: #{procgen_resnet_forward.2} parent=1 // pred_check
      _
    $region59: #{procgen_resnet_forward.2} parent=1 // pred_check_branch
      %106 = sbr.rel (0) target = $region61
    $region60: #{procgen_resnet_forward.2} parent=1 // pred_region
      _
    $region61: #{procgen_resnet_forward.2} parent=1 // pred_fallthru
      _
    // Predicated region
    $region62: #{procgen_resnet_forward.2} parent=1 // pred_check
      _
    $region63: #{procgen_resnet_forward.2} parent=1 // pred_check_branch
      %108 = sbr.rel (0) target = $region65
    $region64: #{procgen_resnet_forward.2} parent=1 // pred_region
      _
    $region65: #{procgen_resnet_forward.2} parent=1 // pred_fallthru
      _
    // Predicated region
    $region66: #{procgen_resnet_forward.2} parent=1 // pred_check
      _
    $region67: #{procgen_resnet_forward.2} parent=1 // pred_check_branch
      %110 = sbr.rel (0) target = $region69
    $region68: #{procgen_resnet_forward.2} parent=1 // pred_region
      _
    $region69: #{procgen_resnet_forward.2} parent=1 // pred_fallthru
      _
    // Predicated region
    $region70: #{procgen_resnet_forward.2} parent=1 // pred_check
      _
    $region71: #{procgen_resnet_forward.2} parent=1 // pred_check_branch
      %112 = sbr.rel (0) target = $region73
    $region72: #{procgen_resnet_forward.2} parent=1 // pred_region
      _
    $region73: #{procgen_resnet_forward.2} parent=1 // pred_fallthru
      _
    // Predicated region
    $region74: #{procgen_resnet_forward.2} parent=1 // pred_check
      _
    $region75: #{procgen_resnet_forward.2} parent=1 // pred_check_branch
      %114 = sbr.rel (0) target = $region77
    $region76: #{procgen_resnet_forward.2} parent=1 // pred_region
      _
    $region77: #{procgen_resnet_forward.2} parent=1 // pred_fallthru
      _
    // Predicated region
    $region78: #{procgen_resnet_forward.2} parent=1 // pred_check
      _
    $region79: #{procgen_resnet_forward.2} parent=1 // pred_check_branch
      %116 = sbr.rel (0) target = $region81
    $region80: #{procgen_resnet_forward.2} parent=1 // pred_region
      _
    $region81: #{procgen_resnet_forward.2} parent=1 // pred_fallthru
      _
    // Predicated region
    $region82: #{procgen_resnet_forward.2} parent=1 // pred_check
      _
    $region83: #{procgen_resnet_forward.2} parent=1 // pred_check_branch
      %118 = sbr.rel (0) target = $region85
    $region84: #{procgen_resnet_forward.2} parent=1 // pred_region
      _
    $region85: #{procgen_resnet_forward.2} parent=1 // pred_fallthru
      _
    // Predicated region
    $region86: #{procgen_resnet_forward.2} parent=1 // pred_check
      _
    $region87: #{procgen_resnet_forward.2} parent=1 // pred_check_branch
      %120 = sbr.rel (0) target = $region89
    $region88: #{procgen_resnet_forward.2} parent=1 // pred_region
      _
    $region89: #{procgen_resnet_forward.2} parent=1 // pred_fallthru
      _
    // Predicated region
    $region90: #{procgen_resnet_forward.2} parent=1 // pred_check
      _
    $region91: #{procgen_resnet_forward.2} parent=1 // pred_check_branch
      %122 = sbr.rel (0) target = $region93
    $region92: #{procgen_resnet_forward.2} parent=1 // pred_region
      _
    $region93: #{procgen_resnet_forward.2} parent=1 // pred_fallthru
      _
    // Predicated region
    $region94: #{procgen_resnet_forward.2} parent=1 // pred_check
      _
    $region95: #{procgen_resnet_forward.2} parent=1 // pred_check_branch
      %124 = sbr.rel (0) target = $region97
    $region96: #{procgen_resnet_forward.2} parent=1 // pred_region
      _
    $region97: #{procgen_resnet_forward.2} parent=1 // pred_fallthru
      _
    // Predicated region
    $region98: #{procgen_resnet_forward.2} parent=1 // pred_check
      _
    $region99: #{procgen_resnet_forward.2} parent=1 // pred_check_branch
      %126 = sbr.rel (0) target = $region101
    $region100: #{procgen_resnet_forward.2} parent=1 // pred_region
      _
    $region101: #{procgen_resnet_forward.2} parent=1 // pred_fallthru
      _
    // Predicated region
    $region102: #{procgen_resnet_forward.2} parent=1 // pred_check
      _
    $region103: #{procgen_resnet_forward.2} parent=1 // pred_check_branch
      %128 = sbr.rel (0) target = $region105
    $region104: #{procgen_resnet_forward.2} parent=1 // pred_region
      _
    $region105: #{procgen_resnet_forward.2} parent=1 // pred_fallthru
      _
    // Predicated region
    $region106: #{procgen_resnet_forward.2} parent=1 // pred_check
      _
    $region107: #{procgen_resnet_forward.2} parent=1 // pred_check_branch
      %130 = sbr.rel (0) target = $region109
    $region108: #{procgen_resnet_forward.2} parent=1 // pred_region
      %s132 = ssub.s32 768, 768
      %133 = vsyncadd [#allocation4], %s132
      %s134 = sshll.u32 [#allocation3], 4
      %s135 = int_to_ptr.vmem [resolvable:$true] %s134
      %140 = dma.hbm_to_vmem [thread:$0]  %s53, 768, %s135, [#allocation4], 64, 64, 4
    $region109: #{procgen_resnet_forward.2} parent=1 // pred_fallthru
      _
    // Predicated region
    $region110: #{procgen_resnet_forward.2} parent=1 // pred_check
      _
    $region111: #{procgen_resnet_forward.2} parent=1 // pred_check_branch
      %142 = sbr.rel (0) target = $region113
    $region112: #{procgen_resnet_forward.2} parent=1 // pred_region
      _
    $region113: #{procgen_resnet_forward.2} parent=1 // pred_fallthru
      _
    // Predicated region
    $region114: #{procgen_resnet_forward.2} parent=1 // pred_check
      _
    $region115: #{procgen_resnet_forward.2} parent=1 // pred_check_branch
      %144 = sbr.rel (0) target = $region117
    $region116: #{procgen_resnet_forward.2} parent=1 // pred_region
      %s146 = ssub.s32 768, 768
      %147 = vsyncadd [#allocation6], %s146
      %s148 = sshll.u32 [#allocation5], 4
      %s149 = int_to_ptr.vmem [resolvable:$true] %s148
      %154 = dma.hbm_to_vmem [thread:$0]  %s57, 768, %s149, [#allocation6], 64, 64, 4
    $region117: #{procgen_resnet_forward.2} parent=1 // pred_fallthru
      _
    // Predicated region
    $region118: #{procgen_resnet_forward.2} parent=1 // pred_check
      _
    $region119: #{procgen_resnet_forward.2} parent=1 // pred_check_branch
      %156 = sbr.rel (0) target = $region121
    $region120: #{procgen_resnet_forward.2} parent=1 // pred_region
      _
    $region121: #{procgen_resnet_forward.2} parent=1 // pred_fallthru
      _
    // Predicated region
    $region122: #{procgen_resnet_forward.2} parent=1 // pred_check
      _
    $region123: #{procgen_resnet_forward.2} parent=1 // pred_check_branch
      %158 = sbr.rel (0) target = $region125
    $region124: #{procgen_resnet_forward.2} parent=1 // pred_region
      %s160 = ssub.s32 768, 768
      %161 = vsyncadd [#allocation6], %s160
      %s162 = sshll.u32 [#allocation7], 4
      %s163 = int_to_ptr.vmem [resolvable:$true] %s162
      %168 = dma.hbm_to_vmem [thread:$0]  %s61, 768, %s163, [#allocation6], 64, 64, 4
    $region125: #{procgen_resnet_forward.2} parent=1 // pred_fallthru
      _
    // Predicated region
    $region126: #{procgen_resnet_forward.2} parent=1 // pred_check
      _
    $region127: #{procgen_resnet_forward.2} parent=1 // pred_check_branch
      %170 = sbr.rel (0) target = $region129
    $region128: #{procgen_resnet_forward.2} parent=1 // pred_region
      _
    $region129: #{procgen_resnet_forward.2} parent=1 // pred_fallthru
      _
    // Predicated region
    $region130: #{procgen_resnet_forward.2} parent=1 // pred_check
      _
    $region131: #{procgen_resnet_forward.2} parent=1 // pred_check_branch
      %172 = sbr.rel (0) target = $region133
    $region132: #{procgen_resnet_forward.2} parent=1 // pred_region
      %s174 = ssub.s32 768, 768
      %175 = vsyncadd [#allocation9], %s174
      %s176 = sshll.u32 [#allocation8], 4
      %s177 = int_to_ptr.vmem [resolvable:$true] %s176
      %182 = dma.hbm_to_vmem [thread:$0]  %s65, 768, %s177, [#allocation9], 64, 64, 4
    $region133: #{procgen_resnet_forward.2} parent=1 // pred_fallthru
      _
    // Predicated region
    $region134: #{procgen_resnet_forward.2} parent=1 // pred_check
      _
    $region135: #{procgen_resnet_forward.2} parent=1 // pred_check_branch
      %184 = sbr.rel (0) target = $region137
    $region136: #{procgen_resnet_forward.2} parent=1 // pred_region
      _
    $region137: #{procgen_resnet_forward.2} parent=1 // pred_fallthru
      _
    // Predicated region
    $region138: #{procgen_resnet_forward.2} parent=1 // pred_check
      _
    $region139: #{procgen_resnet_forward.2} parent=1 // pred_check_branch
      %186 = sbr.rel (0) target = $region141
    $region140: #{procgen_resnet_forward.2} parent=1 // pred_region
      %187 = dma.done [#allocation4], 768
    $region141: #{procgen_resnet_forward.2} parent=1 // pred_fallthru
      _
    // Predicated region
    $region142: #{procgen_resnet_forward.2} parent=1 // pred_check
      _
    $region143: #{procgen_resnet_forward.2} parent=1 // pred_check_branch
      %189 = sbr.rel (0) target = $region145
    $region144: #{procgen_resnet_forward.2} parent=1 // pred_region
      %190 = dma.done [#allocation6], 768
    $region145: #{procgen_resnet_forward.2} parent=1 // pred_fallthru
      _
    // Predicated region
    $region146: #{procgen_resnet_forward.2} parent=1 // pred_check
      _
    $region147: #{procgen_resnet_forward.2} parent=1 // pred_check_branch
      %192 = sbr.rel (0) target = $region149
    $region148: #{procgen_resnet_forward.2} parent=1 // pred_region
      %193 = dma.done [#allocation6], 768
    $region149: #{procgen_resnet_forward.2} parent=1 // pred_fallthru
      _
    // Predicated region
    $region150: #{procgen_resnet_forward.2} parent=1 // pred_check
      _
    $region151: #{procgen_resnet_forward.2} parent=1 // pred_check_branch
      %195 = sbr.rel (0) target = $region153
    $region152: #{procgen_resnet_forward.2} parent=1 // pred_region
      %196 = dma.done [#allocation9], 768
    $region153: #{procgen_resnet_forward.2} parent=1 // pred_fallthru
      _
    %v198 = vld [vmem:[%s1] sm:$0xf]
    %v199 = vld [vmem:[%s1 + $0x4] sm:$0xf]
    %v200 = vld [vmem:[%s1 + $0x8] sm:$0xf]
    %v201 = vld [vmem:[%s1 + $0xc] sm:$0xf]
    %v202 = vunpack.c.l.bf16 %v198
    %v203 = vunpack.c.l.bf16 %v199
    %v204 = vunpack.c.l.bf16 %v200
    %v205 = vunpack.c.l.bf16 %v201
    %v206 = vlaneseq
    %v207 = vshrl.u32 %v206, 7
    %v208 = vadd.s32 %v207, 8
    %v209 = vadd.s32 %v207, 16
    %v210 = vadd.s32 %v207, 24
    %vm211 = vcmp.lt.s32.totalorder %v207, 0
    %v212 = vsub.s32 0, %v207
    %v213 = vsel %vm211, %v212, %v207
    %v214 = vshrl.u32 %v213, 4
    %v215 = vand.u32 %v213, 15
    %v216 = vsub.s32 0, %v215
    %v217 = vsel %vm211, %v216, %v215
    %vm218 = vcmp.lt.s32.totalorder %v208, 0
    %v219 = vsub.s32 0, %v208
    %v220 = vsel %vm218, %v219, %v208
    %v221 = vshrl.u32 %v220, 4
    %v222 = vand.u32 %v220, 15
    %v223 = vsub.s32 0, %v222
    %v224 = vsel %vm218, %v223, %v222
    %vm225 = vcmp.lt.s32.totalorder %v209, 0
    %v226 = vsub.s32 0, %v209
    %v227 = vsel %vm225, %v226, %v209
    %v228 = vshrl.u32 %v227, 4
    %v229 = vand.u32 %v227, 15
    %v230 = vsub.s32 0, %v229
    %v231 = vsel %vm225, %v230, %v229
    %vm232 = vcmp.lt.s32.totalorder %v210, 0
    %v233 = vsub.s32 0, %v210
    %v234 = vsel %vm232, %v233, %v210
    %v235 = vshrl.u32 %v234, 4
    %v236 = vand.u32 %v234, 15
    %v237 = vsub.s32 0, %v236
    %v238 = vsel %vm232, %v237, %v236
    %vm239 = vcmp.ne.s32.totalorder %v217, 0
    %vm240 = vcmp.ne.s32.totalorder %v224, 0
    %vm241 = vcmp.ne.s32.totalorder %v231, 0
    %vm242 = vcmp.ne.s32.totalorder %v238, 0
    %vm243 = vcmp.lt.s32.totalorder %v217, 0
    %vm244 = vcmp.lt.s32.totalorder %v224, 0
    %vm245 = vcmp.lt.s32.totalorder %v231, 0
    %vm246 = vcmp.lt.s32.totalorder %v238, 0
    %vm247 = vmand %vm243, %vm239
    %vm248 = vmand %vm244, %vm240
    %vm249 = vmand %vm245, %vm241
    %vm250 = vmand %vm246, %vm242
    %v251 = vadd.s32 %v217, 16
    %v252 = vadd.s32 %v224, 16
    %v253 = vadd.s32 %v231, 16
    %v254 = vadd.s32 %v238, 16
    %v255 = vsel %vm247, %v251, %v217
    %v256 = vsel %vm248, %v252, %v224
    %v257 = vsel %vm249, %v253, %v231
    %v258 = vsel %vm250, %v254, %v238
    %vm259 = vcmp.eq.s32.totalorder %v255, 0
    %vm260 = vcmp.eq.s32.totalorder %v256, 0
    %vm261 = vcmp.eq.s32.totalorder %v257, 0
    %vm262 = vcmp.eq.s32.totalorder %v258, 0
    %v263 = vrot.slane %v202, 7
    %v264 = vrot.slane %v203, 7
    %v265 = vrot.slane %v204, 7
    %v266 = vrot.slane %v205, 7
    %vm267 = vcmp.lt.s32.totalorder %v207, 1
    %v268 = vsel %vm267, %v265, %v266
    %v269 = vsel %vm267, %v264, %v265
    %v270 = vsel %vm267, %v263, %v264
    %v271 = vsel %vm267, %v266, %v263
    %v272 = vsel %vm259, 1, 0
    %v273 = vsel %vm260, 1, 0
    %v274 = vsel %vm261, 1, 0
    %v275 = vsel %vm262, 1, 0
    %vm276 = vcmp.eq.s32.totalorder %v272, 1
    %vm277 = vcmp.eq.s32.totalorder %v273, 1
    %vm278 = vcmp.eq.s32.totalorder %v274, 1
    %vm279 = vcmp.eq.s32.totalorder %v275, 1
    %v280 = vsel %vm276, 0.0, %v271
    %v281 = vsel %vm277, 0.0, %v270
    %v282 = vsel %vm278, 0.0, %v269
    %v283 = vsel %vm279, 0.0, %v268
    %vm284 = vcmp.eq.s32.totalorder %v255, 15
    %vm285 = vcmp.eq.s32.totalorder %v256, 15
    %vm286 = vcmp.eq.s32.totalorder %v257, 15
    %vm287 = vcmp.eq.s32.totalorder %v258, 15
    %v288 = vrot.slane %v202, 1
    %v289 = vrot.slane %v203, 1
    %v290 = vrot.slane %v204, 1
    %v291 = vrot.slane %v205, 1
    %vm292 = vcmp.lt.s32.totalorder %v207, 7
    %v293 = vsel %vm292, %v290, %v291
    %v294 = vsel %vm292, %v289, %v290
    %v295 = vsel %vm292, %v288, %v289
    %v296 = vsel %vm292, %v291, %v288
    %v297 = vsel %vm284, 1, 0
    %v298 = vsel %vm285, 1, 0
    %v299 = vsel %vm286, 1, 0
    %v300 = vsel %vm287, 1, 0
    %vm301 = vcmp.eq.s32.totalorder %v297, 1
    %vm302 = vcmp.eq.s32.totalorder %v298, 1
    %vm303 = vcmp.eq.s32.totalorder %v299, 1
    %vm304 = vcmp.eq.s32.totalorder %v300, 1
    %v305 = vsel %vm301, 0.0, %v295
    %v306 = vsel %vm302, 0.0, %v294
    %v307 = vsel %vm303, 0.0, %v293
    %v308 = vsel %vm304, 0.0, %v296
    %v309 = vld [vmem:[%s5] sm:$0x1]
    %v310 = vpack.c.bf16 %v281, %v280
    %v311 = vpack.c.bf16 %v283, %v282
    %v312 = vld [vmem:[%s3] sm:$0xf]
    %v313 = vld [vmem:[%s3 + $0x4] sm:$0xf]
    %v314 = vld [vmem:[%s3 + $0x8] sm:$0xf]
    %v315 = vld [vmem:[%s3 + $0xc] sm:$0xf]
    %v316 = vld [vmem:[%s3 + $0x10] sm:$0xf]
    %v317 = vld [vmem:[%s3 + $0x14] sm:$0xf]
    %v318 = vld [vmem:[%s3 + $0x18] sm:$0xf]
    %v319 = vld [vmem:[%s3 + $0x1c] sm:$0xf]
    %v328 = vunpack.c.l.b16 %v312
    %v329 = vunpack.c.l.b16 %v313
    %v330 = vunpack.c.l.b16 %v314
    %v331 = vunpack.c.l.b16 %v315
    %v332 = vunpack.c.l.b16 %v316
    %v333 = vunpack.c.l.b16 %v317
    %v334 = vunpack.c.l.b16 %v318
    %v335 = vunpack.c.l.b16 %v319
    %v336 = vpack.c.b16 %v329, %v328
    %v337 = vpack.c.b16 %v331, %v330
    %v338 = vpack.c.b16 %v333, %v332
    %v339 = vpack.c.b16 %v335, %v334
    %vm344 = vcmask 523264
    %v346 = vsel %vm344, %v310, 0
    %v349 = vsel %vm344, %v311, 0
    %351 = vmatprep.subr.bf16.mxu0 0
    %352 = vmatpush1.bf16.msra.mxu0 %v336
    %353 = vmatprep.subr.bf16.mxu0 0
    %354 = vmatpush1.bf16.msra.mxu0 %v337
    %355 = vmatprep.subr.bf16.mxu0 0
    %356 = vmatpush1.bf16.msra.mxu0 %v338
    %357 = vmatprep.subr.bf16.mxu0 0
    %358 = vmatpush1.bf16.msra.mxu0 %v339
    %359 = vmatprep.subr.bf16.mxu0 0
    %360 = vmatpush1.bf16.msra.mxu0 0
    %361 = vmatprep.subr.bf16.mxu0 0
    %362 = vmatpush1.bf16.msra.mxu0 0
    %363 = vmatprep.subr.bf16.mxu0 0
    %364 = vmatpush1.bf16.msra.mxu0 0
    %365 = vmatprep.subr.bf16.mxu0 0
    %366 = vmatpush1.bf16.msra.mxu0 0
    %367 = vmatprep.subr.bf16.mxu0 0
    %368 = vmatpush1.bf16.msra.mxu0 0
    %369 = vmatprep.subr.bf16.mxu0 0
    %370 = vmatpush1.bf16.msra.mxu0 0
    %371 = vmatprep.subr.bf16.mxu0 0
    %372 = vmatpush1.bf16.msra.mxu0 0
    %373 = vmatprep.subr.bf16.mxu0 0
    %374 = vmatpush1.bf16.msra.mxu0 0
    %375 = vmatprep.subr.bf16.mxu0 0
    %376 = vmatpush1.bf16.msra.mxu0 0
    %377 = vmatprep.subr.bf16.mxu0 0
    %378 = vmatpush1.bf16.msra.mxu0 0
    %379 = vmatprep.subr.bf16.mxu0 0
    %380 = vmatpush1.bf16.msra.mxu0 0
    %381 = vmatprep.subr.bf16.mxu0 0
    %382 = vmatpush1.bf16.msra.mxu0 0
    %383 = vmatprep.mubr.bf16.mxu0 0
    %384 = vmatmul.mubr.bf16.gmra.mrb[0].mxu0 %v346
    %v385 = vpop.f32.mrb[0].mxu0
    %v386 = vadd.f32 0.0, %v385
    %v387 = vpop.f32.mrb[0].mxu0
    %v388 = vpop.f32.mrb[0].mxu0
    %v389 = vadd.f32 0.0, %v388
    %v390 = vpop.f32.mrb[0].mxu0
    %391 = vmatprep.mubr.bf16.mxu0 0
    %392 = vmatmul.mubr.bf16.gmra.mrb[0].mxu0 %v349
    %v393 = vpop.f32.mrb[0].mxu0
    %v394 = vadd.f32 0.0, %v393
    %v395 = vpop.f32.mrb[0].mxu0
    %v396 = vpop.f32.mrb[0].mxu0
    %v397 = vadd.f32 0.0, %v396
    %v398 = vpop.f32.mrb[0].mxu0
    %399 = vdwg.mxu0
    %v401 = vlaneseq
    %v402 = vshrl.u32 %v401, 7
    %v403 = vsub.s32 0, %v402
    %v404 = vrot.slane %v309, %v403
    %v406 = vadd.f32 %v404, %v386
    %v407 = vadd.f32 %v404, %v389
    %v408 = vadd.f32 %v404, %v394
    %v409 = vadd.f32 %v404, %v397
    %s410 = scalar_lea.vmem %s3, 32
    %v411 = vld [vmem:[%s410] sm:$0xf]
    %v412 = vld [vmem:[%s410 + $0x4] sm:$0xf]
    %v413 = vld [vmem:[%s410 + $0x8] sm:$0xf]
    %v414 = vld [vmem:[%s410 + $0xc] sm:$0xf]
    %v415 = vld [vmem:[%s410 + $0x10] sm:$0xf]
    %v416 = vld [vmem:[%s410 + $0x14] sm:$0xf]
    %v417 = vld [vmem:[%s410 + $0x18] sm:$0xf]
    %v418 = vld [vmem:[%s410 + $0x1c] sm:$0xf]
    %v423 = vunpack.c.l.b16 %v198
    %v424 = vunpack.c.l.b16 %v199
    %v425 = vunpack.c.l.b16 %v200
    %v426 = vunpack.c.l.b16 %v201
    %v427 = vpack.c.b16 %v424, %v423
    %v428 = vpack.c.b16 %v426, %v425
    %v437 = vunpack.c.l.b16 %v411
    %v438 = vunpack.c.l.b16 %v412
    %v439 = vunpack.c.l.b16 %v413
    %v440 = vunpack.c.l.b16 %v414
    %v441 = vunpack.c.l.b16 %v415
    %v442 = vunpack.c.l.b16 %v416
    %v443 = vunpack.c.l.b16 %v417
    %v444 = vunpack.c.l.b16 %v418
    %v445 = vpack.c.b16 %v438, %v437
    %v446 = vpack.c.b16 %v440, %v439
    %v447 = vpack.c.b16 %v442, %v441
    %v448 = vpack.c.b16 %v444, %v443
    %v454 = vsel %vm344, %v427, 0
    %v457 = vsel %vm344, %v428, 0
    %459 = vmatprep.subr.bf16.mxu0 0
    %460 = vmatpush1.bf16.msra.mxu0 %v445
    %461 = vmatprep.subr.bf16.mxu0 0
    %462 = vmatpush1.bf16.msra.mxu0 %v446
    %463 = vmatprep.subr.bf16.mxu0 0
    %464 = vmatpush1.bf16.msra.mxu0 %v447
    %465 = vmatprep.subr.bf16.mxu0 0
    %466 = vmatpush1.bf16.msra.mxu0 %v448
    %467 = vmatprep.subr.bf16.mxu0 0
    %468 = vmatpush1.bf16.msra.mxu0 0
    %469 = vmatprep.subr.bf16.mxu0 0
    %470 = vmatpush1.bf16.msra.mxu0 0
    %471 = vmatprep.subr.bf16.mxu0 0
    %472 = vmatpush1.bf16.msra.mxu0 0
    %473 = vmatprep.subr.bf16.mxu0 0
    %474 = vmatpush1.bf16.msra.mxu0 0
    %475 = vmatprep.subr.bf16.mxu0 0
    %476 = vmatpush1.bf16.msra.mxu0 0
    %477 = vmatprep.subr.bf16.mxu0 0
    %478 = vmatpush1.bf16.msra.mxu0 0
    %479 = vmatprep.subr.bf16.mxu0 0
    %480 = vmatpush1.bf16.msra.mxu0 0
    %481 = vmatprep.subr.bf16.mxu0 0
    %482 = vmatpush1.bf16.msra.mxu0 0
    %483 = vmatprep.subr.bf16.mxu0 0
    %484 = vmatpush1.bf16.msra.mxu0 0
    %485 = vmatprep.subr.bf16.mxu0 0
    %486 = vmatpush1.bf16.msra.mxu0 0
    %487 = vmatprep.subr.bf16.mxu0 0
    %488 = vmatpush1.bf16.msra.mxu0 0
    %489 = vmatprep.subr.bf16.mxu0 0
    %490 = vmatpush1.bf16.msra.mxu0 0
    %491 = vmatprep.mubr.bf16.mxu0 0
    %492 = vmatmul.mubr.bf16.gmra.mrb[0].mxu0 %v454
    %v493 = vpop.f32.mrb[0].mxu0
    %v494 = vadd.f32 0.0, %v493
    %v495 = vpop.f32.mrb[0].mxu0
    %v496 = vpop.f32.mrb[0].mxu0
    %v497 = vadd.f32 0.0, %v496
    %v498 = vpop.f32.mrb[0].mxu0
    %499 = vmatprep.mubr.bf16.mxu0 0
    %500 = vmatmul.mubr.bf16.gmra.mrb[0].mxu0 %v457
    %v501 = vpop.f32.mrb[0].mxu0
    %v502 = vadd.f32 0.0, %v501
    %v503 = vpop.f32.mrb[0].mxu0
    %v504 = vpop.f32.mrb[0].mxu0
    %v505 = vadd.f32 0.0, %v504
    %v506 = vpop.f32.mrb[0].mxu0
    %507 = vdwg.mxu0
    %v508 = vadd.f32 %v406, %v494
    %v509 = vadd.f32 %v407, %v497
    %v510 = vadd.f32 %v408, %v502
    %v511 = vadd.f32 %v409, %v505
    %v512 = vpack.c.bf16 %v306, %v305
    %v513 = vpack.c.bf16 %v308, %v307
    %s514 = scalar_lea.vmem %s3, 64
    %v515 = vld [vmem:[%s514] sm:$0xf]
    %v516 = vld [vmem:[%s514 + $0x4] sm:$0xf]
    %v517 = vld [vmem:[%s514 + $0x8] sm:$0xf]
    %v518 = vld [vmem:[%s514 + $0xc] sm:$0xf]
    %v519 = vld [vmem:[%s514 + $0x10] sm:$0xf]
    %v520 = vld [vmem:[%s514 + $0x14] sm:$0xf]
    %v521 = vld [vmem:[%s514 + $0x18] sm:$0xf]
    %v522 = vld [vmem:[%s514 + $0x1c] sm:$0xf]
    %v531 = vunpack.c.l.b16 %v515
    %v532 = vunpack.c.l.b16 %v516
    %v533 = vunpack.c.l.b16 %v517
    %v534 = vunpack.c.l.b16 %v518
    %v535 = vunpack.c.l.b16 %v519
    %v536 = vunpack.c.l.b16 %v520
    %v537 = vunpack.c.l.b16 %v521
    %v538 = vunpack.c.l.b16 %v522
    %v539 = vpack.c.b16 %v532, %v531
    %v540 = vpack.c.b16 %v534, %v533
    %v541 = vpack.c.b16 %v536, %v535
    %v542 = vpack.c.b16 %v538, %v537
    %v548 = vsel %vm344, %v512, 0
    %v551 = vsel %vm344, %v513, 0
    %553 = vmatprep.subr.bf16.mxu0 0
    %554 = vmatpush1.bf16.msra.mxu0 %v539
    %555 = vmatprep.subr.bf16.mxu0 0
    %556 = vmatpush1.bf16.msra.mxu0 %v540
    %557 = vmatprep.subr.bf16.mxu0 0
    %558 = vmatpush1.bf16.msra.mxu0 %v541
    %559 = vmatprep.subr.bf16.mxu0 0
    %560 = vmatpush1.bf16.msra.mxu0 %v542
    %561 = vmatprep.subr.bf16.mxu0 0
    %562 = vmatpush1.bf16.msra.mxu0 0
    %563 = vmatprep.subr.bf16.mxu0 0
    %564 = vmatpush1.bf16.msra.mxu0 0
    %565 = vmatprep.subr.bf16.mxu0 0
    %566 = vmatpush1.bf16.msra.mxu0 0
    %567 = vmatprep.subr.bf16.mxu0 0
    %568 = vmatpush1.bf16.msra.mxu0 0
    %569 = vmatprep.subr.bf16.mxu0 0
    %570 = vmatpush1.bf16.msra.mxu0 0
    %571 = vmatprep.subr.bf16.mxu0 0
    %572 = vmatpush1.bf16.msra.mxu0 0
    %573 = vmatprep.subr.bf16.mxu0 0
    %574 = vmatpush1.bf16.msra.mxu0 0
    %575 = vmatprep.subr.bf16.mxu0 0
    %576 = vmatpush1.bf16.msra.mxu0 0
    %577 = vmatprep.subr.bf16.mxu0 0
    %578 = vmatpush1.bf16.msra.mxu0 0
    %579 = vmatprep.subr.bf16.mxu0 0
    %580 = vmatpush1.bf16.msra.mxu0 0
    %581 = vmatprep.subr.bf16.mxu0 0
    %582 = vmatpush1.bf16.msra.mxu0 0
    %583 = vmatprep.subr.bf16.mxu0 0
    %584 = vmatpush1.bf16.msra.mxu0 0
    %585 = vmatprep.mubr.bf16.mxu0 0
    %586 = vmatmul.mubr.bf16.gmra.mrb[0].mxu0 %v548
    %v587 = vpop.f32.mrb[0].mxu0
    %v588 = vadd.f32 0.0, %v587
    %v589 = vpop.f32.mrb[0].mxu0
    %v590 = vpop.f32.mrb[0].mxu0
    %v591 = vadd.f32 0.0, %v590
    %v592 = vpop.f32.mrb[0].mxu0
    %593 = vmatprep.mubr.bf16.mxu0 0
    %594 = vmatmul.mubr.bf16.gmra.mrb[0].mxu0 %v551
    %v595 = vpop.f32.mrb[0].mxu0
    %v596 = vadd.f32 0.0, %v595
    %v597 = vpop.f32.mrb[0].mxu0
    %v598 = vpop.f32.mrb[0].mxu0
    %v599 = vadd.f32 0.0, %v598
    %v600 = vpop.f32.mrb[0].mxu0
    %601 = vdwg.mxu0
    %v602 = vadd.f32 %v508, %v588
    %v603 = vadd.f32 %v509, %v591
    %v604 = vadd.f32 %v510, %v596
    %v605 = vadd.f32 %v511, %v599
    %v606 = vrot.slane %v602, 7
    %v607 = vrot.slane %v603, 7
    %v608 = vrot.slane %v604, 7
    %v609 = vrot.slane %v605, 7
    %v610 = vsel %vm267, %v608, %v609
    %v611 = vsel %vm267, %v607, %v608
    %v612 = vsel %vm267, %v606, %v607
    %v613 = vsel %vm267, %v609, %v606
    %v614 = vsel %vm276, %v602, %v613
    %v615 = vsel %vm277, %v603, %v612
    %v616 = vsel %vm278, %v604, %v611
    %v617 = vsel %vm279, %v605, %v610
    %v618 = vrot.slane %v602, 1
    %v619 = vrot.slane %v603, 1
    %v620 = vrot.slane %v604, 1
    %v621 = vrot.slane %v605, 1
    %v622 = vsel %vm292, %v620, %v621
    %v623 = vsel %vm292, %v619, %v620
    %v624 = vsel %vm292, %v618, %v619
    %v625 = vsel %vm292, %v621, %v618
    %v626 = vsel %vm301, %v602, %v624
    %v627 = vsel %vm302, %v603, %v623
    %v628 = vsel %vm303, %v604, %v622
    %v629 = vsel %vm304, %v605, %v625
    %v630 = vmax.f32 %v602, %v614
    %v631 = vmax.f32 %v603, %v615
    %v632 = vmax.f32 %v604, %v616
    %v633 = vmax.f32 %v605, %v617
    %v634 = vmax.f32 %v630, %v626
    %v635 = vmax.f32 %v631, %v627
    %v636 = vmax.f32 %v632, %v628
    %v637 = vmax.f32 %v633, %v629
    %638 = vst [vmem:[#allocation2] sm:$0xff] %v634
    %639 = vst [vmem:[#allocation2 + $0x8] sm:$0xff] %v635
    %640 = vst [vmem:[#allocation2 + $0x10] sm:$0xff] %v636
    %641 = vst [vmem:[#allocation2 + $0x18] sm:$0xff] %v637
    %v642 = vld [vmem:[#allocation2] ss:$2 sm:$0xff]
    %s643 = scalar_lea.vmem [#allocation2], 16
    %v644 = vld [vmem:[%s643] ss:$2 sm:$0xff]
    %v645 = vpack.c.bf16 %v644, %v642
    %v646 = vld [vmem:[%s7] sm:$0xf]
    %v647 = vld [vmem:[%s7 + $0x4] sm:$0xf]
    %v648 = vld [vmem:[%s7 + $0x8] sm:$0xf]
    %v649 = vld [vmem:[%s7 + $0xc] sm:$0xf]
    %v650 = vld [vmem:[%s7 + $0x10] sm:$0xf]
    %v651 = vld [vmem:[%s7 + $0x14] sm:$0xf]
    %v652 = vld [vmem:[%s7 + $0x18] sm:$0xf]
    %v653 = vld [vmem:[%s7 + $0x1c] sm:$0xf]
    %v654 = vld [vmem:[%s7 + $0x20] sm:$0xf]
    %v655 = vld [vmem:[%s7 + $0x24] sm:$0xf]
    %v656 = vld [vmem:[%s7 + $0x28] sm:$0xf]
    %v657 = vld [vmem:[%s7 + $0x2c] sm:$0xf]
    %v658 = vld [vmem:[%s7 + $0x30] sm:$0xf]
    %v659 = vld [vmem:[%s7 + $0x34] sm:$0xf]
    %v660 = vld [vmem:[%s7 + $0x38] sm:$0xf]
    %v661 = vld [vmem:[%s7 + $0x3c] sm:$0xf]
    %v678 = vunpack.c.l.b16 %v646
    %v679 = vunpack.c.l.b16 %v647
    %v680 = vunpack.c.l.b16 %v648
    %v681 = vunpack.c.l.b16 %v649
    %v682 = vunpack.c.l.b16 %v650
    %v683 = vunpack.c.l.b16 %v651
    %v684 = vunpack.c.l.b16 %v652
    %v685 = vunpack.c.l.b16 %v653
    %v686 = vunpack.c.l.b16 %v654
    %v687 = vunpack.c.l.b16 %v655
    %v688 = vunpack.c.l.b16 %v656
    %v689 = vunpack.c.l.b16 %v657
    %v690 = vunpack.c.l.b16 %v658
    %v691 = vunpack.c.l.b16 %v659
    %v692 = vunpack.c.l.b16 %v660
    %v693 = vunpack.c.l.b16 %v661
    %v694 = vpack.c.b16 %v679, %v678
    %v695 = vpack.c.b16 %v681, %v680
    %v696 = vpack.c.b16 %v683, %v682
    %v697 = vpack.c.b16 %v685, %v684
    %v698 = vpack.c.b16 %v687, %v686
    %v699 = vpack.c.b16 %v689, %v688
    %v700 = vpack.c.b16 %v691, %v690
    %v701 = vpack.c.b16 %v693, %v692
    %710 = vmatprep.subr.bf16.mxu0 0
    %711 = vmatpush1.bf16.msra.mxu0 %v694
    %712 = vmatprep.subr.bf16.mxu0 0
    %713 = vmatpush1.bf16.msra.mxu0 %v695
    %714 = vmatprep.subr.bf16.mxu0 0
    %715 = vmatpush1.bf16.msra.mxu0 %v696
    %716 = vmatprep.subr.bf16.mxu0 0
    %717 = vmatpush1.bf16.msra.mxu0 %v697
    %718 = vmatprep.subr.bf16.mxu0 0
    %719 = vmatpush1.bf16.msra.mxu0 %v698
    %720 = vmatprep.subr.bf16.mxu0 0
    %721 = vmatpush1.bf16.msra.mxu0 %v699
    %722 = vmatprep.subr.bf16.mxu0 0
    %723 = vmatpush1.bf16.msra.mxu0 %v700
    %724 = vmatprep.subr.bf16.mxu0 0
    %725 = vmatpush1.bf16.msra.mxu0 %v701
    %726 = vmatprep.subr.bf16.mxu0 0
    %727 = vmatpush1.bf16.msra.mxu0 0
    %728 = vmatprep.subr.bf16.mxu0 0
    %729 = vmatpush1.bf16.msra.mxu0 0
    %730 = vmatprep.subr.bf16.mxu0 0
    %731 = vmatpush1.bf16.msra.mxu0 0
    %732 = vmatprep.subr.bf16.mxu0 0
    %733 = vmatpush1.bf16.msra.mxu0 0
    %734 = vmatprep.subr.bf16.mxu0 0
    %735 = vmatpush1.bf16.msra.mxu0 0
    %736 = vmatprep.subr.bf16.mxu0 0
    %737 = vmatpush1.bf16.msra.mxu0 0
    %738 = vmatprep.subr.bf16.mxu0 0
    %739 = vmatpush1.bf16.msra.mxu0 0
    %740 = vmatprep.subr.bf16.mxu0 0
    %741 = vmatpush1.bf16.msra.mxu0 0
    %742 = vmatprep.mubr.bf16.mxu0 0
    %743 = vmatmul.mubr.bf16.gmra.mrb[0].mxu0 %v645
    %v744 = vpop.f32.mrb[0].mxu0
    %v745 = vadd.f32 0.0, %v744
    %v746 = vpop.f32.mrb[0].mxu0
    %v747 = vpop.f32.mrb[0].mxu0
    %v748 = vadd.f32 0.0, %v747
    %v749 = vpop.f32.mrb[0].mxu0
    %750 = vdwg.mxu0
    %s751 = scalar_lea.vmem %s7, 64
    %v752 = vld [vmem:[%s751] sm:$0xf]
    %v753 = vld [vmem:[%s751 + $0x4] sm:$0xf]
    %v754 = vld [vmem:[%s751 + $0x8] sm:$0xf]
    %v755 = vld [vmem:[%s751 + $0xc] sm:$0xf]
    %v756 = vld [vmem:[%s751 + $0x10] sm:$0xf]
    %v757 = vld [vmem:[%s751 + $0x14] sm:$0xf]
    %v758 = vld [vmem:[%s751 + $0x18] sm:$0xf]
    %v759 = vld [vmem:[%s751 + $0x1c] sm:$0xf]
    %v760 = vld [vmem:[%s751 + $0x20] sm:$0xf]
    %v761 = vld [vmem:[%s751 + $0x24] sm:$0xf]
    %v762 = vld [vmem:[%s751 + $0x28] sm:$0xf]
    %v763 = vld [vmem:[%s751 + $0x2c] sm:$0xf]
    %v764 = vld [vmem:[%s751 + $0x30] sm:$0xf]
    %v765 = vld [vmem:[%s751 + $0x34] sm:$0xf]
    %v766 = vld [vmem:[%s751 + $0x38] sm:$0xf]
    %v767 = vld [vmem:[%s751 + $0x3c] sm:$0xf]
    %v784 = vunpack.c.l.b16 %v752
    %v785 = vunpack.c.l.b16 %v753
    %v786 = vunpack.c.l.b16 %v754
    %v787 = vunpack.c.l.b16 %v755
    %v788 = vunpack.c.l.b16 %v756
    %v789 = vunpack.c.l.b16 %v757
    %v790 = vunpack.c.l.b16 %v758
    %v791 = vunpack.c.l.b16 %v759
    %v792 = vunpack.c.l.b16 %v760
    %v793 = vunpack.c.l.b16 %v761
    %v794 = vunpack.c.l.b16 %v762
    %v795 = vunpack.c.l.b16 %v763
    %v796 = vunpack.c.l.b16 %v764
    %v797 = vunpack.c.l.b16 %v765
    %v798 = vunpack.c.l.b16 %v766
    %v799 = vunpack.c.l.b16 %v767
    %v800 = vpack.c.b16 %v785, %v784
    %v801 = vpack.c.b16 %v787, %v786
    %v802 = vpack.c.b16 %v789, %v788
    %v803 = vpack.c.b16 %v791, %v790
    %v804 = vpack.c.b16 %v793, %v792
    %v805 = vpack.c.b16 %v795, %v794
    %v806 = vpack.c.b16 %v797, %v796
    %v807 = vpack.c.b16 %v799, %v798
    %816 = vmatprep.subr.bf16.mxu0 0
    %817 = vmatpush1.bf16.msra.mxu0 %v800
    %818 = vmatprep.subr.bf16.mxu0 0
    %819 = vmatpush1.bf16.msra.mxu0 %v801
    %820 = vmatprep.subr.bf16.mxu0 0
    %821 = vmatpush1.bf16.msra.mxu0 %v802
    %822 = vmatprep.subr.bf16.mxu0 0
    %823 = vmatpush1.bf16.msra.mxu0 %v803
    %824 = vmatprep.subr.bf16.mxu0 0
    %825 = vmatpush1.bf16.msra.mxu0 %v804
    %826 = vmatprep.subr.bf16.mxu0 0
    %827 = vmatpush1.bf16.msra.mxu0 %v805
    %828 = vmatprep.subr.bf16.mxu0 0
    %829 = vmatpush1.bf16.msra.mxu0 %v806
    %830 = vmatprep.subr.bf16.mxu0 0
    %831 = vmatpush1.bf16.msra.mxu0 %v807
    %832 = vmatprep.subr.bf16.mxu0 0
    %833 = vmatpush1.bf16.msra.mxu0 0
    %834 = vmatprep.subr.bf16.mxu0 0
    %835 = vmatpush1.bf16.msra.mxu0 0
    %836 = vmatprep.subr.bf16.mxu0 0
    %837 = vmatpush1.bf16.msra.mxu0 0
    %838 = vmatprep.subr.bf16.mxu0 0
    %839 = vmatpush1.bf16.msra.mxu0 0
    %840 = vmatprep.subr.bf16.mxu0 0
    %841 = vmatpush1.bf16.msra.mxu0 0
    %842 = vmatprep.subr.bf16.mxu0 0
    %843 = vmatpush1.bf16.msra.mxu0 0
    %844 = vmatprep.subr.bf16.mxu0 0
    %845 = vmatpush1.bf16.msra.mxu0 0
    %846 = vmatprep.subr.bf16.mxu0 0
    %847 = vmatpush1.bf16.msra.mxu0 0
    %848 = vmatprep.mubr.bf16.mxu0 0
    %849 = vmatmul.mubr.bf16.gmra.mrb[0].mxu0 %v645
    %v850 = vpop.f32.mrb[0].mxu0
    %v851 = vadd.f32 0.0, %v850
    %v852 = vpop.f32.mrb[0].mxu0
    %v853 = vpop.f32.mrb[0].mxu0
    %v854 = vadd.f32 0.0, %v853
    %v855 = vpop.f32.mrb[0].mxu0
    %856 = vdwg.mxu0
    %v857 = vmax.f32 %v745, %v851
    %v858 = vmax.f32 %v748, %v854
    %s859 = scalar_lea.vmem %s7, 128
    %v860 = vld [vmem:[%s859] sm:$0xf]
    %v861 = vld [vmem:[%s859 + $0x4] sm:$0xf]
    %v862 = vld [vmem:[%s859 + $0x8] sm:$0xf]
    %v863 = vld [vmem:[%s859 + $0xc] sm:$0xf]
    %v864 = vld [vmem:[%s859 + $0x10] sm:$0xf]
    %v865 = vld [vmem:[%s859 + $0x14] sm:$0xf]
    %v866 = vld [vmem:[%s859 + $0x18] sm:$0xf]
    %v867 = vld [vmem:[%s859 + $0x1c] sm:$0xf]
    %v868 = vld [vmem:[%s859 + $0x20] sm:$0xf]
    %v869 = vld [vmem:[%s859 + $0x24] sm:$0xf]
    %v870 = vld [vmem:[%s859 + $0x28] sm:$0xf]
    %v871 = vld [vmem:[%s859 + $0x2c] sm:$0xf]
    %v872 = vld [vmem:[%s859 + $0x30] sm:$0xf]
    %v873 = vld [vmem:[%s859 + $0x34] sm:$0xf]
    %v874 = vld [vmem:[%s859 + $0x38] sm:$0xf]
    %v875 = vld [vmem:[%s859 + $0x3c] sm:$0xf]
    %v892 = vunpack.c.l.b16 %v860
    %v893 = vunpack.c.l.b16 %v861
    %v894 = vunpack.c.l.b16 %v862
    %v895 = vunpack.c.l.b16 %v863
    %v896 = vunpack.c.l.b16 %v864
    %v897 = vunpack.c.l.b16 %v865
    %v898 = vunpack.c.l.b16 %v866
    %v899 = vunpack.c.l.b16 %v867
    %v900 = vunpack.c.l.b16 %v868
    %v901 = vunpack.c.l.b16 %v869
    %v902 = vunpack.c.l.b16 %v870
    %v903 = vunpack.c.l.b16 %v871
    %v904 = vunpack.c.l.b16 %v872
    %v905 = vunpack.c.l.b16 %v873
    %v906 = vunpack.c.l.b16 %v874
    %v907 = vunpack.c.l.b16 %v875
    %v908 = vpack.c.b16 %v893, %v892
    %v909 = vpack.c.b16 %v895, %v894
    %v910 = vpack.c.b16 %v897, %v896
    %v911 = vpack.c.b16 %v899, %v898
    %v912 = vpack.c.b16 %v901, %v900
    %v913 = vpack.c.b16 %v903, %v902
    %v914 = vpack.c.b16 %v905, %v904
    %v915 = vpack.c.b16 %v907, %v906
    %924 = vmatprep.subr.bf16.mxu0 0
    %925 = vmatpush1.bf16.msra.mxu0 %v908
    %926 = vmatprep.subr.bf16.mxu0 0
    %927 = vmatpush1.bf16.msra.mxu0 %v909
    %928 = vmatprep.subr.bf16.mxu0 0
    %929 = vmatpush1.bf16.msra.mxu0 %v910
    %930 = vmatprep.subr.bf16.mxu0 0
    %931 = vmatpush1.bf16.msra.mxu0 %v911
    %932 = vmatprep.subr.bf16.mxu0 0
    %933 = vmatpush1.bf16.msra.mxu0 %v912
    %934 = vmatprep.subr.bf16.mxu0 0
    %935 = vmatpush1.bf16.msra.mxu0 %v913
    %936 = vmatprep.subr.bf16.mxu0 0
    %937 = vmatpush1.bf16.msra.mxu0 %v914
    %938 = vmatprep.subr.bf16.mxu0 0
    %939 = vmatpush1.bf16.msra.mxu0 %v915
    %940 = vmatprep.subr.bf16.mxu0 0
    %941 = vmatpush1.bf16.msra.mxu0 0
    %942 = vmatprep.subr.bf16.mxu0 0
    %943 = vmatpush1.bf16.msra.mxu0 0
    %944 = vmatprep.subr.bf16.mxu0 0
    %945 = vmatpush1.bf16.msra.mxu0 0
    %946 = vmatprep.subr.bf16.mxu0 0
    %947 = vmatpush1.bf16.msra.mxu0 0
    %948 = vmatprep.subr.bf16.mxu0 0
    %949 = vmatpush1.bf16.msra.mxu0 0
    %950 = vmatprep.subr.bf16.mxu0 0
    %951 = vmatpush1.bf16.msra.mxu0 0
    %952 = vmatprep.subr.bf16.mxu0 0
    %953 = vmatpush1.bf16.msra.mxu0 0
    %954 = vmatprep.subr.bf16.mxu0 0
    %955 = vmatpush1.bf16.msra.mxu0 0
    %956 = vmatprep.mubr.bf16.mxu0 0
    %957 = vmatmul.mubr.bf16.gmra.mrb[0].mxu0 %v645
    %v958 = vpop.f32.mrb[0].mxu0
    %v959 = vadd.f32 0.0, %v958
    %v960 = vpop.f32.mrb[0].mxu0
    %v961 = vpop.f32.mrb[0].mxu0
    %v962 = vadd.f32 0.0, %v961
    %v963 = vpop.f32.mrb[0].mxu0
    %964 = vdwg.mxu0
    %v965 = vmax.f32 %v857, %v959
    %v966 = vmax.f32 %v858, %v962
    %v967 = vmax.f32 %v965, 0.0
    %v968 = vmax.f32 %v966, 0.0
    %vm969 = vcmp.lt.s32.totalorder %v207, 0
    %v970 = vsub.s32 0, %v207
    %v971 = vsel %vm969, %v970, %v207
    %v972 = vshrl.u32 %v971, 3
    %v973 = vand.u32 %v971, 7
    %v974 = vsub.s32 0, %v973
    %v975 = vsel %vm969, %v974, %v973
    %vm976 = vcmp.lt.s32.totalorder %v208, 0
    %v977 = vsub.s32 0, %v208
    %v978 = vsel %vm976, %v977, %v208
    %v979 = vshrl.u32 %v978, 3
    %v980 = vand.u32 %v978, 7
    %v981 = vsub.s32 0, %v980
    %v982 = vsel %vm976, %v981, %v980
    %vm983 = vcmp.ne.s32.totalorder %v975, 0
    %vm984 = vcmp.ne.s32.totalorder %v982, 0
    %vm985 = vcmp.lt.s32.totalorder %v975, 0
    %vm986 = vcmp.lt.s32.totalorder %v982, 0
    %vm987 = vmand %vm985, %vm983
    %vm988 = vmand %vm986, %vm984
    %v989 = vadd.s32 %v975, 8
    %v990 = vadd.s32 %v982, 8
    %v991 = vsel %vm987, %v989, %v975
    %v992 = vsel %vm988, %v990, %v982
    %vm993 = vcmp.eq.s32.totalorder %v991, 0
    %vm994 = vcmp.eq.s32.totalorder %v992, 0
    %v995 = vrot.slane %v967, 7
    %v996 = vrot.slane %v968, 7
    %v997 = vsel %vm267, %v995, %v996
    %v998 = vsel %vm267, %v996, %v995
    %v999 = vsel %vm993, 1, 0
    %v1000 = vsel %vm994, 1, 0
    %vm1001 = vcmp.eq.s32.totalorder %v999, 1
    %vm1002 = vcmp.eq.s32.totalorder %v1000, 1
    %v1003 = vsel %vm1001, 0.0, %v998
    %v1004 = vsel %vm1002, 0.0, %v997
    %vm1005 = vcmp.eq.s32.totalorder %v991, 7
    %vm1006 = vcmp.eq.s32.totalorder %v992, 7
    %v1007 = vrot.slane %v967, 1
    %v1008 = vrot.slane %v968, 1
    %v1009 = vsel %vm292, %v1007, %v1008
    %v1010 = vsel %vm292, %v1008, %v1007
    %v1011 = vsel %vm1005, 1, 0
    %v1012 = vsel %vm1006, 1, 0
    %vm1013 = vcmp.eq.s32.totalorder %v1011, 1
    %vm1014 = vcmp.eq.s32.totalorder %v1012, 1
    %v1015 = vsel %vm1013, 0.0, %v1009
    %v1016 = vsel %vm1014, 0.0, %v1010
    %v1017 = vld [vmem:[%s11] sm:$0x1]
    %v1018 = vpack.c.bf16 %v1004, %v1003
    %v1019 = vld [vmem:[%s9] sm:$0xf]
    %v1020 = vld [vmem:[%s9 + $0x4] sm:$0xf]
    %v1021 = vld [vmem:[%s9 + $0x8] sm:$0xf]
    %v1022 = vld [vmem:[%s9 + $0xc] sm:$0xf]
    %v1023 = vld [vmem:[%s9 + $0x10] sm:$0xf]
    %v1024 = vld [vmem:[%s9 + $0x14] sm:$0xf]
    %v1025 = vld [vmem:[%s9 + $0x18] sm:$0xf]
    %v1026 = vld [vmem:[%s9 + $0x1c] sm:$0xf]
    %v1035 = vunpack.c.l.b16 %v1019
    %v1036 = vunpack.c.l.b16 %v1020
    %v1037 = vunpack.c.l.b16 %v1021
    %v1038 = vunpack.c.l.b16 %v1022
    %v1039 = vunpack.c.l.b16 %v1023
    %v1040 = vunpack.c.l.b16 %v1024
    %v1041 = vunpack.c.l.b16 %v1025
    %v1042 = vunpack.c.l.b16 %v1026
    %v1043 = vpack.c.b16 %v1036, %v1035
    %v1044 = vpack.c.b16 %v1038, %v1037
    %v1045 = vpack.c.b16 %v1040, %v1039
    %v1046 = vpack.c.b16 %v1042, %v1041
    %v1052 = vsel %vm344, %v1018, 0
    %1054 = vmatprep.subr.bf16.mxu0 0
    %1055 = vmatpush1.bf16.msra.mxu0 %v1043
    %1056 = vmatprep.subr.bf16.mxu0 0
    %1057 = vmatpush1.bf16.msra.mxu0 %v1044
    %1058 = vmatprep.subr.bf16.mxu0 0
    %1059 = vmatpush1.bf16.msra.mxu0 %v1045
    %1060 = vmatprep.subr.bf16.mxu0 0
    %1061 = vmatpush1.bf16.msra.mxu0 %v1046
    %1062 = vmatprep.subr.bf16.mxu0 0
    %1063 = vmatpush1.bf16.msra.mxu0 0
    %1064 = vmatprep.subr.bf16.mxu0 0
    %1065 = vmatpush1.bf16.msra.mxu0 0
    %1066 = vmatprep.subr.bf16.mxu0 0
    %1067 = vmatpush1.bf16.msra.mxu0 0
    %1068 = vmatprep.subr.bf16.mxu0 0
    %1069 = vmatpush1.bf16.msra.mxu0 0
    %1070 = vmatprep.subr.bf16.mxu0 0
    %1071 = vmatpush1.bf16.msra.mxu0 0
    %1072 = vmatprep.subr.bf16.mxu0 0
    %1073 = vmatpush1.bf16.msra.mxu0 0
    %1074 = vmatprep.subr.bf16.mxu0 0
    %1075 = vmatpush1.bf16.msra.mxu0 0
    %1076 = vmatprep.subr.bf16.mxu0 0
    %1077 = vmatpush1.bf16.msra.mxu0 0
    %1078 = vmatprep.subr.bf16.mxu0 0
    %1079 = vmatpush1.bf16.msra.mxu0 0
    %1080 = vmatprep.subr.bf16.mxu0 0
    %1081 = vmatpush1.bf16.msra.mxu0 0
    %1082 = vmatprep.subr.bf16.mxu0 0
    %1083 = vmatpush1.bf16.msra.mxu0 0
    %1084 = vmatprep.subr.bf16.mxu0 0
    %1085 = vmatpush1.bf16.msra.mxu0 0
    %1086 = vmatprep.mubr.bf16.mxu0 0
    %1087 = vmatmul.mubr.bf16.gmra.mrb[0].mxu0 %v1052
    %v1088 = vpop.f32.mrb[0].mxu0
    %v1089 = vadd.f32 0.0, %v1088
    %v1090 = vpop.f32.mrb[0].mxu0
    %v1091 = vpop.f32.mrb[0].mxu0
    %v1092 = vadd.f32 0.0, %v1091
    %v1093 = vpop.f32.mrb[0].mxu0
    %1094 = vdwg.mxu0
    %v1096 = vlaneseq
    %v1097 = vshrl.u32 %v1096, 7
    %v1098 = vsub.s32 0, %v1097
    %v1099 = vrot.slane %v1017, %v1098
    %v1101 = vadd.f32 %v1099, %v1089
    %v1102 = vadd.f32 %v1099, %v1092
    %v1103 = vpack.c.bf16 %v968, %v967
    %s1104 = scalar_lea.vmem %s9, 32
    %v1105 = vld [vmem:[%s1104] sm:$0xf]
    %v1106 = vld [vmem:[%s1104 + $0x4] sm:$0xf]
    %v1107 = vld [vmem:[%s1104 + $0x8] sm:$0xf]
    %v1108 = vld [vmem:[%s1104 + $0xc] sm:$0xf]
    %v1109 = vld [vmem:[%s1104 + $0x10] sm:$0xf]
    %v1110 = vld [vmem:[%s1104 + $0x14] sm:$0xf]
    %v1111 = vld [vmem:[%s1104 + $0x18] sm:$0xf]
    %v1112 = vld [vmem:[%s1104 + $0x1c] sm:$0xf]
    %v1121 = vunpack.c.l.b16 %v1105
    %v1122 = vunpack.c.l.b16 %v1106
    %v1123 = vunpack.c.l.b16 %v1107
    %v1124 = vunpack.c.l.b16 %v1108
    %v1125 = vunpack.c.l.b16 %v1109
    %v1126 = vunpack.c.l.b16 %v1110
    %v1127 = vunpack.c.l.b16 %v1111
    %v1128 = vunpack.c.l.b16 %v1112
    %v1129 = vpack.c.b16 %v1122, %v1121
    %v1130 = vpack.c.b16 %v1124, %v1123
    %v1131 = vpack.c.b16 %v1126, %v1125
    %v1132 = vpack.c.b16 %v1128, %v1127
    %v1138 = vsel %vm344, %v1103, 0
    %1140 = vmatprep.subr.bf16.mxu0 0
    %1141 = vmatpush1.bf16.msra.mxu0 %v1129
    %1142 = vmatprep.subr.bf16.mxu0 0
    %1143 = vmatpush1.bf16.msra.mxu0 %v1130
    %1144 = vmatprep.subr.bf16.mxu0 0
    %1145 = vmatpush1.bf16.msra.mxu0 %v1131
    %1146 = vmatprep.subr.bf16.mxu0 0
    %1147 = vmatpush1.bf16.msra.mxu0 %v1132
    %1148 = vmatprep.subr.bf16.mxu0 0
    %1149 = vmatpush1.bf16.msra.mxu0 0
    %1150 = vmatprep.subr.bf16.mxu0 0
    %1151 = vmatpush1.bf16.msra.mxu0 0
    %1152 = vmatprep.subr.bf16.mxu0 0
    %1153 = vmatpush1.bf16.msra.mxu0 0
    %1154 = vmatprep.subr.bf16.mxu0 0
    %1155 = vmatpush1.bf16.msra.mxu0 0
    %1156 = vmatprep.subr.bf16.mxu0 0
    %1157 = vmatpush1.bf16.msra.mxu0 0
    %1158 = vmatprep.subr.bf16.mxu0 0
    %1159 = vmatpush1.bf16.msra.mxu0 0
    %1160 = vmatprep.subr.bf16.mxu0 0
    %1161 = vmatpush1.bf16.msra.mxu0 0
    %1162 = vmatprep.subr.bf16.mxu0 0
    %1163 = vmatpush1.bf16.msra.mxu0 0
    %1164 = vmatprep.subr.bf16.mxu0 0
    %1165 = vmatpush1.bf16.msra.mxu0 0
    %1166 = vmatprep.subr.bf16.mxu0 0
    %1167 = vmatpush1.bf16.msra.mxu0 0
    %1168 = vmatprep.subr.bf16.mxu0 0
    %1169 = vmatpush1.bf16.msra.mxu0 0
    %1170 = vmatprep.subr.bf16.mxu0 0
    %1171 = vmatpush1.bf16.msra.mxu0 0
    %1172 = vmatprep.mubr.bf16.mxu0 0
    %1173 = vmatmul.mubr.bf16.gmra.mrb[0].mxu0 %v1138
    %v1174 = vpop.f32.mrb[0].mxu0
    %v1175 = vadd.f32 0.0, %v1174
    %v1176 = vpop.f32.mrb[0].mxu0
    %v1177 = vpop.f32.mrb[0].mxu0
    %v1178 = vadd.f32 0.0, %v1177
    %v1179 = vpop.f32.mrb[0].mxu0
    %1180 = vdwg.mxu0
    %v1181 = vadd.f32 %v1101, %v1175
    %v1182 = vadd.f32 %v1102, %v1178
    %v1183 = vpack.c.bf16 %v1016, %v1015
    %s1184 = scalar_lea.vmem %s9, 64
    %v1185 = vld [vmem:[%s1184] sm:$0xf]
    %v1186 = vld [vmem:[%s1184 + $0x4] sm:$0xf]
    %v1187 = vld [vmem:[%s1184 + $0x8] sm:$0xf]
    %v1188 = vld [vmem:[%s1184 + $0xc] sm:$0xf]
    %v1189 = vld [vmem:[%s1184 + $0x10] sm:$0xf]
    %v1190 = vld [vmem:[%s1184 + $0x14] sm:$0xf]
    %v1191 = vld [vmem:[%s1184 + $0x18] sm:$0xf]
    %v1192 = vld [vmem:[%s1184 + $0x1c] sm:$0xf]
    %v1201 = vunpack.c.l.b16 %v1185
    %v1202 = vunpack.c.l.b16 %v1186
    %v1203 = vunpack.c.l.b16 %v1187
    %v1204 = vunpack.c.l.b16 %v1188
    %v1205 = vunpack.c.l.b16 %v1189
    %v1206 = vunpack.c.l.b16 %v1190
    %v1207 = vunpack.c.l.b16 %v1191
    %v1208 = vunpack.c.l.b16 %v1192
    %v1209 = vpack.c.b16 %v1202, %v1201
    %v1210 = vpack.c.b16 %v1204, %v1203
    %v1211 = vpack.c.b16 %v1206, %v1205
    %v1212 = vpack.c.b16 %v1208, %v1207
    %v1218 = vsel %vm344, %v1183, 0
    %1220 = vmatprep.subr.bf16.mxu0 0
    %1221 = vmatpush1.bf16.msra.mxu0 %v1209
    %1222 = vmatprep.subr.bf16.mxu0 0
    %1223 = vmatpush1.bf16.msra.mxu0 %v1210
    %1224 = vmatprep.subr.bf16.mxu0 0
    %1225 = vmatpush1.bf16.msra.mxu0 %v1211
    %1226 = vmatprep.subr.bf16.mxu0 0
    %1227 = vmatpush1.bf16.msra.mxu0 %v1212
    %1228 = vmatprep.subr.bf16.mxu0 0
    %1229 = vmatpush1.bf16.msra.mxu0 0
    %1230 = vmatprep.subr.bf16.mxu0 0
    %1231 = vmatpush1.bf16.msra.mxu0 0
    %1232 = vmatprep.subr.bf16.mxu0 0
    %1233 = vmatpush1.bf16.msra.mxu0 0
    %1234 = vmatprep.subr.bf16.mxu0 0
    %1235 = vmatpush1.bf16.msra.mxu0 0
    %1236 = vmatprep.subr.bf16.mxu0 0
    %1237 = vmatpush1.bf16.msra.mxu0 0
    %1238 = vmatprep.subr.bf16.mxu0 0
    %1239 = vmatpush1.bf16.msra.mxu0 0
    %1240 = vmatprep.subr.bf16.mxu0 0
    %1241 = vmatpush1.bf16.msra.mxu0 0
    %1242 = vmatprep.subr.bf16.mxu0 0
    %1243 = vmatpush1.bf16.msra.mxu0 0
    %1244 = vmatprep.subr.bf16.mxu0 0
    %1245 = vmatpush1.bf16.msra.mxu0 0
    %1246 = vmatprep.subr.bf16.mxu0 0
    %1247 = vmatpush1.bf16.msra.mxu0 0
    %1248 = vmatprep.subr.bf16.mxu0 0
    %1249 = vmatpush1.bf16.msra.mxu0 0
    %1250 = vmatprep.subr.bf16.mxu0 0
    %1251 = vmatpush1.bf16.msra.mxu0 0
    %1252 = vmatprep.mubr.bf16.mxu0 0
    %1253 = vmatmul.mubr.bf16.gmra.mrb[0].mxu0 %v1218
    %v1254 = vpop.f32.mrb[0].mxu0
    %v1255 = vadd.f32 0.0, %v1254
    %v1256 = vpop.f32.mrb[0].mxu0
    %v1257 = vpop.f32.mrb[0].mxu0
    %v1258 = vadd.f32 0.0, %v1257
    %v1259 = vpop.f32.mrb[0].mxu0
    %1260 = vdwg.mxu0
    %v1261 = vadd.f32 %v1181, %v1255
    %v1262 = vadd.f32 %v1182, %v1258
    %v1263 = vmax.f32 %v1261, 0.0
    %v1264 = vmax.f32 %v1262, 0.0
    %v1265 = vrot.slane %v1263, 7
    %v1266 = vrot.slane %v1264, 7
    %v1267 = vsel %vm267, %v1265, %v1266
    %v1268 = vsel %vm267, %v1266, %v1265
    %v1269 = vsel %vm1001, 0.0, %v1268
    %v1270 = vsel %vm1002, 0.0, %v1267
    %v1271 = vrot.slane %v1263, 1
    %v1272 = vrot.slane %v1264, 1
    %v1273 = vsel %vm292, %v1271, %v1272
    %v1274 = vsel %vm292, %v1272, %v1271
    %v1275 = vsel %vm1013, 0.0, %v1273
    %v1276 = vsel %vm1014, 0.0, %v1274
    %v1277 = vld [vmem:[%s15] sm:$0x1]
    %v1278 = vpack.c.bf16 %v1270, %v1269
    %v1279 = vld [vmem:[%s13] sm:$0xf]
    %v1280 = vld [vmem:[%s13 + $0x4] sm:$0xf]
    %v1281 = vld [vmem:[%s13 + $0x8] sm:$0xf]
    %v1282 = vld [vmem:[%s13 + $0xc] sm:$0xf]
    %v1283 = vld [vmem:[%s13 + $0x10] sm:$0xf]
    %v1284 = vld [vmem:[%s13 + $0x14] sm:$0xf]
    %v1285 = vld [vmem:[%s13 + $0x18] sm:$0xf]
    %v1286 = vld [vmem:[%s13 + $0x1c] sm:$0xf]
    %v1295 = vunpack.c.l.b16 %v1279
    %v1296 = vunpack.c.l.b16 %v1280
    %v1297 = vunpack.c.l.b16 %v1281
    %v1298 = vunpack.c.l.b16 %v1282
    %v1299 = vunpack.c.l.b16 %v1283
    %v1300 = vunpack.c.l.b16 %v1284
    %v1301 = vunpack.c.l.b16 %v1285
    %v1302 = vunpack.c.l.b16 %v1286
    %v1303 = vpack.c.b16 %v1296, %v1295
    %v1304 = vpack.c.b16 %v1298, %v1297
    %v1305 = vpack.c.b16 %v1300, %v1299
    %v1306 = vpack.c.b16 %v1302, %v1301
    %v1312 = vsel %vm344, %v1278, 0
    %1314 = vmatprep.subr.bf16.mxu0 0
    %1315 = vmatpush1.bf16.msra.mxu0 %v1303
    %1316 = vmatprep.subr.bf16.mxu0 0
    %1317 = vmatpush1.bf16.msra.mxu0 %v1304
    %1318 = vmatprep.subr.bf16.mxu0 0
    %1319 = vmatpush1.bf16.msra.mxu0 %v1305
    %1320 = vmatprep.subr.bf16.mxu0 0
    %1321 = vmatpush1.bf16.msra.mxu0 %v1306
    %1322 = vmatprep.subr.bf16.mxu0 0
    %1323 = vmatpush1.bf16.msra.mxu0 0
    %1324 = vmatprep.subr.bf16.mxu0 0
    %1325 = vmatpush1.bf16.msra.mxu0 0
    %1326 = vmatprep.subr.bf16.mxu0 0
    %1327 = vmatpush1.bf16.msra.mxu0 0
    %1328 = vmatprep.subr.bf16.mxu0 0
    %1329 = vmatpush1.bf16.msra.mxu0 0
    %1330 = vmatprep.subr.bf16.mxu0 0
    %1331 = vmatpush1.bf16.msra.mxu0 0
    %1332 = vmatprep.subr.bf16.mxu0 0
    %1333 = vmatpush1.bf16.msra.mxu0 0
    %1334 = vmatprep.subr.bf16.mxu0 0
    %1335 = vmatpush1.bf16.msra.mxu0 0
    %1336 = vmatprep.subr.bf16.mxu0 0
    %1337 = vmatpush1.bf16.msra.mxu0 0
    %1338 = vmatprep.subr.bf16.mxu0 0
    %1339 = vmatpush1.bf16.msra.mxu0 0
    %1340 = vmatprep.subr.bf16.mxu0 0
    %1341 = vmatpush1.bf16.msra.mxu0 0
    %1342 = vmatprep.subr.bf16.mxu0 0
    %1343 = vmatpush1.bf16.msra.mxu0 0
    %1344 = vmatprep.subr.bf16.mxu0 0
    %1345 = vmatpush1.bf16.msra.mxu0 0
    %1346 = vmatprep.mubr.bf16.mxu0 0
    %1347 = vmatmul.mubr.bf16.gmra.mrb[0].mxu0 %v1312
    %v1348 = vpop.f32.mrb[0].mxu0
    %v1349 = vadd.f32 0.0, %v1348
    %v1350 = vpop.f32.mrb[0].mxu0
    %v1351 = vpop.f32.mrb[0].mxu0
    %v1352 = vadd.f32 0.0, %v1351
    %v1353 = vpop.f32.mrb[0].mxu0
    %1354 = vdwg.mxu0
    %v1356 = vlaneseq
    %v1357 = vshrl.u32 %v1356, 7
    %v1358 = vsub.s32 0, %v1357
    %v1359 = vrot.slane %v1277, %v1358
    %v1361 = vadd.f32 %v1359, %v1349
    %v1362 = vadd.f32 %v1359, %v1352
    %v1363 = vpack.c.bf16 %v1264, %v1263
    %s1364 = scalar_lea.vmem %s13, 32
    %v1365 = vld [vmem:[%s1364] sm:$0xf]
    %v1366 = vld [vmem:[%s1364 + $0x4] sm:$0xf]
    %v1367 = vld [vmem:[%s1364 + $0x8] sm:$0xf]
    %v1368 = vld [vmem:[%s1364 + $0xc] sm:$0xf]
    %v1369 = vld [vmem:[%s1364 + $0x10] sm:$0xf]
    %v1370 = vld [vmem:[%s1364 + $0x14] sm:$0xf]
    %v1371 = vld [vmem:[%s1364 + $0x18] sm:$0xf]
    %v1372 = vld [vmem:[%s1364 + $0x1c] sm:$0xf]
    %v1381 = vunpack.c.l.b16 %v1365
    %v1382 = vunpack.c.l.b16 %v1366
    %v1383 = vunpack.c.l.b16 %v1367
    %v1384 = vunpack.c.l.b16 %v1368
    %v1385 = vunpack.c.l.b16 %v1369
    %v1386 = vunpack.c.l.b16 %v1370
    %v1387 = vunpack.c.l.b16 %v1371
    %v1388 = vunpack.c.l.b16 %v1372
    %v1389 = vpack.c.b16 %v1382, %v1381
    %v1390 = vpack.c.b16 %v1384, %v1383
    %v1391 = vpack.c.b16 %v1386, %v1385
    %v1392 = vpack.c.b16 %v1388, %v1387
    %v1398 = vsel %vm344, %v1363, 0
    %1400 = vmatprep.subr.bf16.mxu0 0
    %1401 = vmatpush1.bf16.msra.mxu0 %v1389
    %1402 = vmatprep.subr.bf16.mxu0 0
    %1403 = vmatpush1.bf16.msra.mxu0 %v1390
    %1404 = vmatprep.subr.bf16.mxu0 0
    %1405 = vmatpush1.bf16.msra.mxu0 %v1391
    %1406 = vmatprep.subr.bf16.mxu0 0
    %1407 = vmatpush1.bf16.msra.mxu0 %v1392
    %1408 = vmatprep.subr.bf16.mxu0 0
    %1409 = vmatpush1.bf16.msra.mxu0 0
    %1410 = vmatprep.subr.bf16.mxu0 0
    %1411 = vmatpush1.bf16.msra.mxu0 0
    %1412 = vmatprep.subr.bf16.mxu0 0
    %1413 = vmatpush1.bf16.msra.mxu0 0
    %1414 = vmatprep.subr.bf16.mxu0 0
    %1415 = vmatpush1.bf16.msra.mxu0 0
    %1416 = vmatprep.subr.bf16.mxu0 0
    %1417 = vmatpush1.bf16.msra.mxu0 0
    %1418 = vmatprep.subr.bf16.mxu0 0
    %1419 = vmatpush1.bf16.msra.mxu0 0
    %1420 = vmatprep.subr.bf16.mxu0 0
    %1421 = vmatpush1.bf16.msra.mxu0 0
    %1422 = vmatprep.subr.bf16.mxu0 0
    %1423 = vmatpush1.bf16.msra.mxu0 0
    %1424 = vmatprep.subr.bf16.mxu0 0
    %1425 = vmatpush1.bf16.msra.mxu0 0
    %1426 = vmatprep.subr.bf16.mxu0 0
    %1427 = vmatpush1.bf16.msra.mxu0 0
    %1428 = vmatprep.subr.bf16.mxu0 0
    %1429 = vmatpush1.bf16.msra.mxu0 0
    %1430 = vmatprep.subr.bf16.mxu0 0
    %1431 = vmatpush1.bf16.msra.mxu0 0
    %1432 = vmatprep.mubr.bf16.mxu0 0
    %1433 = vmatmul.mubr.bf16.gmra.mrb[0].mxu0 %v1398
    %v1434 = vpop.f32.mrb[0].mxu0
    %v1435 = vadd.f32 0.0, %v1434
    %v1436 = vpop.f32.mrb[0].mxu0
    %v1437 = vpop.f32.mrb[0].mxu0
    %v1438 = vadd.f32 0.0, %v1437
    %v1439 = vpop.f32.mrb[0].mxu0
    %1440 = vdwg.mxu0
    %v1441 = vadd.f32 %v1361, %v1435
    %v1442 = vadd.f32 %v1362, %v1438
    %v1443 = vpack.c.bf16 %v1276, %v1275
    %s1444 = scalar_lea.vmem %s13, 64
    %v1445 = vld [vmem:[%s1444] sm:$0xf]
    %v1446 = vld [vmem:[%s1444 + $0x4] sm:$0xf]
    %v1447 = vld [vmem:[%s1444 + $0x8] sm:$0xf]
    %v1448 = vld [vmem:[%s1444 + $0xc] sm:$0xf]
    %v1449 = vld [vmem:[%s1444 + $0x10] sm:$0xf]
    %v1450 = vld [vmem:[%s1444 + $0x14] sm:$0xf]
    %v1451 = vld [vmem:[%s1444 + $0x18] sm:$0xf]
    %v1452 = vld [vmem:[%s1444 + $0x1c] sm:$0xf]
    %v1461 = vunpack.c.l.b16 %v1445
    %v1462 = vunpack.c.l.b16 %v1446
    %v1463 = vunpack.c.l.b16 %v1447
    %v1464 = vunpack.c.l.b16 %v1448
    %v1465 = vunpack.c.l.b16 %v1449
    %v1466 = vunpack.c.l.b16 %v1450
    %v1467 = vunpack.c.l.b16 %v1451
    %v1468 = vunpack.c.l.b16 %v1452
    %v1469 = vpack.c.b16 %v1462, %v1461
    %v1470 = vpack.c.b16 %v1464, %v1463
    %v1471 = vpack.c.b16 %v1466, %v1465
    %v1472 = vpack.c.b16 %v1468, %v1467
    %v1478 = vsel %vm344, %v1443, 0
    %1480 = vmatprep.subr.bf16.mxu0 0
    %1481 = vmatpush1.bf16.msra.mxu0 %v1469
    %1482 = vmatprep.subr.bf16.mxu0 0
    %1483 = vmatpush1.bf16.msra.mxu0 %v1470
    %1484 = vmatprep.subr.bf16.mxu0 0
    %1485 = vmatpush1.bf16.msra.mxu0 %v1471
    %1486 = vmatprep.subr.bf16.mxu0 0
    %1487 = vmatpush1.bf16.msra.mxu0 %v1472
    %1488 = vmatprep.subr.bf16.mxu0 0
    %1489 = vmatpush1.bf16.msra.mxu0 0
    %1490 = vmatprep.subr.bf16.mxu0 0
    %1491 = vmatpush1.bf16.msra.mxu0 0
    %1492 = vmatprep.subr.bf16.mxu0 0
    %1493 = vmatpush1.bf16.msra.mxu0 0
    %1494 = vmatprep.subr.bf16.mxu0 0
    %1495 = vmatpush1.bf16.msra.mxu0 0
    %1496 = vmatprep.subr.bf16.mxu0 0
    %1497 = vmatpush1.bf16.msra.mxu0 0
    %1498 = vmatprep.subr.bf16.mxu0 0
    %1499 = vmatpush1.bf16.msra.mxu0 0
    %1500 = vmatprep.subr.bf16.mxu0 0
    %1501 = vmatpush1.bf16.msra.mxu0 0
    %1502 = vmatprep.subr.bf16.mxu0 0
    %1503 = vmatpush1.bf16.msra.mxu0 0
    %1504 = vmatprep.subr.bf16.mxu0 0
    %1505 = vmatpush1.bf16.msra.mxu0 0
    %1506 = vmatprep.subr.bf16.mxu0 0
    %1507 = vmatpush1.bf16.msra.mxu0 0
    %1508 = vmatprep.subr.bf16.mxu0 0
    %1509 = vmatpush1.bf16.msra.mxu0 0
    %1510 = vmatprep.subr.bf16.mxu0 0
    %1511 = vmatpush1.bf16.msra.mxu0 0
    %1512 = vmatprep.mubr.bf16.mxu0 0
    %1513 = vmatmul.mubr.bf16.gmra.mrb[0].mxu0 %v1478
    %v1514 = vpop.f32.mrb[0].mxu0
    %v1515 = vadd.f32 0.0, %v1514
    %v1516 = vpop.f32.mrb[0].mxu0
    %v1517 = vpop.f32.mrb[0].mxu0
    %v1518 = vadd.f32 0.0, %v1517
    %v1519 = vpop.f32.mrb[0].mxu0
    %1520 = vdwg.mxu0
    %v1521 = vadd.f32 %v1441, %v1515
    %v1522 = vadd.f32 %v1442, %v1518
    %v1523 = vadd.f32 %v1521, %v965
    %v1524 = vadd.f32 %v1522, %v966
    %v1525 = vmax.f32 %v1523, 0.0
    %v1526 = vmax.f32 %v1524, 0.0
    %v1527 = vrot.slane %v1525, 7
    %v1528 = vrot.slane %v1526, 7
    %v1529 = vsel %vm267, %v1527, %v1528
    %v1530 = vsel %vm267, %v1528, %v1527
    %v1531 = vsel %vm1001, 0.0, %v1530
    %v1532 = vsel %vm1002, 0.0, %v1529
    %v1533 = vrot.slane %v1525, 1
    %v1534 = vrot.slane %v1526, 1
    %v1535 = vsel %vm292, %v1533, %v1534
    %v1536 = vsel %vm292, %v1534, %v1533
    %v1537 = vsel %vm1013, 0.0, %v1535
    %v1538 = vsel %vm1014, 0.0, %v1536
    %v1539 = vld [vmem:[%s19] sm:$0x1]
    %v1540 = vpack.c.bf16 %v1532, %v1531
    %v1541 = vld [vmem:[%s17] sm:$0xf]
    %v1542 = vld [vmem:[%s17 + $0x4] sm:$0xf]
    %v1543 = vld [vmem:[%s17 + $0x8] sm:$0xf]
    %v1544 = vld [vmem:[%s17 + $0xc] sm:$0xf]
    %v1545 = vld [vmem:[%s17 + $0x10] sm:$0xf]
    %v1546 = vld [vmem:[%s17 + $0x14] sm:$0xf]
    %v1547 = vld [vmem:[%s17 + $0x18] sm:$0xf]
    %v1548 = vld [vmem:[%s17 + $0x1c] sm:$0xf]
    %v1557 = vunpack.c.l.b16 %v1541
    %v1558 = vunpack.c.l.b16 %v1542
    %v1559 = vunpack.c.l.b16 %v1543
    %v1560 = vunpack.c.l.b16 %v1544
    %v1561 = vunpack.c.l.b16 %v1545
    %v1562 = vunpack.c.l.b16 %v1546
    %v1563 = vunpack.c.l.b16 %v1547
    %v1564 = vunpack.c.l.b16 %v1548
    %v1565 = vpack.c.b16 %v1558, %v1557
    %v1566 = vpack.c.b16 %v1560, %v1559
    %v1567 = vpack.c.b16 %v1562, %v1561
    %v1568 = vpack.c.b16 %v1564, %v1563
    %v1574 = vsel %vm344, %v1540, 0
    %1576 = vmatprep.subr.bf16.mxu0 0
    %1577 = vmatpush1.bf16.msra.mxu0 %v1565
    %1578 = vmatprep.subr.bf16.mxu0 0
    %1579 = vmatpush1.bf16.msra.mxu0 %v1566
    %1580 = vmatprep.subr.bf16.mxu0 0
    %1581 = vmatpush1.bf16.msra.mxu0 %v1567
    %1582 = vmatprep.subr.bf16.mxu0 0
    %1583 = vmatpush1.bf16.msra.mxu0 %v1568
    %1584 = vmatprep.subr.bf16.mxu0 0
    %1585 = vmatpush1.bf16.msra.mxu0 0
    %1586 = vmatprep.subr.bf16.mxu0 0
    %1587 = vmatpush1.bf16.msra.mxu0 0
    %1588 = vmatprep.subr.bf16.mxu0 0
    %1589 = vmatpush1.bf16.msra.mxu0 0
    %1590 = vmatprep.subr.bf16.mxu0 0
    %1591 = vmatpush1.bf16.msra.mxu0 0
    %1592 = vmatprep.subr.bf16.mxu0 0
    %1593 = vmatpush1.bf16.msra.mxu0 0
    %1594 = vmatprep.subr.bf16.mxu0 0
    %1595 = vmatpush1.bf16.msra.mxu0 0
    %1596 = vmatprep.subr.bf16.mxu0 0
    %1597 = vmatpush1.bf16.msra.mxu0 0
    %1598 = vmatprep.subr.bf16.mxu0 0
    %1599 = vmatpush1.bf16.msra.mxu0 0
    %1600 = vmatprep.subr.bf16.mxu0 0
    %1601 = vmatpush1.bf16.msra.mxu0 0
    %1602 = vmatprep.subr.bf16.mxu0 0
    %1603 = vmatpush1.bf16.msra.mxu0 0
    %1604 = vmatprep.subr.bf16.mxu0 0
    %1605 = vmatpush1.bf16.msra.mxu0 0
    %1606 = vmatprep.subr.bf16.mxu0 0
    %1607 = vmatpush1.bf16.msra.mxu0 0
    %1608 = vmatprep.mubr.bf16.mxu0 0
    %1609 = vmatmul.mubr.bf16.gmra.mrb[0].mxu0 %v1574
    %v1610 = vpop.f32.mrb[0].mxu0
    %v1611 = vadd.f32 0.0, %v1610
    %v1612 = vpop.f32.mrb[0].mxu0
    %v1613 = vpop.f32.mrb[0].mxu0
    %v1614 = vadd.f32 0.0, %v1613
    %v1615 = vpop.f32.mrb[0].mxu0
    %1616 = vdwg.mxu0
    %v1618 = vlaneseq
    %v1619 = vshrl.u32 %v1618, 7
    %v1620 = vsub.s32 0, %v1619
    %v1621 = vrot.slane %v1539, %v1620
    %v1623 = vadd.f32 %v1621, %v1611
    %v1624 = vadd.f32 %v1621, %v1614
    %v1625 = vpack.c.bf16 %v1526, %v1525
    %s1626 = scalar_lea.vmem %s17, 32
    %v1627 = vld [vmem:[%s1626] sm:$0xf]
    %v1628 = vld [vmem:[%s1626 + $0x4] sm:$0xf]
    %v1629 = vld [vmem:[%s1626 + $0x8] sm:$0xf]
    %v1630 = vld [vmem:[%s1626 + $0xc] sm:$0xf]
    %v1631 = vld [vmem:[%s1626 + $0x10] sm:$0xf]
    %v1632 = vld [vmem:[%s1626 + $0x14] sm:$0xf]
    %v1633 = vld [vmem:[%s1626 + $0x18] sm:$0xf]
    %v1634 = vld [vmem:[%s1626 + $0x1c] sm:$0xf]
    %v1643 = vunpack.c.l.b16 %v1627
    %v1644 = vunpack.c.l.b16 %v1628
    %v1645 = vunpack.c.l.b16 %v1629
    %v1646 = vunpack.c.l.b16 %v1630
    %v1647 = vunpack.c.l.b16 %v1631
    %v1648 = vunpack.c.l.b16 %v1632
    %v1649 = vunpack.c.l.b16 %v1633
    %v1650 = vunpack.c.l.b16 %v1634
    %v1651 = vpack.c.b16 %v1644, %v1643
    %v1652 = vpack.c.b16 %v1646, %v1645
    %v1653 = vpack.c.b16 %v1648, %v1647
    %v1654 = vpack.c.b16 %v1650, %v1649
    %v1660 = vsel %vm344, %v1625, 0
    %1662 = vmatprep.subr.bf16.mxu0 0
    %1663 = vmatpush1.bf16.msra.mxu0 %v1651
    %1664 = vmatprep.subr.bf16.mxu0 0
    %1665 = vmatpush1.bf16.msra.mxu0 %v1652
    %1666 = vmatprep.subr.bf16.mxu0 0
    %1667 = vmatpush1.bf16.msra.mxu0 %v1653
    %1668 = vmatprep.subr.bf16.mxu0 0
    %1669 = vmatpush1.bf16.msra.mxu0 %v1654
    %1670 = vmatprep.subr.bf16.mxu0 0
    %1671 = vmatpush1.bf16.msra.mxu0 0
    %1672 = vmatprep.subr.bf16.mxu0 0
    %1673 = vmatpush1.bf16.msra.mxu0 0
    %1674 = vmatprep.subr.bf16.mxu0 0
    %1675 = vmatpush1.bf16.msra.mxu0 0
    %1676 = vmatprep.subr.bf16.mxu0 0
    %1677 = vmatpush1.bf16.msra.mxu0 0
    %1678 = vmatprep.subr.bf16.mxu0 0
    %1679 = vmatpush1.bf16.msra.mxu0 0
    %1680 = vmatprep.subr.bf16.mxu0 0
    %1681 = vmatpush1.bf16.msra.mxu0 0
    %1682 = vmatprep.subr.bf16.mxu0 0
    %1683 = vmatpush1.bf16.msra.mxu0 0
    %1684 = vmatprep.subr.bf16.mxu0 0
    %1685 = vmatpush1.bf16.msra.mxu0 0
    %1686 = vmatprep.subr.bf16.mxu0 0
    %1687 = vmatpush1.bf16.msra.mxu0 0
    %1688 = vmatprep.subr.bf16.mxu0 0
    %1689 = vmatpush1.bf16.msra.mxu0 0
    %1690 = vmatprep.subr.bf16.mxu0 0
    %1691 = vmatpush1.bf16.msra.mxu0 0
    %1692 = vmatprep.subr.bf16.mxu0 0
    %1693 = vmatpush1.bf16.msra.mxu0 0
    %1694 = vmatprep.mubr.bf16.mxu0 0
    %1695 = vmatmul.mubr.bf16.gmra.mrb[0].mxu0 %v1660
    %v1696 = vpop.f32.mrb[0].mxu0
    %v1697 = vadd.f32 0.0, %v1696
    %v1698 = vpop.f32.mrb[0].mxu0
    %v1699 = vpop.f32.mrb[0].mxu0
    %v1700 = vadd.f32 0.0, %v1699
    %v1701 = vpop.f32.mrb[0].mxu0
    %1702 = vdwg.mxu0
    %v1703 = vadd.f32 %v1623, %v1697
    %v1704 = vadd.f32 %v1624, %v1700
    %v1705 = vpack.c.bf16 %v1538, %v1537
    %s1706 = scalar_lea.vmem %s17, 64
    %v1707 = vld [vmem:[%s1706] sm:$0xf]
    %v1708 = vld [vmem:[%s1706 + $0x4] sm:$0xf]
    %v1709 = vld [vmem:[%s1706 + $0x8] sm:$0xf]
    %v1710 = vld [vmem:[%s1706 + $0xc] sm:$0xf]
    %v1711 = vld [vmem:[%s1706 + $0x10] sm:$0xf]
    %v1712 = vld [vmem:[%s1706 + $0x14] sm:$0xf]
    %v1713 = vld [vmem:[%s1706 + $0x18] sm:$0xf]
    %v1714 = vld [vmem:[%s1706 + $0x1c] sm:$0xf]
    %v1723 = vunpack.c.l.b16 %v1707
    %v1724 = vunpack.c.l.b16 %v1708
    %v1725 = vunpack.c.l.b16 %v1709
    %v1726 = vunpack.c.l.b16 %v1710
    %v1727 = vunpack.c.l.b16 %v1711
    %v1728 = vunpack.c.l.b16 %v1712
    %v1729 = vunpack.c.l.b16 %v1713
    %v1730 = vunpack.c.l.b16 %v1714
    %v1731 = vpack.c.b16 %v1724, %v1723
    %v1732 = vpack.c.b16 %v1726, %v1725
    %v1733 = vpack.c.b16 %v1728, %v1727
    %v1734 = vpack.c.b16 %v1730, %v1729
    %v1740 = vsel %vm344, %v1705, 0
    %1742 = vmatprep.subr.bf16.mxu0 0
    %1743 = vmatpush1.bf16.msra.mxu0 %v1731
    %1744 = vmatprep.subr.bf16.mxu0 0
    %1745 = vmatpush1.bf16.msra.mxu0 %v1732
    %1746 = vmatprep.subr.bf16.mxu0 0
    %1747 = vmatpush1.bf16.msra.mxu0 %v1733
    %1748 = vmatprep.subr.bf16.mxu0 0
    %1749 = vmatpush1.bf16.msra.mxu0 %v1734
    %1750 = vmatprep.subr.bf16.mxu0 0
    %1751 = vmatpush1.bf16.msra.mxu0 0
    %1752 = vmatprep.subr.bf16.mxu0 0
    %1753 = vmatpush1.bf16.msra.mxu0 0
    %1754 = vmatprep.subr.bf16.mxu0 0
    %1755 = vmatpush1.bf16.msra.mxu0 0
    %1756 = vmatprep.subr.bf16.mxu0 0
    %1757 = vmatpush1.bf16.msra.mxu0 0
    %1758 = vmatprep.subr.bf16.mxu0 0
    %1759 = vmatpush1.bf16.msra.mxu0 0
    %1760 = vmatprep.subr.bf16.mxu0 0
    %1761 = vmatpush1.bf16.msra.mxu0 0
    %1762 = vmatprep.subr.bf16.mxu0 0
    %1763 = vmatpush1.bf16.msra.mxu0 0
    %1764 = vmatprep.subr.bf16.mxu0 0
    %1765 = vmatpush1.bf16.msra.mxu0 0
    %1766 = vmatprep.subr.bf16.mxu0 0
    %1767 = vmatpush1.bf16.msra.mxu0 0
    %1768 = vmatprep.subr.bf16.mxu0 0
    %1769 = vmatpush1.bf16.msra.mxu0 0
    %1770 = vmatprep.subr.bf16.mxu0 0
    %1771 = vmatpush1.bf16.msra.mxu0 0
    %1772 = vmatprep.subr.bf16.mxu0 0
    %1773 = vmatpush1.bf16.msra.mxu0 0
    %1774 = vmatprep.mubr.bf16.mxu0 0
    %1775 = vmatmul.mubr.bf16.gmra.mrb[0].mxu0 %v1740
    %v1776 = vpop.f32.mrb[0].mxu0
    %v1777 = vadd.f32 0.0, %v1776
    %v1778 = vpop.f32.mrb[0].mxu0
    %v1779 = vpop.f32.mrb[0].mxu0
    %v1780 = vadd.f32 0.0, %v1779
    %v1781 = vpop.f32.mrb[0].mxu0
    %1782 = vdwg.mxu0
    %v1783 = vadd.f32 %v1703, %v1777
    %v1784 = vadd.f32 %v1704, %v1780
    %v1785 = vmax.f32 %v1783, 0.0
    %v1786 = vmax.f32 %v1784, 0.0
    %v1787 = vrot.slane %v1785, 7
    %v1788 = vrot.slane %v1786, 7
    %v1789 = vsel %vm267, %v1787, %v1788
    %v1790 = vsel %vm267, %v1788, %v1787
    %v1791 = vsel %vm1001, 0.0, %v1790
    %v1792 = vsel %vm1002, 0.0, %v1789
    %v1793 = vrot.slane %v1785, 1
    %v1794 = vrot.slane %v1786, 1
    %v1795 = vsel %vm292, %v1793, %v1794
    %v1796 = vsel %vm292, %v1794, %v1793
    %v1797 = vsel %vm1013, 0.0, %v1795
    %v1798 = vsel %vm1014, 0.0, %v1796
    %v1799 = vld [vmem:[%s23] sm:$0x1]
    %v1800 = vpack.c.bf16 %v1792, %v1791
    %v1801 = vld [vmem:[%s21] sm:$0xf]
    %v1802 = vld [vmem:[%s21 + $0x4] sm:$0xf]
    %v1803 = vld [vmem:[%s21 + $0x8] sm:$0xf]
    %v1804 = vld [vmem:[%s21 + $0xc] sm:$0xf]
    %v1805 = vld [vmem:[%s21 + $0x10] sm:$0xf]
    %v1806 = vld [vmem:[%s21 + $0x14] sm:$0xf]
    %v1807 = vld [vmem:[%s21 + $0x18] sm:$0xf]
    %v1808 = vld [vmem:[%s21 + $0x1c] sm:$0xf]
    %v1817 = vunpack.c.l.b16 %v1801
    %v1818 = vunpack.c.l.b16 %v1802
    %v1819 = vunpack.c.l.b16 %v1803
    %v1820 = vunpack.c.l.b16 %v1804
    %v1821 = vunpack.c.l.b16 %v1805
    %v1822 = vunpack.c.l.b16 %v1806
    %v1823 = vunpack.c.l.b16 %v1807
    %v1824 = vunpack.c.l.b16 %v1808
    %v1825 = vpack.c.b16 %v1818, %v1817
    %v1826 = vpack.c.b16 %v1820, %v1819
    %v1827 = vpack.c.b16 %v1822, %v1821
    %v1828 = vpack.c.b16 %v1824, %v1823
    %v1834 = vsel %vm344, %v1800, 0
    %1836 = vmatprep.subr.bf16.mxu0 0
    %1837 = vmatpush1.bf16.msra.mxu0 %v1825
    %1838 = vmatprep.subr.bf16.mxu0 0
    %1839 = vmatpush1.bf16.msra.mxu0 %v1826
    %1840 = vmatprep.subr.bf16.mxu0 0
    %1841 = vmatpush1.bf16.msra.mxu0 %v1827
    %1842 = vmatprep.subr.bf16.mxu0 0
    %1843 = vmatpush1.bf16.msra.mxu0 %v1828
    %1844 = vmatprep.subr.bf16.mxu0 0
    %1845 = vmatpush1.bf16.msra.mxu0 0
    %1846 = vmatprep.subr.bf16.mxu0 0
    %1847 = vmatpush1.bf16.msra.mxu0 0
    %1848 = vmatprep.subr.bf16.mxu0 0
    %1849 = vmatpush1.bf16.msra.mxu0 0
    %1850 = vmatprep.subr.bf16.mxu0 0
    %1851 = vmatpush1.bf16.msra.mxu0 0
    %1852 = vmatprep.subr.bf16.mxu0 0
    %1853 = vmatpush1.bf16.msra.mxu0 0
    %1854 = vmatprep.subr.bf16.mxu0 0
    %1855 = vmatpush1.bf16.msra.mxu0 0
    %1856 = vmatprep.subr.bf16.mxu0 0
    %1857 = vmatpush1.bf16.msra.mxu0 0
    %1858 = vmatprep.subr.bf16.mxu0 0
    %1859 = vmatpush1.bf16.msra.mxu0 0
    %1860 = vmatprep.subr.bf16.mxu0 0
    %1861 = vmatpush1.bf16.msra.mxu0 0
    %1862 = vmatprep.subr.bf16.mxu0 0
    %1863 = vmatpush1.bf16.msra.mxu0 0
    %1864 = vmatprep.subr.bf16.mxu0 0
    %1865 = vmatpush1.bf16.msra.mxu0 0
    %1866 = vmatprep.subr.bf16.mxu0 0
    %1867 = vmatpush1.bf16.msra.mxu0 0
    %1868 = vmatprep.mubr.bf16.mxu0 0
    %1869 = vmatmul.mubr.bf16.gmra.mrb[0].mxu0 %v1834
    %v1870 = vpop.f32.mrb[0].mxu0
    %v1871 = vadd.f32 0.0, %v1870
    %v1872 = vpop.f32.mrb[0].mxu0
    %v1873 = vpop.f32.mrb[0].mxu0
    %v1874 = vadd.f32 0.0, %v1873
    %v1875 = vpop.f32.mrb[0].mxu0
    %1876 = vdwg.mxu0
    %v1878 = vlaneseq
    %v1879 = vshrl.u32 %v1878, 7
    %v1880 = vsub.s32 0, %v1879
    %v1881 = vrot.slane %v1799, %v1880
    %v1883 = vadd.f32 %v1881, %v1871
    %v1884 = vadd.f32 %v1881, %v1874
    %v1885 = vpack.c.bf16 %v1786, %v1785
    %s1886 = scalar_lea.vmem %s21, 32
    %v1887 = vld [vmem:[%s1886] sm:$0xf]
    %v1888 = vld [vmem:[%s1886 + $0x4] sm:$0xf]
    %v1889 = vld [vmem:[%s1886 + $0x8] sm:$0xf]
    %v1890 = vld [vmem:[%s1886 + $0xc] sm:$0xf]
    %v1891 = vld [vmem:[%s1886 + $0x10] sm:$0xf]
    %v1892 = vld [vmem:[%s1886 + $0x14] sm:$0xf]
    %v1893 = vld [vmem:[%s1886 + $0x18] sm:$0xf]
    %v1894 = vld [vmem:[%s1886 + $0x1c] sm:$0xf]
    %v1903 = vunpack.c.l.b16 %v1887
    %v1904 = vunpack.c.l.b16 %v1888
    %v1905 = vunpack.c.l.b16 %v1889
    %v1906 = vunpack.c.l.b16 %v1890
    %v1907 = vunpack.c.l.b16 %v1891
    %v1908 = vunpack.c.l.b16 %v1892
    %v1909 = vunpack.c.l.b16 %v1893
    %v1910 = vunpack.c.l.b16 %v1894
    %v1911 = vpack.c.b16 %v1904, %v1903
    %v1912 = vpack.c.b16 %v1906, %v1905
    %v1913 = vpack.c.b16 %v1908, %v1907
    %v1914 = vpack.c.b16 %v1910, %v1909
    %v1920 = vsel %vm344, %v1885, 0
    %1922 = vmatprep.subr.bf16.mxu0 0
    %1923 = vmatpush1.bf16.msra.mxu0 %v1911
    %1924 = vmatprep.subr.bf16.mxu0 0
    %1925 = vmatpush1.bf16.msra.mxu0 %v1912
    %1926 = vmatprep.subr.bf16.mxu0 0
    %1927 = vmatpush1.bf16.msra.mxu0 %v1913
    %1928 = vmatprep.subr.bf16.mxu0 0
    %1929 = vmatpush1.bf16.msra.mxu0 %v1914
    %1930 = vmatprep.subr.bf16.mxu0 0
    %1931 = vmatpush1.bf16.msra.mxu0 0
    %1932 = vmatprep.subr.bf16.mxu0 0
    %1933 = vmatpush1.bf16.msra.mxu0 0
    %1934 = vmatprep.subr.bf16.mxu0 0
    %1935 = vmatpush1.bf16.msra.mxu0 0
    %1936 = vmatprep.subr.bf16.mxu0 0
    %1937 = vmatpush1.bf16.msra.mxu0 0
    %1938 = vmatprep.subr.bf16.mxu0 0
    %1939 = vmatpush1.bf16.msra.mxu0 0
    %1940 = vmatprep.subr.bf16.mxu0 0
    %1941 = vmatpush1.bf16.msra.mxu0 0
    %1942 = vmatprep.subr.bf16.mxu0 0
    %1943 = vmatpush1.bf16.msra.mxu0 0
    %1944 = vmatprep.subr.bf16.mxu0 0
    %1945 = vmatpush1.bf16.msra.mxu0 0
    %1946 = vmatprep.subr.bf16.mxu0 0
    %1947 = vmatpush1.bf16.msra.mxu0 0
    %1948 = vmatprep.subr.bf16.mxu0 0
    %1949 = vmatpush1.bf16.msra.mxu0 0
    %1950 = vmatprep.subr.bf16.mxu0 0
    %1951 = vmatpush1.bf16.msra.mxu0 0
    %1952 = vmatprep.subr.bf16.mxu0 0
    %1953 = vmatpush1.bf16.msra.mxu0 0
    %1954 = vmatprep.mubr.bf16.mxu0 0
    %1955 = vmatmul.mubr.bf16.gmra.mrb[0].mxu0 %v1920
    %v1956 = vpop.f32.mrb[0].mxu0
    %v1957 = vadd.f32 0.0, %v1956
    %v1958 = vpop.f32.mrb[0].mxu0
    %v1959 = vpop.f32.mrb[0].mxu0
    %v1960 = vadd.f32 0.0, %v1959
    %v1961 = vpop.f32.mrb[0].mxu0
    %1962 = vdwg.mxu0
    %v1963 = vadd.f32 %v1883, %v1957
    %v1964 = vadd.f32 %v1884, %v1960
    %v1965 = vpack.c.bf16 %v1798, %v1797
    %s1966 = scalar_lea.vmem %s21, 64
    %v1967 = vld [vmem:[%s1966] sm:$0xf]
    %v1968 = vld [vmem:[%s1966 + $0x4] sm:$0xf]
    %v1969 = vld [vmem:[%s1966 + $0x8] sm:$0xf]
    %v1970 = vld [vmem:[%s1966 + $0xc] sm:$0xf]
    %v1971 = vld [vmem:[%s1966 + $0x10] sm:$0xf]
    %v1972 = vld [vmem:[%s1966 + $0x14] sm:$0xf]
    %v1973 = vld [vmem:[%s1966 + $0x18] sm:$0xf]
    %v1974 = vld [vmem:[%s1966 + $0x1c] sm:$0xf]
    %v1983 = vunpack.c.l.b16 %v1967
    %v1984 = vunpack.c.l.b16 %v1968
    %v1985 = vunpack.c.l.b16 %v1969
    %v1986 = vunpack.c.l.b16 %v1970
    %v1987 = vunpack.c.l.b16 %v1971
    %v1988 = vunpack.c.l.b16 %v1972
    %v1989 = vunpack.c.l.b16 %v1973
    %v1990 = vunpack.c.l.b16 %v1974
    %v1991 = vpack.c.b16 %v1984, %v1983
    %v1992 = vpack.c.b16 %v1986, %v1985
    %v1993 = vpack.c.b16 %v1988, %v1987
    %v1994 = vpack.c.b16 %v1990, %v1989
    %v2000 = vsel %vm344, %v1965, 0
    %2002 = vmatprep.subr.bf16.mxu0 0
    %2003 = vmatpush1.bf16.msra.mxu0 %v1991
    %2004 = vmatprep.subr.bf16.mxu0 0
    %2005 = vmatpush1.bf16.msra.mxu0 %v1992
    %2006 = vmatprep.subr.bf16.mxu0 0
    %2007 = vmatpush1.bf16.msra.mxu0 %v1993
    %2008 = vmatprep.subr.bf16.mxu0 0
    %2009 = vmatpush1.bf16.msra.mxu0 %v1994
    %2010 = vmatprep.subr.bf16.mxu0 0
    %2011 = vmatpush1.bf16.msra.mxu0 0
    %2012 = vmatprep.subr.bf16.mxu0 0
    %2013 = vmatpush1.bf16.msra.mxu0 0
    %2014 = vmatprep.subr.bf16.mxu0 0
    %2015 = vmatpush1.bf16.msra.mxu0 0
    %2016 = vmatprep.subr.bf16.mxu0 0
    %2017 = vmatpush1.bf16.msra.mxu0 0
    %2018 = vmatprep.subr.bf16.mxu0 0
    %2019 = vmatpush1.bf16.msra.mxu0 0
    %2020 = vmatprep.subr.bf16.mxu0 0
    %2021 = vmatpush1.bf16.msra.mxu0 0
    %2022 = vmatprep.subr.bf16.mxu0 0
    %2023 = vmatpush1.bf16.msra.mxu0 0
    %2024 = vmatprep.subr.bf16.mxu0 0
    %2025 = vmatpush1.bf16.msra.mxu0 0
    %2026 = vmatprep.subr.bf16.mxu0 0
    %2027 = vmatpush1.bf16.msra.mxu0 0
    %2028 = vmatprep.subr.bf16.mxu0 0
    %2029 = vmatpush1.bf16.msra.mxu0 0
    %2030 = vmatprep.subr.bf16.mxu0 0
    %2031 = vmatpush1.bf16.msra.mxu0 0
    %2032 = vmatprep.subr.bf16.mxu0 0
    %2033 = vmatpush1.bf16.msra.mxu0 0
    %2034 = vmatprep.mubr.bf16.mxu0 0
    %2035 = vmatmul.mubr.bf16.gmra.mrb[0].mxu0 %v2000
    %v2036 = vpop.f32.mrb[0].mxu0
    %v2037 = vadd.f32 0.0, %v2036
    %v2038 = vpop.f32.mrb[0].mxu0
    %v2039 = vpop.f32.mrb[0].mxu0
    %v2040 = vadd.f32 0.0, %v2039
    %v2041 = vpop.f32.mrb[0].mxu0
    %2042 = vdwg.mxu0
    %v2043 = vadd.f32 %v1963, %v2037
    %v2044 = vadd.f32 %v1964, %v2040
    %v2045 = vadd.f32 %v2043, %v1523
    %v2046 = vadd.f32 %v2044, %v1524
    %v2047 = vrot.slane %v2045, 7
    %v2048 = vrot.slane %v2046, 7
    %v2049 = vsel %vm267, %v2047, %v2048
    %v2050 = vsel %vm267, %v2048, %v2047
    %v2051 = vsel %vm1001, 0.0, %v2050
    %v2052 = vsel %vm1002, 0.0, %v2049
    %v2053 = vrot.slane %v2045, 1
    %v2054 = vrot.slane %v2046, 1
    %v2055 = vsel %vm292, %v2053, %v2054
    %v2056 = vsel %vm292, %v2054, %v2053
    %v2057 = vsel %vm1013, 0.0, %v2055
    %v2058 = vsel %vm1014, 0.0, %v2056
    %v2059 = vld [vmem:[%s27] sm:$0x1]
    %v2060 = vpack.c.bf16 %v2052, %v2051
    %v2061 = vld [vmem:[%s25] sm:$0xf]
    %v2062 = vld [vmem:[%s25 + $0x4] sm:$0xf]
    %v2063 = vld [vmem:[%s25 + $0x8] sm:$0xf]
    %v2064 = vld [vmem:[%s25 + $0xc] sm:$0xf]
    %v2065 = vld [vmem:[%s25 + $0x10] sm:$0xf]
    %v2066 = vld [vmem:[%s25 + $0x14] sm:$0xf]
    %v2067 = vld [vmem:[%s25 + $0x18] sm:$0xf]
    %v2068 = vld [vmem:[%s25 + $0x1c] sm:$0xf]
    %v2077 = vunpack.c.l.b16 %v2061
    %v2078 = vunpack.c.l.b16 %v2062
    %v2079 = vunpack.c.l.b16 %v2063
    %v2080 = vunpack.c.l.b16 %v2064
    %v2081 = vunpack.c.l.b16 %v2065
    %v2082 = vunpack.c.l.b16 %v2066
    %v2083 = vunpack.c.l.b16 %v2067
    %v2084 = vunpack.c.l.b16 %v2068
    %v2085 = vpack.c.b16 %v2078, %v2077
    %v2086 = vpack.c.b16 %v2080, %v2079
    %v2087 = vpack.c.b16 %v2082, %v2081
    %v2088 = vpack.c.b16 %v2084, %v2083
    %v2094 = vsel %vm344, %v2060, 0
    %2096 = vmatprep.subr.bf16.mxu0 0
    %2097 = vmatpush1.bf16.msra.mxu0 %v2085
    %2098 = vmatprep.subr.bf16.mxu0 0
    %2099 = vmatpush1.bf16.msra.mxu0 %v2086
    %2100 = vmatprep.subr.bf16.mxu0 0
    %2101 = vmatpush1.bf16.msra.mxu0 %v2087
    %2102 = vmatprep.subr.bf16.mxu0 0
    %2103 = vmatpush1.bf16.msra.mxu0 %v2088
    %2104 = vmatprep.subr.bf16.mxu0 0
    %2105 = vmatpush1.bf16.msra.mxu0 0
    %2106 = vmatprep.subr.bf16.mxu0 0
    %2107 = vmatpush1.bf16.msra.mxu0 0
    %2108 = vmatprep.subr.bf16.mxu0 0
    %2109 = vmatpush1.bf16.msra.mxu0 0
    %2110 = vmatprep.subr.bf16.mxu0 0
    %2111 = vmatpush1.bf16.msra.mxu0 0
    %2112 = vmatprep.subr.bf16.mxu0 0
    %2113 = vmatpush1.bf16.msra.mxu0 0
    %2114 = vmatprep.subr.bf16.mxu0 0
    %2115 = vmatpush1.bf16.msra.mxu0 0
    %2116 = vmatprep.subr.bf16.mxu0 0
    %2117 = vmatpush1.bf16.msra.mxu0 0
    %2118 = vmatprep.subr.bf16.mxu0 0
    %2119 = vmatpush1.bf16.msra.mxu0 0
    %2120 = vmatprep.subr.bf16.mxu0 0
    %2121 = vmatpush1.bf16.msra.mxu0 0
    %2122 = vmatprep.subr.bf16.mxu0 0
    %2123 = vmatpush1.bf16.msra.mxu0 0
    %2124 = vmatprep.subr.bf16.mxu0 0
    %2125 = vmatpush1.bf16.msra.mxu0 0
    %2126 = vmatprep.subr.bf16.mxu0 0
    %2127 = vmatpush1.bf16.msra.mxu0 0
    %2128 = vmatprep.mubr.bf16.mxu0 0
    %2129 = vmatmul.mubr.bf16.gmra.mrb[0].mxu0 %v2094
    %v2130 = vpop.f32.mrb[0].mxu0
    %v2131 = vadd.f32 0.0, %v2130
    %v2132 = vpop.f32.mrb[0].mxu0
    %v2133 = vpop.f32.mrb[0].mxu0
    %v2134 = vadd.f32 0.0, %v2133
    %v2135 = vpop.f32.mrb[0].mxu0
    %2136 = vdwg.mxu0
    %v2138 = vlaneseq
    %v2139 = vshrl.u32 %v2138, 7
    %v2140 = vsub.s32 0, %v2139
    %v2141 = vrot.slane %v2059, %v2140
    %v2143 = vadd.f32 %v2141, %v2131
    %v2144 = vadd.f32 %v2141, %v2134
    %v2145 = vpack.c.bf16 %v2046, %v2045
    %s2146 = scalar_lea.vmem %s25, 32
    %v2147 = vld [vmem:[%s2146] sm:$0xf]
    %v2148 = vld [vmem:[%s2146 + $0x4] sm:$0xf]
    %v2149 = vld [vmem:[%s2146 + $0x8] sm:$0xf]
    %v2150 = vld [vmem:[%s2146 + $0xc] sm:$0xf]
    %v2151 = vld [vmem:[%s2146 + $0x10] sm:$0xf]
    %v2152 = vld [vmem:[%s2146 + $0x14] sm:$0xf]
    %v2153 = vld [vmem:[%s2146 + $0x18] sm:$0xf]
    %v2154 = vld [vmem:[%s2146 + $0x1c] sm:$0xf]
    %v2163 = vunpack.c.l.b16 %v2147
    %v2164 = vunpack.c.l.b16 %v2148
    %v2165 = vunpack.c.l.b16 %v2149
    %v2166 = vunpack.c.l.b16 %v2150
    %v2167 = vunpack.c.l.b16 %v2151
    %v2168 = vunpack.c.l.b16 %v2152
    %v2169 = vunpack.c.l.b16 %v2153
    %v2170 = vunpack.c.l.b16 %v2154
    %v2171 = vpack.c.b16 %v2164, %v2163
    %v2172 = vpack.c.b16 %v2166, %v2165
    %v2173 = vpack.c.b16 %v2168, %v2167
    %v2174 = vpack.c.b16 %v2170, %v2169
    %v2180 = vsel %vm344, %v2145, 0
    %2182 = vmatprep.subr.bf16.mxu0 0
    %2183 = vmatpush1.bf16.msra.mxu0 %v2171
    %2184 = vmatprep.subr.bf16.mxu0 0
    %2185 = vmatpush1.bf16.msra.mxu0 %v2172
    %2186 = vmatprep.subr.bf16.mxu0 0
    %2187 = vmatpush1.bf16.msra.mxu0 %v2173
    %2188 = vmatprep.subr.bf16.mxu0 0
    %2189 = vmatpush1.bf16.msra.mxu0 %v2174
    %2190 = vmatprep.subr.bf16.mxu0 0
    %2191 = vmatpush1.bf16.msra.mxu0 0
    %2192 = vmatprep.subr.bf16.mxu0 0
    %2193 = vmatpush1.bf16.msra.mxu0 0
    %2194 = vmatprep.subr.bf16.mxu0 0
    %2195 = vmatpush1.bf16.msra.mxu0 0
    %2196 = vmatprep.subr.bf16.mxu0 0
    %2197 = vmatpush1.bf16.msra.mxu0 0
    %2198 = vmatprep.subr.bf16.mxu0 0
    %2199 = vmatpush1.bf16.msra.mxu0 0
    %2200 = vmatprep.subr.bf16.mxu0 0
    %2201 = vmatpush1.bf16.msra.mxu0 0
    %2202 = vmatprep.subr.bf16.mxu0 0
    %2203 = vmatpush1.bf16.msra.mxu0 0
    %2204 = vmatprep.subr.bf16.mxu0 0
    %2205 = vmatpush1.bf16.msra.mxu0 0
    %2206 = vmatprep.subr.bf16.mxu0 0
    %2207 = vmatpush1.bf16.msra.mxu0 0
    %2208 = vmatprep.subr.bf16.mxu0 0
    %2209 = vmatpush1.bf16.msra.mxu0 0
    %2210 = vmatprep.subr.bf16.mxu0 0
    %2211 = vmatpush1.bf16.msra.mxu0 0
    %2212 = vmatprep.subr.bf16.mxu0 0
    %2213 = vmatpush1.bf16.msra.mxu0 0
    %2214 = vmatprep.mubr.bf16.mxu0 0
    %2215 = vmatmul.mubr.bf16.gmra.mrb[0].mxu0 %v2180
    %v2216 = vpop.f32.mrb[0].mxu0
    %v2217 = vadd.f32 0.0, %v2216
    %v2218 = vpop.f32.mrb[0].mxu0
    %v2219 = vpop.f32.mrb[0].mxu0
    %v2220 = vadd.f32 0.0, %v2219
    %v2221 = vpop.f32.mrb[0].mxu0
    %2222 = vdwg.mxu0
    %v2223 = vadd.f32 %v2143, %v2217
    %v2224 = vadd.f32 %v2144, %v2220
    %v2225 = vpack.c.bf16 %v2058, %v2057
    %s2226 = scalar_lea.vmem %s25, 64
    %v2227 = vld [vmem:[%s2226] sm:$0xf]
    %v2228 = vld [vmem:[%s2226 + $0x4] sm:$0xf]
    %v2229 = vld [vmem:[%s2226 + $0x8] sm:$0xf]
    %v2230 = vld [vmem:[%s2226 + $0xc] sm:$0xf]
    %v2231 = vld [vmem:[%s2226 + $0x10] sm:$0xf]
    %v2232 = vld [vmem:[%s2226 + $0x14] sm:$0xf]
    %v2233 = vld [vmem:[%s2226 + $0x18] sm:$0xf]
    %v2234 = vld [vmem:[%s2226 + $0x1c] sm:$0xf]
    %v2243 = vunpack.c.l.b16 %v2227
    %v2244 = vunpack.c.l.b16 %v2228
    %v2245 = vunpack.c.l.b16 %v2229
    %v2246 = vunpack.c.l.b16 %v2230
    %v2247 = vunpack.c.l.b16 %v2231
    %v2248 = vunpack.c.l.b16 %v2232
    %v2249 = vunpack.c.l.b16 %v2233
    %v2250 = vunpack.c.l.b16 %v2234
    %v2251 = vpack.c.b16 %v2244, %v2243
    %v2252 = vpack.c.b16 %v2246, %v2245
    %v2253 = vpack.c.b16 %v2248, %v2247
    %v2254 = vpack.c.b16 %v2250, %v2249
    %v2260 = vsel %vm344, %v2225, 0
    %2262 = vmatprep.subr.bf16.mxu0 0
    %2263 = vmatpush1.bf16.msra.mxu0 %v2251
    %2264 = vmatprep.subr.bf16.mxu0 0
    %2265 = vmatpush1.bf16.msra.mxu0 %v2252
    %2266 = vmatprep.subr.bf16.mxu0 0
    %2267 = vmatpush1.bf16.msra.mxu0 %v2253
    %2268 = vmatprep.subr.bf16.mxu0 0
    %2269 = vmatpush1.bf16.msra.mxu0 %v2254
    %2270 = vmatprep.subr.bf16.mxu0 0
    %2271 = vmatpush1.bf16.msra.mxu0 0
    %2272 = vmatprep.subr.bf16.mxu0 0
    %2273 = vmatpush1.bf16.msra.mxu0 0
    %2274 = vmatprep.subr.bf16.mxu0 0
    %2275 = vmatpush1.bf16.msra.mxu0 0
    %2276 = vmatprep.subr.bf16.mxu0 0
    %2277 = vmatpush1.bf16.msra.mxu0 0
    %2278 = vmatprep.subr.bf16.mxu0 0
    %2279 = vmatpush1.bf16.msra.mxu0 0
    %2280 = vmatprep.subr.bf16.mxu0 0
    %2281 = vmatpush1.bf16.msra.mxu0 0
    %2282 = vmatprep.subr.bf16.mxu0 0
    %2283 = vmatpush1.bf16.msra.mxu0 0
    %2284 = vmatprep.subr.bf16.mxu0 0
    %2285 = vmatpush1.bf16.msra.mxu0 0
    %2286 = vmatprep.subr.bf16.mxu0 0
    %2287 = vmatpush1.bf16.msra.mxu0 0
    %2288 = vmatprep.subr.bf16.mxu0 0
    %2289 = vmatpush1.bf16.msra.mxu0 0
    %2290 = vmatprep.subr.bf16.mxu0 0
    %2291 = vmatpush1.bf16.msra.mxu0 0
    %2292 = vmatprep.subr.bf16.mxu0 0
    %2293 = vmatpush1.bf16.msra.mxu0 0
    %2294 = vmatprep.mubr.bf16.mxu0 0
    %2295 = vmatmul.mubr.bf16.gmra.mrb[0].mxu0 %v2260
    %v2296 = vpop.f32.mrb[0].mxu0
    %v2297 = vadd.f32 0.0, %v2296
    %v2298 = vpop.f32.mrb[0].mxu0
    %v2299 = vpop.f32.mrb[0].mxu0
    %v2300 = vadd.f32 0.0, %v2299
    %v2301 = vpop.f32.mrb[0].mxu0
    %2302 = vdwg.mxu0
    %v2303 = vadd.f32 %v2223, %v2297
    %v2304 = vadd.f32 %v2224, %v2300
    %v2305 = vrot.slane %v2303, 7
    %v2306 = vrot.slane %v2304, 7
    %v2307 = vsel %vm267, %v2305, %v2306
    %v2308 = vsel %vm267, %v2306, %v2305
    %v2309 = vsel %vm1001, %v2303, %v2308
    %v2310 = vsel %vm1002, %v2304, %v2307
    %v2311 = vrot.slane %v2303, 1
    %v2312 = vrot.slane %v2304, 1
    %v2313 = vsel %vm292, %v2311, %v2312
    %v2314 = vsel %vm292, %v2312, %v2311
    %v2315 = vsel %vm1013, %v2303, %v2313
    %v2316 = vsel %vm1014, %v2304, %v2314
    %v2317 = vmax.f32 %v2303, %v2309
    %v2318 = vmax.f32 %v2304, %v2310
    %v2319 = vmax.f32 %v2317, %v2315
    %v2320 = vmax.f32 %v2318, %v2316
    %2321 = vst [vmem:[#allocation2] sm:$0xff] %v2319
    %2322 = vst [vmem:[#allocation2 + $0x8] sm:$0xff] %v2320
    %v2323 = vld [vmem:[#allocation2] ss:$2 sm:$0xff]
    %v2324 = vpack.c.bf16 %v2323, %v2323
    %v2325 = vld [vmem:[%s29] sm:$0xf]
    %v2326 = vld [vmem:[%s29 + $0x4] sm:$0xf]
    %v2327 = vld [vmem:[%s29 + $0x8] sm:$0xf]
    %v2328 = vld [vmem:[%s29 + $0xc] sm:$0xf]
    %v2329 = vld [vmem:[%s29 + $0x10] sm:$0xf]
    %v2330 = vld [vmem:[%s29 + $0x14] sm:$0xf]
    %v2331 = vld [vmem:[%s29 + $0x18] sm:$0xf]
    %v2332 = vld [vmem:[%s29 + $0x1c] sm:$0xf]
    %v2333 = vld [vmem:[%s29 + $0x20] sm:$0xf]
    %v2334 = vld [vmem:[%s29 + $0x24] sm:$0xf]
    %v2335 = vld [vmem:[%s29 + $0x28] sm:$0xf]
    %v2336 = vld [vmem:[%s29 + $0x2c] sm:$0xf]
    %v2337 = vld [vmem:[%s29 + $0x30] sm:$0xf]
    %v2338 = vld [vmem:[%s29 + $0x34] sm:$0xf]
    %v2339 = vld [vmem:[%s29 + $0x38] sm:$0xf]
    %v2340 = vld [vmem:[%s29 + $0x3c] sm:$0xf]
    %v2357 = vunpack.c.l.b16 %v2325
    %v2358 = vunpack.c.l.b16 %v2326
    %v2359 = vunpack.c.l.b16 %v2327
    %v2360 = vunpack.c.l.b16 %v2328
    %v2361 = vunpack.c.l.b16 %v2329
    %v2362 = vunpack.c.l.b16 %v2330
    %v2363 = vunpack.c.l.b16 %v2331
    %v2364 = vunpack.c.l.b16 %v2332
    %v2365 = vunpack.c.l.b16 %v2333
    %v2366 = vunpack.c.l.b16 %v2334
    %v2367 = vunpack.c.l.b16 %v2335
    %v2368 = vunpack.c.l.b16 %v2336
    %v2369 = vunpack.c.l.b16 %v2337
    %v2370 = vunpack.c.l.b16 %v2338
    %v2371 = vunpack.c.l.b16 %v2339
    %v2372 = vunpack.c.l.b16 %v2340
    %v2373 = vpack.c.b16 %v2358, %v2357
    %v2374 = vpack.c.b16 %v2360, %v2359
    %v2375 = vpack.c.b16 %v2362, %v2361
    %v2376 = vpack.c.b16 %v2364, %v2363
    %v2377 = vpack.c.b16 %v2366, %v2365
    %v2378 = vpack.c.b16 %v2368, %v2367
    %v2379 = vpack.c.b16 %v2370, %v2369
    %v2380 = vpack.c.b16 %v2372, %v2371
    %2389 = vmatprep.subr.bf16.mxu0 0
    %2390 = vmatpush1.bf16.msra.mxu0 %v2373
    %2391 = vmatprep.subr.bf16.mxu0 0
    %2392 = vmatpush1.bf16.msra.mxu0 %v2374
    %2393 = vmatprep.subr.bf16.mxu0 0
    %2394 = vmatpush1.bf16.msra.mxu0 %v2375
    %2395 = vmatprep.subr.bf16.mxu0 0
    %2396 = vmatpush1.bf16.msra.mxu0 %v2376
    %2397 = vmatprep.subr.bf16.mxu0 0
    %2398 = vmatpush1.bf16.msra.mxu0 %v2377
    %2399 = vmatprep.subr.bf16.mxu0 0
    %2400 = vmatpush1.bf16.msra.mxu0 %v2378
    %2401 = vmatprep.subr.bf16.mxu0 0
    %2402 = vmatpush1.bf16.msra.mxu0 %v2379
    %2403 = vmatprep.subr.bf16.mxu0 0
    %2404 = vmatpush1.bf16.msra.mxu0 %v2380
    %2405 = vmatprep.subr.bf16.mxu0 0
    %2406 = vmatpush1.bf16.msra.mxu0 0
    %2407 = vmatprep.subr.bf16.mxu0 0
    %2408 = vmatpush1.bf16.msra.mxu0 0
    %2409 = vmatprep.subr.bf16.mxu0 0
    %2410 = vmatpush1.bf16.msra.mxu0 0
    %2411 = vmatprep.subr.bf16.mxu0 0
    %2412 = vmatpush1.bf16.msra.mxu0 0
    %2413 = vmatprep.subr.bf16.mxu0 0
    %2414 = vmatpush1.bf16.msra.mxu0 0
    %2415 = vmatprep.subr.bf16.mxu0 0
    %2416 = vmatpush1.bf16.msra.mxu0 0
    %2417 = vmatprep.subr.bf16.mxu0 0
    %2418 = vmatpush1.bf16.msra.mxu0 0
    %2419 = vmatprep.subr.bf16.mxu0 0
    %2420 = vmatpush1.bf16.msra.mxu0 0
    %2421 = vmatprep.mubr.bf16.mxu0 0
    %2422 = vmatmul.mubr.bf16.gmra.mrb[0].mxu0 %v2324
    %v2423 = vpop.f32.mrb[0].mxu0
    %v2424 = vadd.f32 0.0, %v2423
    %v2425 = vpop.f32.mrb[0].mxu0
    %v2426 = vpop.f32.mrb[0].mxu0
    %v2427 = vpop.f32.mrb[0].mxu0
    %2428 = vdwg.mxu0
    %s2429 = scalar_lea.vmem %s29, 64
    %v2430 = vld [vmem:[%s2429] sm:$0xf]
    %v2431 = vld [vmem:[%s2429 + $0x4] sm:$0xf]
    %v2432 = vld [vmem:[%s2429 + $0x8] sm:$0xf]
    %v2433 = vld [vmem:[%s2429 + $0xc] sm:$0xf]
    %v2434 = vld [vmem:[%s2429 + $0x10] sm:$0xf]
    %v2435 = vld [vmem:[%s2429 + $0x14] sm:$0xf]
    %v2436 = vld [vmem:[%s2429 + $0x18] sm:$0xf]
    %v2437 = vld [vmem:[%s2429 + $0x1c] sm:$0xf]
    %v2438 = vld [vmem:[%s2429 + $0x20] sm:$0xf]
    %v2439 = vld [vmem:[%s2429 + $0x24] sm:$0xf]
    %v2440 = vld [vmem:[%s2429 + $0x28] sm:$0xf]
    %v2441 = vld [vmem:[%s2429 + $0x2c] sm:$0xf]
    %v2442 = vld [vmem:[%s2429 + $0x30] sm:$0xf]
    %v2443 = vld [vmem:[%s2429 + $0x34] sm:$0xf]
    %v2444 = vld [vmem:[%s2429 + $0x38] sm:$0xf]
    %v2445 = vld [vmem:[%s2429 + $0x3c] sm:$0xf]
    %v2462 = vunpack.c.l.b16 %v2430
    %v2463 = vunpack.c.l.b16 %v2431
    %v2464 = vunpack.c.l.b16 %v2432
    %v2465 = vunpack.c.l.b16 %v2433
    %v2466 = vunpack.c.l.b16 %v2434
    %v2467 = vunpack.c.l.b16 %v2435
    %v2468 = vunpack.c.l.b16 %v2436
    %v2469 = vunpack.c.l.b16 %v2437
    %v2470 = vunpack.c.l.b16 %v2438
    %v2471 = vunpack.c.l.b16 %v2439
    %v2472 = vunpack.c.l.b16 %v2440
    %v2473 = vunpack.c.l.b16 %v2441
    %v2474 = vunpack.c.l.b16 %v2442
    %v2475 = vunpack.c.l.b16 %v2443
    %v2476 = vunpack.c.l.b16 %v2444
    %v2477 = vunpack.c.l.b16 %v2445
    %v2478 = vpack.c.b16 %v2463, %v2462
    %v2479 = vpack.c.b16 %v2465, %v2464
    %v2480 = vpack.c.b16 %v2467, %v2466
    %v2481 = vpack.c.b16 %v2469, %v2468
    %v2482 = vpack.c.b16 %v2471, %v2470
    %v2483 = vpack.c.b16 %v2473, %v2472
    %v2484 = vpack.c.b16 %v2475, %v2474
    %v2485 = vpack.c.b16 %v2477, %v2476
    %2494 = vmatprep.subr.bf16.mxu0 0
    %2495 = vmatpush1.bf16.msra.mxu0 %v2478
    %2496 = vmatprep.subr.bf16.mxu0 0
    %2497 = vmatpush1.bf16.msra.mxu0 %v2479
    %2498 = vmatprep.subr.bf16.mxu0 0
    %2499 = vmatpush1.bf16.msra.mxu0 %v2480
    %2500 = vmatprep.subr.bf16.mxu0 0
    %2501 = vmatpush1.bf16.msra.mxu0 %v2481
    %2502 = vmatprep.subr.bf16.mxu0 0
    %2503 = vmatpush1.bf16.msra.mxu0 %v2482
    %2504 = vmatprep.subr.bf16.mxu0 0
    %2505 = vmatpush1.bf16.msra.mxu0 %v2483
    %2506 = vmatprep.subr.bf16.mxu0 0
    %2507 = vmatpush1.bf16.msra.mxu0 %v2484
    %2508 = vmatprep.subr.bf16.mxu0 0
    %2509 = vmatpush1.bf16.msra.mxu0 %v2485
    %2510 = vmatprep.subr.bf16.mxu0 0
    %2511 = vmatpush1.bf16.msra.mxu0 0
    %2512 = vmatprep.subr.bf16.mxu0 0
    %2513 = vmatpush1.bf16.msra.mxu0 0
    %2514 = vmatprep.subr.bf16.mxu0 0
    %2515 = vmatpush1.bf16.msra.mxu0 0
    %2516 = vmatprep.subr.bf16.mxu0 0
    %2517 = vmatpush1.bf16.msra.mxu0 0
    %2518 = vmatprep.subr.bf16.mxu0 0
    %2519 = vmatpush1.bf16.msra.mxu0 0
    %2520 = vmatprep.subr.bf16.mxu0 0
    %2521 = vmatpush1.bf16.msra.mxu0 0
    %2522 = vmatprep.subr.bf16.mxu0 0
    %2523 = vmatpush1.bf16.msra.mxu0 0
    %2524 = vmatprep.subr.bf16.mxu0 0
    %2525 = vmatpush1.bf16.msra.mxu0 0
    %2526 = vmatprep.mubr.bf16.mxu0 0
    %2527 = vmatmul.mubr.bf16.gmra.mrb[0].mxu0 %v2324
    %v2528 = vpop.f32.mrb[0].mxu0
    %v2529 = vadd.f32 0.0, %v2528
    %v2530 = vpop.f32.mrb[0].mxu0
    %v2531 = vpop.f32.mrb[0].mxu0
    %v2532 = vpop.f32.mrb[0].mxu0
    %2533 = vdwg.mxu0
    %v2534 = vmax.f32 %v2424, %v2529
    %s2535 = scalar_lea.vmem %s29, 128
    %v2536 = vld [vmem:[%s2535] sm:$0xf]
    %v2537 = vld [vmem:[%s2535 + $0x4] sm:$0xf]
    %v2538 = vld [vmem:[%s2535 + $0x8] sm:$0xf]
    %v2539 = vld [vmem:[%s2535 + $0xc] sm:$0xf]
    %v2540 = vld [vmem:[%s2535 + $0x10] sm:$0xf]
    %v2541 = vld [vmem:[%s2535 + $0x14] sm:$0xf]
    %v2542 = vld [vmem:[%s2535 + $0x18] sm:$0xf]
    %v2543 = vld [vmem:[%s2535 + $0x1c] sm:$0xf]
    %v2544 = vld [vmem:[%s2535 + $0x20] sm:$0xf]
    %v2545 = vld [vmem:[%s2535 + $0x24] sm:$0xf]
    %v2546 = vld [vmem:[%s2535 + $0x28] sm:$0xf]
    %v2547 = vld [vmem:[%s2535 + $0x2c] sm:$0xf]
    %v2548 = vld [vmem:[%s2535 + $0x30] sm:$0xf]
    %v2549 = vld [vmem:[%s2535 + $0x34] sm:$0xf]
    %v2550 = vld [vmem:[%s2535 + $0x38] sm:$0xf]
    %v2551 = vld [vmem:[%s2535 + $0x3c] sm:$0xf]
    %v2568 = vunpack.c.l.b16 %v2536
    %v2569 = vunpack.c.l.b16 %v2537
    %v2570 = vunpack.c.l.b16 %v2538
    %v2571 = vunpack.c.l.b16 %v2539
    %v2572 = vunpack.c.l.b16 %v2540
    %v2573 = vunpack.c.l.b16 %v2541
    %v2574 = vunpack.c.l.b16 %v2542
    %v2575 = vunpack.c.l.b16 %v2543
    %v2576 = vunpack.c.l.b16 %v2544
    %v2577 = vunpack.c.l.b16 %v2545
    %v2578 = vunpack.c.l.b16 %v2546
    %v2579 = vunpack.c.l.b16 %v2547
    %v2580 = vunpack.c.l.b16 %v2548
    %v2581 = vunpack.c.l.b16 %v2549
    %v2582 = vunpack.c.l.b16 %v2550
    %v2583 = vunpack.c.l.b16 %v2551
    %v2584 = vpack.c.b16 %v2569, %v2568
    %v2585 = vpack.c.b16 %v2571, %v2570
    %v2586 = vpack.c.b16 %v2573, %v2572
    %v2587 = vpack.c.b16 %v2575, %v2574
    %v2588 = vpack.c.b16 %v2577, %v2576
    %v2589 = vpack.c.b16 %v2579, %v2578
    %v2590 = vpack.c.b16 %v2581, %v2580
    %v2591 = vpack.c.b16 %v2583, %v2582
    %2600 = vmatprep.subr.bf16.mxu0 0
    %2601 = vmatpush1.bf16.msra.mxu0 %v2584
    %2602 = vmatprep.subr.bf16.mxu0 0
    %2603 = vmatpush1.bf16.msra.mxu0 %v2585
    %2604 = vmatprep.subr.bf16.mxu0 0
    %2605 = vmatpush1.bf16.msra.mxu0 %v2586
    %2606 = vmatprep.subr.bf16.mxu0 0
    %2607 = vmatpush1.bf16.msra.mxu0 %v2587
    %2608 = vmatprep.subr.bf16.mxu0 0
    %2609 = vmatpush1.bf16.msra.mxu0 %v2588
    %2610 = vmatprep.subr.bf16.mxu0 0
    %2611 = vmatpush1.bf16.msra.mxu0 %v2589
    %2612 = vmatprep.subr.bf16.mxu0 0
    %2613 = vmatpush1.bf16.msra.mxu0 %v2590
    %2614 = vmatprep.subr.bf16.mxu0 0
    %2615 = vmatpush1.bf16.msra.mxu0 %v2591
    %2616 = vmatprep.subr.bf16.mxu0 0
    %2617 = vmatpush1.bf16.msra.mxu0 0
    %2618 = vmatprep.subr.bf16.mxu0 0
    %2619 = vmatpush1.bf16.msra.mxu0 0
    %2620 = vmatprep.subr.bf16.mxu0 0
    %2621 = vmatpush1.bf16.msra.mxu0 0
    %2622 = vmatprep.subr.bf16.mxu0 0
    %2623 = vmatpush1.bf16.msra.mxu0 0
    %2624 = vmatprep.subr.bf16.mxu0 0
    %2625 = vmatpush1.bf16.msra.mxu0 0
    %2626 = vmatprep.subr.bf16.mxu0 0
    %2627 = vmatpush1.bf16.msra.mxu0 0
    %2628 = vmatprep.subr.bf16.mxu0 0
    %2629 = vmatpush1.bf16.msra.mxu0 0
    %2630 = vmatprep.subr.bf16.mxu0 0
    %2631 = vmatpush1.bf16.msra.mxu0 0
    %2632 = vmatprep.mubr.bf16.mxu0 0
    %2633 = vmatmul.mubr.bf16.gmra.mrb[0].mxu0 %v2324
    %v2634 = vpop.f32.mrb[0].mxu0
    %v2635 = vadd.f32 0.0, %v2634
    %v2636 = vpop.f32.mrb[0].mxu0
    %v2637 = vpop.f32.mrb[0].mxu0
    %v2638 = vpop.f32.mrb[0].mxu0
    %2639 = vdwg.mxu0
    %v2640 = vmax.f32 %v2534, %v2635
    %v2641 = vmax.f32 %v2640, 0.0
    %vm2642 = vcmp.lt.s32.totalorder %v207, 0
    %v2643 = vsub.s32 0, %v207
    %v2644 = vsel %vm2642, %v2643, %v207
    %v2645 = vshrl.u32 %v2644, 2
    %v2646 = vand.u32 %v2644, 3
    %v2647 = vsub.s32 0, %v2646
    %v2648 = vsel %vm2642, %v2647, %v2646
    %vm2649 = vcmp.ne.s32.totalorder %v2648, 0
    %vm2650 = vcmp.lt.s32.totalorder %v2648, 0
    %vm2651 = vmand %vm2650, %vm2649
    %v2652 = vadd.s32 %v2648, 4
    %v2653 = vsel %vm2651, %v2652, %v2648
    %vm2654 = vcmp.eq.s32.totalorder %v2653, 0
    %v2655 = vrot.slane %v2641, 7
    %v2656 = vsel %vm2654, 1, 0
    %vm2657 = vcmp.eq.s32.totalorder %v2656, 1
    %v2658 = vsel %vm2657, 0.0, %v2655
    %vm2659 = vcmp.eq.s32.totalorder %v2653, 3
    %v2660 = vrot.slane %v2641, 1
    %v2661 = vsel %vm2659, 1, 0
    %vm2662 = vcmp.eq.s32.totalorder %v2661, 1
    %v2663 = vsel %vm2662, 0.0, %v2660
    %v2664 = vld [vmem:[%s33] sm:$0x1]
    %v2665 = vpack.c.bf16 %v2658, %v2658
    %v2666 = vld [vmem:[%s31] sm:$0xf]
    %v2667 = vld [vmem:[%s31 + $0x4] sm:$0xf]
    %v2668 = vld [vmem:[%s31 + $0x8] sm:$0xf]
    %v2669 = vld [vmem:[%s31 + $0xc] sm:$0xf]
    %v2670 = vld [vmem:[%s31 + $0x10] sm:$0xf]
    %v2671 = vld [vmem:[%s31 + $0x14] sm:$0xf]
    %v2672 = vld [vmem:[%s31 + $0x18] sm:$0xf]
    %v2673 = vld [vmem:[%s31 + $0x1c] sm:$0xf]
    %v2682 = vunpack.c.l.b16 %v2666
    %v2683 = vunpack.c.l.b16 %v2667
    %v2684 = vunpack.c.l.b16 %v2668
    %v2685 = vunpack.c.l.b16 %v2669
    %v2686 = vunpack.c.l.b16 %v2670
    %v2687 = vunpack.c.l.b16 %v2671
    %v2688 = vunpack.c.l.b16 %v2672
    %v2689 = vunpack.c.l.b16 %v2673
    %v2690 = vpack.c.b16 %v2683, %v2682
    %v2691 = vpack.c.b16 %v2685, %v2684
    %v2692 = vpack.c.b16 %v2687, %v2686
    %v2693 = vpack.c.b16 %v2689, %v2688
    %v2699 = vsel %vm344, %v2665, 0
    %2701 = vmatprep.subr.bf16.mxu0 0
    %2702 = vmatpush1.bf16.msra.mxu0 %v2690
    %2703 = vmatprep.subr.bf16.mxu0 0
    %2704 = vmatpush1.bf16.msra.mxu0 %v2691
    %2705 = vmatprep.subr.bf16.mxu0 0
    %2706 = vmatpush1.bf16.msra.mxu0 %v2692
    %2707 = vmatprep.subr.bf16.mxu0 0
    %2708 = vmatpush1.bf16.msra.mxu0 %v2693
    %2709 = vmatprep.subr.bf16.mxu0 0
    %2710 = vmatpush1.bf16.msra.mxu0 0
    %2711 = vmatprep.subr.bf16.mxu0 0
    %2712 = vmatpush1.bf16.msra.mxu0 0
    %2713 = vmatprep.subr.bf16.mxu0 0
    %2714 = vmatpush1.bf16.msra.mxu0 0
    %2715 = vmatprep.subr.bf16.mxu0 0
    %2716 = vmatpush1.bf16.msra.mxu0 0
    %2717 = vmatprep.subr.bf16.mxu0 0
    %2718 = vmatpush1.bf16.msra.mxu0 0
    %2719 = vmatprep.subr.bf16.mxu0 0
    %2720 = vmatpush1.bf16.msra.mxu0 0
    %2721 = vmatprep.subr.bf16.mxu0 0
    %2722 = vmatpush1.bf16.msra.mxu0 0
    %2723 = vmatprep.subr.bf16.mxu0 0
    %2724 = vmatpush1.bf16.msra.mxu0 0
    %2725 = vmatprep.subr.bf16.mxu0 0
    %2726 = vmatpush1.bf16.msra.mxu0 0
    %2727 = vmatprep.subr.bf16.mxu0 0
    %2728 = vmatpush1.bf16.msra.mxu0 0
    %2729 = vmatprep.subr.bf16.mxu0 0
    %2730 = vmatpush1.bf16.msra.mxu0 0
    %2731 = vmatprep.subr.bf16.mxu0 0
    %2732 = vmatpush1.bf16.msra.mxu0 0
    %2733 = vmatprep.mubr.bf16.mxu0 0
    %2734 = vmatmul.mubr.bf16.gmra.mrb[0].mxu0 %v2699
    %v2735 = vpop.f32.mrb[0].mxu0
    %v2736 = vadd.f32 0.0, %v2735
    %v2737 = vpop.f32.mrb[0].mxu0
    %v2738 = vpop.f32.mrb[0].mxu0
    %v2739 = vpop.f32.mrb[0].mxu0
    %2740 = vdwg.mxu0
    %v2742 = vlaneseq
    %v2743 = vshrl.u32 %v2742, 7
    %v2744 = vsub.s32 0, %v2743
    %v2745 = vrot.slane %v2664, %v2744
    %v2747 = vadd.f32 %v2745, %v2736
    %v2748 = vpack.c.bf16 %v2641, %v2641
    %s2749 = scalar_lea.vmem %s31, 32
    %v2750 = vld [vmem:[%s2749] sm:$0xf]
    %v2751 = vld [vmem:[%s2749 + $0x4] sm:$0xf]
    %v2752 = vld [vmem:[%s2749 + $0x8] sm:$0xf]
    %v2753 = vld [vmem:[%s2749 + $0xc] sm:$0xf]
    %v2754 = vld [vmem:[%s2749 + $0x10] sm:$0xf]
    %v2755 = vld [vmem:[%s2749 + $0x14] sm:$0xf]
    %v2756 = vld [vmem:[%s2749 + $0x18] sm:$0xf]
    %v2757 = vld [vmem:[%s2749 + $0x1c] sm:$0xf]
    %v2766 = vunpack.c.l.b16 %v2750
    %v2767 = vunpack.c.l.b16 %v2751
    %v2768 = vunpack.c.l.b16 %v2752
    %v2769 = vunpack.c.l.b16 %v2753
    %v2770 = vunpack.c.l.b16 %v2754
    %v2771 = vunpack.c.l.b16 %v2755
    %v2772 = vunpack.c.l.b16 %v2756
    %v2773 = vunpack.c.l.b16 %v2757
    %v2774 = vpack.c.b16 %v2767, %v2766
    %v2775 = vpack.c.b16 %v2769, %v2768
    %v2776 = vpack.c.b16 %v2771, %v2770
    %v2777 = vpack.c.b16 %v2773, %v2772
    %v2783 = vsel %vm344, %v2748, 0
    %2785 = vmatprep.subr.bf16.mxu0 0
    %2786 = vmatpush1.bf16.msra.mxu0 %v2774
    %2787 = vmatprep.subr.bf16.mxu0 0
    %2788 = vmatpush1.bf16.msra.mxu0 %v2775
    %2789 = vmatprep.subr.bf16.mxu0 0
    %2790 = vmatpush1.bf16.msra.mxu0 %v2776
    %2791 = vmatprep.subr.bf16.mxu0 0
    %2792 = vmatpush1.bf16.msra.mxu0 %v2777
    %2793 = vmatprep.subr.bf16.mxu0 0
    %2794 = vmatpush1.bf16.msra.mxu0 0
    %2795 = vmatprep.subr.bf16.mxu0 0
    %2796 = vmatpush1.bf16.msra.mxu0 0
    %2797 = vmatprep.subr.bf16.mxu0 0
    %2798 = vmatpush1.bf16.msra.mxu0 0
    %2799 = vmatprep.subr.bf16.mxu0 0
    %2800 = vmatpush1.bf16.msra.mxu0 0
    %2801 = vmatprep.subr.bf16.mxu0 0
    %2802 = vmatpush1.bf16.msra.mxu0 0
    %2803 = vmatprep.subr.bf16.mxu0 0
    %2804 = vmatpush1.bf16.msra.mxu0 0
    %2805 = vmatprep.subr.bf16.mxu0 0
    %2806 = vmatpush1.bf16.msra.mxu0 0
    %2807 = vmatprep.subr.bf16.mxu0 0
    %2808 = vmatpush1.bf16.msra.mxu0 0
    %2809 = vmatprep.subr.bf16.mxu0 0
    %2810 = vmatpush1.bf16.msra.mxu0 0
    %2811 = vmatprep.subr.bf16.mxu0 0
    %2812 = vmatpush1.bf16.msra.mxu0 0
    %2813 = vmatprep.subr.bf16.mxu0 0
    %2814 = vmatpush1.bf16.msra.mxu0 0
    %2815 = vmatprep.subr.bf16.mxu0 0
    %2816 = vmatpush1.bf16.msra.mxu0 0
    %2817 = vmatprep.mubr.bf16.mxu0 0
    %2818 = vmatmul.mubr.bf16.gmra.mrb[0].mxu0 %v2783
    %v2819 = vpop.f32.mrb[0].mxu0
    %v2820 = vadd.f32 0.0, %v2819
    %v2821 = vpop.f32.mrb[0].mxu0
    %v2822 = vpop.f32.mrb[0].mxu0
    %v2823 = vpop.f32.mrb[0].mxu0
    %2824 = vdwg.mxu0
    %v2825 = vadd.f32 %v2747, %v2820
    %v2826 = vpack.c.bf16 %v2663, %v2663
    %s2827 = scalar_lea.vmem %s31, 64
    %v2828 = vld [vmem:[%s2827] sm:$0xf]
    %v2829 = vld [vmem:[%s2827 + $0x4] sm:$0xf]
    %v2830 = vld [vmem:[%s2827 + $0x8] sm:$0xf]
    %v2831 = vld [vmem:[%s2827 + $0xc] sm:$0xf]
    %v2832 = vld [vmem:[%s2827 + $0x10] sm:$0xf]
    %v2833 = vld [vmem:[%s2827 + $0x14] sm:$0xf]
    %v2834 = vld [vmem:[%s2827 + $0x18] sm:$0xf]
    %v2835 = vld [vmem:[%s2827 + $0x1c] sm:$0xf]
    %v2844 = vunpack.c.l.b16 %v2828
    %v2845 = vunpack.c.l.b16 %v2829
    %v2846 = vunpack.c.l.b16 %v2830
    %v2847 = vunpack.c.l.b16 %v2831
    %v2848 = vunpack.c.l.b16 %v2832
    %v2849 = vunpack.c.l.b16 %v2833
    %v2850 = vunpack.c.l.b16 %v2834
    %v2851 = vunpack.c.l.b16 %v2835
    %v2852 = vpack.c.b16 %v2845, %v2844
    %v2853 = vpack.c.b16 %v2847, %v2846
    %v2854 = vpack.c.b16 %v2849, %v2848
    %v2855 = vpack.c.b16 %v2851, %v2850
    %v2861 = vsel %vm344, %v2826, 0
    %2863 = vmatprep.subr.bf16.mxu0 0
    %2864 = vmatpush1.bf16.msra.mxu0 %v2852
    %2865 = vmatprep.subr.bf16.mxu0 0
    %2866 = vmatpush1.bf16.msra.mxu0 %v2853
    %2867 = vmatprep.subr.bf16.mxu0 0
    %2868 = vmatpush1.bf16.msra.mxu0 %v2854
    %2869 = vmatprep.subr.bf16.mxu0 0
    %2870 = vmatpush1.bf16.msra.mxu0 %v2855
    %2871 = vmatprep.subr.bf16.mxu0 0
    %2872 = vmatpush1.bf16.msra.mxu0 0
    %2873 = vmatprep.subr.bf16.mxu0 0
    %2874 = vmatpush1.bf16.msra.mxu0 0
    %2875 = vmatprep.subr.bf16.mxu0 0
    %2876 = vmatpush1.bf16.msra.mxu0 0
    %2877 = vmatprep.subr.bf16.mxu0 0
    %2878 = vmatpush1.bf16.msra.mxu0 0
    %2879 = vmatprep.subr.bf16.mxu0 0
    %2880 = vmatpush1.bf16.msra.mxu0 0
    %2881 = vmatprep.subr.bf16.mxu0 0
    %2882 = vmatpush1.bf16.msra.mxu0 0
    %2883 = vmatprep.subr.bf16.mxu0 0
    %2884 = vmatpush1.bf16.msra.mxu0 0
    %2885 = vmatprep.subr.bf16.mxu0 0
    %2886 = vmatpush1.bf16.msra.mxu0 0
    %2887 = vmatprep.subr.bf16.mxu0 0
    %2888 = vmatpush1.bf16.msra.mxu0 0
    %2889 = vmatprep.subr.bf16.mxu0 0
    %2890 = vmatpush1.bf16.msra.mxu0 0
    %2891 = vmatprep.subr.bf16.mxu0 0
    %2892 = vmatpush1.bf16.msra.mxu0 0
    %2893 = vmatprep.subr.bf16.mxu0 0
    %2894 = vmatpush1.bf16.msra.mxu0 0
    %2895 = vmatprep.mubr.bf16.mxu0 0
    %2896 = vmatmul.mubr.bf16.gmra.mrb[0].mxu0 %v2861
    %v2897 = vpop.f32.mrb[0].mxu0
    %v2898 = vadd.f32 0.0, %v2897
    %v2899 = vpop.f32.mrb[0].mxu0
    %v2900 = vpop.f32.mrb[0].mxu0
    %v2901 = vpop.f32.mrb[0].mxu0
    %2902 = vdwg.mxu0
    %v2903 = vadd.f32 %v2825, %v2898
    %v2904 = vmax.f32 %v2903, 0.0
    %v2905 = vrot.slane %v2904, 7
    %v2906 = vsel %vm2657, 0.0, %v2905
    %v2907 = vrot.slane %v2904, 1
    %v2908 = vsel %vm2662, 0.0, %v2907
    %v2909 = vld [vmem:[%s37] sm:$0x1]
    %v2910 = vpack.c.bf16 %v2906, %v2906
    %v2911 = vld [vmem:[%s35] sm:$0xf]
    %v2912 = vld [vmem:[%s35 + $0x4] sm:$0xf]
    %v2913 = vld [vmem:[%s35 + $0x8] sm:$0xf]
    %v2914 = vld [vmem:[%s35 + $0xc] sm:$0xf]
    %v2915 = vld [vmem:[%s35 + $0x10] sm:$0xf]
    %v2916 = vld [vmem:[%s35 + $0x14] sm:$0xf]
    %v2917 = vld [vmem:[%s35 + $0x18] sm:$0xf]
    %v2918 = vld [vmem:[%s35 + $0x1c] sm:$0xf]
    %v2927 = vunpack.c.l.b16 %v2911
    %v2928 = vunpack.c.l.b16 %v2912
    %v2929 = vunpack.c.l.b16 %v2913
    %v2930 = vunpack.c.l.b16 %v2914
    %v2931 = vunpack.c.l.b16 %v2915
    %v2932 = vunpack.c.l.b16 %v2916
    %v2933 = vunpack.c.l.b16 %v2917
    %v2934 = vunpack.c.l.b16 %v2918
    %v2935 = vpack.c.b16 %v2928, %v2927
    %v2936 = vpack.c.b16 %v2930, %v2929
    %v2937 = vpack.c.b16 %v2932, %v2931
    %v2938 = vpack.c.b16 %v2934, %v2933
    %v2944 = vsel %vm344, %v2910, 0
    %2946 = vmatprep.subr.bf16.mxu0 0
    %2947 = vmatpush1.bf16.msra.mxu0 %v2935
    %2948 = vmatprep.subr.bf16.mxu0 0
    %2949 = vmatpush1.bf16.msra.mxu0 %v2936
    %2950 = vmatprep.subr.bf16.mxu0 0
    %2951 = vmatpush1.bf16.msra.mxu0 %v2937
    %2952 = vmatprep.subr.bf16.mxu0 0
    %2953 = vmatpush1.bf16.msra.mxu0 %v2938
    %2954 = vmatprep.subr.bf16.mxu0 0
    %2955 = vmatpush1.bf16.msra.mxu0 0
    %2956 = vmatprep.subr.bf16.mxu0 0
    %2957 = vmatpush1.bf16.msra.mxu0 0
    %2958 = vmatprep.subr.bf16.mxu0 0
    %2959 = vmatpush1.bf16.msra.mxu0 0
    %2960 = vmatprep.subr.bf16.mxu0 0
    %2961 = vmatpush1.bf16.msra.mxu0 0
    %2962 = vmatprep.subr.bf16.mxu0 0
    %2963 = vmatpush1.bf16.msra.mxu0 0
    %2964 = vmatprep.subr.bf16.mxu0 0
    %2965 = vmatpush1.bf16.msra.mxu0 0
    %2966 = vmatprep.subr.bf16.mxu0 0
    %2967 = vmatpush1.bf16.msra.mxu0 0
    %2968 = vmatprep.subr.bf16.mxu0 0
    %2969 = vmatpush1.bf16.msra.mxu0 0
    %2970 = vmatprep.subr.bf16.mxu0 0
    %2971 = vmatpush1.bf16.msra.mxu0 0
    %2972 = vmatprep.subr.bf16.mxu0 0
    %2973 = vmatpush1.bf16.msra.mxu0 0
    %2974 = vmatprep.subr.bf16.mxu0 0
    %2975 = vmatpush1.bf16.msra.mxu0 0
    %2976 = vmatprep.subr.bf16.mxu0 0
    %2977 = vmatpush1.bf16.msra.mxu0 0
    %2978 = vmatprep.mubr.bf16.mxu0 0
    %2979 = vmatmul.mubr.bf16.gmra.mrb[0].mxu0 %v2944
    %v2980 = vpop.f32.mrb[0].mxu0
    %v2981 = vadd.f32 0.0, %v2980
    %v2982 = vpop.f32.mrb[0].mxu0
    %v2983 = vpop.f32.mrb[0].mxu0
    %v2984 = vpop.f32.mrb[0].mxu0
    %2985 = vdwg.mxu0
    %v2987 = vlaneseq
    %v2988 = vshrl.u32 %v2987, 7
    %v2989 = vsub.s32 0, %v2988
    %v2990 = vrot.slane %v2909, %v2989
    %v2992 = vadd.f32 %v2990, %v2981
    %v2993 = vpack.c.bf16 %v2904, %v2904
    %s2994 = scalar_lea.vmem %s35, 32
    %v2995 = vld [vmem:[%s2994] sm:$0xf]
    %v2996 = vld [vmem:[%s2994 + $0x4] sm:$0xf]
    %v2997 = vld [vmem:[%s2994 + $0x8] sm:$0xf]
    %v2998 = vld [vmem:[%s2994 + $0xc] sm:$0xf]
    %v2999 = vld [vmem:[%s2994 + $0x10] sm:$0xf]
    %v3000 = vld [vmem:[%s2994 + $0x14] sm:$0xf]
    %v3001 = vld [vmem:[%s2994 + $0x18] sm:$0xf]
    %v3002 = vld [vmem:[%s2994 + $0x1c] sm:$0xf]
    %v3011 = vunpack.c.l.b16 %v2995
    %v3012 = vunpack.c.l.b16 %v2996
    %v3013 = vunpack.c.l.b16 %v2997
    %v3014 = vunpack.c.l.b16 %v2998
    %v3015 = vunpack.c.l.b16 %v2999
    %v3016 = vunpack.c.l.b16 %v3000
    %v3017 = vunpack.c.l.b16 %v3001
    %v3018 = vunpack.c.l.b16 %v3002
    %v3019 = vpack.c.b16 %v3012, %v3011
    %v3020 = vpack.c.b16 %v3014, %v3013
    %v3021 = vpack.c.b16 %v3016, %v3015
    %v3022 = vpack.c.b16 %v3018, %v3017
    %v3028 = vsel %vm344, %v2993, 0
    %3030 = vmatprep.subr.bf16.mxu0 0
    %3031 = vmatpush1.bf16.msra.mxu0 %v3019
    %3032 = vmatprep.subr.bf16.mxu0 0
    %3033 = vmatpush1.bf16.msra.mxu0 %v3020
    %3034 = vmatprep.subr.bf16.mxu0 0
    %3035 = vmatpush1.bf16.msra.mxu0 %v3021
    %3036 = vmatprep.subr.bf16.mxu0 0
    %3037 = vmatpush1.bf16.msra.mxu0 %v3022
    %3038 = vmatprep.subr.bf16.mxu0 0
    %3039 = vmatpush1.bf16.msra.mxu0 0
    %3040 = vmatprep.subr.bf16.mxu0 0
    %3041 = vmatpush1.bf16.msra.mxu0 0
    %3042 = vmatprep.subr.bf16.mxu0 0
    %3043 = vmatpush1.bf16.msra.mxu0 0
    %3044 = vmatprep.subr.bf16.mxu0 0
    %3045 = vmatpush1.bf16.msra.mxu0 0
    %3046 = vmatprep.subr.bf16.mxu0 0
    %3047 = vmatpush1.bf16.msra.mxu0 0
    %3048 = vmatprep.subr.bf16.mxu0 0
    %3049 = vmatpush1.bf16.msra.mxu0 0
    %3050 = vmatprep.subr.bf16.mxu0 0
    %3051 = vmatpush1.bf16.msra.mxu0 0
    %3052 = vmatprep.subr.bf16.mxu0 0
    %3053 = vmatpush1.bf16.msra.mxu0 0
    %3054 = vmatprep.subr.bf16.mxu0 0
    %3055 = vmatpush1.bf16.msra.mxu0 0
    %3056 = vmatprep.subr.bf16.mxu0 0
    %3057 = vmatpush1.bf16.msra.mxu0 0
    %3058 = vmatprep.subr.bf16.mxu0 0
    %3059 = vmatpush1.bf16.msra.mxu0 0
    %3060 = vmatprep.subr.bf16.mxu0 0
    %3061 = vmatpush1.bf16.msra.mxu0 0
    %3062 = vmatprep.mubr.bf16.mxu0 0
    %3063 = vmatmul.mubr.bf16.gmra.mrb[0].mxu0 %v3028
    %v3064 = vpop.f32.mrb[0].mxu0
    %v3065 = vadd.f32 0.0, %v3064
    %v3066 = vpop.f32.mrb[0].mxu0
    %v3067 = vpop.f32.mrb[0].mxu0
    %v3068 = vpop.f32.mrb[0].mxu0
    %3069 = vdwg.mxu0
    %v3070 = vadd.f32 %v2992, %v3065
    %v3071 = vpack.c.bf16 %v2908, %v2908
    %s3072 = scalar_lea.vmem %s35, 64
    %v3073 = vld [vmem:[%s3072] sm:$0xf]
    %v3074 = vld [vmem:[%s3072 + $0x4] sm:$0xf]
    %v3075 = vld [vmem:[%s3072 + $0x8] sm:$0xf]
    %v3076 = vld [vmem:[%s3072 + $0xc] sm:$0xf]
    %v3077 = vld [vmem:[%s3072 + $0x10] sm:$0xf]
    %v3078 = vld [vmem:[%s3072 + $0x14] sm:$0xf]
    %v3079 = vld [vmem:[%s3072 + $0x18] sm:$0xf]
    %v3080 = vld [vmem:[%s3072 + $0x1c] sm:$0xf]
    %v3089 = vunpack.c.l.b16 %v3073
    %v3090 = vunpack.c.l.b16 %v3074
    %v3091 = vunpack.c.l.b16 %v3075
    %v3092 = vunpack.c.l.b16 %v3076
    %v3093 = vunpack.c.l.b16 %v3077
    %v3094 = vunpack.c.l.b16 %v3078
    %v3095 = vunpack.c.l.b16 %v3079
    %v3096 = vunpack.c.l.b16 %v3080
    %v3097 = vpack.c.b16 %v3090, %v3089
    %v3098 = vpack.c.b16 %v3092, %v3091
    %v3099 = vpack.c.b16 %v3094, %v3093
    %v3100 = vpack.c.b16 %v3096, %v3095
    %v3106 = vsel %vm344, %v3071, 0
    %3108 = vmatprep.subr.bf16.mxu0 0
    %3109 = vmatpush1.bf16.msra.mxu0 %v3097
    %3110 = vmatprep.subr.bf16.mxu0 0
    %3111 = vmatpush1.bf16.msra.mxu0 %v3098
    %3112 = vmatprep.subr.bf16.mxu0 0
    %3113 = vmatpush1.bf16.msra.mxu0 %v3099
    %3114 = vmatprep.subr.bf16.mxu0 0
    %3115 = vmatpush1.bf16.msra.mxu0 %v3100
    %3116 = vmatprep.subr.bf16.mxu0 0
    %3117 = vmatpush1.bf16.msra.mxu0 0
    %3118 = vmatprep.subr.bf16.mxu0 0
    %3119 = vmatpush1.bf16.msra.mxu0 0
    %3120 = vmatprep.subr.bf16.mxu0 0
    %3121 = vmatpush1.bf16.msra.mxu0 0
    %3122 = vmatprep.subr.bf16.mxu0 0
    %3123 = vmatpush1.bf16.msra.mxu0 0
    %3124 = vmatprep.subr.bf16.mxu0 0
    %3125 = vmatpush1.bf16.msra.mxu0 0
    %3126 = vmatprep.subr.bf16.mxu0 0
    %3127 = vmatpush1.bf16.msra.mxu0 0
    %3128 = vmatprep.subr.bf16.mxu0 0
    %3129 = vmatpush1.bf16.msra.mxu0 0
    %3130 = vmatprep.subr.bf16.mxu0 0
    %3131 = vmatpush1.bf16.msra.mxu0 0
    %3132 = vmatprep.subr.bf16.mxu0 0
    %3133 = vmatpush1.bf16.msra.mxu0 0
    %3134 = vmatprep.subr.bf16.mxu0 0
    %3135 = vmatpush1.bf16.msra.mxu0 0
    %3136 = vmatprep.subr.bf16.mxu0 0
    %3137 = vmatpush1.bf16.msra.mxu0 0
    %3138 = vmatprep.subr.bf16.mxu0 0
    %3139 = vmatpush1.bf16.msra.mxu0 0
    %3140 = vmatprep.mubr.bf16.mxu0 0
    %3141 = vmatmul.mubr.bf16.gmra.mrb[0].mxu0 %v3106
    %v3142 = vpop.f32.mrb[0].mxu0
    %v3143 = vadd.f32 0.0, %v3142
    %v3144 = vpop.f32.mrb[0].mxu0
    %v3145 = vpop.f32.mrb[0].mxu0
    %v3146 = vpop.f32.mrb[0].mxu0
    %3147 = vdwg.mxu0
    %v3148 = vadd.f32 %v3070, %v3143
    %v3149 = vadd.f32 %v3148, %v2640
    %v3150 = vmax.f32 %v3149, 0.0
    %v3151 = vrot.slane %v3150, 7
    %v3152 = vsel %vm2657, 0.0, %v3151
    %v3153 = vrot.slane %v3150, 1
    %v3154 = vsel %vm2662, 0.0, %v3153
    %v3155 = vld [vmem:[%s41] sm:$0x1]
    %v3156 = vpack.c.bf16 %v3152, %v3152
    %v3157 = vld [vmem:[%s39] sm:$0xf]
    %v3158 = vld [vmem:[%s39 + $0x4] sm:$0xf]
    %v3159 = vld [vmem:[%s39 + $0x8] sm:$0xf]
    %v3160 = vld [vmem:[%s39 + $0xc] sm:$0xf]
    %v3161 = vld [vmem:[%s39 + $0x10] sm:$0xf]
    %v3162 = vld [vmem:[%s39 + $0x14] sm:$0xf]
    %v3163 = vld [vmem:[%s39 + $0x18] sm:$0xf]
    %v3164 = vld [vmem:[%s39 + $0x1c] sm:$0xf]
    %v3173 = vunpack.c.l.b16 %v3157
    %v3174 = vunpack.c.l.b16 %v3158
    %v3175 = vunpack.c.l.b16 %v3159
    %v3176 = vunpack.c.l.b16 %v3160
    %v3177 = vunpack.c.l.b16 %v3161
    %v3178 = vunpack.c.l.b16 %v3162
    %v3179 = vunpack.c.l.b16 %v3163
    %v3180 = vunpack.c.l.b16 %v3164
    %v3181 = vpack.c.b16 %v3174, %v3173
    %v3182 = vpack.c.b16 %v3176, %v3175
    %v3183 = vpack.c.b16 %v3178, %v3177
    %v3184 = vpack.c.b16 %v3180, %v3179
    %v3190 = vsel %vm344, %v3156, 0
    %3192 = vmatprep.subr.bf16.mxu0 0
    %3193 = vmatpush1.bf16.msra.mxu0 %v3181
    %3194 = vmatprep.subr.bf16.mxu0 0
    %3195 = vmatpush1.bf16.msra.mxu0 %v3182
    %3196 = vmatprep.subr.bf16.mxu0 0
    %3197 = vmatpush1.bf16.msra.mxu0 %v3183
    %3198 = vmatprep.subr.bf16.mxu0 0
    %3199 = vmatpush1.bf16.msra.mxu0 %v3184
    %3200 = vmatprep.subr.bf16.mxu0 0
    %3201 = vmatpush1.bf16.msra.mxu0 0
    %3202 = vmatprep.subr.bf16.mxu0 0
    %3203 = vmatpush1.bf16.msra.mxu0 0
    %3204 = vmatprep.subr.bf16.mxu0 0
    %3205 = vmatpush1.bf16.msra.mxu0 0
    %3206 = vmatprep.subr.bf16.mxu0 0
    %3207 = vmatpush1.bf16.msra.mxu0 0
    %3208 = vmatprep.subr.bf16.mxu0 0
    %3209 = vmatpush1.bf16.msra.mxu0 0
    %3210 = vmatprep.subr.bf16.mxu0 0
    %3211 = vmatpush1.bf16.msra.mxu0 0
    %3212 = vmatprep.subr.bf16.mxu0 0
    %3213 = vmatpush1.bf16.msra.mxu0 0
    %3214 = vmatprep.subr.bf16.mxu0 0
    %3215 = vmatpush1.bf16.msra.mxu0 0
    %3216 = vmatprep.subr.bf16.mxu0 0
    %3217 = vmatpush1.bf16.msra.mxu0 0
    %3218 = vmatprep.subr.bf16.mxu0 0
    %3219 = vmatpush1.bf16.msra.mxu0 0
    %3220 = vmatprep.subr.bf16.mxu0 0
    %3221 = vmatpush1.bf16.msra.mxu0 0
    %3222 = vmatprep.subr.bf16.mxu0 0
    %3223 = vmatpush1.bf16.msra.mxu0 0
    %3224 = vmatprep.mubr.bf16.mxu0 0
    %3225 = vmatmul.mubr.bf16.gmra.mrb[0].mxu0 %v3190
    %v3226 = vpop.f32.mrb[0].mxu0
    %v3227 = vadd.f32 0.0, %v3226
    %v3228 = vpop.f32.mrb[0].mxu0
    %v3229 = vpop.f32.mrb[0].mxu0
    %v3230 = vpop.f32.mrb[0].mxu0
    %3231 = vdwg.mxu0
    %v3233 = vlaneseq
    %v3234 = vshrl.u32 %v3233, 7
    %v3235 = vsub.s32 0, %v3234
    %v3236 = vrot.slane %v3155, %v3235
    %v3238 = vadd.f32 %v3236, %v3227
    %v3239 = vpack.c.bf16 %v3150, %v3150
    %s3240 = scalar_lea.vmem %s39, 32
    %v3241 = vld [vmem:[%s3240] sm:$0xf]
    %v3242 = vld [vmem:[%s3240 + $0x4] sm:$0xf]
    %v3243 = vld [vmem:[%s3240 + $0x8] sm:$0xf]
    %v3244 = vld [vmem:[%s3240 + $0xc] sm:$0xf]
    %v3245 = vld [vmem:[%s3240 + $0x10] sm:$0xf]
    %v3246 = vld [vmem:[%s3240 + $0x14] sm:$0xf]
    %v3247 = vld [vmem:[%s3240 + $0x18] sm:$0xf]
    %v3248 = vld [vmem:[%s3240 + $0x1c] sm:$0xf]
    %v3257 = vunpack.c.l.b16 %v3241
    %v3258 = vunpack.c.l.b16 %v3242
    %v3259 = vunpack.c.l.b16 %v3243
    %v3260 = vunpack.c.l.b16 %v3244
    %v3261 = vunpack.c.l.b16 %v3245
    %v3262 = vunpack.c.l.b16 %v3246
    %v3263 = vunpack.c.l.b16 %v3247
    %v3264 = vunpack.c.l.b16 %v3248
    %v3265 = vpack.c.b16 %v3258, %v3257
    %v3266 = vpack.c.b16 %v3260, %v3259
    %v3267 = vpack.c.b16 %v3262, %v3261
    %v3268 = vpack.c.b16 %v3264, %v3263
    %v3274 = vsel %vm344, %v3239, 0
    %3276 = vmatprep.subr.bf16.mxu0 0
    %3277 = vmatpush1.bf16.msra.mxu0 %v3265
    %3278 = vmatprep.subr.bf16.mxu0 0
    %3279 = vmatpush1.bf16.msra.mxu0 %v3266
    %3280 = vmatprep.subr.bf16.mxu0 0
    %3281 = vmatpush1.bf16.msra.mxu0 %v3267
    %3282 = vmatprep.subr.bf16.mxu0 0
    %3283 = vmatpush1.bf16.msra.mxu0 %v3268
    %3284 = vmatprep.subr.bf16.mxu0 0
    %3285 = vmatpush1.bf16.msra.mxu0 0
    %3286 = vmatprep.subr.bf16.mxu0 0
    %3287 = vmatpush1.bf16.msra.mxu0 0
    %3288 = vmatprep.subr.bf16.mxu0 0
    %3289 = vmatpush1.bf16.msra.mxu0 0
    %3290 = vmatprep.subr.bf16.mxu0 0
    %3291 = vmatpush1.bf16.msra.mxu0 0
    %3292 = vmatprep.subr.bf16.mxu0 0
    %3293 = vmatpush1.bf16.msra.mxu0 0
    %3294 = vmatprep.subr.bf16.mxu0 0
    %3295 = vmatpush1.bf16.msra.mxu0 0
    %3296 = vmatprep.subr.bf16.mxu0 0
    %3297 = vmatpush1.bf16.msra.mxu0 0
    %3298 = vmatprep.subr.bf16.mxu0 0
    %3299 = vmatpush1.bf16.msra.mxu0 0
    %3300 = vmatprep.subr.bf16.mxu0 0
    %3301 = vmatpush1.bf16.msra.mxu0 0
    %3302 = vmatprep.subr.bf16.mxu0 0
    %3303 = vmatpush1.bf16.msra.mxu0 0
    %3304 = vmatprep.subr.bf16.mxu0 0
    %3305 = vmatpush1.bf16.msra.mxu0 0
    %3306 = vmatprep.subr.bf16.mxu0 0
    %3307 = vmatpush1.bf16.msra.mxu0 0
    %3308 = vmatprep.mubr.bf16.mxu0 0
    %3309 = vmatmul.mubr.bf16.gmra.mrb[0].mxu0 %v3274
    %v3310 = vpop.f32.mrb[0].mxu0
    %v3311 = vadd.f32 0.0, %v3310
    %v3312 = vpop.f32.mrb[0].mxu0
    %v3313 = vpop.f32.mrb[0].mxu0
    %v3314 = vpop.f32.mrb[0].mxu0
    %3315 = vdwg.mxu0
    %v3316 = vadd.f32 %v3238, %v3311
    %v3317 = vpack.c.bf16 %v3154, %v3154
    %s3318 = scalar_lea.vmem %s39, 64
    %v3319 = vld [vmem:[%s3318] sm:$0xf]
    %v3320 = vld [vmem:[%s3318 + $0x4] sm:$0xf]
    %v3321 = vld [vmem:[%s3318 + $0x8] sm:$0xf]
    %v3322 = vld [vmem:[%s3318 + $0xc] sm:$0xf]
    %v3323 = vld [vmem:[%s3318 + $0x10] sm:$0xf]
    %v3324 = vld [vmem:[%s3318 + $0x14] sm:$0xf]
    %v3325 = vld [vmem:[%s3318 + $0x18] sm:$0xf]
    %v3326 = vld [vmem:[%s3318 + $0x1c] sm:$0xf]
    %v3335 = vunpack.c.l.b16 %v3319
    %v3336 = vunpack.c.l.b16 %v3320
    %v3337 = vunpack.c.l.b16 %v3321
    %v3338 = vunpack.c.l.b16 %v3322
    %v3339 = vunpack.c.l.b16 %v3323
    %v3340 = vunpack.c.l.b16 %v3324
    %v3341 = vunpack.c.l.b16 %v3325
    %v3342 = vunpack.c.l.b16 %v3326
    %v3343 = vpack.c.b16 %v3336, %v3335
    %v3344 = vpack.c.b16 %v3338, %v3337
    %v3345 = vpack.c.b16 %v3340, %v3339
    %v3346 = vpack.c.b16 %v3342, %v3341
    %v3352 = vsel %vm344, %v3317, 0
    %3354 = vmatprep.subr.bf16.mxu0 0
    %3355 = vmatpush1.bf16.msra.mxu0 %v3343
    %3356 = vmatprep.subr.bf16.mxu0 0
    %3357 = vmatpush1.bf16.msra.mxu0 %v3344
    %3358 = vmatprep.subr.bf16.mxu0 0
    %3359 = vmatpush1.bf16.msra.mxu0 %v3345
    %3360 = vmatprep.subr.bf16.mxu0 0
    %3361 = vmatpush1.bf16.msra.mxu0 %v3346
    %3362 = vmatprep.subr.bf16.mxu0 0
    %3363 = vmatpush1.bf16.msra.mxu0 0
    %3364 = vmatprep.subr.bf16.mxu0 0
    %3365 = vmatpush1.bf16.msra.mxu0 0
    %3366 = vmatprep.subr.bf16.mxu0 0
    %3367 = vmatpush1.bf16.msra.mxu0 0
    %3368 = vmatprep.subr.bf16.mxu0 0
    %3369 = vmatpush1.bf16.msra.mxu0 0
    %3370 = vmatprep.subr.bf16.mxu0 0
    %3371 = vmatpush1.bf16.msra.mxu0 0
    %3372 = vmatprep.subr.bf16.mxu0 0
    %3373 = vmatpush1.bf16.msra.mxu0 0
    %3374 = vmatprep.subr.bf16.mxu0 0
    %3375 = vmatpush1.bf16.msra.mxu0 0
    %3376 = vmatprep.subr.bf16.mxu0 0
    %3377 = vmatpush1.bf16.msra.mxu0 0
    %3378 = vmatprep.subr.bf16.mxu0 0
    %3379 = vmatpush1.bf16.msra.mxu0 0
    %3380 = vmatprep.subr.bf16.mxu0 0
    %3381 = vmatpush1.bf16.msra.mxu0 0
    %3382 = vmatprep.subr.bf16.mxu0 0
    %3383 = vmatpush1.bf16.msra.mxu0 0
    %3384 = vmatprep.subr.bf16.mxu0 0
    %3385 = vmatpush1.bf16.msra.mxu0 0
    %3386 = vmatprep.mubr.bf16.mxu0 0
    %3387 = vmatmul.mubr.bf16.gmra.mrb[0].mxu0 %v3352
    %v3388 = vpop.f32.mrb[0].mxu0
    %v3389 = vadd.f32 0.0, %v3388
    %v3390 = vpop.f32.mrb[0].mxu0
    %v3391 = vpop.f32.mrb[0].mxu0
    %v3392 = vpop.f32.mrb[0].mxu0
    %3393 = vdwg.mxu0
    %v3394 = vadd.f32 %v3316, %v3389
    %v3395 = vmax.f32 %v3394, 0.0
    %v3396 = vrot.slane %v3395, 7
    %v3397 = vsel %vm2657, 0.0, %v3396
    %v3398 = vrot.slane %v3395, 1
    %v3399 = vsel %vm2662, 0.0, %v3398
    %v3400 = vld [vmem:[%s45] sm:$0x1]
    %v3401 = vpack.c.bf16 %v3397, %v3397
    %v3402 = vld [vmem:[%s43] sm:$0xf]
    %v3403 = vld [vmem:[%s43 + $0x4] sm:$0xf]
    %v3404 = vld [vmem:[%s43 + $0x8] sm:$0xf]
    %v3405 = vld [vmem:[%s43 + $0xc] sm:$0xf]
    %v3406 = vld [vmem:[%s43 + $0x10] sm:$0xf]
    %v3407 = vld [vmem:[%s43 + $0x14] sm:$0xf]
    %v3408 = vld [vmem:[%s43 + $0x18] sm:$0xf]
    %v3409 = vld [vmem:[%s43 + $0x1c] sm:$0xf]
    %v3418 = vunpack.c.l.b16 %v3402
    %v3419 = vunpack.c.l.b16 %v3403
    %v3420 = vunpack.c.l.b16 %v3404
    %v3421 = vunpack.c.l.b16 %v3405
    %v3422 = vunpack.c.l.b16 %v3406
    %v3423 = vunpack.c.l.b16 %v3407
    %v3424 = vunpack.c.l.b16 %v3408
    %v3425 = vunpack.c.l.b16 %v3409
    %v3426 = vpack.c.b16 %v3419, %v3418
    %v3427 = vpack.c.b16 %v3421, %v3420
    %v3428 = vpack.c.b16 %v3423, %v3422
    %v3429 = vpack.c.b16 %v3425, %v3424
    %v3435 = vsel %vm344, %v3401, 0
    %3437 = vmatprep.subr.bf16.mxu0 0
    %3438 = vmatpush1.bf16.msra.mxu0 %v3426
    %3439 = vmatprep.subr.bf16.mxu0 0
    %3440 = vmatpush1.bf16.msra.mxu0 %v3427
    %3441 = vmatprep.subr.bf16.mxu0 0
    %3442 = vmatpush1.bf16.msra.mxu0 %v3428
    %3443 = vmatprep.subr.bf16.mxu0 0
    %3444 = vmatpush1.bf16.msra.mxu0 %v3429
    %3445 = vmatprep.subr.bf16.mxu0 0
    %3446 = vmatpush1.bf16.msra.mxu0 0
    %3447 = vmatprep.subr.bf16.mxu0 0
    %3448 = vmatpush1.bf16.msra.mxu0 0
    %3449 = vmatprep.subr.bf16.mxu0 0
    %3450 = vmatpush1.bf16.msra.mxu0 0
    %3451 = vmatprep.subr.bf16.mxu0 0
    %3452 = vmatpush1.bf16.msra.mxu0 0
    %3453 = vmatprep.subr.bf16.mxu0 0
    %3454 = vmatpush1.bf16.msra.mxu0 0
    %3455 = vmatprep.subr.bf16.mxu0 0
    %3456 = vmatpush1.bf16.msra.mxu0 0
    %3457 = vmatprep.subr.bf16.mxu0 0
    %3458 = vmatpush1.bf16.msra.mxu0 0
    %3459 = vmatprep.subr.bf16.mxu0 0
    %3460 = vmatpush1.bf16.msra.mxu0 0
    %3461 = vmatprep.subr.bf16.mxu0 0
    %3462 = vmatpush1.bf16.msra.mxu0 0
    %3463 = vmatprep.subr.bf16.mxu0 0
    %3464 = vmatpush1.bf16.msra.mxu0 0
    %3465 = vmatprep.subr.bf16.mxu0 0
    %3466 = vmatpush1.bf16.msra.mxu0 0
    %3467 = vmatprep.subr.bf16.mxu0 0
    %3468 = vmatpush1.bf16.msra.mxu0 0
    %3469 = vmatprep.mubr.bf16.mxu0 0
    %3470 = vmatmul.mubr.bf16.gmra.mrb[0].mxu0 %v3435
    %v3471 = vpop.f32.mrb[0].mxu0
    %v3472 = vadd.f32 0.0, %v3471
    %v3473 = vpop.f32.mrb[0].mxu0
    %v3474 = vpop.f32.mrb[0].mxu0
    %v3475 = vpop.f32.mrb[0].mxu0
    %3476 = vdwg.mxu0
    %v3478 = vlaneseq
    %v3479 = vshrl.u32 %v3478, 7
    %v3480 = vsub.s32 0, %v3479
    %v3481 = vrot.slane %v3400, %v3480
    %v3483 = vadd.f32 %v3481, %v3472
    %v3484 = vpack.c.bf16 %v3395, %v3395
    %s3485 = scalar_lea.vmem %s43, 32
    %v3486 = vld [vmem:[%s3485] sm:$0xf]
    %v3487 = vld [vmem:[%s3485 + $0x4] sm:$0xf]
    %v3488 = vld [vmem:[%s3485 + $0x8] sm:$0xf]
    %v3489 = vld [vmem:[%s3485 + $0xc] sm:$0xf]
    %v3490 = vld [vmem:[%s3485 + $0x10] sm:$0xf]
    %v3491 = vld [vmem:[%s3485 + $0x14] sm:$0xf]
    %v3492 = vld [vmem:[%s3485 + $0x18] sm:$0xf]
    %v3493 = vld [vmem:[%s3485 + $0x1c] sm:$0xf]
    %v3502 = vunpack.c.l.b16 %v3486
    %v3503 = vunpack.c.l.b16 %v3487
    %v3504 = vunpack.c.l.b16 %v3488
    %v3505 = vunpack.c.l.b16 %v3489
    %v3506 = vunpack.c.l.b16 %v3490
    %v3507 = vunpack.c.l.b16 %v3491
    %v3508 = vunpack.c.l.b16 %v3492
    %v3509 = vunpack.c.l.b16 %v3493
    %v3510 = vpack.c.b16 %v3503, %v3502
    %v3511 = vpack.c.b16 %v3505, %v3504
    %v3512 = vpack.c.b16 %v3507, %v3506
    %v3513 = vpack.c.b16 %v3509, %v3508
    %v3519 = vsel %vm344, %v3484, 0
    %3521 = vmatprep.subr.bf16.mxu0 0
    %3522 = vmatpush1.bf16.msra.mxu0 %v3510
    %3523 = vmatprep.subr.bf16.mxu0 0
    %3524 = vmatpush1.bf16.msra.mxu0 %v3511
    %3525 = vmatprep.subr.bf16.mxu0 0
    %3526 = vmatpush1.bf16.msra.mxu0 %v3512
    %3527 = vmatprep.subr.bf16.mxu0 0
    %3528 = vmatpush1.bf16.msra.mxu0 %v3513
    %3529 = vmatprep.subr.bf16.mxu0 0
    %3530 = vmatpush1.bf16.msra.mxu0 0
    %3531 = vmatprep.subr.bf16.mxu0 0
    %3532 = vmatpush1.bf16.msra.mxu0 0
    %3533 = vmatprep.subr.bf16.mxu0 0
    %3534 = vmatpush1.bf16.msra.mxu0 0
    %3535 = vmatprep.subr.bf16.mxu0 0
    %3536 = vmatpush1.bf16.msra.mxu0 0
    %3537 = vmatprep.subr.bf16.mxu0 0
    %3538 = vmatpush1.bf16.msra.mxu0 0
    %3539 = vmatprep.subr.bf16.mxu0 0
    %3540 = vmatpush1.bf16.msra.mxu0 0
    %3541 = vmatprep.subr.bf16.mxu0 0
    %3542 = vmatpush1.bf16.msra.mxu0 0
    %3543 = vmatprep.subr.bf16.mxu0 0
    %3544 = vmatpush1.bf16.msra.mxu0 0
    %3545 = vmatprep.subr.bf16.mxu0 0
    %3546 = vmatpush1.bf16.msra.mxu0 0
    %3547 = vmatprep.subr.bf16.mxu0 0
    %3548 = vmatpush1.bf16.msra.mxu0 0
    %3549 = vmatprep.subr.bf16.mxu0 0
    %3550 = vmatpush1.bf16.msra.mxu0 0
    %3551 = vmatprep.subr.bf16.mxu0 0
    %3552 = vmatpush1.bf16.msra.mxu0 0
    %3553 = vmatprep.mubr.bf16.mxu0 0
    %3554 = vmatmul.mubr.bf16.gmra.mrb[0].mxu0 %v3519
    %v3555 = vpop.f32.mrb[0].mxu0
    %v3556 = vadd.f32 0.0, %v3555
    %v3557 = vpop.f32.mrb[0].mxu0
    %v3558 = vpop.f32.mrb[0].mxu0
    %v3559 = vpop.f32.mrb[0].mxu0
    %3560 = vdwg.mxu0
    %v3561 = vadd.f32 %v3483, %v3556
    %v3562 = vpack.c.bf16 %v3399, %v3399
    %s3563 = scalar_lea.vmem %s43, 64
    %v3564 = vld [vmem:[%s3563] sm:$0xf]
    %v3565 = vld [vmem:[%s3563 + $0x4] sm:$0xf]
    %v3566 = vld [vmem:[%s3563 + $0x8] sm:$0xf]
    %v3567 = vld [vmem:[%s3563 + $0xc] sm:$0xf]
    %v3568 = vld [vmem:[%s3563 + $0x10] sm:$0xf]
    %v3569 = vld [vmem:[%s3563 + $0x14] sm:$0xf]
    %v3570 = vld [vmem:[%s3563 + $0x18] sm:$0xf]
    %v3571 = vld [vmem:[%s3563 + $0x1c] sm:$0xf]
    %v3580 = vunpack.c.l.b16 %v3564
    %v3581 = vunpack.c.l.b16 %v3565
    %v3582 = vunpack.c.l.b16 %v3566
    %v3583 = vunpack.c.l.b16 %v3567
    %v3584 = vunpack.c.l.b16 %v3568
    %v3585 = vunpack.c.l.b16 %v3569
    %v3586 = vunpack.c.l.b16 %v3570
    %v3587 = vunpack.c.l.b16 %v3571
    %v3588 = vpack.c.b16 %v3581, %v3580
    %v3589 = vpack.c.b16 %v3583, %v3582
    %v3590 = vpack.c.b16 %v3585, %v3584
    %v3591 = vpack.c.b16 %v3587, %v3586
    %v3597 = vsel %vm344, %v3562, 0
    %3599 = vmatprep.subr.bf16.mxu0 0
    %3600 = vmatpush1.bf16.msra.mxu0 %v3588
    %3601 = vmatprep.subr.bf16.mxu0 0
    %3602 = vmatpush1.bf16.msra.mxu0 %v3589
    %3603 = vmatprep.subr.bf16.mxu0 0
    %3604 = vmatpush1.bf16.msra.mxu0 %v3590
    %3605 = vmatprep.subr.bf16.mxu0 0
    %3606 = vmatpush1.bf16.msra.mxu0 %v3591
    %3607 = vmatprep.subr.bf16.mxu0 0
    %3608 = vmatpush1.bf16.msra.mxu0 0
    %3609 = vmatprep.subr.bf16.mxu0 0
    %3610 = vmatpush1.bf16.msra.mxu0 0
    %3611 = vmatprep.subr.bf16.mxu0 0
    %3612 = vmatpush1.bf16.msra.mxu0 0
    %3613 = vmatprep.subr.bf16.mxu0 0
    %3614 = vmatpush1.bf16.msra.mxu0 0
    %3615 = vmatprep.subr.bf16.mxu0 0
    %3616 = vmatpush1.bf16.msra.mxu0 0
    %3617 = vmatprep.subr.bf16.mxu0 0
    %3618 = vmatpush1.bf16.msra.mxu0 0
    %3619 = vmatprep.subr.bf16.mxu0 0
    %3620 = vmatpush1.bf16.msra.mxu0 0
    %3621 = vmatprep.subr.bf16.mxu0 0
    %3622 = vmatpush1.bf16.msra.mxu0 0
    %3623 = vmatprep.subr.bf16.mxu0 0
    %3624 = vmatpush1.bf16.msra.mxu0 0
    %3625 = vmatprep.subr.bf16.mxu0 0
    %3626 = vmatpush1.bf16.msra.mxu0 0
    %3627 = vmatprep.subr.bf16.mxu0 0
    %3628 = vmatpush1.bf16.msra.mxu0 0
    %3629 = vmatprep.subr.bf16.mxu0 0
    %3630 = vmatpush1.bf16.msra.mxu0 0
    %3631 = vmatprep.mubr.bf16.mxu0 0
    %3632 = vmatmul.mubr.bf16.gmra.mrb[0].mxu0 %v3597
    %v3633 = vpop.f32.mrb[0].mxu0
    %v3634 = vadd.f32 0.0, %v3633
    %v3635 = vpop.f32.mrb[0].mxu0
    %v3636 = vpop.f32.mrb[0].mxu0
    %v3637 = vpop.f32.mrb[0].mxu0
    %3638 = vdwg.mxu0
    %v3639 = vadd.f32 %v3561, %v3634
    %v3640 = vadd.f32 %v3639, %v3149
    %v3641 = vrot.slane %v3640, 7
    %v3642 = vsel %vm2657, 0.0, %v3641
    %v3643 = vrot.slane %v3640, 1
    %v3644 = vsel %vm2662, 0.0, %v3643
    %v3645 = vld [vmem:[%s49] sm:$0x1]
    %v3646 = vpack.c.bf16 %v3642, %v3642
    %v3647 = vld [vmem:[%s47] sm:$0xf]
    %v3648 = vld [vmem:[%s47 + $0x4] sm:$0xf]
    %v3649 = vld [vmem:[%s47 + $0x8] sm:$0xf]
    %v3650 = vld [vmem:[%s47 + $0xc] sm:$0xf]
    %v3651 = vld [vmem:[%s47 + $0x10] sm:$0xf]
    %v3652 = vld [vmem:[%s47 + $0x14] sm:$0xf]
    %v3653 = vld [vmem:[%s47 + $0x18] sm:$0xf]
    %v3654 = vld [vmem:[%s47 + $0x1c] sm:$0xf]
    %v3663 = vunpack.c.l.b16 %v3647
    %v3664 = vunpack.c.l.b16 %v3648
    %v3665 = vunpack.c.l.b16 %v3649
    %v3666 = vunpack.c.l.b16 %v3650
    %v3667 = vunpack.c.l.b16 %v3651
    %v3668 = vunpack.c.l.b16 %v3652
    %v3669 = vunpack.c.l.b16 %v3653
    %v3670 = vunpack.c.l.b16 %v3654
    %v3671 = vpack.c.b16 %v3664, %v3663
    %v3672 = vpack.c.b16 %v3666, %v3665
    %v3673 = vpack.c.b16 %v3668, %v3667
    %v3674 = vpack.c.b16 %v3670, %v3669
    %v3680 = vsel %vm344, %v3646, 0
    %3682 = vmatprep.subr.bf16.mxu0 0
    %3683 = vmatpush1.bf16.msra.mxu0 %v3671
    %3684 = vmatprep.subr.bf16.mxu0 0
    %3685 = vmatpush1.bf16.msra.mxu0 %v3672
    %3686 = vmatprep.subr.bf16.mxu0 0
    %3687 = vmatpush1.bf16.msra.mxu0 %v3673
    %3688 = vmatprep.subr.bf16.mxu0 0
    %3689 = vmatpush1.bf16.msra.mxu0 %v3674
    %3690 = vmatprep.subr.bf16.mxu0 0
    %3691 = vmatpush1.bf16.msra.mxu0 0
    %3692 = vmatprep.subr.bf16.mxu0 0
    %3693 = vmatpush1.bf16.msra.mxu0 0
    %3694 = vmatprep.subr.bf16.mxu0 0
    %3695 = vmatpush1.bf16.msra.mxu0 0
    %3696 = vmatprep.subr.bf16.mxu0 0
    %3697 = vmatpush1.bf16.msra.mxu0 0
    %3698 = vmatprep.subr.bf16.mxu0 0
    %3699 = vmatpush1.bf16.msra.mxu0 0
    %3700 = vmatprep.subr.bf16.mxu0 0
    %3701 = vmatpush1.bf16.msra.mxu0 0
    %3702 = vmatprep.subr.bf16.mxu0 0
    %3703 = vmatpush1.bf16.msra.mxu0 0
    %3704 = vmatprep.subr.bf16.mxu0 0
    %3705 = vmatpush1.bf16.msra.mxu0 0
    %3706 = vmatprep.subr.bf16.mxu0 0
    %3707 = vmatpush1.bf16.msra.mxu0 0
    %3708 = vmatprep.subr.bf16.mxu0 0
    %3709 = vmatpush1.bf16.msra.mxu0 0
    %3710 = vmatprep.subr.bf16.mxu0 0
    %3711 = vmatpush1.bf16.msra.mxu0 0
    %3712 = vmatprep.subr.bf16.mxu0 0
    %3713 = vmatpush1.bf16.msra.mxu0 0
    %3714 = vmatprep.mubr.bf16.mxu0 0
    %3715 = vmatmul.mubr.bf16.gmra.mrb[0].mxu0 %v3680
    %v3716 = vpop.f32.mrb[0].mxu0
    %v3717 = vadd.f32 0.0, %v3716
    %v3718 = vpop.f32.mrb[0].mxu0
    %v3719 = vpop.f32.mrb[0].mxu0
    %v3720 = vpop.f32.mrb[0].mxu0
    %3721 = vdwg.mxu0
    %v3723 = vlaneseq
    %v3724 = vshrl.u32 %v3723, 7
    %v3725 = vsub.s32 0, %v3724
    %v3726 = vrot.slane %v3645, %v3725
    %v3728 = vadd.f32 %v3726, %v3717
    %v3729 = vpack.c.bf16 %v3640, %v3640
    %s3730 = scalar_lea.vmem %s47, 32
    %v3731 = vld [vmem:[%s3730] sm:$0xf]
    %v3732 = vld [vmem:[%s3730 + $0x4] sm:$0xf]
    %v3733 = vld [vmem:[%s3730 + $0x8] sm:$0xf]
    %v3734 = vld [vmem:[%s3730 + $0xc] sm:$0xf]
    %v3735 = vld [vmem:[%s3730 + $0x10] sm:$0xf]
    %v3736 = vld [vmem:[%s3730 + $0x14] sm:$0xf]
    %v3737 = vld [vmem:[%s3730 + $0x18] sm:$0xf]
    %v3738 = vld [vmem:[%s3730 + $0x1c] sm:$0xf]
    %v3747 = vunpack.c.l.b16 %v3731
    %v3748 = vunpack.c.l.b16 %v3732
    %v3749 = vunpack.c.l.b16 %v3733
    %v3750 = vunpack.c.l.b16 %v3734
    %v3751 = vunpack.c.l.b16 %v3735
    %v3752 = vunpack.c.l.b16 %v3736
    %v3753 = vunpack.c.l.b16 %v3737
    %v3754 = vunpack.c.l.b16 %v3738
    %v3755 = vpack.c.b16 %v3748, %v3747
    %v3756 = vpack.c.b16 %v3750, %v3749
    %v3757 = vpack.c.b16 %v3752, %v3751
    %v3758 = vpack.c.b16 %v3754, %v3753
    %v3764 = vsel %vm344, %v3729, 0
    %3766 = vmatprep.subr.bf16.mxu0 0
    %3767 = vmatpush1.bf16.msra.mxu0 %v3755
    %3768 = vmatprep.subr.bf16.mxu0 0
    %3769 = vmatpush1.bf16.msra.mxu0 %v3756
    %3770 = vmatprep.subr.bf16.mxu0 0
    %3771 = vmatpush1.bf16.msra.mxu0 %v3757
    %3772 = vmatprep.subr.bf16.mxu0 0
    %3773 = vmatpush1.bf16.msra.mxu0 %v3758
    %3774 = vmatprep.subr.bf16.mxu0 0
    %3775 = vmatpush1.bf16.msra.mxu0 0
    %3776 = vmatprep.subr.bf16.mxu0 0
    %3777 = vmatpush1.bf16.msra.mxu0 0
    %3778 = vmatprep.subr.bf16.mxu0 0
    %3779 = vmatpush1.bf16.msra.mxu0 0
    %3780 = vmatprep.subr.bf16.mxu0 0
    %3781 = vmatpush1.bf16.msra.mxu0 0
    %3782 = vmatprep.subr.bf16.mxu0 0
    %3783 = vmatpush1.bf16.msra.mxu0 0
    %3784 = vmatprep.subr.bf16.mxu0 0
    %3785 = vmatpush1.bf16.msra.mxu0 0
    %3786 = vmatprep.subr.bf16.mxu0 0
    %3787 = vmatpush1.bf16.msra.mxu0 0
    %3788 = vmatprep.subr.bf16.mxu0 0
    %3789 = vmatpush1.bf16.msra.mxu0 0
    %3790 = vmatprep.subr.bf16.mxu0 0
    %3791 = vmatpush1.bf16.msra.mxu0 0
    %3792 = vmatprep.subr.bf16.mxu0 0
    %3793 = vmatpush1.bf16.msra.mxu0 0
    %3794 = vmatprep.subr.bf16.mxu0 0
    %3795 = vmatpush1.bf16.msra.mxu0 0
    %3796 = vmatprep.subr.bf16.mxu0 0
    %3797 = vmatpush1.bf16.msra.mxu0 0
    %3798 = vmatprep.mubr.bf16.mxu0 0
    %3799 = vmatmul.mubr.bf16.gmra.mrb[0].mxu0 %v3764
    %v3800 = vpop.f32.mrb[0].mxu0
    %v3801 = vadd.f32 0.0, %v3800
    %v3802 = vpop.f32.mrb[0].mxu0
    %v3803 = vpop.f32.mrb[0].mxu0
    %v3804 = vpop.f32.mrb[0].mxu0
    %3805 = vdwg.mxu0
    %v3806 = vadd.f32 %v3728, %v3801
    %v3807 = vpack.c.bf16 %v3644, %v3644
    %s3808 = scalar_lea.vmem %s47, 64
    %v3809 = vld [vmem:[%s3808] sm:$0xf]
    %v3810 = vld [vmem:[%s3808 + $0x4] sm:$0xf]
    %v3811 = vld [vmem:[%s3808 + $0x8] sm:$0xf]
    %v3812 = vld [vmem:[%s3808 + $0xc] sm:$0xf]
    %v3813 = vld [vmem:[%s3808 + $0x10] sm:$0xf]
    %v3814 = vld [vmem:[%s3808 + $0x14] sm:$0xf]
    %v3815 = vld [vmem:[%s3808 + $0x18] sm:$0xf]
    %v3816 = vld [vmem:[%s3808 + $0x1c] sm:$0xf]
    %v3825 = vunpack.c.l.b16 %v3809
    %v3826 = vunpack.c.l.b16 %v3810
    %v3827 = vunpack.c.l.b16 %v3811
    %v3828 = vunpack.c.l.b16 %v3812
    %v3829 = vunpack.c.l.b16 %v3813
    %v3830 = vunpack.c.l.b16 %v3814
    %v3831 = vunpack.c.l.b16 %v3815
    %v3832 = vunpack.c.l.b16 %v3816
    %v3833 = vpack.c.b16 %v3826, %v3825
    %v3834 = vpack.c.b16 %v3828, %v3827
    %v3835 = vpack.c.b16 %v3830, %v3829
    %v3836 = vpack.c.b16 %v3832, %v3831
    %v3842 = vsel %vm344, %v3807, 0
    %3844 = vmatprep.subr.bf16.mxu0 0
    %3845 = vmatpush1.bf16.msra.mxu0 %v3833
    %3846 = vmatprep.subr.bf16.mxu0 0
    %3847 = vmatpush1.bf16.msra.mxu0 %v3834
    %3848 = vmatprep.subr.bf16.mxu0 0
    %3849 = vmatpush1.bf16.msra.mxu0 %v3835
    %3850 = vmatprep.subr.bf16.mxu0 0
    %3851 = vmatpush1.bf16.msra.mxu0 %v3836
    %3852 = vmatprep.subr.bf16.mxu0 0
    %3853 = vmatpush1.bf16.msra.mxu0 0
    %3854 = vmatprep.subr.bf16.mxu0 0
    %3855 = vmatpush1.bf16.msra.mxu0 0
    %3856 = vmatprep.subr.bf16.mxu0 0
    %3857 = vmatpush1.bf16.msra.mxu0 0
    %3858 = vmatprep.subr.bf16.mxu0 0
    %3859 = vmatpush1.bf16.msra.mxu0 0
    %3860 = vmatprep.subr.bf16.mxu0 0
    %3861 = vmatpush1.bf16.msra.mxu0 0
    %3862 = vmatprep.subr.bf16.mxu0 0
    %3863 = vmatpush1.bf16.msra.mxu0 0
    %3864 = vmatprep.subr.bf16.mxu0 0
    %3865 = vmatpush1.bf16.msra.mxu0 0
    %3866 = vmatprep.subr.bf16.mxu0 0
    %3867 = vmatpush1.bf16.msra.mxu0 0
    %3868 = vmatprep.subr.bf16.mxu0 0
    %3869 = vmatpush1.bf16.msra.mxu0 0
    %3870 = vmatprep.subr.bf16.mxu0 0
    %3871 = vmatpush1.bf16.msra.mxu0 0
    %3872 = vmatprep.subr.bf16.mxu0 0
    %3873 = vmatpush1.bf16.msra.mxu0 0
    %3874 = vmatprep.subr.bf16.mxu0 0
    %3875 = vmatpush1.bf16.msra.mxu0 0
    %3876 = vmatprep.mubr.bf16.mxu0 0
    %3877 = vmatmul.mubr.bf16.gmra.mrb[0].mxu0 %v3842
    %v3878 = vpop.f32.mrb[0].mxu0
    %v3879 = vadd.f32 0.0, %v3878
    %v3880 = vpop.f32.mrb[0].mxu0
    %v3881 = vpop.f32.mrb[0].mxu0
    %v3882 = vpop.f32.mrb[0].mxu0
    %3883 = vdwg.mxu0
    %v3884 = vadd.f32 %v3806, %v3879
    %v3885 = vrot.slane %v3884, 7
    %v3886 = vsel %vm2657, %v3884, %v3885
    %v3887 = vrot.slane %v3884, 1
    %v3888 = vsel %vm2662, %v3884, %v3887
    %v3889 = vmax.f32 %v3884, %v3886
    %v3890 = vmax.f32 %v3889, %v3888
    %3891 = vst.msk [vmem:[#allocation2] sm:$0xff] %vm344, %v3890
    %v3892 = vld [vmem:[#allocation2] ss:$2 sm:$0xf]
    %v3893 = vpack.c.bf16 %v3892, %v3892
    %v3894 = vld [vmem:[%s51] sm:$0xf]
    %v3895 = vld [vmem:[%s51 + $0x4] sm:$0xf]
    %v3896 = vld [vmem:[%s51 + $0x8] sm:$0xf]
    %v3897 = vld [vmem:[%s51 + $0xc] sm:$0xf]
    %v3898 = vld [vmem:[%s51 + $0x10] sm:$0xf]
    %v3899 = vld [vmem:[%s51 + $0x14] sm:$0xf]
    %v3900 = vld [vmem:[%s51 + $0x18] sm:$0xf]
    %v3901 = vld [vmem:[%s51 + $0x1c] sm:$0xf]
    %v3910 = vunpack.c.l.b16 %v3894
    %v3911 = vunpack.c.l.b16 %v3895
    %v3912 = vunpack.c.l.b16 %v3896
    %v3913 = vunpack.c.l.b16 %v3897
    %v3914 = vunpack.c.l.b16 %v3898
    %v3915 = vunpack.c.l.b16 %v3899
    %v3916 = vunpack.c.l.b16 %v3900
    %v3917 = vunpack.c.l.b16 %v3901
    %v3918 = vpack.c.b16 %v3911, %v3910
    %v3919 = vpack.c.b16 %v3913, %v3912
    %v3920 = vpack.c.b16 %v3915, %v3914
    %v3921 = vpack.c.b16 %v3917, %v3916
    %v3927 = vsel %vm344, %v3893, 0
    %3929 = vmatprep.subr.bf16.mxu0 0
    %3930 = vmatpush1.bf16.msra.mxu0 %v3918
    %3931 = vmatprep.subr.bf16.mxu0 0
    %3932 = vmatpush1.bf16.msra.mxu0 %v3919
    %3933 = vmatprep.subr.bf16.mxu0 0
    %3934 = vmatpush1.bf16.msra.mxu0 %v3920
    %3935 = vmatprep.subr.bf16.mxu0 0
    %3936 = vmatpush1.bf16.msra.mxu0 %v3921
    %3937 = vmatprep.subr.bf16.mxu0 0
    %3938 = vmatpush1.bf16.msra.mxu0 0
    %3939 = vmatprep.subr.bf16.mxu0 0
    %3940 = vmatpush1.bf16.msra.mxu0 0
    %3941 = vmatprep.subr.bf16.mxu0 0
    %3942 = vmatpush1.bf16.msra.mxu0 0
    %3943 = vmatprep.subr.bf16.mxu0 0
    %3944 = vmatpush1.bf16.msra.mxu0 0
    %3945 = vmatprep.subr.bf16.mxu0 0
    %3946 = vmatpush1.bf16.msra.mxu0 0
    %3947 = vmatprep.subr.bf16.mxu0 0
    %3948 = vmatpush1.bf16.msra.mxu0 0
    %3949 = vmatprep.subr.bf16.mxu0 0
    %3950 = vmatpush1.bf16.msra.mxu0 0
    %3951 = vmatprep.subr.bf16.mxu0 0
    %3952 = vmatpush1.bf16.msra.mxu0 0
    %3953 = vmatprep.subr.bf16.mxu0 0
    %3954 = vmatpush1.bf16.msra.mxu0 0
    %3955 = vmatprep.subr.bf16.mxu0 0
    %3956 = vmatpush1.bf16.msra.mxu0 0
    %3957 = vmatprep.subr.bf16.mxu0 0
    %3958 = vmatpush1.bf16.msra.mxu0 0
    %3959 = vmatprep.subr.bf16.mxu0 0
    %3960 = vmatpush1.bf16.msra.mxu0 0
    %3961 = vmatprep.mubr.bf16.mxu0 0
    %3962 = vmatmul.mubr.bf16.gmra.mrb[0].mxu0 %v3927
    %v3963 = vpop.f32.mrb[0].mxu0
    %v3964 = vadd.f32 0.0, %v3963
    %v3965 = vpop.f32.mrb[0].mxu0
    %v3966 = vpop.f32.mrb[0].mxu0
    %v3967 = vpop.f32.mrb[0].mxu0
    %3968 = vdwg.mxu0
    %s3969 = scalar_lea.vmem %s51, 32
    %v3970 = vld [vmem:[%s3969] sm:$0xf]
    %v3971 = vld [vmem:[%s3969 + $0x4] sm:$0xf]
    %v3972 = vld [vmem:[%s3969 + $0x8] sm:$0xf]
    %v3973 = vld [vmem:[%s3969 + $0xc] sm:$0xf]
    %v3974 = vld [vmem:[%s3969 + $0x10] sm:$0xf]
    %v3975 = vld [vmem:[%s3969 + $0x14] sm:$0xf]
    %v3976 = vld [vmem:[%s3969 + $0x18] sm:$0xf]
    %v3977 = vld [vmem:[%s3969 + $0x1c] sm:$0xf]
    %v3986 = vunpack.c.l.b16 %v3970
    %v3987 = vunpack.c.l.b16 %v3971
    %v3988 = vunpack.c.l.b16 %v3972
    %v3989 = vunpack.c.l.b16 %v3973
    %v3990 = vunpack.c.l.b16 %v3974
    %v3991 = vunpack.c.l.b16 %v3975
    %v3992 = vunpack.c.l.b16 %v3976
    %v3993 = vunpack.c.l.b16 %v3977
    %v3994 = vpack.c.b16 %v3987, %v3986
    %v3995 = vpack.c.b16 %v3989, %v3988
    %v3996 = vpack.c.b16 %v3991, %v3990
    %v3997 = vpack.c.b16 %v3993, %v3992
    %4002 = vmatprep.subr.bf16.mxu0 0
    %4003 = vmatpush1.bf16.msra.mxu0 %v3994
    %4004 = vmatprep.subr.bf16.mxu0 0
    %4005 = vmatpush1.bf16.msra.mxu0 %v3995
    %4006 = vmatprep.subr.bf16.mxu0 0
    %4007 = vmatpush1.bf16.msra.mxu0 %v3996
    %4008 = vmatprep.subr.bf16.mxu0 0
    %4009 = vmatpush1.bf16.msra.mxu0 %v3997
    %4010 = vmatprep.subr.bf16.mxu0 0
    %4011 = vmatpush1.bf16.msra.mxu0 0
    %4012 = vmatprep.subr.bf16.mxu0 0
    %4013 = vmatpush1.bf16.msra.mxu0 0
    %4014 = vmatprep.subr.bf16.mxu0 0
    %4015 = vmatpush1.bf16.msra.mxu0 0
    %4016 = vmatprep.subr.bf16.mxu0 0
    %4017 = vmatpush1.bf16.msra.mxu0 0
    %4018 = vmatprep.subr.bf16.mxu0 0
    %4019 = vmatpush1.bf16.msra.mxu0 0
    %4020 = vmatprep.subr.bf16.mxu0 0
    %4021 = vmatpush1.bf16.msra.mxu0 0
    %4022 = vmatprep.subr.bf16.mxu0 0
    %4023 = vmatpush1.bf16.msra.mxu0 0
    %4024 = vmatprep.subr.bf16.mxu0 0
    %4025 = vmatpush1.bf16.msra.mxu0 0
    %4026 = vmatprep.subr.bf16.mxu0 0
    %4027 = vmatpush1.bf16.msra.mxu0 0
    %4028 = vmatprep.subr.bf16.mxu0 0
    %4029 = vmatpush1.bf16.msra.mxu0 0
    %4030 = vmatprep.subr.bf16.mxu0 0
    %4031 = vmatpush1.bf16.msra.mxu0 0
    %4032 = vmatprep.subr.bf16.mxu0 0
    %4033 = vmatpush1.bf16.msra.mxu0 0
    %4034 = vmatprep.mubr.bf16.mxu0 0
    %4035 = vmatmul.mubr.bf16.gmra.mrb[0].mxu0 %v3927
    %v4036 = vpop.f32.mrb[0].mxu0
    %v4037 = vadd.f32 0.0, %v4036
    %v4038 = vpop.f32.mrb[0].mxu0
    %v4039 = vpop.f32.mrb[0].mxu0
    %v4040 = vpop.f32.mrb[0].mxu0
    %4041 = vdwg.mxu0
    %v4042 = vmax.f32 %v3964, %v4037
    %s4043 = scalar_lea.vmem %s51, 64
    %v4044 = vld [vmem:[%s4043] sm:$0xf]
    %v4045 = vld [vmem:[%s4043 + $0x4] sm:$0xf]
    %v4046 = vld [vmem:[%s4043 + $0x8] sm:$0xf]
    %v4047 = vld [vmem:[%s4043 + $0xc] sm:$0xf]
    %v4048 = vld [vmem:[%s4043 + $0x10] sm:$0xf]
    %v4049 = vld [vmem:[%s4043 + $0x14] sm:$0xf]
    %v4050 = vld [vmem:[%s4043 + $0x18] sm:$0xf]
    %v4051 = vld [vmem:[%s4043 + $0x1c] sm:$0xf]
    %v4060 = vunpack.c.l.b16 %v4044
    %v4061 = vunpack.c.l.b16 %v4045
    %v4062 = vunpack.c.l.b16 %v4046
    %v4063 = vunpack.c.l.b16 %v4047
    %v4064 = vunpack.c.l.b16 %v4048
    %v4065 = vunpack.c.l.b16 %v4049
    %v4066 = vunpack.c.l.b16 %v4050
    %v4067 = vunpack.c.l.b16 %v4051
    %v4068 = vpack.c.b16 %v4061, %v4060
    %v4069 = vpack.c.b16 %v4063, %v4062
    %v4070 = vpack.c.b16 %v4065, %v4064
    %v4071 = vpack.c.b16 %v4067, %v4066
    %4076 = vmatprep.subr.bf16.mxu0 0
    %4077 = vmatpush1.bf16.msra.mxu0 %v4068
    %4078 = vmatprep.subr.bf16.mxu0 0
    %4079 = vmatpush1.bf16.msra.mxu0 %v4069
    %4080 = vmatprep.subr.bf16.mxu0 0
    %4081 = vmatpush1.bf16.msra.mxu0 %v4070
    %4082 = vmatprep.subr.bf16.mxu0 0
    %4083 = vmatpush1.bf16.msra.mxu0 %v4071
    %4084 = vmatprep.subr.bf16.mxu0 0
    %4085 = vmatpush1.bf16.msra.mxu0 0
    %4086 = vmatprep.subr.bf16.mxu0 0
    %4087 = vmatpush1.bf16.msra.mxu0 0
    %4088 = vmatprep.subr.bf16.mxu0 0
    %4089 = vmatpush1.bf16.msra.mxu0 0
    %4090 = vmatprep.subr.bf16.mxu0 0
    %4091 = vmatpush1.bf16.msra.mxu0 0
    %4092 = vmatprep.subr.bf16.mxu0 0
    %4093 = vmatpush1.bf16.msra.mxu0 0
    %4094 = vmatprep.subr.bf16.mxu0 0
    %4095 = vmatpush1.bf16.msra.mxu0 0
    %4096 = vmatprep.subr.bf16.mxu0 0
    %4097 = vmatpush1.bf16.msra.mxu0 0
    %4098 = vmatprep.subr.bf16.mxu0 0
    %4099 = vmatpush1.bf16.msra.mxu0 0
    %4100 = vmatprep.subr.bf16.mxu0 0
    %4101 = vmatpush1.bf16.msra.mxu0 0
    %4102 = vmatprep.subr.bf16.mxu0 0
    %4103 = vmatpush1.bf16.msra.mxu0 0
    %4104 = vmatprep.subr.bf16.mxu0 0
    %4105 = vmatpush1.bf16.msra.mxu0 0
    %4106 = vmatprep.subr.bf16.mxu0 0
    %4107 = vmatpush1.bf16.msra.mxu0 0
    %4108 = vmatprep.mubr.bf16.mxu0 0
    %4109 = vmatmul.mubr.bf16.gmra.mrb[0].mxu0 %v3927
    %v4110 = vpop.f32.mrb[0].mxu0
    %v4111 = vadd.f32 0.0, %v4110
    %v4112 = vpop.f32.mrb[0].mxu0
    %v4113 = vpop.f32.mrb[0].mxu0
    %v4114 = vpop.f32.mrb[0].mxu0
    %4115 = vdwg.mxu0
    %v4116 = vmax.f32 %v4042, %v4111
    %v4117 = vmax.f32 %v4116, 0.0
    %vm4118 = vcmp.lt.s32.totalorder %v207, 0
    %v4119 = vsub.s32 0, %v207
    %v4120 = vsel %vm4118, %v4119, %v207
    %v4121 = vshrl.u32 %v4120, 1
    %v4122 = vand.u32 %v4120, 1
    %v4123 = vsub.s32 0, %v4122
    %v4124 = vsel %vm4118, %v4123, %v4122
    %vm4125 = vcmp.ne.s32.totalorder %v4124, 0
    %vm4126 = vcmp.lt.s32.totalorder %v4124, 0
    %vm4127 = vmand %vm4126, %vm4125
    %v4128 = vadd.s32 %v4124, 2
    %v4129 = vsel %vm4127, %v4128, %v4124
    %vm4130 = vcmp.eq.s32.totalorder %v4129, 0
    %vm4131 = vcmask 1047556
    %v4132 = vrot.slane %v4117, 4
    %v4133 = vsel %vm4131, %v4132, %v4117
    %v4134 = vrot.slane %v4133, 4
    %v4135 = vsel %vm4131, %v4134, %v4117
    %v4136 = vsel %vm4130, 1, 0
    %vm4137 = vcmp.eq.s32.totalorder %v4136, 1
    %v4139 = vrot.slane %v4135, 3
    %v4141 = vsel %vm4137, 0.0, %v4139
    %vm4142 = vcmp.eq.s32.totalorder %v4129, 1
    %v4143 = vsel %vm4142, 1, 0
    %vm4144 = vcmp.eq.s32.totalorder %v4143, 1
    %v4145 = vrot.slane %v4135, 1
    %v4147 = vsel %vm4144, 0.0, %v4145
    %v4148 = vld [vmem:[%s55] sm:$0x1]
    %v4149 = vpack.c.bf16 %v4141, %v4141
    %v4150 = vld [vmem:[#allocation3] sm:$0xf]
    %v4151 = vld [vmem:[#allocation3 + $0x4] sm:$0xf]
    %v4152 = vld [vmem:[#allocation3 + $0x8] sm:$0xf]
    %v4153 = vld [vmem:[#allocation3 + $0xc] sm:$0xf]
    %v4158 = vunpack.c.l.b16 %v4150
    %v4159 = vunpack.c.l.b16 %v4151
    %v4160 = vunpack.c.l.b16 %v4152
    %v4161 = vunpack.c.l.b16 %v4153
    %v4162 = vpack.c.b16 %v4159, %v4158
    %v4163 = vpack.c.b16 %v4161, %v4160
    %vm4166 = vcmask 261120
    %v4168 = vsel %vm4166, %v4149, 0
    %4170 = vmatprep.subr.bf16.mxu0 0
    %4171 = vmatpush1.bf16.msra.mxu0 %v4162
    %4172 = vmatprep.subr.bf16.mxu0 0
    %4173 = vmatpush1.bf16.msra.mxu0 %v4163
    %4174 = vmatprep.subr.bf16.mxu0 0
    %4175 = vmatpush1.bf16.msra.mxu0 0
    %4176 = vmatprep.subr.bf16.mxu0 0
    %4177 = vmatpush1.bf16.msra.mxu0 0
    %4178 = vmatprep.subr.bf16.mxu0 0
    %4179 = vmatpush1.bf16.msra.mxu0 0
    %4180 = vmatprep.subr.bf16.mxu0 0
    %4181 = vmatpush1.bf16.msra.mxu0 0
    %4182 = vmatprep.subr.bf16.mxu0 0
    %4183 = vmatpush1.bf16.msra.mxu0 0
    %4184 = vmatprep.subr.bf16.mxu0 0
    %4185 = vmatpush1.bf16.msra.mxu0 0
    %4186 = vmatprep.subr.bf16.mxu0 0
    %4187 = vmatpush1.bf16.msra.mxu0 0
    %4188 = vmatprep.subr.bf16.mxu0 0
    %4189 = vmatpush1.bf16.msra.mxu0 0
    %4190 = vmatprep.subr.bf16.mxu0 0
    %4191 = vmatpush1.bf16.msra.mxu0 0
    %4192 = vmatprep.subr.bf16.mxu0 0
    %4193 = vmatpush1.bf16.msra.mxu0 0
    %4194 = vmatprep.subr.bf16.mxu0 0
    %4195 = vmatpush1.bf16.msra.mxu0 0
    %4196 = vmatprep.subr.bf16.mxu0 0
    %4197 = vmatpush1.bf16.msra.mxu0 0
    %4198 = vmatprep.subr.bf16.mxu0 0
    %4199 = vmatpush1.bf16.msra.mxu0 0
    %4200 = vmatprep.subr.bf16.mxu0 0
    %4201 = vmatpush1.bf16.msra.mxu0 0
    %4202 = vmatprep.mubr.bf16.mxu0 0
    %4203 = vmatmul.mubr.bf16.gmra.mrb[0].mxu0 %v4168
    %v4204 = vpop.f32.mrb[0].mxu0
    %v4205 = vadd.f32 0.0, %v4204
    %v4206 = vpop.f32.mrb[0].mxu0
    %v4207 = vpop.f32.mrb[0].mxu0
    %v4208 = vpop.f32.mrb[0].mxu0
    %4209 = vdwg.mxu0
    %v4211 = vlaneseq
    %v4212 = vshrl.u32 %v4211, 7
    %v4213 = vsub.s32 0, %v4212
    %v4214 = vrot.slane %v4148, %v4213
    %v4216 = vadd.f32 %v4214, %v4205
    %v4217 = vpack.c.bf16 %v4117, %v4117
    %s4218 = scalar_lea.vmem [#allocation3], 16
    %v4219 = vld [vmem:[%s4218] sm:$0xf]
    %v4220 = vld [vmem:[%s4218 + $0x4] sm:$0xf]
    %v4221 = vld [vmem:[%s4218 + $0x8] sm:$0xf]
    %v4222 = vld [vmem:[%s4218 + $0xc] sm:$0xf]
    %v4227 = vunpack.c.l.b16 %v4219
    %v4228 = vunpack.c.l.b16 %v4220
    %v4229 = vunpack.c.l.b16 %v4221
    %v4230 = vunpack.c.l.b16 %v4222
    %v4231 = vpack.c.b16 %v4228, %v4227
    %v4232 = vpack.c.b16 %v4230, %v4229
    %v4236 = vsel %vm4166, %v4217, 0
    %4238 = vmatprep.subr.bf16.mxu0 0
    %4239 = vmatpush1.bf16.msra.mxu0 %v4231
    %4240 = vmatprep.subr.bf16.mxu0 0
    %4241 = vmatpush1.bf16.msra.mxu0 %v4232
    %4242 = vmatprep.subr.bf16.mxu0 0
    %4243 = vmatpush1.bf16.msra.mxu0 0
    %4244 = vmatprep.subr.bf16.mxu0 0
    %4245 = vmatpush1.bf16.msra.mxu0 0
    %4246 = vmatprep.subr.bf16.mxu0 0
    %4247 = vmatpush1.bf16.msra.mxu0 0
    %4248 = vmatprep.subr.bf16.mxu0 0
    %4249 = vmatpush1.bf16.msra.mxu0 0
    %4250 = vmatprep.subr.bf16.mxu0 0
    %4251 = vmatpush1.bf16.msra.mxu0 0
    %4252 = vmatprep.subr.bf16.mxu0 0
    %4253 = vmatpush1.bf16.msra.mxu0 0
    %4254 = vmatprep.subr.bf16.mxu0 0
    %4255 = vmatpush1.bf16.msra.mxu0 0
    %4256 = vmatprep.subr.bf16.mxu0 0
    %4257 = vmatpush1.bf16.msra.mxu0 0
    %4258 = vmatprep.subr.bf16.mxu0 0
    %4259 = vmatpush1.bf16.msra.mxu0 0
    %4260 = vmatprep.subr.bf16.mxu0 0
    %4261 = vmatpush1.bf16.msra.mxu0 0
    %4262 = vmatprep.subr.bf16.mxu0 0
    %4263 = vmatpush1.bf16.msra.mxu0 0
    %4264 = vmatprep.subr.bf16.mxu0 0
    %4265 = vmatpush1.bf16.msra.mxu0 0
    %4266 = vmatprep.subr.bf16.mxu0 0
    %4267 = vmatpush1.bf16.msra.mxu0 0
    %4268 = vmatprep.subr.bf16.mxu0 0
    %4269 = vmatpush1.bf16.msra.mxu0 0
    %4270 = vmatprep.mubr.bf16.mxu0 0
    %4271 = vmatmul.mubr.bf16.gmra.mrb[0].mxu0 %v4236
    %v4272 = vpop.f32.mrb[0].mxu0
    %v4273 = vadd.f32 0.0, %v4272
    %v4274 = vpop.f32.mrb[0].mxu0
    %v4275 = vpop.f32.mrb[0].mxu0
    %v4276 = vpop.f32.mrb[0].mxu0
    %4277 = vdwg.mxu0
    %v4278 = vadd.f32 %v4216, %v4273
    %v4279 = vpack.c.bf16 %v4147, %v4147
    %s4280 = scalar_lea.vmem [#allocation3], 32
    %v4281 = vld [vmem:[%s4280] sm:$0xf]
    %v4282 = vld [vmem:[%s4280 + $0x4] sm:$0xf]
    %v4283 = vld [vmem:[%s4280 + $0x8] sm:$0xf]
    %v4284 = vld [vmem:[%s4280 + $0xc] sm:$0xf]
    %v4289 = vunpack.c.l.b16 %v4281
    %v4290 = vunpack.c.l.b16 %v4282
    %v4291 = vunpack.c.l.b16 %v4283
    %v4292 = vunpack.c.l.b16 %v4284
    %v4293 = vpack.c.b16 %v4290, %v4289
    %v4294 = vpack.c.b16 %v4292, %v4291
    %v4298 = vsel %vm4166, %v4279, 0
    %4300 = vmatprep.subr.bf16.mxu0 0
    %4301 = vmatpush1.bf16.msra.mxu0 %v4293
    %4302 = vmatprep.subr.bf16.mxu0 0
    %4303 = vmatpush1.bf16.msra.mxu0 %v4294
    %4304 = vmatprep.subr.bf16.mxu0 0
    %4305 = vmatpush1.bf16.msra.mxu0 0
    %4306 = vmatprep.subr.bf16.mxu0 0
    %4307 = vmatpush1.bf16.msra.mxu0 0
    %4308 = vmatprep.subr.bf16.mxu0 0
    %4309 = vmatpush1.bf16.msra.mxu0 0
    %4310 = vmatprep.subr.bf16.mxu0 0
    %4311 = vmatpush1.bf16.msra.mxu0 0
    %4312 = vmatprep.subr.bf16.mxu0 0
    %4313 = vmatpush1.bf16.msra.mxu0 0
    %4314 = vmatprep.subr.bf16.mxu0 0
    %4315 = vmatpush1.bf16.msra.mxu0 0
    %4316 = vmatprep.subr.bf16.mxu0 0
    %4317 = vmatpush1.bf16.msra.mxu0 0
    %4318 = vmatprep.subr.bf16.mxu0 0
    %4319 = vmatpush1.bf16.msra.mxu0 0
    %4320 = vmatprep.subr.bf16.mxu0 0
    %4321 = vmatpush1.bf16.msra.mxu0 0
    %4322 = vmatprep.subr.bf16.mxu0 0
    %4323 = vmatpush1.bf16.msra.mxu0 0
    %4324 = vmatprep.subr.bf16.mxu0 0
    %4325 = vmatpush1.bf16.msra.mxu0 0
    %4326 = vmatprep.subr.bf16.mxu0 0
    %4327 = vmatpush1.bf16.msra.mxu0 0
    %4328 = vmatprep.subr.bf16.mxu0 0
    %4329 = vmatpush1.bf16.msra.mxu0 0
    %4330 = vmatprep.subr.bf16.mxu0 0
    %4331 = vmatpush1.bf16.msra.mxu0 0
    %4332 = vmatprep.mubr.bf16.mxu0 0
    %4333 = vmatmul.mubr.bf16.gmra.mrb[0].mxu0 %v4298
    %v4334 = vpop.f32.mrb[0].mxu0
    %v4335 = vadd.f32 0.0, %v4334
    %v4336 = vpop.f32.mrb[0].mxu0
    %v4337 = vpop.f32.mrb[0].mxu0
    %v4338 = vpop.f32.mrb[0].mxu0
    %4339 = vdwg.mxu0
    %v4340 = vadd.f32 %v4278, %v4335
    %v4341 = vmax.f32 %v4340, 0.0
    %v4342 = vrot.slane %v4341, 4
    %v4343 = vsel %vm4131, %v4342, %v4341
    %v4344 = vrot.slane %v4343, 4
    %v4345 = vsel %vm4131, %v4344, %v4341
    %v4347 = vrot.slane %v4345, 3
    %v4349 = vsel %vm4137, 0.0, %v4347
    %v4350 = vrot.slane %v4345, 1
    %v4352 = vsel %vm4144, 0.0, %v4350
    %v4353 = vld [vmem:[%s59] sm:$0x1]
    %v4354 = vpack.c.bf16 %v4349, %v4349
    %v4355 = vld [vmem:[#allocation5] sm:$0xf]
    %v4356 = vld [vmem:[#allocation5 + $0x4] sm:$0xf]
    %v4357 = vld [vmem:[#allocation5 + $0x8] sm:$0xf]
    %v4358 = vld [vmem:[#allocation5 + $0xc] sm:$0xf]
    %v4363 = vunpack.c.l.b16 %v4355
    %v4364 = vunpack.c.l.b16 %v4356
    %v4365 = vunpack.c.l.b16 %v4357
    %v4366 = vunpack.c.l.b16 %v4358
    %v4367 = vpack.c.b16 %v4364, %v4363
    %v4368 = vpack.c.b16 %v4366, %v4365
    %v4372 = vsel %vm4166, %v4354, 0
    %4374 = vmatprep.subr.bf16.mxu0 0
    %4375 = vmatpush1.bf16.msra.mxu0 %v4367
    %4376 = vmatprep.subr.bf16.mxu0 0
    %4377 = vmatpush1.bf16.msra.mxu0 %v4368
    %4378 = vmatprep.subr.bf16.mxu0 0
    %4379 = vmatpush1.bf16.msra.mxu0 0
    %4380 = vmatprep.subr.bf16.mxu0 0
    %4381 = vmatpush1.bf16.msra.mxu0 0
    %4382 = vmatprep.subr.bf16.mxu0 0
    %4383 = vmatpush1.bf16.msra.mxu0 0
    %4384 = vmatprep.subr.bf16.mxu0 0
    %4385 = vmatpush1.bf16.msra.mxu0 0
    %4386 = vmatprep.subr.bf16.mxu0 0
    %4387 = vmatpush1.bf16.msra.mxu0 0
    %4388 = vmatprep.subr.bf16.mxu0 0
    %4389 = vmatpush1.bf16.msra.mxu0 0
    %4390 = vmatprep.subr.bf16.mxu0 0
    %4391 = vmatpush1.bf16.msra.mxu0 0
    %4392 = vmatprep.subr.bf16.mxu0 0
    %4393 = vmatpush1.bf16.msra.mxu0 0
    %4394 = vmatprep.subr.bf16.mxu0 0
    %4395 = vmatpush1.bf16.msra.mxu0 0
    %4396 = vmatprep.subr.bf16.mxu0 0
    %4397 = vmatpush1.bf16.msra.mxu0 0
    %4398 = vmatprep.subr.bf16.mxu0 0
    %4399 = vmatpush1.bf16.msra.mxu0 0
    %4400 = vmatprep.subr.bf16.mxu0 0
    %4401 = vmatpush1.bf16.msra.mxu0 0
    %4402 = vmatprep.subr.bf16.mxu0 0
    %4403 = vmatpush1.bf16.msra.mxu0 0
    %4404 = vmatprep.subr.bf16.mxu0 0
    %4405 = vmatpush1.bf16.msra.mxu0 0
    %4406 = vmatprep.mubr.bf16.mxu0 0
    %4407 = vmatmul.mubr.bf16.gmra.mrb[0].mxu0 %v4372
    %v4408 = vpop.f32.mrb[0].mxu0
    %v4409 = vadd.f32 0.0, %v4408
    %v4410 = vpop.f32.mrb[0].mxu0
    %v4411 = vpop.f32.mrb[0].mxu0
    %v4412 = vpop.f32.mrb[0].mxu0
    %4413 = vdwg.mxu0
    %v4415 = vlaneseq
    %v4416 = vshrl.u32 %v4415, 7
    %v4417 = vsub.s32 0, %v4416
    %v4418 = vrot.slane %v4353, %v4417
    %v4420 = vadd.f32 %v4418, %v4409
    %v4421 = vpack.c.bf16 %v4341, %v4341
    %s4422 = scalar_lea.vmem [#allocation5], 16
    %v4423 = vld [vmem:[%s4422] sm:$0xf]
    %v4424 = vld [vmem:[%s4422 + $0x4] sm:$0xf]
    %v4425 = vld [vmem:[%s4422 + $0x8] sm:$0xf]
    %v4426 = vld [vmem:[%s4422 + $0xc] sm:$0xf]
    %v4431 = vunpack.c.l.b16 %v4423
    %v4432 = vunpack.c.l.b16 %v4424
    %v4433 = vunpack.c.l.b16 %v4425
    %v4434 = vunpack.c.l.b16 %v4426
    %v4435 = vpack.c.b16 %v4432, %v4431
    %v4436 = vpack.c.b16 %v4434, %v4433
    %v4440 = vsel %vm4166, %v4421, 0
    %4442 = vmatprep.subr.bf16.mxu0 0
    %4443 = vmatpush1.bf16.msra.mxu0 %v4435
    %4444 = vmatprep.subr.bf16.mxu0 0
    %4445 = vmatpush1.bf16.msra.mxu0 %v4436
    %4446 = vmatprep.subr.bf16.mxu0 0
    %4447 = vmatpush1.bf16.msra.mxu0 0
    %4448 = vmatprep.subr.bf16.mxu0 0
    %4449 = vmatpush1.bf16.msra.mxu0 0
    %4450 = vmatprep.subr.bf16.mxu0 0
    %4451 = vmatpush1.bf16.msra.mxu0 0
    %4452 = vmatprep.subr.bf16.mxu0 0
    %4453 = vmatpush1.bf16.msra.mxu0 0
    %4454 = vmatprep.subr.bf16.mxu0 0
    %4455 = vmatpush1.bf16.msra.mxu0 0
    %4456 = vmatprep.subr.bf16.mxu0 0
    %4457 = vmatpush1.bf16.msra.mxu0 0
    %4458 = vmatprep.subr.bf16.mxu0 0
    %4459 = vmatpush1.bf16.msra.mxu0 0
    %4460 = vmatprep.subr.bf16.mxu0 0
    %4461 = vmatpush1.bf16.msra.mxu0 0
    %4462 = vmatprep.subr.bf16.mxu0 0
    %4463 = vmatpush1.bf16.msra.mxu0 0
    %4464 = vmatprep.subr.bf16.mxu0 0
    %4465 = vmatpush1.bf16.msra.mxu0 0
    %4466 = vmatprep.subr.bf16.mxu0 0
    %4467 = vmatpush1.bf16.msra.mxu0 0
    %4468 = vmatprep.subr.bf16.mxu0 0
    %4469 = vmatpush1.bf16.msra.mxu0 0
    %4470 = vmatprep.subr.bf16.mxu0 0
    %4471 = vmatpush1.bf16.msra.mxu0 0
    %4472 = vmatprep.subr.bf16.mxu0 0
    %4473 = vmatpush1.bf16.msra.mxu0 0
    %4474 = vmatprep.mubr.bf16.mxu0 0
    %4475 = vmatmul.mubr.bf16.gmra.mrb[0].mxu0 %v4440
    %v4476 = vpop.f32.mrb[0].mxu0
    %v4477 = vadd.f32 0.0, %v4476
    %v4478 = vpop.f32.mrb[0].mxu0
    %v4479 = vpop.f32.mrb[0].mxu0
    %v4480 = vpop.f32.mrb[0].mxu0
    %4481 = vdwg.mxu0
    %v4482 = vadd.f32 %v4420, %v4477
    %v4483 = vpack.c.bf16 %v4352, %v4352
    %s4484 = scalar_lea.vmem [#allocation5], 32
    %v4485 = vld [vmem:[%s4484] sm:$0xf]
    %v4486 = vld [vmem:[%s4484 + $0x4] sm:$0xf]
    %v4487 = vld [vmem:[%s4484 + $0x8] sm:$0xf]
    %v4488 = vld [vmem:[%s4484 + $0xc] sm:$0xf]
    %v4493 = vunpack.c.l.b16 %v4485
    %v4494 = vunpack.c.l.b16 %v4486
    %v4495 = vunpack.c.l.b16 %v4487
    %v4496 = vunpack.c.l.b16 %v4488
    %v4497 = vpack.c.b16 %v4494, %v4493
    %v4498 = vpack.c.b16 %v4496, %v4495
    %v4502 = vsel %vm4166, %v4483, 0
    %4504 = vmatprep.subr.bf16.mxu0 0
    %4505 = vmatpush1.bf16.msra.mxu0 %v4497
    %4506 = vmatprep.subr.bf16.mxu0 0
    %4507 = vmatpush1.bf16.msra.mxu0 %v4498
    %4508 = vmatprep.subr.bf16.mxu0 0
    %4509 = vmatpush1.bf16.msra.mxu0 0
    %4510 = vmatprep.subr.bf16.mxu0 0
    %4511 = vmatpush1.bf16.msra.mxu0 0
    %4512 = vmatprep.subr.bf16.mxu0 0
    %4513 = vmatpush1.bf16.msra.mxu0 0
    %4514 = vmatprep.subr.bf16.mxu0 0
    %4515 = vmatpush1.bf16.msra.mxu0 0
    %4516 = vmatprep.subr.bf16.mxu0 0
    %4517 = vmatpush1.bf16.msra.mxu0 0
    %4518 = vmatprep.subr.bf16.mxu0 0
    %4519 = vmatpush1.bf16.msra.mxu0 0
    %4520 = vmatprep.subr.bf16.mxu0 0
    %4521 = vmatpush1.bf16.msra.mxu0 0
    %4522 = vmatprep.subr.bf16.mxu0 0
    %4523 = vmatpush1.bf16.msra.mxu0 0
    %4524 = vmatprep.subr.bf16.mxu0 0
    %4525 = vmatpush1.bf16.msra.mxu0 0
    %4526 = vmatprep.subr.bf16.mxu0 0
    %4527 = vmatpush1.bf16.msra.mxu0 0
    %4528 = vmatprep.subr.bf16.mxu0 0
    %4529 = vmatpush1.bf16.msra.mxu0 0
    %4530 = vmatprep.subr.bf16.mxu0 0
    %4531 = vmatpush1.bf16.msra.mxu0 0
    %4532 = vmatprep.subr.bf16.mxu0 0
    %4533 = vmatpush1.bf16.msra.mxu0 0
    %4534 = vmatprep.subr.bf16.mxu0 0
    %4535 = vmatpush1.bf16.msra.mxu0 0
    %4536 = vmatprep.mubr.bf16.mxu0 0
    %4537 = vmatmul.mubr.bf16.gmra.mrb[0].mxu0 %v4502
    %v4538 = vpop.f32.mrb[0].mxu0
    %v4539 = vadd.f32 0.0, %v4538
    %v4540 = vpop.f32.mrb[0].mxu0
    %v4541 = vpop.f32.mrb[0].mxu0
    %v4542 = vpop.f32.mrb[0].mxu0
    %4543 = vdwg.mxu0
    %v4544 = vadd.f32 %v4482, %v4539
    %v4545 = vadd.f32 %v4544, %v4116
    %v4546 = vmax.f32 %v4545, 0.0
    %v4547 = vrot.slane %v4546, 4
    %v4548 = vsel %vm4131, %v4547, %v4546
    %v4549 = vrot.slane %v4548, 4
    %v4550 = vsel %vm4131, %v4549, %v4546
    %v4552 = vrot.slane %v4550, 3
    %v4554 = vsel %vm4137, 0.0, %v4552
    %v4555 = vrot.slane %v4550, 1
    %v4557 = vsel %vm4144, 0.0, %v4555
    %v4558 = vld [vmem:[%s63] sm:$0x1]
    %v4559 = vpack.c.bf16 %v4554, %v4554
    %v4560 = vld [vmem:[#allocation7] sm:$0xf]
    %v4561 = vld [vmem:[#allocation7 + $0x4] sm:$0xf]
    %v4562 = vld [vmem:[#allocation7 + $0x8] sm:$0xf]
    %v4563 = vld [vmem:[#allocation7 + $0xc] sm:$0xf]
    %v4568 = vunpack.c.l.b16 %v4560
    %v4569 = vunpack.c.l.b16 %v4561
    %v4570 = vunpack.c.l.b16 %v4562
    %v4571 = vunpack.c.l.b16 %v4563
    %v4572 = vpack.c.b16 %v4569, %v4568
    %v4573 = vpack.c.b16 %v4571, %v4570
    %v4577 = vsel %vm4166, %v4559, 0
    %4579 = vmatprep.subr.bf16.mxu0 0
    %4580 = vmatpush1.bf16.msra.mxu0 %v4572
    %4581 = vmatprep.subr.bf16.mxu0 0
    %4582 = vmatpush1.bf16.msra.mxu0 %v4573
    %4583 = vmatprep.subr.bf16.mxu0 0
    %4584 = vmatpush1.bf16.msra.mxu0 0
    %4585 = vmatprep.subr.bf16.mxu0 0
    %4586 = vmatpush1.bf16.msra.mxu0 0
    %4587 = vmatprep.subr.bf16.mxu0 0
    %4588 = vmatpush1.bf16.msra.mxu0 0
    %4589 = vmatprep.subr.bf16.mxu0 0
    %4590 = vmatpush1.bf16.msra.mxu0 0
    %4591 = vmatprep.subr.bf16.mxu0 0
    %4592 = vmatpush1.bf16.msra.mxu0 0
    %4593 = vmatprep.subr.bf16.mxu0 0
    %4594 = vmatpush1.bf16.msra.mxu0 0
    %4595 = vmatprep.subr.bf16.mxu0 0
    %4596 = vmatpush1.bf16.msra.mxu0 0
    %4597 = vmatprep.subr.bf16.mxu0 0
    %4598 = vmatpush1.bf16.msra.mxu0 0
    %4599 = vmatprep.subr.bf16.mxu0 0
    %4600 = vmatpush1.bf16.msra.mxu0 0
    %4601 = vmatprep.subr.bf16.mxu0 0
    %4602 = vmatpush1.bf16.msra.mxu0 0
    %4603 = vmatprep.subr.bf16.mxu0 0
    %4604 = vmatpush1.bf16.msra.mxu0 0
    %4605 = vmatprep.subr.bf16.mxu0 0
    %4606 = vmatpush1.bf16.msra.mxu0 0
    %4607 = vmatprep.subr.bf16.mxu0 0
    %4608 = vmatpush1.bf16.msra.mxu0 0
    %4609 = vmatprep.subr.bf16.mxu0 0
    %4610 = vmatpush1.bf16.msra.mxu0 0
    %4611 = vmatprep.mubr.bf16.mxu0 0
    %4612 = vmatmul.mubr.bf16.gmra.mrb[0].mxu0 %v4577
    %v4613 = vpop.f32.mrb[0].mxu0
    %v4614 = vadd.f32 0.0, %v4613
    %v4615 = vpop.f32.mrb[0].mxu0
    %v4616 = vpop.f32.mrb[0].mxu0
    %v4617 = vpop.f32.mrb[0].mxu0
    %4618 = vdwg.mxu0
    %v4620 = vlaneseq
    %v4621 = vshrl.u32 %v4620, 7
    %v4622 = vsub.s32 0, %v4621
    %v4623 = vrot.slane %v4558, %v4622
    %v4625 = vadd.f32 %v4623, %v4614
    %v4626 = vpack.c.bf16 %v4546, %v4546
    %s4627 = scalar_lea.vmem [#allocation7], 16
    %v4628 = vld [vmem:[%s4627] sm:$0xf]
    %v4629 = vld [vmem:[%s4627 + $0x4] sm:$0xf]
    %v4630 = vld [vmem:[%s4627 + $0x8] sm:$0xf]
    %v4631 = vld [vmem:[%s4627 + $0xc] sm:$0xf]
    %v4636 = vunpack.c.l.b16 %v4628
    %v4637 = vunpack.c.l.b16 %v4629
    %v4638 = vunpack.c.l.b16 %v4630
    %v4639 = vunpack.c.l.b16 %v4631
    %v4640 = vpack.c.b16 %v4637, %v4636
    %v4641 = vpack.c.b16 %v4639, %v4638
    %v4645 = vsel %vm4166, %v4626, 0
    %4647 = vmatprep.subr.bf16.mxu0 0
    %4648 = vmatpush1.bf16.msra.mxu0 %v4640
    %4649 = vmatprep.subr.bf16.mxu0 0
    %4650 = vmatpush1.bf16.msra.mxu0 %v4641
    %4651 = vmatprep.subr.bf16.mxu0 0
    %4652 = vmatpush1.bf16.msra.mxu0 0
    %4653 = vmatprep.subr.bf16.mxu0 0
    %4654 = vmatpush1.bf16.msra.mxu0 0
    %4655 = vmatprep.subr.bf16.mxu0 0
    %4656 = vmatpush1.bf16.msra.mxu0 0
    %4657 = vmatprep.subr.bf16.mxu0 0
    %4658 = vmatpush1.bf16.msra.mxu0 0
    %4659 = vmatprep.subr.bf16.mxu0 0
    %4660 = vmatpush1.bf16.msra.mxu0 0
    %4661 = vmatprep.subr.bf16.mxu0 0
    %4662 = vmatpush1.bf16.msra.mxu0 0
    %4663 = vmatprep.subr.bf16.mxu0 0
    %4664 = vmatpush1.bf16.msra.mxu0 0
    %4665 = vmatprep.subr.bf16.mxu0 0
    %4666 = vmatpush1.bf16.msra.mxu0 0
    %4667 = vmatprep.subr.bf16.mxu0 0
    %4668 = vmatpush1.bf16.msra.mxu0 0
    %4669 = vmatprep.subr.bf16.mxu0 0
    %4670 = vmatpush1.bf16.msra.mxu0 0
    %4671 = vmatprep.subr.bf16.mxu0 0
    %4672 = vmatpush1.bf16.msra.mxu0 0
    %4673 = vmatprep.subr.bf16.mxu0 0
    %4674 = vmatpush1.bf16.msra.mxu0 0
    %4675 = vmatprep.subr.bf16.mxu0 0
    %4676 = vmatpush1.bf16.msra.mxu0 0
    %4677 = vmatprep.subr.bf16.mxu0 0
    %4678 = vmatpush1.bf16.msra.mxu0 0
    %4679 = vmatprep.mubr.bf16.mxu0 0
    %4680 = vmatmul.mubr.bf16.gmra.mrb[0].mxu0 %v4645
    %v4681 = vpop.f32.mrb[0].mxu0
    %v4682 = vadd.f32 0.0, %v4681
    %v4683 = vpop.f32.mrb[0].mxu0
    %v4684 = vpop.f32.mrb[0].mxu0
    %v4685 = vpop.f32.mrb[0].mxu0
    %4686 = vdwg.mxu0
    %v4687 = vadd.f32 %v4625, %v4682
    %v4688 = vpack.c.bf16 %v4557, %v4557
    %s4689 = scalar_lea.vmem [#allocation7], 32
    %v4690 = vld [vmem:[%s4689] sm:$0xf]
    %v4691 = vld [vmem:[%s4689 + $0x4] sm:$0xf]
    %v4692 = vld [vmem:[%s4689 + $0x8] sm:$0xf]
    %v4693 = vld [vmem:[%s4689 + $0xc] sm:$0xf]
    %v4698 = vunpack.c.l.b16 %v4690
    %v4699 = vunpack.c.l.b16 %v4691
    %v4700 = vunpack.c.l.b16 %v4692
    %v4701 = vunpack.c.l.b16 %v4693
    %v4702 = vpack.c.b16 %v4699, %v4698
    %v4703 = vpack.c.b16 %v4701, %v4700
    %v4707 = vsel %vm4166, %v4688, 0
    %4709 = vmatprep.subr.bf16.mxu0 0
    %4710 = vmatpush1.bf16.msra.mxu0 %v4702
    %4711 = vmatprep.subr.bf16.mxu0 0
    %4712 = vmatpush1.bf16.msra.mxu0 %v4703
    %4713 = vmatprep.subr.bf16.mxu0 0
    %4714 = vmatpush1.bf16.msra.mxu0 0
    %4715 = vmatprep.subr.bf16.mxu0 0
    %4716 = vmatpush1.bf16.msra.mxu0 0
    %4717 = vmatprep.subr.bf16.mxu0 0
    %4718 = vmatpush1.bf16.msra.mxu0 0
    %4719 = vmatprep.subr.bf16.mxu0 0
    %4720 = vmatpush1.bf16.msra.mxu0 0
    %4721 = vmatprep.subr.bf16.mxu0 0
    %4722 = vmatpush1.bf16.msra.mxu0 0
    %4723 = vmatprep.subr.bf16.mxu0 0
    %4724 = vmatpush1.bf16.msra.mxu0 0
    %4725 = vmatprep.subr.bf16.mxu0 0
    %4726 = vmatpush1.bf16.msra.mxu0 0
    %4727 = vmatprep.subr.bf16.mxu0 0
    %4728 = vmatpush1.bf16.msra.mxu0 0
    %4729 = vmatprep.subr.bf16.mxu0 0
    %4730 = vmatpush1.bf16.msra.mxu0 0
    %4731 = vmatprep.subr.bf16.mxu0 0
    %4732 = vmatpush1.bf16.msra.mxu0 0
    %4733 = vmatprep.subr.bf16.mxu0 0
    %4734 = vmatpush1.bf16.msra.mxu0 0
    %4735 = vmatprep.subr.bf16.mxu0 0
    %4736 = vmatpush1.bf16.msra.mxu0 0
    %4737 = vmatprep.subr.bf16.mxu0 0
    %4738 = vmatpush1.bf16.msra.mxu0 0
    %4739 = vmatprep.subr.bf16.mxu0 0
    %4740 = vmatpush1.bf16.msra.mxu0 0
    %4741 = vmatprep.mubr.bf16.mxu0 0
    %4742 = vmatmul.mubr.bf16.gmra.mrb[0].mxu0 %v4707
    %v4743 = vpop.f32.mrb[0].mxu0
    %v4744 = vadd.f32 0.0, %v4743
    %v4745 = vpop.f32.mrb[0].mxu0
    %v4746 = vpop.f32.mrb[0].mxu0
    %v4747 = vpop.f32.mrb[0].mxu0
    %4748 = vdwg.mxu0
    %v4749 = vadd.f32 %v4687, %v4744
    %v4750 = vmax.f32 %v4749, 0.0
    %v4751 = vrot.slane %v4750, 4
    %v4752 = vsel %vm4131, %v4751, %v4750
    %v4753 = vrot.slane %v4752, 4
    %v4754 = vsel %vm4131, %v4753, %v4750
    %v4756 = vrot.slane %v4754, 3
    %v4758 = vsel %vm4137, 0.0, %v4756
    %v4759 = vrot.slane %v4754, 1
    %v4761 = vsel %vm4144, 0.0, %v4759
    %v4762 = vld [vmem:[%s67] sm:$0x1]
    %v4763 = vpack.c.bf16 %v4758, %v4758
    %v4764 = vld [vmem:[#allocation8] sm:$0xf]
    %v4765 = vld [vmem:[#allocation8 + $0x4] sm:$0xf]
    %v4766 = vld [vmem:[#allocation8 + $0x8] sm:$0xf]
    %v4767 = vld [vmem:[#allocation8 + $0xc] sm:$0xf]
    %v4772 = vunpack.c.l.b16 %v4764
    %v4773 = vunpack.c.l.b16 %v4765
    %v4774 = vunpack.c.l.b16 %v4766
    %v4775 = vunpack.c.l.b16 %v4767
    %v4776 = vpack.c.b16 %v4773, %v4772
    %v4777 = vpack.c.b16 %v4775, %v4774
    %v4781 = vsel %vm4166, %v4763, 0
    %4783 = vmatprep.subr.bf16.mxu0 0
    %4784 = vmatpush1.bf16.msra.mxu0 %v4776
    %4785 = vmatprep.subr.bf16.mxu0 0
    %4786 = vmatpush1.bf16.msra.mxu0 %v4777
    %4787 = vmatprep.subr.bf16.mxu0 0
    %4788 = vmatpush1.bf16.msra.mxu0 0
    %4789 = vmatprep.subr.bf16.mxu0 0
    %4790 = vmatpush1.bf16.msra.mxu0 0
    %4791 = vmatprep.subr.bf16.mxu0 0
    %4792 = vmatpush1.bf16.msra.mxu0 0
    %4793 = vmatprep.subr.bf16.mxu0 0
    %4794 = vmatpush1.bf16.msra.mxu0 0
    %4795 = vmatprep.subr.bf16.mxu0 0
    %4796 = vmatpush1.bf16.msra.mxu0 0
    %4797 = vmatprep.subr.bf16.mxu0 0
    %4798 = vmatpush1.bf16.msra.mxu0 0
    %4799 = vmatprep.subr.bf16.mxu0 0
    %4800 = vmatpush1.bf16.msra.mxu0 0
    %4801 = vmatprep.subr.bf16.mxu0 0
    %4802 = vmatpush1.bf16.msra.mxu0 0
    %4803 = vmatprep.subr.bf16.mxu0 0
    %4804 = vmatpush1.bf16.msra.mxu0 0
    %4805 = vmatprep.subr.bf16.mxu0 0
    %4806 = vmatpush1.bf16.msra.mxu0 0
    %4807 = vmatprep.subr.bf16.mxu0 0
    %4808 = vmatpush1.bf16.msra.mxu0 0
    %4809 = vmatprep.subr.bf16.mxu0 0
    %4810 = vmatpush1.bf16.msra.mxu0 0
    %4811 = vmatprep.subr.bf16.mxu0 0
    %4812 = vmatpush1.bf16.msra.mxu0 0
    %4813 = vmatprep.subr.bf16.mxu0 0
    %4814 = vmatpush1.bf16.msra.mxu0 0
    %4815 = vmatprep.mubr.bf16.mxu0 0
    %4816 = vmatmul.mubr.bf16.gmra.mrb[0].mxu0 %v4781
    %v4817 = vpop.f32.mrb[0].mxu0
    %v4818 = vadd.f32 0.0, %v4817
    %v4819 = vpop.f32.mrb[0].mxu0
    %v4820 = vpop.f32.mrb[0].mxu0
    %v4821 = vpop.f32.mrb[0].mxu0
    %4822 = vdwg.mxu0
    %v4824 = vlaneseq
    %v4825 = vshrl.u32 %v4824, 7
    %v4826 = vsub.s32 0, %v4825
    %v4827 = vrot.slane %v4762, %v4826
    %v4829 = vadd.f32 %v4827, %v4818
    %v4830 = vpack.c.bf16 %v4750, %v4750
    %s4831 = scalar_lea.vmem [#allocation8], 16
    %v4832 = vld [vmem:[%s4831] sm:$0xf]
    %v4833 = vld [vmem:[%s4831 + $0x4] sm:$0xf]
    %v4834 = vld [vmem:[%s4831 + $0x8] sm:$0xf]
    %v4835 = vld [vmem:[%s4831 + $0xc] sm:$0xf]
    %v4840 = vunpack.c.l.b16 %v4832
    %v4841 = vunpack.c.l.b16 %v4833
    %v4842 = vunpack.c.l.b16 %v4834
    %v4843 = vunpack.c.l.b16 %v4835
    %v4844 = vpack.c.b16 %v4841, %v4840
    %v4845 = vpack.c.b16 %v4843, %v4842
    %v4849 = vsel %vm4166, %v4830, 0
    %4851 = vmatprep.subr.bf16.mxu0 0
    %4852 = vmatpush1.bf16.msra.mxu0 %v4844
    %4853 = vmatprep.subr.bf16.mxu0 0
    %4854 = vmatpush1.bf16.msra.mxu0 %v4845
    %4855 = vmatprep.subr.bf16.mxu0 0
    %4856 = vmatpush1.bf16.msra.mxu0 0
    %4857 = vmatprep.subr.bf16.mxu0 0
    %4858 = vmatpush1.bf16.msra.mxu0 0
    %4859 = vmatprep.subr.bf16.mxu0 0
    %4860 = vmatpush1.bf16.msra.mxu0 0
    %4861 = vmatprep.subr.bf16.mxu0 0
    %4862 = vmatpush1.bf16.msra.mxu0 0
    %4863 = vmatprep.subr.bf16.mxu0 0
    %4864 = vmatpush1.bf16.msra.mxu0 0
    %4865 = vmatprep.subr.bf16.mxu0 0
    %4866 = vmatpush1.bf16.msra.mxu0 0
    %4867 = vmatprep.subr.bf16.mxu0 0
    %4868 = vmatpush1.bf16.msra.mxu0 0
    %4869 = vmatprep.subr.bf16.mxu0 0
    %4870 = vmatpush1.bf16.msra.mxu0 0
    %4871 = vmatprep.subr.bf16.mxu0 0
    %4872 = vmatpush1.bf16.msra.mxu0 0
    %4873 = vmatprep.subr.bf16.mxu0 0
    %4874 = vmatpush1.bf16.msra.mxu0 0
    %4875 = vmatprep.subr.bf16.mxu0 0
    %4876 = vmatpush1.bf16.msra.mxu0 0
    %4877 = vmatprep.subr.bf16.mxu0 0
    %4878 = vmatpush1.bf16.msra.mxu0 0
    %4879 = vmatprep.subr.bf16.mxu0 0
    %4880 = vmatpush1.bf16.msra.mxu0 0
    %4881 = vmatprep.subr.bf16.mxu0 0
    %4882 = vmatpush1.bf16.msra.mxu0 0
    %4883 = vmatprep.mubr.bf16.mxu0 0
    %4884 = vmatmul.mubr.bf16.gmra.mrb[0].mxu0 %v4849
    %v4885 = vpop.f32.mrb[0].mxu0
    %v4886 = vadd.f32 0.0, %v4885
    %v4887 = vpop.f32.mrb[0].mxu0
    %v4888 = vpop.f32.mrb[0].mxu0
    %v4889 = vpop.f32.mrb[0].mxu0
    %4890 = vdwg.mxu0
    %v4891 = vadd.f32 %v4829, %v4886
    %v4892 = vpack.c.bf16 %v4761, %v4761
    %s4893 = scalar_lea.vmem [#allocation8], 32
    %v4894 = vld [vmem:[%s4893] sm:$0xf]
    %v4895 = vld [vmem:[%s4893 + $0x4] sm:$0xf]
    %v4896 = vld [vmem:[%s4893 + $0x8] sm:$0xf]
    %v4897 = vld [vmem:[%s4893 + $0xc] sm:$0xf]
    %v4902 = vunpack.c.l.b16 %v4894
    %v4903 = vunpack.c.l.b16 %v4895
    %v4904 = vunpack.c.l.b16 %v4896
    %v4905 = vunpack.c.l.b16 %v4897
    %v4906 = vpack.c.b16 %v4903, %v4902
    %v4907 = vpack.c.b16 %v4905, %v4904
    %v4911 = vsel %vm4166, %v4892, 0
    %4913 = vmatprep.subr.bf16.mxu0 0
    %4914 = vmatpush1.bf16.msra.mxu0 %v4906
    %4915 = vmatprep.subr.bf16.mxu0 0
    %4916 = vmatpush1.bf16.msra.mxu0 %v4907
    %4917 = vmatprep.subr.bf16.mxu0 0
    %4918 = vmatpush1.bf16.msra.mxu0 0
    %4919 = vmatprep.subr.bf16.mxu0 0
    %4920 = vmatpush1.bf16.msra.mxu0 0
    %4921 = vmatprep.subr.bf16.mxu0 0
    %4922 = vmatpush1.bf16.msra.mxu0 0
    %4923 = vmatprep.subr.bf16.mxu0 0
    %4924 = vmatpush1.bf16.msra.mxu0 0
    %4925 = vmatprep.subr.bf16.mxu0 0
    %4926 = vmatpush1.bf16.msra.mxu0 0
    %4927 = vmatprep.subr.bf16.mxu0 0
    %4928 = vmatpush1.bf16.msra.mxu0 0
    %4929 = vmatprep.subr.bf16.mxu0 0
    %4930 = vmatpush1.bf16.msra.mxu0 0
    %4931 = vmatprep.subr.bf16.mxu0 0
    %4932 = vmatpush1.bf16.msra.mxu0 0
    %4933 = vmatprep.subr.bf16.mxu0 0
    %4934 = vmatpush1.bf16.msra.mxu0 0
    %4935 = vmatprep.subr.bf16.mxu0 0
    %4936 = vmatpush1.bf16.msra.mxu0 0
    %4937 = vmatprep.subr.bf16.mxu0 0
    %4938 = vmatpush1.bf16.msra.mxu0 0
    %4939 = vmatprep.subr.bf16.mxu0 0
    %4940 = vmatpush1.bf16.msra.mxu0 0
    %4941 = vmatprep.subr.bf16.mxu0 0
    %4942 = vmatpush1.bf16.msra.mxu0 0
    %4943 = vmatprep.subr.bf16.mxu0 0
    %4944 = vmatpush1.bf16.msra.mxu0 0
    %4945 = vmatprep.mubr.bf16.mxu0 0
    %4946 = vmatmul.mubr.bf16.gmra.mrb[0].mxu0 %v4911
    %v4947 = vpop.f32.mrb[0].mxu0
    %v4948 = vadd.f32 0.0, %v4947
    %v4949 = vpop.f32.mrb[0].mxu0
    %v4950 = vpop.f32.mrb[0].mxu0
    %v4951 = vpop.f32.mrb[0].mxu0
    %4952 = vdwg.mxu0
    %v4953 = vadd.f32 %v4891, %v4948
    %v4954 = vadd.f32 %v4953, %v4545
    %v4955 = vpack.c.bf16 %v4954, %v4954
    %vm4956 = vcmask 254976
    %4957 = vst.msk [vmem:[%s69] sm:$0x3] %vm4956, %v4955
    // Predicated region
    $region154: #{procgen_resnet_forward.2} parent=1 // pred_check
      _
    $region155: #{procgen_resnet_forward.2} parent=1 // pred_check_branch
      %4959 = sbr.rel (0) target = $region157
    $region156: #{procgen_resnet_forward.2} parent=1 // pred_region
      _
    $region157: #{procgen_resnet_forward.2} parent=1 // pred_fallthru
      _
    // Predicated region
    $region158: #{procgen_resnet_forward.2} parent=1 // pred_check
      _
    $region159: #{procgen_resnet_forward.2} parent=1 // pred_check_branch
      %4961 = sbr.rel (0) target = $region161
    $region160: #{procgen_resnet_forward.2} parent=1 // pred_region
      _
    $region161: #{procgen_resnet_forward.2} parent=1 // pred_fallthru
      _
    %4962 = vsyncpa [#allocation4], 1
    %4963 = vsyncpa [#allocation6], 1
    %4964 = vsyncpa [#allocation9], 1

</llo_original>
